<compile_context>
chip_gen: v7x
topology: tpu7x:2x2x1
jax: 0.10.0
libtpu: 0.0.40
codegen_flags: <defaults>
</compile_context>

<pallas_src>
import jax
import jax.numpy as jnp
import numpy as np
from jax.experimental import pallas as pl
from jax.experimental.pallas import tpu as pltpu

OBS_LEN = 8            # obs_len / target_len
PRE_LEN = 12           # pre_len
H_ENC = 24             # per-direction encoder hidden (hidden // 2)
H_DEC = 48             # decoder hidden (2 * H_ENC)
NUM_LAYER = 3
IN_FEA = 2
BATCH = 4

E_SLOT = 32            # encoder per-gate lane slot  (4 * 32 = 128 gate lanes)
D_SLOT = 64            # decoder per-gate lane slot  (4 * 64 = 256 gate lanes)
NG_ENC = 4 * E_SLOT
NG_DEC = 4 * D_SLOT
OUT_LANES = 128        # fc output padded to a full lane block (dense store)


# ---------------------------------------------------------------------------
# shared LSTM cell update on slot-packed gate lanes (all f32 elementwise math)
# ---------------------------------------------------------------------------
def _lstm_cell(gates, c, hid, slot):
    """gates: (rows, 4*slot) with gate k in lanes [k*slot, k*slot+hid); c: (rows, hid)."""
    i = jax.nn.sigmoid(gates[:, 0 * slot:0 * slot + hid])
    f = jax.nn.sigmoid(gates[:, 1 * slot:1 * slot + hid])
    g = jnp.tanh(gates[:, 2 * slot:2 * slot + hid])
    o = jax.nn.sigmoid(gates[:, 3 * slot:3 * slot + hid])
    c_new = f * c + i * g
    return o * jnp.tanh(c_new), c_new


# ---------------------------------------------------------------------------
# Pallas kernel
# ---------------------------------------------------------------------------
def encoder_trainer_kernel(xp_ref, wih_ref, whh_ref, be_ref, wd_ref, bd_ref,
                           fcw_ref, fcb_ref, out_ref, tops_ref):
    f32, bf16 = jnp.float32, jnp.bfloat16
    S, R = OBS_LEN, 2 * BATCH                      # packed rows: [fwd batch | bwd batch]

    # hoisted per-direction row masks at the state width
    ridx = jax.lax.broadcasted_iota(jnp.int32, (R, H_ENC), 0)
    top = (ridx < BATCH).astype(f32)               # rows 0..3 -> forward direction
    bot = 1.0 - top                                # rows 4..7 -> backward direction

    # ---------------- packed bidirectional 3-layer encoder ----------------
    xin = xp_ref[...]                              # (S*R, 96) bf16, layer-0 packed input
    h = h_step0 = None
    for l in range(NUM_LAYER):
        # (#1) input->gate contribution for ALL S steps in one batched matmul,
        #      off the serial path (M = 64 rows, bf16 operands, f32 accumulate).
        ih_all = jnp.dot(xin, wih_ref[l], preferred_element_type=f32)      # (S*R, 128)
        whh_l = whh_ref[l]                         # (48, 128) bf16
        be_l = be_ref[l]                           # (R, 128)  f32 pre-broadcast bias

        # serial recurrence: per cell only the two 24-wide h blocks are contracted
        h = jnp.zeros((R, H_ENC), f32)
        c = jnp.zeros((R, H_ENC), f32)
        hs = []
        for s in range(S):
            act = jnp.concatenate([h * top, h * bot], axis=-1)             # (R, 48)
            gates = (ih_all[s * R:(s + 1) * R, :] + be_l
                     + jnp.dot(act.astype(bf16), whh_l, preferred_element_type=f32))
            h, c = _lstm_cell(gates, c, H_ENC, E_SLOT)
            hs.append(h)

        if l < NUM_LAYER - 1:
            # (#8) build the NEXT layer's batched ih input once per layer:
            #   fwd rows at step s need [out_f[s]   | out_b[s]  ] in lanes [ 0:48)
            #   bwd rows at step s need [out_f[S-1-s]|out_b[S-1-s]] in lanes [48:96)
            pieces = []
            for s in range(S):
                a = hs[s]                                            # fwd: out_f[s]     | bwd: out_b[S-1-s]
                r = pltpu.roll(hs[S - 1 - s], shift=BATCH, axis=0)   # fwd: out_b[s]     | bwd: out_f[S-1-s]
                pieces.append(jnp.concatenate(
                    [a * top, r * top, r * bot, a * bot], axis=-1))  # (R, 96)
            xin = jnp.concatenate(pieces, axis=0).astype(bf16)       # (S*R, 96)
        else:
            h_step0 = hs[0]                        # bwd half holds out_b at time S-1

    # decoder seed = encoder top-layer output at the last timestep
    seed = jnp.concatenate([h[0:BATCH, :], h_step0[BATCH:R, :]], axis=-1)  # (4, 48)

    # ---------------- autoregressive 3-layer decoder ----------------
    # (#4) NOTE: layer 0's input at step t is the previous step's TOP-layer
    # output, so the 36 cells form one serial dependency chain; a wavefront
    # (diagonal) schedule does not apply to this module.
    wd_l = [wd_ref[l] for l in range(NUM_LAYER)]   # (96, 256) bf16, hoisted
    bd_l = [bd_ref[l] for l in range(NUM_LAYER)]   # (4, 256)  f32,  hoisted
    hd = [jnp.zeros((BATCH, H_DEC), jnp.float32) for _ in range(NUM_LAYER)]
    cd = [jnp.zeros((BATCH, H_DEC), jnp.float32) for _ in range(NUM_LAYER)]
    x = seed
    for t in range(PRE_LEN):
        for l in range(NUM_LAYER):
            act = jnp.concatenate([x, hd[l]], axis=-1)                     # (4, 96)
            gates = bd_l[l] + jnp.dot(act.astype(bf16), wd_l[l],
                                      preferred_element_type=f32)          # (4, 256)
            hd[l], cd[l] = _lstm_cell(gates, cd[l], H_DEC, D_SLOT)
            x = hd[l]
        tops_ref[t * BATCH:(t + 1) * BATCH, :] = x          # (#9) bounded live range

    # ---------------- deferred fc: one matmul + one lane-dense store ----------------
    h_all = tops_ref[...].astype(bf16)                       # (PRE_LEN*BATCH, 48)
    out_ref[...] = (jnp.dot(h_all, fcw_ref[...], preferred_element_type=f32)
                    + fcb_ref[...])


# ---------------------------------------------------------------------------
# wrapper
# ---------------------------------------------------------------------------
def encoder_trainer_forward(traj, packed):
    """traj: (BATCH, OBS_LEN, 2) float32  ->  (BATCH, PRE_LEN, 2) float32."""
    assert traj.shape == (BATCH, OBS_LEN, IN_FEA)
    R = 2 * BATCH
    x = jnp.transpose(traj, (1, 0, 2)).astype(jnp.float32)                 # (S, bs, 2)

    # packed layer-0 input for the batched ih matmul:
    #   fwd rows (0..3) carry x[s]      in lanes [0:2)
    #   bwd rows (4..7) carry x[S-1-s]  in lanes [48:50)   (bwd weight block rows)
    xp = jnp.zeros((OBS_LEN, R, 2 * H_DEC), jnp.float32)
    xp = xp.at[:, 0:BATCH, 0:IN_FEA].set(x)
    xp = xp.at[:, BATCH:R, H_DEC:H_DEC + IN_FEA].set(x[::-1])
    xp = xp.reshape(OBS_LEN * R, 2 * H_DEC).astype(jnp.bfloat16)           # (64, 96)

    vmem = pl.BlockSpec(memory_space=pltpu.MemorySpace.VMEM)
    out = pl.pallas_call(
        encoder_trainer_kernel,
        out_shape=jax.ShapeDtypeStruct((PRE_LEN * BATCH, OUT_LANES), jnp.float32),
        in_specs=[vmem] * 8,
        out_specs=vmem,
        scratch_shapes=[
            pltpu.VMEM((PRE_LEN * BATCH, H_DEC), jnp.float32),   # decoder top-layer h
        ],
    )(xp, packed["wih"], packed["whh"], packed["be"],
      packed["wd"], packed["bd"], packed["fc_w"], packed["fc_b"])
    out = out[:, 0:2].reshape(PRE_LEN, BATCH, 2)
    return jnp.transpose(out, (1, 0, 2))                                   # (bs, PRE_LEN, 2)


# ---------------------------------------------------------------------------
# parameter construction / packing
# ---------------------------------------------------------------------------
def init_params(key):
    """PyTorch-style uniform(-1/sqrt(h), 1/sqrt(h)) params in natural layout."""
    keys = iter(jax.random.split(key, 64))

    def u(shape, s):
        return jax.random.uniform(next(keys), shape, jnp.float32, -s, s)

    s_e = 1.0 / float(np.sqrt(H_ENC))
    s_d = 1.0 / float(np.sqrt(H_DEC))

    enc = []
    for l in range(NUM_LAYER):
        in_sz = IN_FEA if l == 0 else 2 * H_ENC
        layer = {}
        for d in ("fwd", "bwd"):
            layer[d] = (u((in_sz, 4 * H_ENC), s_e),                        # W_ih (in, 4h)
                        u((H_ENC, 4 * H_ENC), s_e),                        # W_hh (h, 4h)
                        u((1, 4 * H_ENC), s_e) + u((1, 4 * H_ENC), s_e))   # b_ih + b_hh
        enc.append(layer)

    dec = []
    for _l in range(NUM_LAYER):
        dec.append((u((H_DEC, 4 * H_DEC), s_d),
                    u((H_DEC, 4 * H_DEC), s_d),
                    u((1, 4 * H_DEC), s_d) + u((1, 4 * H_DEC), s_d)))

    s_fc = 1.0 / float(np.sqrt(H_DEC))
    return {"enc": enc, "dec": dec,
            "fc_w": u((H_DEC, 2), s_fc), "fc_b": u((1, 2), s_fc)}


def _pack_gate_cols(w, hid, slot):
    """(rows, 4*hid) -> (rows, 4*slot) with gate k in lanes [k*slot, k*slot+hid)."""
    out = jnp.zeros((w.shape[0], 4 * slot), jnp.float32)
    for k in range(4):
        out = out.at[:, k * slot:k * slot + hid].set(w[:, k * hid:(k + 1) * hid])
    return out


def pack_params(params):
    """Natural params -> fused, slot-packed, block-diagonal kernel layout (weights bf16)."""
    bf16 = jnp.bfloat16

    wih, whh, be = [], [], []
    for l in range(NUM_LAYER):
        w_ih_f, w_hh_f, b_f = params["enc"][l]["fwd"]
        w_ih_b, w_hh_b, b_b = params["enc"][l]["bwd"]
        in_sz = w_ih_f.shape[0]                              # 2 (layer 0) or 48

        wi = jnp.zeros((2 * H_DEC, NG_ENC), jnp.float32)                  # (96, 128)
        wi = wi.at[0:in_sz, :].set(_pack_gate_cols(w_ih_f, H_ENC, E_SLOT))           # fwd rows
        wi = wi.at[H_DEC:H_DEC + in_sz, :].set(_pack_gate_cols(w_ih_b, H_ENC, E_SLOT))  # bwd rows
        wih.append(wi)

        wh = jnp.zeros((2 * H_ENC, NG_ENC), jnp.float32)                  # (48, 128)
        wh = wh.at[0:H_ENC, :].set(_pack_gate_cols(w_hh_f, H_ENC, E_SLOT))
        wh = wh.at[H_ENC:2 * H_ENC, :].set(_pack_gate_cols(w_hh_b, H_ENC, E_SLOT))
        whh.append(wh)

        be.append(jnp.concatenate(
            [jnp.broadcast_to(_pack_gate_cols(b_f, H_ENC, E_SLOT), (BATCH, NG_ENC)),
             jnp.broadcast_to(_pack_gate_cols(b_b, H_ENC, E_SLOT), (BATCH, NG_ENC))],
            axis=0))                                                       # (8, 128)

    wd, bd = [], []
    for l in range(NUM_LAYER):
        w_ih, w_hh, b = params["dec"][l]
        w = jnp.zeros((2 * H_DEC, NG_DEC), jnp.float32)                   # (96, 256)
        w = w.at[0:H_DEC, :].set(_pack_gate_cols(w_ih, H_DEC, D_SLOT))    # x rows
        w = w.at[H_DEC:2 * H_DEC, :].set(_pack_gate_cols(w_hh, H_DEC, D_SLOT))  # h rows
        wd.append(w)
        bd.append(jnp.broadcast_to(_pack_gate_cols(b, H_DEC, D_SLOT), (BATCH, NG_DEC)))

    fc_w = jnp.zeros((H_DEC, OUT_LANES), jnp.float32).at[:, 0:2].set(params["fc_w"])
    fc_b = jnp.zeros((1, OUT_LANES), jnp.float32).at[:, 0:2].set(params["fc_b"])

    return {"wih": jnp.stack(wih).astype(bf16),   # (3, 96, 128) bf16
            "whh": jnp.stack(whh).astype(bf16),   # (3, 48, 128) bf16
            "be":  jnp.stack(be),                 # (3,  8, 128) f32
            "wd":  jnp.stack(wd).astype(bf16),    # (3, 96, 256) bf16
            "bd":  jnp.stack(bd),                 # (3,  4, 256) f32
            "fc_w": fc_w.astype(bf16),            # (48, 128)    bf16
            "fc_b": fc_b}                         # (1, 128)     f32


# ---------------------------------------------------------------------------
# pure-JAX reference (straightforward, unpacked f32 math)
# ---------------------------------------------------------------------------
def _lstm_cell_ref(x, h, c, w_ih, w_hh, b):
    hid = h.shape[-1]
    gates = jnp.dot(x, w_ih) + jnp.dot(h, w_hh) + b
    i = jax.nn.sigmoid(gates[:, 0 * hid:1 * hid])
    f = jax.nn.sigmoid(gates[:, 1 * hid:2 * hid])
    g = jnp.tanh(gates[:, 2 * hid:3 * hid])
    o = jax.nn.sigmoid(gates[:, 3 * hid:4 * hid])
    c_new = f * c + i * g
    return o * jnp.tanh(c_new), c_new


def reference_forward(traj, params):
    x = jnp.transpose(traj, (1, 0, 2)).astype(jnp.float32)      # (S, bs, 2)
    S, bs, _ = x.shape
    cur = [x[t] for t in range(S)]
    for l in range(NUM_LAYER):
        w_ih_f, w_hh_f, b_f = params["enc"][l]["fwd"]
        w_ih_b, w_hh_b, b_b = params["enc"][l]["bwd"]
        h = jnp.zeros((bs, H_ENC), jnp.float32)
        c = jnp.zeros((bs, H_ENC), jnp.float32)
        outs_f = []
        for t in range(S):
            h, c = _lstm_cell_ref(cur[t], h, c, w_ih_f, w_hh_f, b_f)
            outs_f.append(h)
        h = jnp.zeros((bs, H_ENC), jnp.float32)
        c = jnp.zeros((bs, H_ENC), jnp.float32)
        outs_b = [None] * S
        for t in range(S - 1, -1, -1):
            h, c = _lstm_cell_ref(cur[t], h, c, w_ih_b, w_hh_b, b_b)
            outs_b[t] = h
        cur = [jnp.concatenate([outs_f[t], outs_b[t]], axis=-1) for t in range(S)]

    xt = cur[S - 1]                                              # trj_encoded[-1]
    hs = [jnp.zeros((bs, H_DEC), jnp.float32) for _ in range(NUM_LAYER)]
    cs = [jnp.zeros((bs, H_DEC), jnp.float32) for _ in range(NUM_LAYER)]
    ys = []
    for _ in range(PRE_LEN):
        for l in range(NUM_LAYER):
            w_ih, w_hh, b = params["dec"][l]
            hs[l], cs[l] = _lstm_cell_ref(xt, hs[l], cs[l], w_ih, w_hh, b)
            xt = hs[l]
        ys.append(jnp.dot(xt, params["fc_w"]) + params["fc_b"])
    return jnp.transpose(jnp.stack(ys, axis=0), (1, 0, 2))       # (bs, PRE_LEN, 2)


# ---------------------------------------------------------------------------
if __name__ == "__main__":
    key = jax.random.PRNGKey(0)
    k_param, k_data = jax.random.split(key)
    params = init_params(k_param)
    packed = pack_params(params)

    traj = jax.random.normal(k_data, (BATCH, OBS_LEN, IN_FEA), jnp.float32)

    out = jax.block_until_ready(jax.jit(encoder_trainer_forward)(traj, packed))
    assert out.shape == (BATCH, PRE_LEN, 2), out.shape

    # kernel uses bf16 matmul operands with f32 accumulation -> compare against
    # the pure-f32 reference at bf16-level tolerance
    ref = jax.block_until_ready(jax.jit(reference_forward)(traj, params))
    np.testing.assert_allclose(np.asarray(out), np.asarray(ref), rtol=2e-2, atol=2e-2)

    print("KERNEL_OK")
</pallas_src>

<mosaic_0001>
module attributes {stable_mosaic.version = 11 : i64} {
  func.func @encoder_trainer_kernel(%arg0: memref<64x96xbf16, #tpu.memory_space<vmem>>, %arg1: memref<3x96x128xbf16, #tpu.memory_space<vmem>>, %arg2: memref<3x48x128xbf16, #tpu.memory_space<vmem>>, %arg3: memref<3x8x128xf32, #tpu.memory_space<vmem>>, %arg4: memref<3x96x256xbf16, #tpu.memory_space<vmem>>, %arg5: memref<3x4x256xf32, #tpu.memory_space<vmem>>, %arg6: memref<48x128xbf16, #tpu.memory_space<vmem>>, %arg7: memref<1x128xf32, #tpu.memory_space<vmem>>, %arg8: memref<48x128xf32, #tpu.memory_space<vmem>>, %arg9: memref<48x48xf32, #tpu.memory_space<vmem>>) attributes {dimension_semantics = [], scalar_prefetch = 0 : i64, scratch_operands = 1 : i64, tpu.core_type = #tpu.core_type<tc>} {
    %0 = tpu.iota {dimensions = array<i32: 0>} : vector<8x24xi32>
    %c4_i32 = arith.constant 4 : i32
    %1 = vector.broadcast %c4_i32 : i32 to vector<8x24xi32>
    %2 = arith.cmpi slt, %0, %1 : vector<8x24xi32>
    %3 = arith.extui %2 : vector<8x24xi1> to vector<8x24xi32>
    %4 = arith.sitofp %3 : vector<8x24xi32> to vector<8x24xf32>
    %cst = arith.constant 1.000000e+00 : f32
    %5 = vector.broadcast %cst : f32 to vector<8x24xf32>
    %6 = arith.subf %5, %4 : vector<8x24xf32>
    %c0 = arith.constant 0 : index
    %c0_0 = arith.constant 0 : index
    %7 = vector.load %arg0[%c0, %c0_0] : memref<64x96xbf16, #tpu.memory_space<vmem>>, vector<64x96xbf16>
    %c0_1 = arith.constant 0 : index
    %c0_2 = arith.constant 0 : index
    %c0_3 = arith.constant 0 : index
    %8 = vector.load %arg1[%c0_1, %c0_2, %c0_3] : memref<3x96x128xbf16, #tpu.memory_space<vmem>>, vector<1x96x128xbf16>
    %9 = vector.shape_cast %8 : vector<1x96x128xbf16> to vector<96x128xbf16>
    %cst_4 = arith.constant dense<0.000000e+00> : vector<64x128xf32>
    %10 = tpu.matmul %7, %9, %cst_4 {dimension_numbers = #tpu.dot_dimension_numbers<[1], [0], [0], [1], [0, 0, 1, 1], [], []>} : vector<64x96xbf16>, vector<96x128xbf16>, vector<64x128xf32> -> vector<64x128xf32>
    %c0_5 = arith.constant 0 : index
    %c0_6 = arith.constant 0 : index
    %c0_7 = arith.constant 0 : index
    %11 = vector.load %arg2[%c0_5, %c0_6, %c0_7] : memref<3x48x128xbf16, #tpu.memory_space<vmem>>, vector<1x48x128xbf16>
    %12 = vector.shape_cast %11 : vector<1x48x128xbf16> to vector<48x128xbf16>
    %c0_8 = arith.constant 0 : index
    %c0_9 = arith.constant 0 : index
    %c0_10 = arith.constant 0 : index
    %13 = vector.load %arg3[%c0_8, %c0_9, %c0_10] : memref<3x8x128xf32, #tpu.memory_space<vmem>>, vector<1x8x128xf32>
    %14 = vector.shape_cast %13 : vector<1x8x128xf32> to vector<8x128xf32>
    %cst_11 = arith.constant 0.000000e+00 : f32
    %15 = vector.broadcast %cst_11 : f32 to vector<8x24xf32>
    %cst_12 = arith.constant 0.000000e+00 : f32
    %16 = vector.broadcast %cst_12 : f32 to vector<8x24xf32>
    %17 = arith.mulf %15, %4 : vector<8x24xf32>
    %18 = arith.mulf %15, %6 : vector<8x24xf32>
    %19 = tpu.concatenate %17, %18 in 1 : vector<8x24xf32>, vector<8x24xf32> -> vector<8x48xf32>
    %20 = vector.extract_strided_slice %10 {offsets = [0, 0], sizes = [8, 128], strides = [1, 1]} : vector<64x128xf32> to vector<8x128xf32>
    %21 = arith.addf %20, %14 : vector<8x128xf32>
    %22 = arith.truncf %19 : vector<8x48xf32> to vector<8x48xbf16>
    %cst_13 = arith.constant dense<0.000000e+00> : vector<8x128xf32>
    %23 = tpu.matmul %22, %12, %cst_13 {dimension_numbers = #tpu.dot_dimension_numbers<[1], [0], [0], [1], [0, 0, 1, 1], [], []>} : vector<8x48xbf16>, vector<48x128xbf16>, vector<8x128xf32> -> vector<8x128xf32>
    %24 = arith.addf %21, %23 : vector<8x128xf32>
    %25 = vector.extract_strided_slice %24 {offsets = [0, 0], sizes = [8, 24], strides = [1, 1]} : vector<8x128xf32> to vector<8x24xf32>
    %26 = arith.negf %25 : vector<8x24xf32>
    %27 = math.exp %26 : vector<8x24xf32>
    %cst_14 = arith.constant 1.000000e+00 : f32
    %28 = vector.broadcast %cst_14 : f32 to vector<8x24xf32>
    %29 = arith.addf %28, %27 : vector<8x24xf32>
    %30 = arith.divf %28, %29 : vector<8x24xf32>
    %31 = vector.extract_strided_slice %24 {offsets = [0, 32], sizes = [8, 24], strides = [1, 1]} : vector<8x128xf32> to vector<8x24xf32>
    %32 = arith.negf %31 : vector<8x24xf32>
    %33 = math.exp %32 : vector<8x24xf32>
    %cst_15 = arith.constant 1.000000e+00 : f32
    %34 = vector.broadcast %cst_15 : f32 to vector<8x24xf32>
    %35 = arith.addf %34, %33 : vector<8x24xf32>
    %36 = arith.divf %34, %35 : vector<8x24xf32>
    %37 = vector.extract_strided_slice %24 {offsets = [0, 64], sizes = [8, 24], strides = [1, 1]} : vector<8x128xf32> to vector<8x24xf32>
    %38 = math.tanh %37 : vector<8x24xf32>
    %39 = vector.extract_strided_slice %24 {offsets = [0, 96], sizes = [8, 24], strides = [1, 1]} : vector<8x128xf32> to vector<8x24xf32>
    %40 = arith.negf %39 : vector<8x24xf32>
    %41 = math.exp %40 : vector<8x24xf32>
    %cst_16 = arith.constant 1.000000e+00 : f32
    %42 = vector.broadcast %cst_16 : f32 to vector<8x24xf32>
    %43 = arith.addf %42, %41 : vector<8x24xf32>
    %44 = arith.divf %42, %43 : vector<8x24xf32>
    %45 = arith.mulf %36, %16 : vector<8x24xf32>
    %46 = arith.mulf %30, %38 : vector<8x24xf32>
    %47 = arith.addf %45, %46 : vector<8x24xf32>
    %48 = math.tanh %47 : vector<8x24xf32>
    %49 = arith.mulf %44, %48 : vector<8x24xf32>
    %50 = arith.mulf %49, %4 : vector<8x24xf32>
    %51 = arith.mulf %49, %6 : vector<8x24xf32>
    %52 = tpu.concatenate %50, %51 in 1 : vector<8x24xf32>, vector<8x24xf32> -> vector<8x48xf32>
    %53 = vector.extract_strided_slice %10 {offsets = [8, 0], sizes = [8, 128], strides = [1, 1]} : vector<64x128xf32> to vector<8x128xf32>
    %54 = arith.addf %53, %14 : vector<8x128xf32>
    %55 = arith.truncf %52 : vector<8x48xf32> to vector<8x48xbf16>
    %cst_17 = arith.constant dense<0.000000e+00> : vector<8x128xf32>
    %56 = tpu.matmul %55, %12, %cst_17 {dimension_numbers = #tpu.dot_dimension_numbers<[1], [0], [0], [1], [0, 0, 1, 1], [], []>} : vector<8x48xbf16>, vector<48x128xbf16>, vector<8x128xf32> -> vector<8x128xf32>
    %57 = arith.addf %54, %56 : vector<8x128xf32>
    %58 = vector.extract_strided_slice %57 {offsets = [0, 0], sizes = [8, 24], strides = [1, 1]} : vector<8x128xf32> to vector<8x24xf32>
    %59 = arith.negf %58 : vector<8x24xf32>
    %60 = math.exp %59 : vector<8x24xf32>
    %cst_18 = arith.constant 1.000000e+00 : f32
    %61 = vector.broadcast %cst_18 : f32 to vector<8x24xf32>
    %62 = arith.addf %61, %60 : vector<8x24xf32>
    %63 = arith.divf %61, %62 : vector<8x24xf32>
    %64 = vector.extract_strided_slice %57 {offsets = [0, 32], sizes = [8, 24], strides = [1, 1]} : vector<8x128xf32> to vector<8x24xf32>
    %65 = arith.negf %64 : vector<8x24xf32>
    %66 = math.exp %65 : vector<8x24xf32>
    %cst_19 = arith.constant 1.000000e+00 : f32
    %67 = vector.broadcast %cst_19 : f32 to vector<8x24xf32>
    %68 = arith.addf %67, %66 : vector<8x24xf32>
    %69 = arith.divf %67, %68 : vector<8x24xf32>
    %70 = vector.extract_strided_slice %57 {offsets = [0, 64], sizes = [8, 24], strides = [1, 1]} : vector<8x128xf32> to vector<8x24xf32>
    %71 = math.tanh %70 : vector<8x24xf32>
    %72 = vector.extract_strided_slice %57 {offsets = [0, 96], sizes = [8, 24], strides = [1, 1]} : vector<8x128xf32> to vector<8x24xf32>
    %73 = arith.negf %72 : vector<8x24xf32>
    %74 = math.exp %73 : vector<8x24xf32>
    %cst_20 = arith.constant 1.000000e+00 : f32
    %75 = vector.broadcast %cst_20 : f32 to vector<8x24xf32>
    %76 = arith.addf %75, %74 : vector<8x24xf32>
    %77 = arith.divf %75, %76 : vector<8x24xf32>
    %78 = arith.mulf %69, %47 : vector<8x24xf32>
    %79 = arith.mulf %63, %71 : vector<8x24xf32>
    %80 = arith.addf %78, %79 : vector<8x24xf32>
    %81 = math.tanh %80 : vector<8x24xf32>
    %82 = arith.mulf %77, %81 : vector<8x24xf32>
    %83 = arith.mulf %82, %4 : vector<8x24xf32>
    %84 = arith.mulf %82, %6 : vector<8x24xf32>
    %85 = tpu.concatenate %83, %84 in 1 : vector<8x24xf32>, vector<8x24xf32> -> vector<8x48xf32>
    %86 = vector.extract_strided_slice %10 {offsets = [16, 0], sizes = [8, 128], strides = [1, 1]} : vector<64x128xf32> to vector<8x128xf32>
    %87 = arith.addf %86, %14 : vector<8x128xf32>
    %88 = arith.truncf %85 : vector<8x48xf32> to vector<8x48xbf16>
    %cst_21 = arith.constant dense<0.000000e+00> : vector<8x128xf32>
    %89 = tpu.matmul %88, %12, %cst_21 {dimension_numbers = #tpu.dot_dimension_numbers<[1], [0], [0], [1], [0, 0, 1, 1], [], []>} : vector<8x48xbf16>, vector<48x128xbf16>, vector<8x128xf32> -> vector<8x128xf32>
    %90 = arith.addf %87, %89 : vector<8x128xf32>
    %91 = vector.extract_strided_slice %90 {offsets = [0, 0], sizes = [8, 24], strides = [1, 1]} : vector<8x128xf32> to vector<8x24xf32>
    %92 = arith.negf %91 : vector<8x24xf32>
    %93 = math.exp %92 : vector<8x24xf32>
    %cst_22 = arith.constant 1.000000e+00 : f32
    %94 = vector.broadcast %cst_22 : f32 to vector<8x24xf32>
    %95 = arith.addf %94, %93 : vector<8x24xf32>
    %96 = arith.divf %94, %95 : vector<8x24xf32>
    %97 = vector.extract_strided_slice %90 {offsets = [0, 32], sizes = [8, 24], strides = [1, 1]} : vector<8x128xf32> to vector<8x24xf32>
    %98 = arith.negf %97 : vector<8x24xf32>
    %99 = math.exp %98 : vector<8x24xf32>
    %cst_23 = arith.constant 1.000000e+00 : f32
    %100 = vector.broadcast %cst_23 : f32 to vector<8x24xf32>
    %101 = arith.addf %100, %99 : vector<8x24xf32>
    %102 = arith.divf %100, %101 : vector<8x24xf32>
    %103 = vector.extract_strided_slice %90 {offsets = [0, 64], sizes = [8, 24], strides = [1, 1]} : vector<8x128xf32> to vector<8x24xf32>
    %104 = math.tanh %103 : vector<8x24xf32>
    %105 = vector.extract_strided_slice %90 {offsets = [0, 96], sizes = [8, 24], strides = [1, 1]} : vector<8x128xf32> to vector<8x24xf32>
    %106 = arith.negf %105 : vector<8x24xf32>
    %107 = math.exp %106 : vector<8x24xf32>
    %cst_24 = arith.constant 1.000000e+00 : f32
    %108 = vector.broadcast %cst_24 : f32 to vector<8x24xf32>
    %109 = arith.addf %108, %107 : vector<8x24xf32>
    %110 = arith.divf %108, %109 : vector<8x24xf32>
    %111 = arith.mulf %102, %80 : vector<8x24xf32>
    %112 = arith.mulf %96, %104 : vector<8x24xf32>
    %113 = arith.addf %111, %112 : vector<8x24xf32>
    %114 = math.tanh %113 : vector<8x24xf32>
    %115 = arith.mulf %110, %114 : vector<8x24xf32>
    %116 = arith.mulf %115, %4 : vector<8x24xf32>
    %117 = arith.mulf %115, %6 : vector<8x24xf32>
    %118 = tpu.concatenate %116, %117 in 1 : vector<8x24xf32>, vector<8x24xf32> -> vector<8x48xf32>
    %119 = vector.extract_strided_slice %10 {offsets = [24, 0], sizes = [8, 128], strides = [1, 1]} : vector<64x128xf32> to vector<8x128xf32>
    %120 = arith.addf %119, %14 : vector<8x128xf32>
    %121 = arith.truncf %118 : vector<8x48xf32> to vector<8x48xbf16>
    %cst_25 = arith.constant dense<0.000000e+00> : vector<8x128xf32>
    %122 = tpu.matmul %121, %12, %cst_25 {dimension_numbers = #tpu.dot_dimension_numbers<[1], [0], [0], [1], [0, 0, 1, 1], [], []>} : vector<8x48xbf16>, vector<48x128xbf16>, vector<8x128xf32> -> vector<8x128xf32>
    %123 = arith.addf %120, %122 : vector<8x128xf32>
    %124 = vector.extract_strided_slice %123 {offsets = [0, 0], sizes = [8, 24], strides = [1, 1]} : vector<8x128xf32> to vector<8x24xf32>
    %125 = arith.negf %124 : vector<8x24xf32>
    %126 = math.exp %125 : vector<8x24xf32>
    %cst_26 = arith.constant 1.000000e+00 : f32
    %127 = vector.broadcast %cst_26 : f32 to vector<8x24xf32>
    %128 = arith.addf %127, %126 : vector<8x24xf32>
    %129 = arith.divf %127, %128 : vector<8x24xf32>
    %130 = vector.extract_strided_slice %123 {offsets = [0, 32], sizes = [8, 24], strides = [1, 1]} : vector<8x128xf32> to vector<8x24xf32>
    %131 = arith.negf %130 : vector<8x24xf32>
    %132 = math.exp %131 : vector<8x24xf32>
    %cst_27 = arith.constant 1.000000e+00 : f32
    %133 = vector.broadcast %cst_27 : f32 to vector<8x24xf32>
    %134 = arith.addf %133, %132 : vector<8x24xf32>
    %135 = arith.divf %133, %134 : vector<8x24xf32>
    %136 = vector.extract_strided_slice %123 {offsets = [0, 64], sizes = [8, 24], strides = [1, 1]} : vector<8x128xf32> to vector<8x24xf32>
    %137 = math.tanh %136 : vector<8x24xf32>
    %138 = vector.extract_strided_slice %123 {offsets = [0, 96], sizes = [8, 24], strides = [1, 1]} : vector<8x128xf32> to vector<8x24xf32>
    %139 = arith.negf %138 : vector<8x24xf32>
    %140 = math.exp %139 : vector<8x24xf32>
    %cst_28 = arith.constant 1.000000e+00 : f32
    %141 = vector.broadcast %cst_28 : f32 to vector<8x24xf32>
    %142 = arith.addf %141, %140 : vector<8x24xf32>
    %143 = arith.divf %141, %142 : vector<8x24xf32>
    %144 = arith.mulf %135, %113 : vector<8x24xf32>
    %145 = arith.mulf %129, %137 : vector<8x24xf32>
    %146 = arith.addf %144, %145 : vector<8x24xf32>
    %147 = math.tanh %146 : vector<8x24xf32>
    %148 = arith.mulf %143, %147 : vector<8x24xf32>
    %149 = arith.mulf %148, %4 : vector<8x24xf32>
    %150 = arith.mulf %148, %6 : vector<8x24xf32>
    %151 = tpu.concatenate %149, %150 in 1 : vector<8x24xf32>, vector<8x24xf32> -> vector<8x48xf32>
    %152 = vector.extract_strided_slice %10 {offsets = [32, 0], sizes = [8, 128], strides = [1, 1]} : vector<64x128xf32> to vector<8x128xf32>
    %153 = arith.addf %152, %14 : vector<8x128xf32>
    %154 = arith.truncf %151 : vector<8x48xf32> to vector<8x48xbf16>
    %cst_29 = arith.constant dense<0.000000e+00> : vector<8x128xf32>
    %155 = tpu.matmul %154, %12, %cst_29 {dimension_numbers = #tpu.dot_dimension_numbers<[1], [0], [0], [1], [0, 0, 1, 1], [], []>} : vector<8x48xbf16>, vector<48x128xbf16>, vector<8x128xf32> -> vector<8x128xf32>
    %156 = arith.addf %153, %155 : vector<8x128xf32>
    %157 = vector.extract_strided_slice %156 {offsets = [0, 0], sizes = [8, 24], strides = [1, 1]} : vector<8x128xf32> to vector<8x24xf32>
    %158 = arith.negf %157 : vector<8x24xf32>
    %159 = math.exp %158 : vector<8x24xf32>
    %cst_30 = arith.constant 1.000000e+00 : f32
    %160 = vector.broadcast %cst_30 : f32 to vector<8x24xf32>
    %161 = arith.addf %160, %159 : vector<8x24xf32>
    %162 = arith.divf %160, %161 : vector<8x24xf32>
    %163 = vector.extract_strided_slice %156 {offsets = [0, 32], sizes = [8, 24], strides = [1, 1]} : vector<8x128xf32> to vector<8x24xf32>
    %164 = arith.negf %163 : vector<8x24xf32>
    %165 = math.exp %164 : vector<8x24xf32>
    %cst_31 = arith.constant 1.000000e+00 : f32
    %166 = vector.broadcast %cst_31 : f32 to vector<8x24xf32>
    %167 = arith.addf %166, %165 : vector<8x24xf32>
    %168 = arith.divf %166, %167 : vector<8x24xf32>
    %169 = vector.extract_strided_slice %156 {offsets = [0, 64], sizes = [8, 24], strides = [1, 1]} : vector<8x128xf32> to vector<8x24xf32>
    %170 = math.tanh %169 : vector<8x24xf32>
    %171 = vector.extract_strided_slice %156 {offsets = [0, 96], sizes = [8, 24], strides = [1, 1]} : vector<8x128xf32> to vector<8x24xf32>
    %172 = arith.negf %171 : vector<8x24xf32>
    %173 = math.exp %172 : vector<8x24xf32>
    %cst_32 = arith.constant 1.000000e+00 : f32
    %174 = vector.broadcast %cst_32 : f32 to vector<8x24xf32>
    %175 = arith.addf %174, %173 : vector<8x24xf32>
    %176 = arith.divf %174, %175 : vector<8x24xf32>
    %177 = arith.mulf %168, %146 : vector<8x24xf32>
    %178 = arith.mulf %162, %170 : vector<8x24xf32>
    %179 = arith.addf %177, %178 : vector<8x24xf32>
    %180 = math.tanh %179 : vector<8x24xf32>
    %181 = arith.mulf %176, %180 : vector<8x24xf32>
    %182 = arith.mulf %181, %4 : vector<8x24xf32>
    %183 = arith.mulf %181, %6 : vector<8x24xf32>
    %184 = tpu.concatenate %182, %183 in 1 : vector<8x24xf32>, vector<8x24xf32> -> vector<8x48xf32>
    %185 = vector.extract_strided_slice %10 {offsets = [40, 0], sizes = [8, 128], strides = [1, 1]} : vector<64x128xf32> to vector<8x128xf32>
    %186 = arith.addf %185, %14 : vector<8x128xf32>
    %187 = arith.truncf %184 : vector<8x48xf32> to vector<8x48xbf16>
    %cst_33 = arith.constant dense<0.000000e+00> : vector<8x128xf32>
    %188 = tpu.matmul %187, %12, %cst_33 {dimension_numbers = #tpu.dot_dimension_numbers<[1], [0], [0], [1], [0, 0, 1, 1], [], []>} : vector<8x48xbf16>, vector<48x128xbf16>, vector<8x128xf32> -> vector<8x128xf32>
    %189 = arith.addf %186, %188 : vector<8x128xf32>
    %190 = vector.extract_strided_slice %189 {offsets = [0, 0], sizes = [8, 24], strides = [1, 1]} : vector<8x128xf32> to vector<8x24xf32>
    %191 = arith.negf %190 : vector<8x24xf32>
    %192 = math.exp %191 : vector<8x24xf32>
    %cst_34 = arith.constant 1.000000e+00 : f32
    %193 = vector.broadcast %cst_34 : f32 to vector<8x24xf32>
    %194 = arith.addf %193, %192 : vector<8x24xf32>
    %195 = arith.divf %193, %194 : vector<8x24xf32>
    %196 = vector.extract_strided_slice %189 {offsets = [0, 32], sizes = [8, 24], strides = [1, 1]} : vector<8x128xf32> to vector<8x24xf32>
    %197 = arith.negf %196 : vector<8x24xf32>
    %198 = math.exp %197 : vector<8x24xf32>
    %cst_35 = arith.constant 1.000000e+00 : f32
    %199 = vector.broadcast %cst_35 : f32 to vector<8x24xf32>
    %200 = arith.addf %199, %198 : vector<8x24xf32>
    %201 = arith.divf %199, %200 : vector<8x24xf32>
    %202 = vector.extract_strided_slice %189 {offsets = [0, 64], sizes = [8, 24], strides = [1, 1]} : vector<8x128xf32> to vector<8x24xf32>
    %203 = math.tanh %202 : vector<8x24xf32>
    %204 = vector.extract_strided_slice %189 {offsets = [0, 96], sizes = [8, 24], strides = [1, 1]} : vector<8x128xf32> to vector<8x24xf32>
    %205 = arith.negf %204 : vector<8x24xf32>
    %206 = math.exp %205 : vector<8x24xf32>
    %cst_36 = arith.constant 1.000000e+00 : f32
    %207 = vector.broadcast %cst_36 : f32 to vector<8x24xf32>
    %208 = arith.addf %207, %206 : vector<8x24xf32>
    %209 = arith.divf %207, %208 : vector<8x24xf32>
    %210 = arith.mulf %201, %179 : vector<8x24xf32>
    %211 = arith.mulf %195, %203 : vector<8x24xf32>
    %212 = arith.addf %210, %211 : vector<8x24xf32>
    %213 = math.tanh %212 : vector<8x24xf32>
    %214 = arith.mulf %209, %213 : vector<8x24xf32>
    %215 = arith.mulf %214, %4 : vector<8x24xf32>
    %216 = arith.mulf %214, %6 : vector<8x24xf32>
    %217 = tpu.concatenate %215, %216 in 1 : vector<8x24xf32>, vector<8x24xf32> -> vector<8x48xf32>
    %218 = vector.extract_strided_slice %10 {offsets = [48, 0], sizes = [8, 128], strides = [1, 1]} : vector<64x128xf32> to vector<8x128xf32>
    %219 = arith.addf %218, %14 : vector<8x128xf32>
    %220 = arith.truncf %217 : vector<8x48xf32> to vector<8x48xbf16>
    %cst_37 = arith.constant dense<0.000000e+00> : vector<8x128xf32>
    %221 = tpu.matmul %220, %12, %cst_37 {dimension_numbers = #tpu.dot_dimension_numbers<[1], [0], [0], [1], [0, 0, 1, 1], [], []>} : vector<8x48xbf16>, vector<48x128xbf16>, vector<8x128xf32> -> vector<8x128xf32>
    %222 = arith.addf %219, %221 : vector<8x128xf32>
    %223 = vector.extract_strided_slice %222 {offsets = [0, 0], sizes = [8, 24], strides = [1, 1]} : vector<8x128xf32> to vector<8x24xf32>
    %224 = arith.negf %223 : vector<8x24xf32>
    %225 = math.exp %224 : vector<8x24xf32>
    %cst_38 = arith.constant 1.000000e+00 : f32
    %226 = vector.broadcast %cst_38 : f32 to vector<8x24xf32>
    %227 = arith.addf %226, %225 : vector<8x24xf32>
    %228 = arith.divf %226, %227 : vector<8x24xf32>
    %229 = vector.extract_strided_slice %222 {offsets = [0, 32], sizes = [8, 24], strides = [1, 1]} : vector<8x128xf32> to vector<8x24xf32>
    %230 = arith.negf %229 : vector<8x24xf32>
    %231 = math.exp %230 : vector<8x24xf32>
    %cst_39 = arith.constant 1.000000e+00 : f32
    %232 = vector.broadcast %cst_39 : f32 to vector<8x24xf32>
    %233 = arith.addf %232, %231 : vector<8x24xf32>
    %234 = arith.divf %232, %233 : vector<8x24xf32>
    %235 = vector.extract_strided_slice %222 {offsets = [0, 64], sizes = [8, 24], strides = [1, 1]} : vector<8x128xf32> to vector<8x24xf32>
    %236 = math.tanh %235 : vector<8x24xf32>
    %237 = vector.extract_strided_slice %222 {offsets = [0, 96], sizes = [8, 24], strides = [1, 1]} : vector<8x128xf32> to vector<8x24xf32>
    %238 = arith.negf %237 : vector<8x24xf32>
    %239 = math.exp %238 : vector<8x24xf32>
    %cst_40 = arith.constant 1.000000e+00 : f32
    %240 = vector.broadcast %cst_40 : f32 to vector<8x24xf32>
    %241 = arith.addf %240, %239 : vector<8x24xf32>
    %242 = arith.divf %240, %241 : vector<8x24xf32>
    %243 = arith.mulf %234, %212 : vector<8x24xf32>
    %244 = arith.mulf %228, %236 : vector<8x24xf32>
    %245 = arith.addf %243, %244 : vector<8x24xf32>
    %246 = math.tanh %245 : vector<8x24xf32>
    %247 = arith.mulf %242, %246 : vector<8x24xf32>
    %248 = arith.mulf %247, %4 : vector<8x24xf32>
    %249 = arith.mulf %247, %6 : vector<8x24xf32>
    %250 = tpu.concatenate %248, %249 in 1 : vector<8x24xf32>, vector<8x24xf32> -> vector<8x48xf32>
    %251 = vector.extract_strided_slice %10 {offsets = [56, 0], sizes = [8, 128], strides = [1, 1]} : vector<64x128xf32> to vector<8x128xf32>
    %252 = arith.addf %251, %14 : vector<8x128xf32>
    %253 = arith.truncf %250 : vector<8x48xf32> to vector<8x48xbf16>
    %cst_41 = arith.constant dense<0.000000e+00> : vector<8x128xf32>
    %254 = tpu.matmul %253, %12, %cst_41 {dimension_numbers = #tpu.dot_dimension_numbers<[1], [0], [0], [1], [0, 0, 1, 1], [], []>} : vector<8x48xbf16>, vector<48x128xbf16>, vector<8x128xf32> -> vector<8x128xf32>
    %255 = arith.addf %252, %254 : vector<8x128xf32>
    %256 = vector.extract_strided_slice %255 {offsets = [0, 0], sizes = [8, 24], strides = [1, 1]} : vector<8x128xf32> to vector<8x24xf32>
    %257 = arith.negf %256 : vector<8x24xf32>
    %258 = math.exp %257 : vector<8x24xf32>
    %cst_42 = arith.constant 1.000000e+00 : f32
    %259 = vector.broadcast %cst_42 : f32 to vector<8x24xf32>
    %260 = arith.addf %259, %258 : vector<8x24xf32>
    %261 = arith.divf %259, %260 : vector<8x24xf32>
    %262 = vector.extract_strided_slice %255 {offsets = [0, 32], sizes = [8, 24], strides = [1, 1]} : vector<8x128xf32> to vector<8x24xf32>
    %263 = arith.negf %262 : vector<8x24xf32>
    %264 = math.exp %263 : vector<8x24xf32>
    %cst_43 = arith.constant 1.000000e+00 : f32
    %265 = vector.broadcast %cst_43 : f32 to vector<8x24xf32>
    %266 = arith.addf %265, %264 : vector<8x24xf32>
    %267 = arith.divf %265, %266 : vector<8x24xf32>
    %268 = vector.extract_strided_slice %255 {offsets = [0, 64], sizes = [8, 24], strides = [1, 1]} : vector<8x128xf32> to vector<8x24xf32>
    %269 = math.tanh %268 : vector<8x24xf32>
    %270 = vector.extract_strided_slice %255 {offsets = [0, 96], sizes = [8, 24], strides = [1, 1]} : vector<8x128xf32> to vector<8x24xf32>
    %271 = arith.negf %270 : vector<8x24xf32>
    %272 = math.exp %271 : vector<8x24xf32>
    %cst_44 = arith.constant 1.000000e+00 : f32
    %273 = vector.broadcast %cst_44 : f32 to vector<8x24xf32>
    %274 = arith.addf %273, %272 : vector<8x24xf32>
    %275 = arith.divf %273, %274 : vector<8x24xf32>
    %276 = arith.mulf %267, %245 : vector<8x24xf32>
    %277 = arith.mulf %261, %269 : vector<8x24xf32>
    %278 = arith.addf %276, %277 : vector<8x24xf32>
    %279 = math.tanh %278 : vector<8x24xf32>
    %280 = arith.mulf %275, %279 : vector<8x24xf32>
    %c4_i32_45 = arith.constant 4 : i32
    %281 = tpu.dynamic_rotate %280 by %c4_i32_45 dim 0 : vector<8x24xf32>, i32 -> vector<8x24xf32>
    %282 = arith.mulf %49, %4 : vector<8x24xf32>
    %283 = arith.mulf %281, %4 : vector<8x24xf32>
    %284 = arith.mulf %281, %6 : vector<8x24xf32>
    %285 = arith.mulf %49, %6 : vector<8x24xf32>
    %286 = tpu.concatenate %282, %283, %284, %285 in 1 : vector<8x24xf32>, vector<8x24xf32>, vector<8x24xf32>, vector<8x24xf32> -> vector<8x96xf32>
    %c4_i32_46 = arith.constant 4 : i32
    %287 = tpu.dynamic_rotate %247 by %c4_i32_46 dim 0 : vector<8x24xf32>, i32 -> vector<8x24xf32>
    %288 = arith.mulf %82, %4 : vector<8x24xf32>
    %289 = arith.mulf %287, %4 : vector<8x24xf32>
    %290 = arith.mulf %287, %6 : vector<8x24xf32>
    %291 = arith.mulf %82, %6 : vector<8x24xf32>
    %292 = tpu.concatenate %288, %289, %290, %291 in 1 : vector<8x24xf32>, vector<8x24xf32>, vector<8x24xf32>, vector<8x24xf32> -> vector<8x96xf32>
    %c4_i32_47 = arith.constant 4 : i32
    %293 = tpu.dynamic_rotate %214 by %c4_i32_47 dim 0 : vector<8x24xf32>, i32 -> vector<8x24xf32>
    %294 = arith.mulf %115, %4 : vector<8x24xf32>
    %295 = arith.mulf %293, %4 : vector<8x24xf32>
    %296 = arith.mulf %293, %6 : vector<8x24xf32>
    %297 = arith.mulf %115, %6 : vector<8x24xf32>
    %298 = tpu.concatenate %294, %295, %296, %297 in 1 : vector<8x24xf32>, vector<8x24xf32>, vector<8x24xf32>, vector<8x24xf32> -> vector<8x96xf32>
    %c4_i32_48 = arith.constant 4 : i32
    %299 = tpu.dynamic_rotate %181 by %c4_i32_48 dim 0 : vector<8x24xf32>, i32 -> vector<8x24xf32>
    %300 = arith.mulf %148, %4 : vector<8x24xf32>
    %301 = arith.mulf %299, %4 : vector<8x24xf32>
    %302 = arith.mulf %299, %6 : vector<8x24xf32>
    %303 = arith.mulf %148, %6 : vector<8x24xf32>
    %304 = tpu.concatenate %300, %301, %302, %303 in 1 : vector<8x24xf32>, vector<8x24xf32>, vector<8x24xf32>, vector<8x24xf32> -> vector<8x96xf32>
    %c4_i32_49 = arith.constant 4 : i32
    %305 = tpu.dynamic_rotate %148 by %c4_i32_49 dim 0 : vector<8x24xf32>, i32 -> vector<8x24xf32>
    %306 = arith.mulf %181, %4 : vector<8x24xf32>
    %307 = arith.mulf %305, %4 : vector<8x24xf32>
    %308 = arith.mulf %305, %6 : vector<8x24xf32>
    %309 = arith.mulf %181, %6 : vector<8x24xf32>
    %310 = tpu.concatenate %306, %307, %308, %309 in 1 : vector<8x24xf32>, vector<8x24xf32>, vector<8x24xf32>, vector<8x24xf32> -> vector<8x96xf32>
    %c4_i32_50 = arith.constant 4 : i32
    %311 = tpu.dynamic_rotate %115 by %c4_i32_50 dim 0 : vector<8x24xf32>, i32 -> vector<8x24xf32>
    %312 = arith.mulf %214, %4 : vector<8x24xf32>
    %313 = arith.mulf %311, %4 : vector<8x24xf32>
    %314 = arith.mulf %311, %6 : vector<8x24xf32>
    %315 = arith.mulf %214, %6 : vector<8x24xf32>
    %316 = tpu.concatenate %312, %313, %314, %315 in 1 : vector<8x24xf32>, vector<8x24xf32>, vector<8x24xf32>, vector<8x24xf32> -> vector<8x96xf32>
    %c4_i32_51 = arith.constant 4 : i32
    %317 = tpu.dynamic_rotate %82 by %c4_i32_51 dim 0 : vector<8x24xf32>, i32 -> vector<8x24xf32>
    %318 = arith.mulf %247, %4 : vector<8x24xf32>
    %319 = arith.mulf %317, %4 : vector<8x24xf32>
    %320 = arith.mulf %317, %6 : vector<8x24xf32>
    %321 = arith.mulf %247, %6 : vector<8x24xf32>
    %322 = tpu.concatenate %318, %319, %320, %321 in 1 : vector<8x24xf32>, vector<8x24xf32>, vector<8x24xf32>, vector<8x24xf32> -> vector<8x96xf32>
    %c4_i32_52 = arith.constant 4 : i32
    %323 = tpu.dynamic_rotate %49 by %c4_i32_52 dim 0 : vector<8x24xf32>, i32 -> vector<8x24xf32>
    %324 = arith.mulf %280, %4 : vector<8x24xf32>
    %325 = arith.mulf %323, %4 : vector<8x24xf32>
    %326 = arith.mulf %323, %6 : vector<8x24xf32>
    %327 = arith.mulf %280, %6 : vector<8x24xf32>
    %328 = tpu.concatenate %324, %325, %326, %327 in 1 : vector<8x24xf32>, vector<8x24xf32>, vector<8x24xf32>, vector<8x24xf32> -> vector<8x96xf32>
    %329 = tpu.concatenate %286, %292, %298, %304, %310, %316, %322, %328 in 0 : vector<8x96xf32>, vector<8x96xf32>, vector<8x96xf32>, vector<8x96xf32>, vector<8x96xf32>, vector<8x96xf32>, vector<8x96xf32>, vector<8x96xf32> -> vector<64x96xf32>
    %330 = arith.truncf %329 : vector<64x96xf32> to vector<64x96xbf16>
    %c1 = arith.constant 1 : index
    %c0_53 = arith.constant 0 : index
    %c0_54 = arith.constant 0 : index
    %331 = vector.load %arg1[%c1, %c0_53, %c0_54] : memref<3x96x128xbf16, #tpu.memory_space<vmem>>, vector<1x96x128xbf16>
    %332 = vector.shape_cast %331 : vector<1x96x128xbf16> to vector<96x128xbf16>
    %cst_55 = arith.constant dense<0.000000e+00> : vector<64x128xf32>
    %333 = tpu.matmul %330, %332, %cst_55 {dimension_numbers = #tpu.dot_dimension_numbers<[1], [0], [0], [1], [0, 0, 1, 1], [], []>} : vector<64x96xbf16>, vector<96x128xbf16>, vector<64x128xf32> -> vector<64x128xf32>
    %c1_56 = arith.constant 1 : index
    %c0_57 = arith.constant 0 : index
    %c0_58 = arith.constant 0 : index
    %334 = vector.load %arg2[%c1_56, %c0_57, %c0_58] : memref<3x48x128xbf16, #tpu.memory_space<vmem>>, vector<1x48x128xbf16>
    %335 = vector.shape_cast %334 : vector<1x48x128xbf16> to vector<48x128xbf16>
    %c1_59 = arith.constant 1 : index
    %c0_60 = arith.constant 0 : index
    %c0_61 = arith.constant 0 : index
    %336 = vector.load %arg3[%c1_59, %c0_60, %c0_61] : memref<3x8x128xf32, #tpu.memory_space<vmem>>, vector<1x8x128xf32>
    %337 = vector.shape_cast %336 : vector<1x8x128xf32> to vector<8x128xf32>
    %cst_62 = arith.constant 0.000000e+00 : f32
    %338 = vector.broadcast %cst_62 : f32 to vector<8x24xf32>
    %cst_63 = arith.constant 0.000000e+00 : f32
    %339 = vector.broadcast %cst_63 : f32 to vector<8x24xf32>
    %340 = arith.mulf %338, %4 : vector<8x24xf32>
    %341 = arith.mulf %338, %6 : vector<8x24xf32>
    %342 = tpu.concatenate %340, %341 in 1 : vector<8x24xf32>, vector<8x24xf32> -> vector<8x48xf32>
    %343 = vector.extract_strided_slice %333 {offsets = [0, 0], sizes = [8, 128], strides = [1, 1]} : vector<64x128xf32> to vector<8x128xf32>
    %344 = arith.addf %343, %337 : vector<8x128xf32>
    %345 = arith.truncf %342 : vector<8x48xf32> to vector<8x48xbf16>
    %cst_64 = arith.constant dense<0.000000e+00> : vector<8x128xf32>
    %346 = tpu.matmul %345, %335, %cst_64 {dimension_numbers = #tpu.dot_dimension_numbers<[1], [0], [0], [1], [0, 0, 1, 1], [], []>} : vector<8x48xbf16>, vector<48x128xbf16>, vector<8x128xf32> -> vector<8x128xf32>
    %347 = arith.addf %344, %346 : vector<8x128xf32>
    %348 = vector.extract_strided_slice %347 {offsets = [0, 0], sizes = [8, 24], strides = [1, 1]} : vector<8x128xf32> to vector<8x24xf32>
    %349 = arith.negf %348 : vector<8x24xf32>
    %350 = math.exp %349 : vector<8x24xf32>
    %cst_65 = arith.constant 1.000000e+00 : f32
    %351 = vector.broadcast %cst_65 : f32 to vector<8x24xf32>
    %352 = arith.addf %351, %350 : vector<8x24xf32>
    %353 = arith.divf %351, %352 : vector<8x24xf32>
    %354 = vector.extract_strided_slice %347 {offsets = [0, 32], sizes = [8, 24], strides = [1, 1]} : vector<8x128xf32> to vector<8x24xf32>
    %355 = arith.negf %354 : vector<8x24xf32>
    %356 = math.exp %355 : vector<8x24xf32>
    %cst_66 = arith.constant 1.000000e+00 : f32
    %357 = vector.broadcast %cst_66 : f32 to vector<8x24xf32>
    %358 = arith.addf %357, %356 : vector<8x24xf32>
    %359 = arith.divf %357, %358 : vector<8x24xf32>
    %360 = vector.extract_strided_slice %347 {offsets = [0, 64], sizes = [8, 24], strides = [1, 1]} : vector<8x128xf32> to vector<8x24xf32>
    %361 = math.tanh %360 : vector<8x24xf32>
    %362 = vector.extract_strided_slice %347 {offsets = [0, 96], sizes = [8, 24], strides = [1, 1]} : vector<8x128xf32> to vector<8x24xf32>
    %363 = arith.negf %362 : vector<8x24xf32>
    %364 = math.exp %363 : vector<8x24xf32>
    %cst_67 = arith.constant 1.000000e+00 : f32
    %365 = vector.broadcast %cst_67 : f32 to vector<8x24xf32>
    %366 = arith.addf %365, %364 : vector<8x24xf32>
    %367 = arith.divf %365, %366 : vector<8x24xf32>
    %368 = arith.mulf %359, %339 : vector<8x24xf32>
    %369 = arith.mulf %353, %361 : vector<8x24xf32>
    %370 = arith.addf %368, %369 : vector<8x24xf32>
    %371 = math.tanh %370 : vector<8x24xf32>
    %372 = arith.mulf %367, %371 : vector<8x24xf32>
    %373 = arith.mulf %372, %4 : vector<8x24xf32>
    %374 = arith.mulf %372, %6 : vector<8x24xf32>
    %375 = tpu.concatenate %373, %374 in 1 : vector<8x24xf32>, vector<8x24xf32> -> vector<8x48xf32>
    %376 = vector.extract_strided_slice %333 {offsets = [8, 0], sizes = [8, 128], strides = [1, 1]} : vector<64x128xf32> to vector<8x128xf32>
    %377 = arith.addf %376, %337 : vector<8x128xf32>
    %378 = arith.truncf %375 : vector<8x48xf32> to vector<8x48xbf16>
    %cst_68 = arith.constant dense<0.000000e+00> : vector<8x128xf32>
    %379 = tpu.matmul %378, %335, %cst_68 {dimension_numbers = #tpu.dot_dimension_numbers<[1], [0], [0], [1], [0, 0, 1, 1], [], []>} : vector<8x48xbf16>, vector<48x128xbf16>, vector<8x128xf32> -> vector<8x128xf32>
    %380 = arith.addf %377, %379 : vector<8x128xf32>
    %381 = vector.extract_strided_slice %380 {offsets = [0, 0], sizes = [8, 24], strides = [1, 1]} : vector<8x128xf32> to vector<8x24xf32>
    %382 = arith.negf %381 : vector<8x24xf32>
    %383 = math.exp %382 : vector<8x24xf32>
    %cst_69 = arith.constant 1.000000e+00 : f32
    %384 = vector.broadcast %cst_69 : f32 to vector<8x24xf32>
    %385 = arith.addf %384, %383 : vector<8x24xf32>
    %386 = arith.divf %384, %385 : vector<8x24xf32>
    %387 = vector.extract_strided_slice %380 {offsets = [0, 32], sizes = [8, 24], strides = [1, 1]} : vector<8x128xf32> to vector<8x24xf32>
    %388 = arith.negf %387 : vector<8x24xf32>
    %389 = math.exp %388 : vector<8x24xf32>
    %cst_70 = arith.constant 1.000000e+00 : f32
    %390 = vector.broadcast %cst_70 : f32 to vector<8x24xf32>
    %391 = arith.addf %390, %389 : vector<8x24xf32>
    %392 = arith.divf %390, %391 : vector<8x24xf32>
    %393 = vector.extract_strided_slice %380 {offsets = [0, 64], sizes = [8, 24], strides = [1, 1]} : vector<8x128xf32> to vector<8x24xf32>
    %394 = math.tanh %393 : vector<8x24xf32>
    %395 = vector.extract_strided_slice %380 {offsets = [0, 96], sizes = [8, 24], strides = [1, 1]} : vector<8x128xf32> to vector<8x24xf32>
    %396 = arith.negf %395 : vector<8x24xf32>
    %397 = math.exp %396 : vector<8x24xf32>
    %cst_71 = arith.constant 1.000000e+00 : f32
    %398 = vector.broadcast %cst_71 : f32 to vector<8x24xf32>
    %399 = arith.addf %398, %397 : vector<8x24xf32>
    %400 = arith.divf %398, %399 : vector<8x24xf32>
    %401 = arith.mulf %392, %370 : vector<8x24xf32>
    %402 = arith.mulf %386, %394 : vector<8x24xf32>
    %403 = arith.addf %401, %402 : vector<8x24xf32>
    %404 = math.tanh %403 : vector<8x24xf32>
    %405 = arith.mulf %400, %404 : vector<8x24xf32>
    %406 = arith.mulf %405, %4 : vector<8x24xf32>
    %407 = arith.mulf %405, %6 : vector<8x24xf32>
    %408 = tpu.concatenate %406, %407 in 1 : vector<8x24xf32>, vector<8x24xf32> -> vector<8x48xf32>
    %409 = vector.extract_strided_slice %333 {offsets = [16, 0], sizes = [8, 128], strides = [1, 1]} : vector<64x128xf32> to vector<8x128xf32>
    %410 = arith.addf %409, %337 : vector<8x128xf32>
    %411 = arith.truncf %408 : vector<8x48xf32> to vector<8x48xbf16>
    %cst_72 = arith.constant dense<0.000000e+00> : vector<8x128xf32>
    %412 = tpu.matmul %411, %335, %cst_72 {dimension_numbers = #tpu.dot_dimension_numbers<[1], [0], [0], [1], [0, 0, 1, 1], [], []>} : vector<8x48xbf16>, vector<48x128xbf16>, vector<8x128xf32> -> vector<8x128xf32>
    %413 = arith.addf %410, %412 : vector<8x128xf32>
    %414 = vector.extract_strided_slice %413 {offsets = [0, 0], sizes = [8, 24], strides = [1, 1]} : vector<8x128xf32> to vector<8x24xf32>
    %415 = arith.negf %414 : vector<8x24xf32>
    %416 = math.exp %415 : vector<8x24xf32>
    %cst_73 = arith.constant 1.000000e+00 : f32
    %417 = vector.broadcast %cst_73 : f32 to vector<8x24xf32>
    %418 = arith.addf %417, %416 : vector<8x24xf32>
    %419 = arith.divf %417, %418 : vector<8x24xf32>
    %420 = vector.extract_strided_slice %413 {offsets = [0, 32], sizes = [8, 24], strides = [1, 1]} : vector<8x128xf32> to vector<8x24xf32>
    %421 = arith.negf %420 : vector<8x24xf32>
    %422 = math.exp %421 : vector<8x24xf32>
    %cst_74 = arith.constant 1.000000e+00 : f32
    %423 = vector.broadcast %cst_74 : f32 to vector<8x24xf32>
    %424 = arith.addf %423, %422 : vector<8x24xf32>
    %425 = arith.divf %423, %424 : vector<8x24xf32>
    %426 = vector.extract_strided_slice %413 {offsets = [0, 64], sizes = [8, 24], strides = [1, 1]} : vector<8x128xf32> to vector<8x24xf32>
    %427 = math.tanh %426 : vector<8x24xf32>
    %428 = vector.extract_strided_slice %413 {offsets = [0, 96], sizes = [8, 24], strides = [1, 1]} : vector<8x128xf32> to vector<8x24xf32>
    %429 = arith.negf %428 : vector<8x24xf32>
    %430 = math.exp %429 : vector<8x24xf32>
    %cst_75 = arith.constant 1.000000e+00 : f32
    %431 = vector.broadcast %cst_75 : f32 to vector<8x24xf32>
    %432 = arith.addf %431, %430 : vector<8x24xf32>
    %433 = arith.divf %431, %432 : vector<8x24xf32>
    %434 = arith.mulf %425, %403 : vector<8x24xf32>
    %435 = arith.mulf %419, %427 : vector<8x24xf32>
    %436 = arith.addf %434, %435 : vector<8x24xf32>
    %437 = math.tanh %436 : vector<8x24xf32>
    %438 = arith.mulf %433, %437 : vector<8x24xf32>
    %439 = arith.mulf %438, %4 : vector<8x24xf32>
    %440 = arith.mulf %438, %6 : vector<8x24xf32>
    %441 = tpu.concatenate %439, %440 in 1 : vector<8x24xf32>, vector<8x24xf32> -> vector<8x48xf32>
    %442 = vector.extract_strided_slice %333 {offsets = [24, 0], sizes = [8, 128], strides = [1, 1]} : vector<64x128xf32> to vector<8x128xf32>
    %443 = arith.addf %442, %337 : vector<8x128xf32>
    %444 = arith.truncf %441 : vector<8x48xf32> to vector<8x48xbf16>
    %cst_76 = arith.constant dense<0.000000e+00> : vector<8x128xf32>
    %445 = tpu.matmul %444, %335, %cst_76 {dimension_numbers = #tpu.dot_dimension_numbers<[1], [0], [0], [1], [0, 0, 1, 1], [], []>} : vector<8x48xbf16>, vector<48x128xbf16>, vector<8x128xf32> -> vector<8x128xf32>
    %446 = arith.addf %443, %445 : vector<8x128xf32>
    %447 = vector.extract_strided_slice %446 {offsets = [0, 0], sizes = [8, 24], strides = [1, 1]} : vector<8x128xf32> to vector<8x24xf32>
    %448 = arith.negf %447 : vector<8x24xf32>
    %449 = math.exp %448 : vector<8x24xf32>
    %cst_77 = arith.constant 1.000000e+00 : f32
    %450 = vector.broadcast %cst_77 : f32 to vector<8x24xf32>
    %451 = arith.addf %450, %449 : vector<8x24xf32>
    %452 = arith.divf %450, %451 : vector<8x24xf32>
    %453 = vector.extract_strided_slice %446 {offsets = [0, 32], sizes = [8, 24], strides = [1, 1]} : vector<8x128xf32> to vector<8x24xf32>
    %454 = arith.negf %453 : vector<8x24xf32>
    %455 = math.exp %454 : vector<8x24xf32>
    %cst_78 = arith.constant 1.000000e+00 : f32
    %456 = vector.broadcast %cst_78 : f32 to vector<8x24xf32>
    %457 = arith.addf %456, %455 : vector<8x24xf32>
    %458 = arith.divf %456, %457 : vector<8x24xf32>
    %459 = vector.extract_strided_slice %446 {offsets = [0, 64], sizes = [8, 24], strides = [1, 1]} : vector<8x128xf32> to vector<8x24xf32>
    %460 = math.tanh %459 : vector<8x24xf32>
    %461 = vector.extract_strided_slice %446 {offsets = [0, 96], sizes = [8, 24], strides = [1, 1]} : vector<8x128xf32> to vector<8x24xf32>
    %462 = arith.negf %461 : vector<8x24xf32>
    %463 = math.exp %462 : vector<8x24xf32>
    %cst_79 = arith.constant 1.000000e+00 : f32
    %464 = vector.broadcast %cst_79 : f32 to vector<8x24xf32>
    %465 = arith.addf %464, %463 : vector<8x24xf32>
    %466 = arith.divf %464, %465 : vector<8x24xf32>
    %467 = arith.mulf %458, %436 : vector<8x24xf32>
    %468 = arith.mulf %452, %460 : vector<8x24xf32>
    %469 = arith.addf %467, %468 : vector<8x24xf32>
    %470 = math.tanh %469 : vector<8x24xf32>
    %471 = arith.mulf %466, %470 : vector<8x24xf32>
    %472 = arith.mulf %471, %4 : vector<8x24xf32>
    %473 = arith.mulf %471, %6 : vector<8x24xf32>
    %474 = tpu.concatenate %472, %473 in 1 : vector<8x24xf32>, vector<8x24xf32> -> vector<8x48xf32>
    %475 = vector.extract_strided_slice %333 {offsets = [32, 0], sizes = [8, 128], strides = [1, 1]} : vector<64x128xf32> to vector<8x128xf32>
    %476 = arith.addf %475, %337 : vector<8x128xf32>
    %477 = arith.truncf %474 : vector<8x48xf32> to vector<8x48xbf16>
    %cst_80 = arith.constant dense<0.000000e+00> : vector<8x128xf32>
    %478 = tpu.matmul %477, %335, %cst_80 {dimension_numbers = #tpu.dot_dimension_numbers<[1], [0], [0], [1], [0, 0, 1, 1], [], []>} : vector<8x48xbf16>, vector<48x128xbf16>, vector<8x128xf32> -> vector<8x128xf32>
    %479 = arith.addf %476, %478 : vector<8x128xf32>
    %480 = vector.extract_strided_slice %479 {offsets = [0, 0], sizes = [8, 24], strides = [1, 1]} : vector<8x128xf32> to vector<8x24xf32>
    %481 = arith.negf %480 : vector<8x24xf32>
    %482 = math.exp %481 : vector<8x24xf32>
    %cst_81 = arith.constant 1.000000e+00 : f32
    %483 = vector.broadcast %cst_81 : f32 to vector<8x24xf32>
    %484 = arith.addf %483, %482 : vector<8x24xf32>
    %485 = arith.divf %483, %484 : vector<8x24xf32>
    %486 = vector.extract_strided_slice %479 {offsets = [0, 32], sizes = [8, 24], strides = [1, 1]} : vector<8x128xf32> to vector<8x24xf32>
    %487 = arith.negf %486 : vector<8x24xf32>
    %488 = math.exp %487 : vector<8x24xf32>
    %cst_82 = arith.constant 1.000000e+00 : f32
    %489 = vector.broadcast %cst_82 : f32 to vector<8x24xf32>
    %490 = arith.addf %489, %488 : vector<8x24xf32>
    %491 = arith.divf %489, %490 : vector<8x24xf32>
    %492 = vector.extract_strided_slice %479 {offsets = [0, 64], sizes = [8, 24], strides = [1, 1]} : vector<8x128xf32> to vector<8x24xf32>
    %493 = math.tanh %492 : vector<8x24xf32>
    %494 = vector.extract_strided_slice %479 {offsets = [0, 96], sizes = [8, 24], strides = [1, 1]} : vector<8x128xf32> to vector<8x24xf32>
    %495 = arith.negf %494 : vector<8x24xf32>
    %496 = math.exp %495 : vector<8x24xf32>
    %cst_83 = arith.constant 1.000000e+00 : f32
    %497 = vector.broadcast %cst_83 : f32 to vector<8x24xf32>
    %498 = arith.addf %497, %496 : vector<8x24xf32>
    %499 = arith.divf %497, %498 : vector<8x24xf32>
    %500 = arith.mulf %491, %469 : vector<8x24xf32>
    %501 = arith.mulf %485, %493 : vector<8x24xf32>
    %502 = arith.addf %500, %501 : vector<8x24xf32>
    %503 = math.tanh %502 : vector<8x24xf32>
    %504 = arith.mulf %499, %503 : vector<8x24xf32>
    %505 = arith.mulf %504, %4 : vector<8x24xf32>
    %506 = arith.mulf %504, %6 : vector<8x24xf32>
    %507 = tpu.concatenate %505, %506 in 1 : vector<8x24xf32>, vector<8x24xf32> -> vector<8x48xf32>
    %508 = vector.extract_strided_slice %333 {offsets = [40, 0], sizes = [8, 128], strides = [1, 1]} : vector<64x128xf32> to vector<8x128xf32>
    %509 = arith.addf %508, %337 : vector<8x128xf32>
    %510 = arith.truncf %507 : vector<8x48xf32> to vector<8x48xbf16>
    %cst_84 = arith.constant dense<0.000000e+00> : vector<8x128xf32>
    %511 = tpu.matmul %510, %335, %cst_84 {dimension_numbers = #tpu.dot_dimension_numbers<[1], [0], [0], [1], [0, 0, 1, 1], [], []>} : vector<8x48xbf16>, vector<48x128xbf16>, vector<8x128xf32> -> vector<8x128xf32>
    %512 = arith.addf %509, %511 : vector<8x128xf32>
    %513 = vector.extract_strided_slice %512 {offsets = [0, 0], sizes = [8, 24], strides = [1, 1]} : vector<8x128xf32> to vector<8x24xf32>
    %514 = arith.negf %513 : vector<8x24xf32>
    %515 = math.exp %514 : vector<8x24xf32>
    %cst_85 = arith.constant 1.000000e+00 : f32
    %516 = vector.broadcast %cst_85 : f32 to vector<8x24xf32>
    %517 = arith.addf %516, %515 : vector<8x24xf32>
    %518 = arith.divf %516, %517 : vector<8x24xf32>
    %519 = vector.extract_strided_slice %512 {offsets = [0, 32], sizes = [8, 24], strides = [1, 1]} : vector<8x128xf32> to vector<8x24xf32>
    %520 = arith.negf %519 : vector<8x24xf32>
    %521 = math.exp %520 : vector<8x24xf32>
    %cst_86 = arith.constant 1.000000e+00 : f32
    %522 = vector.broadcast %cst_86 : f32 to vector<8x24xf32>
    %523 = arith.addf %522, %521 : vector<8x24xf32>
    %524 = arith.divf %522, %523 : vector<8x24xf32>
    %525 = vector.extract_strided_slice %512 {offsets = [0, 64], sizes = [8, 24], strides = [1, 1]} : vector<8x128xf32> to vector<8x24xf32>
    %526 = math.tanh %525 : vector<8x24xf32>
    %527 = vector.extract_strided_slice %512 {offsets = [0, 96], sizes = [8, 24], strides = [1, 1]} : vector<8x128xf32> to vector<8x24xf32>
    %528 = arith.negf %527 : vector<8x24xf32>
    %529 = math.exp %528 : vector<8x24xf32>
    %cst_87 = arith.constant 1.000000e+00 : f32
    %530 = vector.broadcast %cst_87 : f32 to vector<8x24xf32>
    %531 = arith.addf %530, %529 : vector<8x24xf32>
    %532 = arith.divf %530, %531 : vector<8x24xf32>
    %533 = arith.mulf %524, %502 : vector<8x24xf32>
    %534 = arith.mulf %518, %526 : vector<8x24xf32>
    %535 = arith.addf %533, %534 : vector<8x24xf32>
    %536 = math.tanh %535 : vector<8x24xf32>
    %537 = arith.mulf %532, %536 : vector<8x24xf32>
    %538 = arith.mulf %537, %4 : vector<8x24xf32>
    %539 = arith.mulf %537, %6 : vector<8x24xf32>
    %540 = tpu.concatenate %538, %539 in 1 : vector<8x24xf32>, vector<8x24xf32> -> vector<8x48xf32>
    %541 = vector.extract_strided_slice %333 {offsets = [48, 0], sizes = [8, 128], strides = [1, 1]} : vector<64x128xf32> to vector<8x128xf32>
    %542 = arith.addf %541, %337 : vector<8x128xf32>
    %543 = arith.truncf %540 : vector<8x48xf32> to vector<8x48xbf16>
    %cst_88 = arith.constant dense<0.000000e+00> : vector<8x128xf32>
    %544 = tpu.matmul %543, %335, %cst_88 {dimension_numbers = #tpu.dot_dimension_numbers<[1], [0], [0], [1], [0, 0, 1, 1], [], []>} : vector<8x48xbf16>, vector<48x128xbf16>, vector<8x128xf32> -> vector<8x128xf32>
    %545 = arith.addf %542, %544 : vector<8x128xf32>
    %546 = vector.extract_strided_slice %545 {offsets = [0, 0], sizes = [8, 24], strides = [1, 1]} : vector<8x128xf32> to vector<8x24xf32>
    %547 = arith.negf %546 : vector<8x24xf32>
    %548 = math.exp %547 : vector<8x24xf32>
    %cst_89 = arith.constant 1.000000e+00 : f32
    %549 = vector.broadcast %cst_89 : f32 to vector<8x24xf32>
    %550 = arith.addf %549, %548 : vector<8x24xf32>
    %551 = arith.divf %549, %550 : vector<8x24xf32>
    %552 = vector.extract_strided_slice %545 {offsets = [0, 32], sizes = [8, 24], strides = [1, 1]} : vector<8x128xf32> to vector<8x24xf32>
    %553 = arith.negf %552 : vector<8x24xf32>
    %554 = math.exp %553 : vector<8x24xf32>
    %cst_90 = arith.constant 1.000000e+00 : f32
    %555 = vector.broadcast %cst_90 : f32 to vector<8x24xf32>
    %556 = arith.addf %555, %554 : vector<8x24xf32>
    %557 = arith.divf %555, %556 : vector<8x24xf32>
    %558 = vector.extract_strided_slice %545 {offsets = [0, 64], sizes = [8, 24], strides = [1, 1]} : vector<8x128xf32> to vector<8x24xf32>
    %559 = math.tanh %558 : vector<8x24xf32>
    %560 = vector.extract_strided_slice %545 {offsets = [0, 96], sizes = [8, 24], strides = [1, 1]} : vector<8x128xf32> to vector<8x24xf32>
    %561 = arith.negf %560 : vector<8x24xf32>
    %562 = math.exp %561 : vector<8x24xf32>
    %cst_91 = arith.constant 1.000000e+00 : f32
    %563 = vector.broadcast %cst_91 : f32 to vector<8x24xf32>
    %564 = arith.addf %563, %562 : vector<8x24xf32>
    %565 = arith.divf %563, %564 : vector<8x24xf32>
    %566 = arith.mulf %557, %535 : vector<8x24xf32>
    %567 = arith.mulf %551, %559 : vector<8x24xf32>
    %568 = arith.addf %566, %567 : vector<8x24xf32>
    %569 = math.tanh %568 : vector<8x24xf32>
    %570 = arith.mulf %565, %569 : vector<8x24xf32>
    %571 = arith.mulf %570, %4 : vector<8x24xf32>
    %572 = arith.mulf %570, %6 : vector<8x24xf32>
    %573 = tpu.concatenate %571, %572 in 1 : vector<8x24xf32>, vector<8x24xf32> -> vector<8x48xf32>
    %574 = vector.extract_strided_slice %333 {offsets = [56, 0], sizes = [8, 128], strides = [1, 1]} : vector<64x128xf32> to vector<8x128xf32>
    %575 = arith.addf %574, %337 : vector<8x128xf32>
    %576 = arith.truncf %573 : vector<8x48xf32> to vector<8x48xbf16>
    %cst_92 = arith.constant dense<0.000000e+00> : vector<8x128xf32>
    %577 = tpu.matmul %576, %335, %cst_92 {dimension_numbers = #tpu.dot_dimension_numbers<[1], [0], [0], [1], [0, 0, 1, 1], [], []>} : vector<8x48xbf16>, vector<48x128xbf16>, vector<8x128xf32> -> vector<8x128xf32>
    %578 = arith.addf %575, %577 : vector<8x128xf32>
    %579 = vector.extract_strided_slice %578 {offsets = [0, 0], sizes = [8, 24], strides = [1, 1]} : vector<8x128xf32> to vector<8x24xf32>
    %580 = arith.negf %579 : vector<8x24xf32>
    %581 = math.exp %580 : vector<8x24xf32>
    %cst_93 = arith.constant 1.000000e+00 : f32
    %582 = vector.broadcast %cst_93 : f32 to vector<8x24xf32>
    %583 = arith.addf %582, %581 : vector<8x24xf32>
    %584 = arith.divf %582, %583 : vector<8x24xf32>
    %585 = vector.extract_strided_slice %578 {offsets = [0, 32], sizes = [8, 24], strides = [1, 1]} : vector<8x128xf32> to vector<8x24xf32>
    %586 = arith.negf %585 : vector<8x24xf32>
    %587 = math.exp %586 : vector<8x24xf32>
    %cst_94 = arith.constant 1.000000e+00 : f32
    %588 = vector.broadcast %cst_94 : f32 to vector<8x24xf32>
    %589 = arith.addf %588, %587 : vector<8x24xf32>
    %590 = arith.divf %588, %589 : vector<8x24xf32>
    %591 = vector.extract_strided_slice %578 {offsets = [0, 64], sizes = [8, 24], strides = [1, 1]} : vector<8x128xf32> to vector<8x24xf32>
    %592 = math.tanh %591 : vector<8x24xf32>
    %593 = vector.extract_strided_slice %578 {offsets = [0, 96], sizes = [8, 24], strides = [1, 1]} : vector<8x128xf32> to vector<8x24xf32>
    %594 = arith.negf %593 : vector<8x24xf32>
    %595 = math.exp %594 : vector<8x24xf32>
    %cst_95 = arith.constant 1.000000e+00 : f32
    %596 = vector.broadcast %cst_95 : f32 to vector<8x24xf32>
    %597 = arith.addf %596, %595 : vector<8x24xf32>
    %598 = arith.divf %596, %597 : vector<8x24xf32>
    %599 = arith.mulf %590, %568 : vector<8x24xf32>
    %600 = arith.mulf %584, %592 : vector<8x24xf32>
    %601 = arith.addf %599, %600 : vector<8x24xf32>
    %602 = math.tanh %601 : vector<8x24xf32>
    %603 = arith.mulf %598, %602 : vector<8x24xf32>
    %c4_i32_96 = arith.constant 4 : i32
    %604 = tpu.dynamic_rotate %603 by %c4_i32_96 dim 0 : vector<8x24xf32>, i32 -> vector<8x24xf32>
    %605 = arith.mulf %372, %4 : vector<8x24xf32>
    %606 = arith.mulf %604, %4 : vector<8x24xf32>
    %607 = arith.mulf %604, %6 : vector<8x24xf32>
    %608 = arith.mulf %372, %6 : vector<8x24xf32>
    %609 = tpu.concatenate %605, %606, %607, %608 in 1 : vector<8x24xf32>, vector<8x24xf32>, vector<8x24xf32>, vector<8x24xf32> -> vector<8x96xf32>
    %c4_i32_97 = arith.constant 4 : i32
    %610 = tpu.dynamic_rotate %570 by %c4_i32_97 dim 0 : vector<8x24xf32>, i32 -> vector<8x24xf32>
    %611 = arith.mulf %405, %4 : vector<8x24xf32>
    %612 = arith.mulf %610, %4 : vector<8x24xf32>
    %613 = arith.mulf %610, %6 : vector<8x24xf32>
    %614 = arith.mulf %405, %6 : vector<8x24xf32>
    %615 = tpu.concatenate %611, %612, %613, %614 in 1 : vector<8x24xf32>, vector<8x24xf32>, vector<8x24xf32>, vector<8x24xf32> -> vector<8x96xf32>
    %c4_i32_98 = arith.constant 4 : i32
    %616 = tpu.dynamic_rotate %537 by %c4_i32_98 dim 0 : vector<8x24xf32>, i32 -> vector<8x24xf32>
    %617 = arith.mulf %438, %4 : vector<8x24xf32>
    %618 = arith.mulf %616, %4 : vector<8x24xf32>
    %619 = arith.mulf %616, %6 : vector<8x24xf32>
    %620 = arith.mulf %438, %6 : vector<8x24xf32>
    %621 = tpu.concatenate %617, %618, %619, %620 in 1 : vector<8x24xf32>, vector<8x24xf32>, vector<8x24xf32>, vector<8x24xf32> -> vector<8x96xf32>
    %c4_i32_99 = arith.constant 4 : i32
    %622 = tpu.dynamic_rotate %504 by %c4_i32_99 dim 0 : vector<8x24xf32>, i32 -> vector<8x24xf32>
    %623 = arith.mulf %471, %4 : vector<8x24xf32>
    %624 = arith.mulf %622, %4 : vector<8x24xf32>
    %625 = arith.mulf %622, %6 : vector<8x24xf32>
    %626 = arith.mulf %471, %6 : vector<8x24xf32>
    %627 = tpu.concatenate %623, %624, %625, %626 in 1 : vector<8x24xf32>, vector<8x24xf32>, vector<8x24xf32>, vector<8x24xf32> -> vector<8x96xf32>
    %c4_i32_100 = arith.constant 4 : i32
    %628 = tpu.dynamic_rotate %471 by %c4_i32_100 dim 0 : vector<8x24xf32>, i32 -> vector<8x24xf32>
    %629 = arith.mulf %504, %4 : vector<8x24xf32>
    %630 = arith.mulf %628, %4 : vector<8x24xf32>
    %631 = arith.mulf %628, %6 : vector<8x24xf32>
    %632 = arith.mulf %504, %6 : vector<8x24xf32>
    %633 = tpu.concatenate %629, %630, %631, %632 in 1 : vector<8x24xf32>, vector<8x24xf32>, vector<8x24xf32>, vector<8x24xf32> -> vector<8x96xf32>
    %c4_i32_101 = arith.constant 4 : i32
    %634 = tpu.dynamic_rotate %438 by %c4_i32_101 dim 0 : vector<8x24xf32>, i32 -> vector<8x24xf32>
    %635 = arith.mulf %537, %4 : vector<8x24xf32>
    %636 = arith.mulf %634, %4 : vector<8x24xf32>
    %637 = arith.mulf %634, %6 : vector<8x24xf32>
    %638 = arith.mulf %537, %6 : vector<8x24xf32>
    %639 = tpu.concatenate %635, %636, %637, %638 in 1 : vector<8x24xf32>, vector<8x24xf32>, vector<8x24xf32>, vector<8x24xf32> -> vector<8x96xf32>
    %c4_i32_102 = arith.constant 4 : i32
    %640 = tpu.dynamic_rotate %405 by %c4_i32_102 dim 0 : vector<8x24xf32>, i32 -> vector<8x24xf32>
    %641 = arith.mulf %570, %4 : vector<8x24xf32>
    %642 = arith.mulf %640, %4 : vector<8x24xf32>
    %643 = arith.mulf %640, %6 : vector<8x24xf32>
    %644 = arith.mulf %570, %6 : vector<8x24xf32>
    %645 = tpu.concatenate %641, %642, %643, %644 in 1 : vector<8x24xf32>, vector<8x24xf32>, vector<8x24xf32>, vector<8x24xf32> -> vector<8x96xf32>
    %c4_i32_103 = arith.constant 4 : i32
    %646 = tpu.dynamic_rotate %372 by %c4_i32_103 dim 0 : vector<8x24xf32>, i32 -> vector<8x24xf32>
    %647 = arith.mulf %603, %4 : vector<8x24xf32>
    %648 = arith.mulf %646, %4 : vector<8x24xf32>
    %649 = arith.mulf %646, %6 : vector<8x24xf32>
    %650 = arith.mulf %603, %6 : vector<8x24xf32>
    %651 = tpu.concatenate %647, %648, %649, %650 in 1 : vector<8x24xf32>, vector<8x24xf32>, vector<8x24xf32>, vector<8x24xf32> -> vector<8x96xf32>
    %652 = tpu.concatenate %609, %615, %621, %627, %633, %639, %645, %651 in 0 : vector<8x96xf32>, vector<8x96xf32>, vector<8x96xf32>, vector<8x96xf32>, vector<8x96xf32>, vector<8x96xf32>, vector<8x96xf32>, vector<8x96xf32> -> vector<64x96xf32>
    %653 = arith.truncf %652 : vector<64x96xf32> to vector<64x96xbf16>
    %c2 = arith.constant 2 : index
    %c0_104 = arith.constant 0 : index
    %c0_105 = arith.constant 0 : index
    %654 = vector.load %arg1[%c2, %c0_104, %c0_105] : memref<3x96x128xbf16, #tpu.memory_space<vmem>>, vector<1x96x128xbf16>
    %655 = vector.shape_cast %654 : vector<1x96x128xbf16> to vector<96x128xbf16>
    %cst_106 = arith.constant dense<0.000000e+00> : vector<64x128xf32>
    %656 = tpu.matmul %653, %655, %cst_106 {dimension_numbers = #tpu.dot_dimension_numbers<[1], [0], [0], [1], [0, 0, 1, 1], [], []>} : vector<64x96xbf16>, vector<96x128xbf16>, vector<64x128xf32> -> vector<64x128xf32>
    %c2_107 = arith.constant 2 : index
    %c0_108 = arith.constant 0 : index
    %c0_109 = arith.constant 0 : index
    %657 = vector.load %arg2[%c2_107, %c0_108, %c0_109] : memref<3x48x128xbf16, #tpu.memory_space<vmem>>, vector<1x48x128xbf16>
    %658 = vector.shape_cast %657 : vector<1x48x128xbf16> to vector<48x128xbf16>
    %c2_110 = arith.constant 2 : index
    %c0_111 = arith.constant 0 : index
    %c0_112 = arith.constant 0 : index
    %659 = vector.load %arg3[%c2_110, %c0_111, %c0_112] : memref<3x8x128xf32, #tpu.memory_space<vmem>>, vector<1x8x128xf32>
    %660 = vector.shape_cast %659 : vector<1x8x128xf32> to vector<8x128xf32>
    %cst_113 = arith.constant 0.000000e+00 : f32
    %661 = vector.broadcast %cst_113 : f32 to vector<8x24xf32>
    %cst_114 = arith.constant 0.000000e+00 : f32
    %662 = vector.broadcast %cst_114 : f32 to vector<8x24xf32>
    %663 = arith.mulf %661, %4 : vector<8x24xf32>
    %664 = arith.mulf %661, %6 : vector<8x24xf32>
    %665 = tpu.concatenate %663, %664 in 1 : vector<8x24xf32>, vector<8x24xf32> -> vector<8x48xf32>
    %666 = vector.extract_strided_slice %656 {offsets = [0, 0], sizes = [8, 128], strides = [1, 1]} : vector<64x128xf32> to vector<8x128xf32>
    %667 = arith.addf %666, %660 : vector<8x128xf32>
    %668 = arith.truncf %665 : vector<8x48xf32> to vector<8x48xbf16>
    %cst_115 = arith.constant dense<0.000000e+00> : vector<8x128xf32>
    %669 = tpu.matmul %668, %658, %cst_115 {dimension_numbers = #tpu.dot_dimension_numbers<[1], [0], [0], [1], [0, 0, 1, 1], [], []>} : vector<8x48xbf16>, vector<48x128xbf16>, vector<8x128xf32> -> vector<8x128xf32>
    %670 = arith.addf %667, %669 : vector<8x128xf32>
    %671 = vector.extract_strided_slice %670 {offsets = [0, 0], sizes = [8, 24], strides = [1, 1]} : vector<8x128xf32> to vector<8x24xf32>
    %672 = arith.negf %671 : vector<8x24xf32>
    %673 = math.exp %672 : vector<8x24xf32>
    %cst_116 = arith.constant 1.000000e+00 : f32
    %674 = vector.broadcast %cst_116 : f32 to vector<8x24xf32>
    %675 = arith.addf %674, %673 : vector<8x24xf32>
    %676 = arith.divf %674, %675 : vector<8x24xf32>
    %677 = vector.extract_strided_slice %670 {offsets = [0, 32], sizes = [8, 24], strides = [1, 1]} : vector<8x128xf32> to vector<8x24xf32>
    %678 = arith.negf %677 : vector<8x24xf32>
    %679 = math.exp %678 : vector<8x24xf32>
    %cst_117 = arith.constant 1.000000e+00 : f32
    %680 = vector.broadcast %cst_117 : f32 to vector<8x24xf32>
    %681 = arith.addf %680, %679 : vector<8x24xf32>
    %682 = arith.divf %680, %681 : vector<8x24xf32>
    %683 = vector.extract_strided_slice %670 {offsets = [0, 64], sizes = [8, 24], strides = [1, 1]} : vector<8x128xf32> to vector<8x24xf32>
    %684 = math.tanh %683 : vector<8x24xf32>
    %685 = vector.extract_strided_slice %670 {offsets = [0, 96], sizes = [8, 24], strides = [1, 1]} : vector<8x128xf32> to vector<8x24xf32>
    %686 = arith.negf %685 : vector<8x24xf32>
    %687 = math.exp %686 : vector<8x24xf32>
    %cst_118 = arith.constant 1.000000e+00 : f32
    %688 = vector.broadcast %cst_118 : f32 to vector<8x24xf32>
    %689 = arith.addf %688, %687 : vector<8x24xf32>
    %690 = arith.divf %688, %689 : vector<8x24xf32>
    %691 = arith.mulf %682, %662 : vector<8x24xf32>
    %692 = arith.mulf %676, %684 : vector<8x24xf32>
    %693 = arith.addf %691, %692 : vector<8x24xf32>
    %694 = math.tanh %693 : vector<8x24xf32>
    %695 = arith.mulf %690, %694 : vector<8x24xf32>
    %696 = arith.mulf %695, %4 : vector<8x24xf32>
    %697 = arith.mulf %695, %6 : vector<8x24xf32>
    %698 = tpu.concatenate %696, %697 in 1 : vector<8x24xf32>, vector<8x24xf32> -> vector<8x48xf32>
    %699 = vector.extract_strided_slice %656 {offsets = [8, 0], sizes = [8, 128], strides = [1, 1]} : vector<64x128xf32> to vector<8x128xf32>
    %700 = arith.addf %699, %660 : vector<8x128xf32>
    %701 = arith.truncf %698 : vector<8x48xf32> to vector<8x48xbf16>
    %cst_119 = arith.constant dense<0.000000e+00> : vector<8x128xf32>
    %702 = tpu.matmul %701, %658, %cst_119 {dimension_numbers = #tpu.dot_dimension_numbers<[1], [0], [0], [1], [0, 0, 1, 1], [], []>} : vector<8x48xbf16>, vector<48x128xbf16>, vector<8x128xf32> -> vector<8x128xf32>
    %703 = arith.addf %700, %702 : vector<8x128xf32>
    %704 = vector.extract_strided_slice %703 {offsets = [0, 0], sizes = [8, 24], strides = [1, 1]} : vector<8x128xf32> to vector<8x24xf32>
    %705 = arith.negf %704 : vector<8x24xf32>
    %706 = math.exp %705 : vector<8x24xf32>
    %cst_120 = arith.constant 1.000000e+00 : f32
    %707 = vector.broadcast %cst_120 : f32 to vector<8x24xf32>
    %708 = arith.addf %707, %706 : vector<8x24xf32>
    %709 = arith.divf %707, %708 : vector<8x24xf32>
    %710 = vector.extract_strided_slice %703 {offsets = [0, 32], sizes = [8, 24], strides = [1, 1]} : vector<8x128xf32> to vector<8x24xf32>
    %711 = arith.negf %710 : vector<8x24xf32>
    %712 = math.exp %711 : vector<8x24xf32>
    %cst_121 = arith.constant 1.000000e+00 : f32
    %713 = vector.broadcast %cst_121 : f32 to vector<8x24xf32>
    %714 = arith.addf %713, %712 : vector<8x24xf32>
    %715 = arith.divf %713, %714 : vector<8x24xf32>
    %716 = vector.extract_strided_slice %703 {offsets = [0, 64], sizes = [8, 24], strides = [1, 1]} : vector<8x128xf32> to vector<8x24xf32>
    %717 = math.tanh %716 : vector<8x24xf32>
    %718 = vector.extract_strided_slice %703 {offsets = [0, 96], sizes = [8, 24], strides = [1, 1]} : vector<8x128xf32> to vector<8x24xf32>
    %719 = arith.negf %718 : vector<8x24xf32>
    %720 = math.exp %719 : vector<8x24xf32>
    %cst_122 = arith.constant 1.000000e+00 : f32
    %721 = vector.broadcast %cst_122 : f32 to vector<8x24xf32>
    %722 = arith.addf %721, %720 : vector<8x24xf32>
    %723 = arith.divf %721, %722 : vector<8x24xf32>
    %724 = arith.mulf %715, %693 : vector<8x24xf32>
    %725 = arith.mulf %709, %717 : vector<8x24xf32>
    %726 = arith.addf %724, %725 : vector<8x24xf32>
    %727 = math.tanh %726 : vector<8x24xf32>
    %728 = arith.mulf %723, %727 : vector<8x24xf32>
    %729 = arith.mulf %728, %4 : vector<8x24xf32>
    %730 = arith.mulf %728, %6 : vector<8x24xf32>
    %731 = tpu.concatenate %729, %730 in 1 : vector<8x24xf32>, vector<8x24xf32> -> vector<8x48xf32>
    %732 = vector.extract_strided_slice %656 {offsets = [16, 0], sizes = [8, 128], strides = [1, 1]} : vector<64x128xf32> to vector<8x128xf32>
    %733 = arith.addf %732, %660 : vector<8x128xf32>
    %734 = arith.truncf %731 : vector<8x48xf32> to vector<8x48xbf16>
    %cst_123 = arith.constant dense<0.000000e+00> : vector<8x128xf32>
    %735 = tpu.matmul %734, %658, %cst_123 {dimension_numbers = #tpu.dot_dimension_numbers<[1], [0], [0], [1], [0, 0, 1, 1], [], []>} : vector<8x48xbf16>, vector<48x128xbf16>, vector<8x128xf32> -> vector<8x128xf32>
    %736 = arith.addf %733, %735 : vector<8x128xf32>
    %737 = vector.extract_strided_slice %736 {offsets = [0, 0], sizes = [8, 24], strides = [1, 1]} : vector<8x128xf32> to vector<8x24xf32>
    %738 = arith.negf %737 : vector<8x24xf32>
    %739 = math.exp %738 : vector<8x24xf32>
    %cst_124 = arith.constant 1.000000e+00 : f32
    %740 = vector.broadcast %cst_124 : f32 to vector<8x24xf32>
    %741 = arith.addf %740, %739 : vector<8x24xf32>
    %742 = arith.divf %740, %741 : vector<8x24xf32>
    %743 = vector.extract_strided_slice %736 {offsets = [0, 32], sizes = [8, 24], strides = [1, 1]} : vector<8x128xf32> to vector<8x24xf32>
    %744 = arith.negf %743 : vector<8x24xf32>
    %745 = math.exp %744 : vector<8x24xf32>
    %cst_125 = arith.constant 1.000000e+00 : f32
    %746 = vector.broadcast %cst_125 : f32 to vector<8x24xf32>
    %747 = arith.addf %746, %745 : vector<8x24xf32>
    %748 = arith.divf %746, %747 : vector<8x24xf32>
    %749 = vector.extract_strided_slice %736 {offsets = [0, 64], sizes = [8, 24], strides = [1, 1]} : vector<8x128xf32> to vector<8x24xf32>
    %750 = math.tanh %749 : vector<8x24xf32>
    %751 = vector.extract_strided_slice %736 {offsets = [0, 96], sizes = [8, 24], strides = [1, 1]} : vector<8x128xf32> to vector<8x24xf32>
    %752 = arith.negf %751 : vector<8x24xf32>
    %753 = math.exp %752 : vector<8x24xf32>
    %cst_126 = arith.constant 1.000000e+00 : f32
    %754 = vector.broadcast %cst_126 : f32 to vector<8x24xf32>
    %755 = arith.addf %754, %753 : vector<8x24xf32>
    %756 = arith.divf %754, %755 : vector<8x24xf32>
    %757 = arith.mulf %748, %726 : vector<8x24xf32>
    %758 = arith.mulf %742, %750 : vector<8x24xf32>
    %759 = arith.addf %757, %758 : vector<8x24xf32>
    %760 = math.tanh %759 : vector<8x24xf32>
    %761 = arith.mulf %756, %760 : vector<8x24xf32>
    %762 = arith.mulf %761, %4 : vector<8x24xf32>
    %763 = arith.mulf %761, %6 : vector<8x24xf32>
    %764 = tpu.concatenate %762, %763 in 1 : vector<8x24xf32>, vector<8x24xf32> -> vector<8x48xf32>
    %765 = vector.extract_strided_slice %656 {offsets = [24, 0], sizes = [8, 128], strides = [1, 1]} : vector<64x128xf32> to vector<8x128xf32>
    %766 = arith.addf %765, %660 : vector<8x128xf32>
    %767 = arith.truncf %764 : vector<8x48xf32> to vector<8x48xbf16>
    %cst_127 = arith.constant dense<0.000000e+00> : vector<8x128xf32>
    %768 = tpu.matmul %767, %658, %cst_127 {dimension_numbers = #tpu.dot_dimension_numbers<[1], [0], [0], [1], [0, 0, 1, 1], [], []>} : vector<8x48xbf16>, vector<48x128xbf16>, vector<8x128xf32> -> vector<8x128xf32>
    %769 = arith.addf %766, %768 : vector<8x128xf32>
    %770 = vector.extract_strided_slice %769 {offsets = [0, 0], sizes = [8, 24], strides = [1, 1]} : vector<8x128xf32> to vector<8x24xf32>
    %771 = arith.negf %770 : vector<8x24xf32>
    %772 = math.exp %771 : vector<8x24xf32>
    %cst_128 = arith.constant 1.000000e+00 : f32
    %773 = vector.broadcast %cst_128 : f32 to vector<8x24xf32>
    %774 = arith.addf %773, %772 : vector<8x24xf32>
    %775 = arith.divf %773, %774 : vector<8x24xf32>
    %776 = vector.extract_strided_slice %769 {offsets = [0, 32], sizes = [8, 24], strides = [1, 1]} : vector<8x128xf32> to vector<8x24xf32>
    %777 = arith.negf %776 : vector<8x24xf32>
    %778 = math.exp %777 : vector<8x24xf32>
    %cst_129 = arith.constant 1.000000e+00 : f32
    %779 = vector.broadcast %cst_129 : f32 to vector<8x24xf32>
    %780 = arith.addf %779, %778 : vector<8x24xf32>
    %781 = arith.divf %779, %780 : vector<8x24xf32>
    %782 = vector.extract_strided_slice %769 {offsets = [0, 64], sizes = [8, 24], strides = [1, 1]} : vector<8x128xf32> to vector<8x24xf32>
    %783 = math.tanh %782 : vector<8x24xf32>
    %784 = vector.extract_strided_slice %769 {offsets = [0, 96], sizes = [8, 24], strides = [1, 1]} : vector<8x128xf32> to vector<8x24xf32>
    %785 = arith.negf %784 : vector<8x24xf32>
    %786 = math.exp %785 : vector<8x24xf32>
    %cst_130 = arith.constant 1.000000e+00 : f32
    %787 = vector.broadcast %cst_130 : f32 to vector<8x24xf32>
    %788 = arith.addf %787, %786 : vector<8x24xf32>
    %789 = arith.divf %787, %788 : vector<8x24xf32>
    %790 = arith.mulf %781, %759 : vector<8x24xf32>
    %791 = arith.mulf %775, %783 : vector<8x24xf32>
    %792 = arith.addf %790, %791 : vector<8x24xf32>
    %793 = math.tanh %792 : vector<8x24xf32>
    %794 = arith.mulf %789, %793 : vector<8x24xf32>
    %795 = arith.mulf %794, %4 : vector<8x24xf32>
    %796 = arith.mulf %794, %6 : vector<8x24xf32>
    %797 = tpu.concatenate %795, %796 in 1 : vector<8x24xf32>, vector<8x24xf32> -> vector<8x48xf32>
    %798 = vector.extract_strided_slice %656 {offsets = [32, 0], sizes = [8, 128], strides = [1, 1]} : vector<64x128xf32> to vector<8x128xf32>
    %799 = arith.addf %798, %660 : vector<8x128xf32>
    %800 = arith.truncf %797 : vector<8x48xf32> to vector<8x48xbf16>
    %cst_131 = arith.constant dense<0.000000e+00> : vector<8x128xf32>
    %801 = tpu.matmul %800, %658, %cst_131 {dimension_numbers = #tpu.dot_dimension_numbers<[1], [0], [0], [1], [0, 0, 1, 1], [], []>} : vector<8x48xbf16>, vector<48x128xbf16>, vector<8x128xf32> -> vector<8x128xf32>
    %802 = arith.addf %799, %801 : vector<8x128xf32>
    %803 = vector.extract_strided_slice %802 {offsets = [0, 0], sizes = [8, 24], strides = [1, 1]} : vector<8x128xf32> to vector<8x24xf32>
    %804 = arith.negf %803 : vector<8x24xf32>
    %805 = math.exp %804 : vector<8x24xf32>
    %cst_132 = arith.constant 1.000000e+00 : f32
    %806 = vector.broadcast %cst_132 : f32 to vector<8x24xf32>
    %807 = arith.addf %806, %805 : vector<8x24xf32>
    %808 = arith.divf %806, %807 : vector<8x24xf32>
    %809 = vector.extract_strided_slice %802 {offsets = [0, 32], sizes = [8, 24], strides = [1, 1]} : vector<8x128xf32> to vector<8x24xf32>
    %810 = arith.negf %809 : vector<8x24xf32>
    %811 = math.exp %810 : vector<8x24xf32>
    %cst_133 = arith.constant 1.000000e+00 : f32
    %812 = vector.broadcast %cst_133 : f32 to vector<8x24xf32>
    %813 = arith.addf %812, %811 : vector<8x24xf32>
    %814 = arith.divf %812, %813 : vector<8x24xf32>
    %815 = vector.extract_strided_slice %802 {offsets = [0, 64], sizes = [8, 24], strides = [1, 1]} : vector<8x128xf32> to vector<8x24xf32>
    %816 = math.tanh %815 : vector<8x24xf32>
    %817 = vector.extract_strided_slice %802 {offsets = [0, 96], sizes = [8, 24], strides = [1, 1]} : vector<8x128xf32> to vector<8x24xf32>
    %818 = arith.negf %817 : vector<8x24xf32>
    %819 = math.exp %818 : vector<8x24xf32>
    %cst_134 = arith.constant 1.000000e+00 : f32
    %820 = vector.broadcast %cst_134 : f32 to vector<8x24xf32>
    %821 = arith.addf %820, %819 : vector<8x24xf32>
    %822 = arith.divf %820, %821 : vector<8x24xf32>
    %823 = arith.mulf %814, %792 : vector<8x24xf32>
    %824 = arith.mulf %808, %816 : vector<8x24xf32>
    %825 = arith.addf %823, %824 : vector<8x24xf32>
    %826 = math.tanh %825 : vector<8x24xf32>
    %827 = arith.mulf %822, %826 : vector<8x24xf32>
    %828 = arith.mulf %827, %4 : vector<8x24xf32>
    %829 = arith.mulf %827, %6 : vector<8x24xf32>
    %830 = tpu.concatenate %828, %829 in 1 : vector<8x24xf32>, vector<8x24xf32> -> vector<8x48xf32>
    %831 = vector.extract_strided_slice %656 {offsets = [40, 0], sizes = [8, 128], strides = [1, 1]} : vector<64x128xf32> to vector<8x128xf32>
    %832 = arith.addf %831, %660 : vector<8x128xf32>
    %833 = arith.truncf %830 : vector<8x48xf32> to vector<8x48xbf16>
    %cst_135 = arith.constant dense<0.000000e+00> : vector<8x128xf32>
    %834 = tpu.matmul %833, %658, %cst_135 {dimension_numbers = #tpu.dot_dimension_numbers<[1], [0], [0], [1], [0, 0, 1, 1], [], []>} : vector<8x48xbf16>, vector<48x128xbf16>, vector<8x128xf32> -> vector<8x128xf32>
    %835 = arith.addf %832, %834 : vector<8x128xf32>
    %836 = vector.extract_strided_slice %835 {offsets = [0, 0], sizes = [8, 24], strides = [1, 1]} : vector<8x128xf32> to vector<8x24xf32>
    %837 = arith.negf %836 : vector<8x24xf32>
    %838 = math.exp %837 : vector<8x24xf32>
    %cst_136 = arith.constant 1.000000e+00 : f32
    %839 = vector.broadcast %cst_136 : f32 to vector<8x24xf32>
    %840 = arith.addf %839, %838 : vector<8x24xf32>
    %841 = arith.divf %839, %840 : vector<8x24xf32>
    %842 = vector.extract_strided_slice %835 {offsets = [0, 32], sizes = [8, 24], strides = [1, 1]} : vector<8x128xf32> to vector<8x24xf32>
    %843 = arith.negf %842 : vector<8x24xf32>
    %844 = math.exp %843 : vector<8x24xf32>
    %cst_137 = arith.constant 1.000000e+00 : f32
    %845 = vector.broadcast %cst_137 : f32 to vector<8x24xf32>
    %846 = arith.addf %845, %844 : vector<8x24xf32>
    %847 = arith.divf %845, %846 : vector<8x24xf32>
    %848 = vector.extract_strided_slice %835 {offsets = [0, 64], sizes = [8, 24], strides = [1, 1]} : vector<8x128xf32> to vector<8x24xf32>
    %849 = math.tanh %848 : vector<8x24xf32>
    %850 = vector.extract_strided_slice %835 {offsets = [0, 96], sizes = [8, 24], strides = [1, 1]} : vector<8x128xf32> to vector<8x24xf32>
    %851 = arith.negf %850 : vector<8x24xf32>
    %852 = math.exp %851 : vector<8x24xf32>
    %cst_138 = arith.constant 1.000000e+00 : f32
    %853 = vector.broadcast %cst_138 : f32 to vector<8x24xf32>
    %854 = arith.addf %853, %852 : vector<8x24xf32>
    %855 = arith.divf %853, %854 : vector<8x24xf32>
    %856 = arith.mulf %847, %825 : vector<8x24xf32>
    %857 = arith.mulf %841, %849 : vector<8x24xf32>
    %858 = arith.addf %856, %857 : vector<8x24xf32>
    %859 = math.tanh %858 : vector<8x24xf32>
    %860 = arith.mulf %855, %859 : vector<8x24xf32>
    %861 = arith.mulf %860, %4 : vector<8x24xf32>
    %862 = arith.mulf %860, %6 : vector<8x24xf32>
    %863 = tpu.concatenate %861, %862 in 1 : vector<8x24xf32>, vector<8x24xf32> -> vector<8x48xf32>
    %864 = vector.extract_strided_slice %656 {offsets = [48, 0], sizes = [8, 128], strides = [1, 1]} : vector<64x128xf32> to vector<8x128xf32>
    %865 = arith.addf %864, %660 : vector<8x128xf32>
    %866 = arith.truncf %863 : vector<8x48xf32> to vector<8x48xbf16>
    %cst_139 = arith.constant dense<0.000000e+00> : vector<8x128xf32>
    %867 = tpu.matmul %866, %658, %cst_139 {dimension_numbers = #tpu.dot_dimension_numbers<[1], [0], [0], [1], [0, 0, 1, 1], [], []>} : vector<8x48xbf16>, vector<48x128xbf16>, vector<8x128xf32> -> vector<8x128xf32>
    %868 = arith.addf %865, %867 : vector<8x128xf32>
    %869 = vector.extract_strided_slice %868 {offsets = [0, 0], sizes = [8, 24], strides = [1, 1]} : vector<8x128xf32> to vector<8x24xf32>
    %870 = arith.negf %869 : vector<8x24xf32>
    %871 = math.exp %870 : vector<8x24xf32>
    %cst_140 = arith.constant 1.000000e+00 : f32
    %872 = vector.broadcast %cst_140 : f32 to vector<8x24xf32>
    %873 = arith.addf %872, %871 : vector<8x24xf32>
    %874 = arith.divf %872, %873 : vector<8x24xf32>
    %875 = vector.extract_strided_slice %868 {offsets = [0, 32], sizes = [8, 24], strides = [1, 1]} : vector<8x128xf32> to vector<8x24xf32>
    %876 = arith.negf %875 : vector<8x24xf32>
    %877 = math.exp %876 : vector<8x24xf32>
    %cst_141 = arith.constant 1.000000e+00 : f32
    %878 = vector.broadcast %cst_141 : f32 to vector<8x24xf32>
    %879 = arith.addf %878, %877 : vector<8x24xf32>
    %880 = arith.divf %878, %879 : vector<8x24xf32>
    %881 = vector.extract_strided_slice %868 {offsets = [0, 64], sizes = [8, 24], strides = [1, 1]} : vector<8x128xf32> to vector<8x24xf32>
    %882 = math.tanh %881 : vector<8x24xf32>
    %883 = vector.extract_strided_slice %868 {offsets = [0, 96], sizes = [8, 24], strides = [1, 1]} : vector<8x128xf32> to vector<8x24xf32>
    %884 = arith.negf %883 : vector<8x24xf32>
    %885 = math.exp %884 : vector<8x24xf32>
    %cst_142 = arith.constant 1.000000e+00 : f32
    %886 = vector.broadcast %cst_142 : f32 to vector<8x24xf32>
    %887 = arith.addf %886, %885 : vector<8x24xf32>
    %888 = arith.divf %886, %887 : vector<8x24xf32>
    %889 = arith.mulf %880, %858 : vector<8x24xf32>
    %890 = arith.mulf %874, %882 : vector<8x24xf32>
    %891 = arith.addf %889, %890 : vector<8x24xf32>
    %892 = math.tanh %891 : vector<8x24xf32>
    %893 = arith.mulf %888, %892 : vector<8x24xf32>
    %894 = arith.mulf %893, %4 : vector<8x24xf32>
    %895 = arith.mulf %893, %6 : vector<8x24xf32>
    %896 = tpu.concatenate %894, %895 in 1 : vector<8x24xf32>, vector<8x24xf32> -> vector<8x48xf32>
    %897 = vector.extract_strided_slice %656 {offsets = [56, 0], sizes = [8, 128], strides = [1, 1]} : vector<64x128xf32> to vector<8x128xf32>
    %898 = arith.addf %897, %660 : vector<8x128xf32>
    %899 = arith.truncf %896 : vector<8x48xf32> to vector<8x48xbf16>
    %cst_143 = arith.constant dense<0.000000e+00> : vector<8x128xf32>
    %900 = tpu.matmul %899, %658, %cst_143 {dimension_numbers = #tpu.dot_dimension_numbers<[1], [0], [0], [1], [0, 0, 1, 1], [], []>} : vector<8x48xbf16>, vector<48x128xbf16>, vector<8x128xf32> -> vector<8x128xf32>
    %901 = arith.addf %898, %900 : vector<8x128xf32>
    %902 = vector.extract_strided_slice %901 {offsets = [0, 0], sizes = [8, 24], strides = [1, 1]} : vector<8x128xf32> to vector<8x24xf32>
    %903 = arith.negf %902 : vector<8x24xf32>
    %904 = math.exp %903 : vector<8x24xf32>
    %cst_144 = arith.constant 1.000000e+00 : f32
    %905 = vector.broadcast %cst_144 : f32 to vector<8x24xf32>
    %906 = arith.addf %905, %904 : vector<8x24xf32>
    %907 = arith.divf %905, %906 : vector<8x24xf32>
    %908 = vector.extract_strided_slice %901 {offsets = [0, 32], sizes = [8, 24], strides = [1, 1]} : vector<8x128xf32> to vector<8x24xf32>
    %909 = arith.negf %908 : vector<8x24xf32>
    %910 = math.exp %909 : vector<8x24xf32>
    %cst_145 = arith.constant 1.000000e+00 : f32
    %911 = vector.broadcast %cst_145 : f32 to vector<8x24xf32>
    %912 = arith.addf %911, %910 : vector<8x24xf32>
    %913 = arith.divf %911, %912 : vector<8x24xf32>
    %914 = vector.extract_strided_slice %901 {offsets = [0, 64], sizes = [8, 24], strides = [1, 1]} : vector<8x128xf32> to vector<8x24xf32>
    %915 = math.tanh %914 : vector<8x24xf32>
    %916 = vector.extract_strided_slice %901 {offsets = [0, 96], sizes = [8, 24], strides = [1, 1]} : vector<8x128xf32> to vector<8x24xf32>
    %917 = arith.negf %916 : vector<8x24xf32>
    %918 = math.exp %917 : vector<8x24xf32>
    %cst_146 = arith.constant 1.000000e+00 : f32
    %919 = vector.broadcast %cst_146 : f32 to vector<8x24xf32>
    %920 = arith.addf %919, %918 : vector<8x24xf32>
    %921 = arith.divf %919, %920 : vector<8x24xf32>
    %922 = arith.mulf %913, %891 : vector<8x24xf32>
    %923 = arith.mulf %907, %915 : vector<8x24xf32>
    %924 = arith.addf %922, %923 : vector<8x24xf32>
    %925 = math.tanh %924 : vector<8x24xf32>
    %926 = arith.mulf %921, %925 : vector<8x24xf32>
    %927 = vector.extract_strided_slice %926 {offsets = [0, 0], sizes = [4, 24], strides = [1, 1]} : vector<8x24xf32> to vector<4x24xf32>
    %928 = vector.extract_strided_slice %695 {offsets = [4, 0], sizes = [4, 24], strides = [1, 1]} : vector<8x24xf32> to vector<4x24xf32>
    %929 = tpu.concatenate %927, %928 in 1 : vector<4x24xf32>, vector<4x24xf32> -> vector<4x48xf32>
    %c0_147 = arith.constant 0 : index
    %c0_148 = arith.constant 0 : index
    %c0_149 = arith.constant 0 : index
    %930 = vector.load %arg4[%c0_147, %c0_148, %c0_149] : memref<3x96x256xbf16, #tpu.memory_space<vmem>>, vector<1x96x256xbf16>
    %931 = vector.shape_cast %930 : vector<1x96x256xbf16> to vector<96x256xbf16>
    %c1_150 = arith.constant 1 : index
    %c0_151 = arith.constant 0 : index
    %c0_152 = arith.constant 0 : index
    %932 = vector.load %arg4[%c1_150, %c0_151, %c0_152] : memref<3x96x256xbf16, #tpu.memory_space<vmem>>, vector<1x96x256xbf16>
    %933 = vector.shape_cast %932 : vector<1x96x256xbf16> to vector<96x256xbf16>
    %c2_153 = arith.constant 2 : index
    %c0_154 = arith.constant 0 : index
    %c0_155 = arith.constant 0 : index
    %934 = vector.load %arg4[%c2_153, %c0_154, %c0_155] : memref<3x96x256xbf16, #tpu.memory_space<vmem>>, vector<1x96x256xbf16>
    %935 = vector.shape_cast %934 : vector<1x96x256xbf16> to vector<96x256xbf16>
    %c0_156 = arith.constant 0 : index
    %c0_157 = arith.constant 0 : index
    %c0_158 = arith.constant 0 : index
    %936 = vector.load %arg5[%c0_156, %c0_157, %c0_158] : memref<3x4x256xf32, #tpu.memory_space<vmem>>, vector<1x4x256xf32>
    %937 = vector.shape_cast %936 : vector<1x4x256xf32> to vector<4x256xf32>
    %c1_159 = arith.constant 1 : index
    %c0_160 = arith.constant 0 : index
    %c0_161 = arith.constant 0 : index
    %938 = vector.load %arg5[%c1_159, %c0_160, %c0_161] : memref<3x4x256xf32, #tpu.memory_space<vmem>>, vector<1x4x256xf32>
    %939 = vector.shape_cast %938 : vector<1x4x256xf32> to vector<4x256xf32>
    %c2_162 = arith.constant 2 : index
    %c0_163 = arith.constant 0 : index
    %c0_164 = arith.constant 0 : index
    %940 = vector.load %arg5[%c2_162, %c0_163, %c0_164] : memref<3x4x256xf32, #tpu.memory_space<vmem>>, vector<1x4x256xf32>
    %941 = vector.shape_cast %940 : vector<1x4x256xf32> to vector<4x256xf32>
    %cst_165 = arith.constant 0.000000e+00 : f32
    %942 = vector.broadcast %cst_165 : f32 to vector<4x48xf32>
    %cst_166 = arith.constant 0.000000e+00 : f32
    %943 = vector.broadcast %cst_166 : f32 to vector<4x48xf32>
    %cst_167 = arith.constant 0.000000e+00 : f32
    %944 = vector.broadcast %cst_167 : f32 to vector<4x48xf32>
    %cst_168 = arith.constant 0.000000e+00 : f32
    %945 = vector.broadcast %cst_168 : f32 to vector<4x48xf32>
    %cst_169 = arith.constant 0.000000e+00 : f32
    %946 = vector.broadcast %cst_169 : f32 to vector<4x48xf32>
    %cst_170 = arith.constant 0.000000e+00 : f32
    %947 = vector.broadcast %cst_170 : f32 to vector<4x48xf32>
    %948 = tpu.concatenate %929, %942 in 1 : vector<4x48xf32>, vector<4x48xf32> -> vector<4x96xf32>
    %949 = arith.truncf %948 : vector<4x96xf32> to vector<4x96xbf16>
    %cst_171 = arith.constant dense<0.000000e+00> : vector<4x256xf32>
    %950 = tpu.matmul %949, %931, %cst_171 {dimension_numbers = #tpu.dot_dimension_numbers<[1], [0], [0], [1], [0, 0, 1, 1], [], []>} : vector<4x96xbf16>, vector<96x256xbf16>, vector<4x256xf32> -> vector<4x256xf32>
    %951 = arith.addf %937, %950 : vector<4x256xf32>
    %952 = vector.extract_strided_slice %951 {offsets = [0, 0], sizes = [4, 48], strides = [1, 1]} : vector<4x256xf32> to vector<4x48xf32>
    %953 = arith.negf %952 : vector<4x48xf32>
    %954 = math.exp %953 : vector<4x48xf32>
    %cst_172 = arith.constant 1.000000e+00 : f32
    %955 = vector.broadcast %cst_172 : f32 to vector<4x48xf32>
    %956 = arith.addf %955, %954 : vector<4x48xf32>
    %957 = arith.divf %955, %956 : vector<4x48xf32>
    %958 = vector.extract_strided_slice %951 {offsets = [0, 64], sizes = [4, 48], strides = [1, 1]} : vector<4x256xf32> to vector<4x48xf32>
    %959 = arith.negf %958 : vector<4x48xf32>
    %960 = math.exp %959 : vector<4x48xf32>
    %cst_173 = arith.constant 1.000000e+00 : f32
    %961 = vector.broadcast %cst_173 : f32 to vector<4x48xf32>
    %962 = arith.addf %961, %960 : vector<4x48xf32>
    %963 = arith.divf %961, %962 : vector<4x48xf32>
    %964 = vector.extract_strided_slice %951 {offsets = [0, 128], sizes = [4, 48], strides = [1, 1]} : vector<4x256xf32> to vector<4x48xf32>
    %965 = math.tanh %964 : vector<4x48xf32>
    %966 = vector.extract_strided_slice %951 {offsets = [0, 192], sizes = [4, 48], strides = [1, 1]} : vector<4x256xf32> to vector<4x48xf32>
    %967 = arith.negf %966 : vector<4x48xf32>
    %968 = math.exp %967 : vector<4x48xf32>
    %cst_174 = arith.constant 1.000000e+00 : f32
    %969 = vector.broadcast %cst_174 : f32 to vector<4x48xf32>
    %970 = arith.addf %969, %968 : vector<4x48xf32>
    %971 = arith.divf %969, %970 : vector<4x48xf32>
    %972 = arith.mulf %963, %945 : vector<4x48xf32>
    %973 = arith.mulf %957, %965 : vector<4x48xf32>
    %974 = arith.addf %972, %973 : vector<4x48xf32>
    %975 = math.tanh %974 : vector<4x48xf32>
    %976 = arith.mulf %971, %975 : vector<4x48xf32>
    %977 = tpu.concatenate %976, %943 in 1 : vector<4x48xf32>, vector<4x48xf32> -> vector<4x96xf32>
    %978 = arith.truncf %977 : vector<4x96xf32> to vector<4x96xbf16>
    %cst_175 = arith.constant dense<0.000000e+00> : vector<4x256xf32>
    %979 = tpu.matmul %978, %933, %cst_175 {dimension_numbers = #tpu.dot_dimension_numbers<[1], [0], [0], [1], [0, 0, 1, 1], [], []>} : vector<4x96xbf16>, vector<96x256xbf16>, vector<4x256xf32> -> vector<4x256xf32>
    %980 = arith.addf %939, %979 : vector<4x256xf32>
    %981 = vector.extract_strided_slice %980 {offsets = [0, 0], sizes = [4, 48], strides = [1, 1]} : vector<4x256xf32> to vector<4x48xf32>
    %982 = arith.negf %981 : vector<4x48xf32>
    %983 = math.exp %982 : vector<4x48xf32>
    %cst_176 = arith.constant 1.000000e+00 : f32
    %984 = vector.broadcast %cst_176 : f32 to vector<4x48xf32>
    %985 = arith.addf %984, %983 : vector<4x48xf32>
    %986 = arith.divf %984, %985 : vector<4x48xf32>
    %987 = vector.extract_strided_slice %980 {offsets = [0, 64], sizes = [4, 48], strides = [1, 1]} : vector<4x256xf32> to vector<4x48xf32>
    %988 = arith.negf %987 : vector<4x48xf32>
    %989 = math.exp %988 : vector<4x48xf32>
    %cst_177 = arith.constant 1.000000e+00 : f32
    %990 = vector.broadcast %cst_177 : f32 to vector<4x48xf32>
    %991 = arith.addf %990, %989 : vector<4x48xf32>
    %992 = arith.divf %990, %991 : vector<4x48xf32>
    %993 = vector.extract_strided_slice %980 {offsets = [0, 128], sizes = [4, 48], strides = [1, 1]} : vector<4x256xf32> to vector<4x48xf32>
    %994 = math.tanh %993 : vector<4x48xf32>
    %995 = vector.extract_strided_slice %980 {offsets = [0, 192], sizes = [4, 48], strides = [1, 1]} : vector<4x256xf32> to vector<4x48xf32>
    %996 = arith.negf %995 : vector<4x48xf32>
    %997 = math.exp %996 : vector<4x48xf32>
    %cst_178 = arith.constant 1.000000e+00 : f32
    %998 = vector.broadcast %cst_178 : f32 to vector<4x48xf32>
    %999 = arith.addf %998, %997 : vector<4x48xf32>
    %1000 = arith.divf %998, %999 : vector<4x48xf32>
    %1001 = arith.mulf %992, %946 : vector<4x48xf32>
    %1002 = arith.mulf %986, %994 : vector<4x48xf32>
    %1003 = arith.addf %1001, %1002 : vector<4x48xf32>
    %1004 = math.tanh %1003 : vector<4x48xf32>
    %1005 = arith.mulf %1000, %1004 : vector<4x48xf32>
    %1006 = tpu.concatenate %1005, %944 in 1 : vector<4x48xf32>, vector<4x48xf32> -> vector<4x96xf32>
    %1007 = arith.truncf %1006 : vector<4x96xf32> to vector<4x96xbf16>
    %cst_179 = arith.constant dense<0.000000e+00> : vector<4x256xf32>
    %1008 = tpu.matmul %1007, %935, %cst_179 {dimension_numbers = #tpu.dot_dimension_numbers<[1], [0], [0], [1], [0, 0, 1, 1], [], []>} : vector<4x96xbf16>, vector<96x256xbf16>, vector<4x256xf32> -> vector<4x256xf32>
    %1009 = arith.addf %941, %1008 : vector<4x256xf32>
    %1010 = vector.extract_strided_slice %1009 {offsets = [0, 0], sizes = [4, 48], strides = [1, 1]} : vector<4x256xf32> to vector<4x48xf32>
    %1011 = arith.negf %1010 : vector<4x48xf32>
    %1012 = math.exp %1011 : vector<4x48xf32>
    %cst_180 = arith.constant 1.000000e+00 : f32
    %1013 = vector.broadcast %cst_180 : f32 to vector<4x48xf32>
    %1014 = arith.addf %1013, %1012 : vector<4x48xf32>
    %1015 = arith.divf %1013, %1014 : vector<4x48xf32>
    %1016 = vector.extract_strided_slice %1009 {offsets = [0, 64], sizes = [4, 48], strides = [1, 1]} : vector<4x256xf32> to vector<4x48xf32>
    %1017 = arith.negf %1016 : vector<4x48xf32>
    %1018 = math.exp %1017 : vector<4x48xf32>
    %cst_181 = arith.constant 1.000000e+00 : f32
    %1019 = vector.broadcast %cst_181 : f32 to vector<4x48xf32>
    %1020 = arith.addf %1019, %1018 : vector<4x48xf32>
    %1021 = arith.divf %1019, %1020 : vector<4x48xf32>
    %1022 = vector.extract_strided_slice %1009 {offsets = [0, 128], sizes = [4, 48], strides = [1, 1]} : vector<4x256xf32> to vector<4x48xf32>
    %1023 = math.tanh %1022 : vector<4x48xf32>
    %1024 = vector.extract_strided_slice %1009 {offsets = [0, 192], sizes = [4, 48], strides = [1, 1]} : vector<4x256xf32> to vector<4x48xf32>
    %1025 = arith.negf %1024 : vector<4x48xf32>
    %1026 = math.exp %1025 : vector<4x48xf32>
    %cst_182 = arith.constant 1.000000e+00 : f32
    %1027 = vector.broadcast %cst_182 : f32 to vector<4x48xf32>
    %1028 = arith.addf %1027, %1026 : vector<4x48xf32>
    %1029 = arith.divf %1027, %1028 : vector<4x48xf32>
    %1030 = arith.mulf %1021, %947 : vector<4x48xf32>
    %1031 = arith.mulf %1015, %1023 : vector<4x48xf32>
    %1032 = arith.addf %1030, %1031 : vector<4x48xf32>
    %1033 = math.tanh %1032 : vector<4x48xf32>
    %1034 = arith.mulf %1029, %1033 : vector<4x48xf32>
    %c0_183 = arith.constant 0 : index
    %c0_184 = arith.constant 0 : index
    %1035 = vector.load %arg9[%c0_183, %c0_184] : memref<48x48xf32, #tpu.memory_space<vmem>>, vector<4x48xf32>
    tpu.vector_store %arg9[%c0_183, %c0_184], %1034 {strides = array<i32>} : memref<48x48xf32, #tpu.memory_space<vmem>>, vector<4x48xf32>,
    %1036 = tpu.concatenate %1034, %976 in 1 : vector<4x48xf32>, vector<4x48xf32> -> vector<4x96xf32>
    %1037 = arith.truncf %1036 : vector<4x96xf32> to vector<4x96xbf16>
    %cst_185 = arith.constant dense<0.000000e+00> : vector<4x256xf32>
    %1038 = tpu.matmul %1037, %931, %cst_185 {dimension_numbers = #tpu.dot_dimension_numbers<[1], [0], [0], [1], [0, 0, 1, 1], [], []>} : vector<4x96xbf16>, vector<96x256xbf16>, vector<4x256xf32> -> vector<4x256xf32>
    %1039 = arith.addf %937, %1038 : vector<4x256xf32>
    %1040 = vector.extract_strided_slice %1039 {offsets = [0, 0], sizes = [4, 48], strides = [1, 1]} : vector<4x256xf32> to vector<4x48xf32>
    %1041 = arith.negf %1040 : vector<4x48xf32>
    %1042 = math.exp %1041 : vector<4x48xf32>
    %cst_186 = arith.constant 1.000000e+00 : f32
    %1043 = vector.broadcast %cst_186 : f32 to vector<4x48xf32>
    %1044 = arith.addf %1043, %1042 : vector<4x48xf32>
    %1045 = arith.divf %1043, %1044 : vector<4x48xf32>
    %1046 = vector.extract_strided_slice %1039 {offsets = [0, 64], sizes = [4, 48], strides = [1, 1]} : vector<4x256xf32> to vector<4x48xf32>
    %1047 = arith.negf %1046 : vector<4x48xf32>
    %1048 = math.exp %1047 : vector<4x48xf32>
    %cst_187 = arith.constant 1.000000e+00 : f32
    %1049 = vector.broadcast %cst_187 : f32 to vector<4x48xf32>
    %1050 = arith.addf %1049, %1048 : vector<4x48xf32>
    %1051 = arith.divf %1049, %1050 : vector<4x48xf32>
    %1052 = vector.extract_strided_slice %1039 {offsets = [0, 128], sizes = [4, 48], strides = [1, 1]} : vector<4x256xf32> to vector<4x48xf32>
    %1053 = math.tanh %1052 : vector<4x48xf32>
    %1054 = vector.extract_strided_slice %1039 {offsets = [0, 192], sizes = [4, 48], strides = [1, 1]} : vector<4x256xf32> to vector<4x48xf32>
    %1055 = arith.negf %1054 : vector<4x48xf32>
    %1056 = math.exp %1055 : vector<4x48xf32>
    %cst_188 = arith.constant 1.000000e+00 : f32
    %1057 = vector.broadcast %cst_188 : f32 to vector<4x48xf32>
    %1058 = arith.addf %1057, %1056 : vector<4x48xf32>
    %1059 = arith.divf %1057, %1058 : vector<4x48xf32>
    %1060 = arith.mulf %1051, %974 : vector<4x48xf32>
    %1061 = arith.mulf %1045, %1053 : vector<4x48xf32>
    %1062 = arith.addf %1060, %1061 : vector<4x48xf32>
    %1063 = math.tanh %1062 : vector<4x48xf32>
    %1064 = arith.mulf %1059, %1063 : vector<4x48xf32>
    %1065 = tpu.concatenate %1064, %1005 in 1 : vector<4x48xf32>, vector<4x48xf32> -> vector<4x96xf32>
    %1066 = arith.truncf %1065 : vector<4x96xf32> to vector<4x96xbf16>
    %cst_189 = arith.constant dense<0.000000e+00> : vector<4x256xf32>
    %1067 = tpu.matmul %1066, %933, %cst_189 {dimension_numbers = #tpu.dot_dimension_numbers<[1], [0], [0], [1], [0, 0, 1, 1], [], []>} : vector<4x96xbf16>, vector<96x256xbf16>, vector<4x256xf32> -> vector<4x256xf32>
    %1068 = arith.addf %939, %1067 : vector<4x256xf32>
    %1069 = vector.extract_strided_slice %1068 {offsets = [0, 0], sizes = [4, 48], strides = [1, 1]} : vector<4x256xf32> to vector<4x48xf32>
    %1070 = arith.negf %1069 : vector<4x48xf32>
    %1071 = math.exp %1070 : vector<4x48xf32>
    %cst_190 = arith.constant 1.000000e+00 : f32
    %1072 = vector.broadcast %cst_190 : f32 to vector<4x48xf32>
    %1073 = arith.addf %1072, %1071 : vector<4x48xf32>
    %1074 = arith.divf %1072, %1073 : vector<4x48xf32>
    %1075 = vector.extract_strided_slice %1068 {offsets = [0, 64], sizes = [4, 48], strides = [1, 1]} : vector<4x256xf32> to vector<4x48xf32>
    %1076 = arith.negf %1075 : vector<4x48xf32>
    %1077 = math.exp %1076 : vector<4x48xf32>
    %cst_191 = arith.constant 1.000000e+00 : f32
    %1078 = vector.broadcast %cst_191 : f32 to vector<4x48xf32>
    %1079 = arith.addf %1078, %1077 : vector<4x48xf32>
    %1080 = arith.divf %1078, %1079 : vector<4x48xf32>
    %1081 = vector.extract_strided_slice %1068 {offsets = [0, 128], sizes = [4, 48], strides = [1, 1]} : vector<4x256xf32> to vector<4x48xf32>
    %1082 = math.tanh %1081 : vector<4x48xf32>
    %1083 = vector.extract_strided_slice %1068 {offsets = [0, 192], sizes = [4, 48], strides = [1, 1]} : vector<4x256xf32> to vector<4x48xf32>
    %1084 = arith.negf %1083 : vector<4x48xf32>
    %1085 = math.exp %1084 : vector<4x48xf32>
    %cst_192 = arith.constant 1.000000e+00 : f32
    %1086 = vector.broadcast %cst_192 : f32 to vector<4x48xf32>
    %1087 = arith.addf %1086, %1085 : vector<4x48xf32>
    %1088 = arith.divf %1086, %1087 : vector<4x48xf32>
    %1089 = arith.mulf %1080, %1003 : vector<4x48xf32>
    %1090 = arith.mulf %1074, %1082 : vector<4x48xf32>
    %1091 = arith.addf %1089, %1090 : vector<4x48xf32>
    %1092 = math.tanh %1091 : vector<4x48xf32>
    %1093 = arith.mulf %1088, %1092 : vector<4x48xf32>
    %1094 = tpu.concatenate %1093, %1034 in 1 : vector<4x48xf32>, vector<4x48xf32> -> vector<4x96xf32>
    %1095 = arith.truncf %1094 : vector<4x96xf32> to vector<4x96xbf16>
    %cst_193 = arith.constant dense<0.000000e+00> : vector<4x256xf32>
    %1096 = tpu.matmul %1095, %935, %cst_193 {dimension_numbers = #tpu.dot_dimension_numbers<[1], [0], [0], [1], [0, 0, 1, 1], [], []>} : vector<4x96xbf16>, vector<96x256xbf16>, vector<4x256xf32> -> vector<4x256xf32>
    %1097 = arith.addf %941, %1096 : vector<4x256xf32>
    %1098 = vector.extract_strided_slice %1097 {offsets = [0, 0], sizes = [4, 48], strides = [1, 1]} : vector<4x256xf32> to vector<4x48xf32>
    %1099 = arith.negf %1098 : vector<4x48xf32>
    %1100 = math.exp %1099 : vector<4x48xf32>
    %cst_194 = arith.constant 1.000000e+00 : f32
    %1101 = vector.broadcast %cst_194 : f32 to vector<4x48xf32>
    %1102 = arith.addf %1101, %1100 : vector<4x48xf32>
    %1103 = arith.divf %1101, %1102 : vector<4x48xf32>
    %1104 = vector.extract_strided_slice %1097 {offsets = [0, 64], sizes = [4, 48], strides = [1, 1]} : vector<4x256xf32> to vector<4x48xf32>
    %1105 = arith.negf %1104 : vector<4x48xf32>
    %1106 = math.exp %1105 : vector<4x48xf32>
    %cst_195 = arith.constant 1.000000e+00 : f32
    %1107 = vector.broadcast %cst_195 : f32 to vector<4x48xf32>
    %1108 = arith.addf %1107, %1106 : vector<4x48xf32>
    %1109 = arith.divf %1107, %1108 : vector<4x48xf32>
    %1110 = vector.extract_strided_slice %1097 {offsets = [0, 128], sizes = [4, 48], strides = [1, 1]} : vector<4x256xf32> to vector<4x48xf32>
    %1111 = math.tanh %1110 : vector<4x48xf32>
    %1112 = vector.extract_strided_slice %1097 {offsets = [0, 192], sizes = [4, 48], strides = [1, 1]} : vector<4x256xf32> to vector<4x48xf32>
    %1113 = arith.negf %1112 : vector<4x48xf32>
    %1114 = math.exp %1113 : vector<4x48xf32>
    %cst_196 = arith.constant 1.000000e+00 : f32
    %1115 = vector.broadcast %cst_196 : f32 to vector<4x48xf32>
    %1116 = arith.addf %1115, %1114 : vector<4x48xf32>
    %1117 = arith.divf %1115, %1116 : vector<4x48xf32>
    %1118 = arith.mulf %1109, %1032 : vector<4x48xf32>
    %1119 = arith.mulf %1103, %1111 : vector<4x48xf32>
    %1120 = arith.addf %1118, %1119 : vector<4x48xf32>
    %1121 = math.tanh %1120 : vector<4x48xf32>
    %1122 = arith.mulf %1117, %1121 : vector<4x48xf32>
    %c4 = arith.constant 4 : index
    %c0_197 = arith.constant 0 : index
    %1123 = vector.load %arg9[%c4, %c0_197] : memref<48x48xf32, #tpu.memory_space<vmem>>, vector<4x48xf32>
    tpu.vector_store %arg9[%c4, %c0_197], %1122 {strides = array<i32>} : memref<48x48xf32, #tpu.memory_space<vmem>>, vector<4x48xf32>,
    %1124 = tpu.concatenate %1122, %1064 in 1 : vector<4x48xf32>, vector<4x48xf32> -> vector<4x96xf32>
    %1125 = arith.truncf %1124 : vector<4x96xf32> to vector<4x96xbf16>
    %cst_198 = arith.constant dense<0.000000e+00> : vector<4x256xf32>
    %1126 = tpu.matmul %1125, %931, %cst_198 {dimension_numbers = #tpu.dot_dimension_numbers<[1], [0], [0], [1], [0, 0, 1, 1], [], []>} : vector<4x96xbf16>, vector<96x256xbf16>, vector<4x256xf32> -> vector<4x256xf32>
    %1127 = arith.addf %937, %1126 : vector<4x256xf32>
    %1128 = vector.extract_strided_slice %1127 {offsets = [0, 0], sizes = [4, 48], strides = [1, 1]} : vector<4x256xf32> to vector<4x48xf32>
    %1129 = arith.negf %1128 : vector<4x48xf32>
    %1130 = math.exp %1129 : vector<4x48xf32>
    %cst_199 = arith.constant 1.000000e+00 : f32
    %1131 = vector.broadcast %cst_199 : f32 to vector<4x48xf32>
    %1132 = arith.addf %1131, %1130 : vector<4x48xf32>
    %1133 = arith.divf %1131, %1132 : vector<4x48xf32>
    %1134 = vector.extract_strided_slice %1127 {offsets = [0, 64], sizes = [4, 48], strides = [1, 1]} : vector<4x256xf32> to vector<4x48xf32>
    %1135 = arith.negf %1134 : vector<4x48xf32>
    %1136 = math.exp %1135 : vector<4x48xf32>
    %cst_200 = arith.constant 1.000000e+00 : f32
    %1137 = vector.broadcast %cst_200 : f32 to vector<4x48xf32>
    %1138 = arith.addf %1137, %1136 : vector<4x48xf32>
    %1139 = arith.divf %1137, %1138 : vector<4x48xf32>
    %1140 = vector.extract_strided_slice %1127 {offsets = [0, 128], sizes = [4, 48], strides = [1, 1]} : vector<4x256xf32> to vector<4x48xf32>
    %1141 = math.tanh %1140 : vector<4x48xf32>
    %1142 = vector.extract_strided_slice %1127 {offsets = [0, 192], sizes = [4, 48], strides = [1, 1]} : vector<4x256xf32> to vector<4x48xf32>
    %1143 = arith.negf %1142 : vector<4x48xf32>
    %1144 = math.exp %1143 : vector<4x48xf32>
    %cst_201 = arith.constant 1.000000e+00 : f32
    %1145 = vector.broadcast %cst_201 : f32 to vector<4x48xf32>
    %1146 = arith.addf %1145, %1144 : vector<4x48xf32>
    %1147 = arith.divf %1145, %1146 : vector<4x48xf32>
    %1148 = arith.mulf %1139, %1062 : vector<4x48xf32>
    %1149 = arith.mulf %1133, %1141 : vector<4x48xf32>
    %1150 = arith.addf %1148, %1149 : vector<4x48xf32>
    %1151 = math.tanh %1150 : vector<4x48xf32>
    %1152 = arith.mulf %1147, %1151 : vector<4x48xf32>
    %1153 = tpu.concatenate %1152, %1093 in 1 : vector<4x48xf32>, vector<4x48xf32> -> vector<4x96xf32>
    %1154 = arith.truncf %1153 : vector<4x96xf32> to vector<4x96xbf16>
    %cst_202 = arith.constant dense<0.000000e+00> : vector<4x256xf32>
    %1155 = tpu.matmul %1154, %933, %cst_202 {dimension_numbers = #tpu.dot_dimension_numbers<[1], [0], [0], [1], [0, 0, 1, 1], [], []>} : vector<4x96xbf16>, vector<96x256xbf16>, vector<4x256xf32> -> vector<4x256xf32>
    %1156 = arith.addf %939, %1155 : vector<4x256xf32>
    %1157 = vector.extract_strided_slice %1156 {offsets = [0, 0], sizes = [4, 48], strides = [1, 1]} : vector<4x256xf32> to vector<4x48xf32>
    %1158 = arith.negf %1157 : vector<4x48xf32>
    %1159 = math.exp %1158 : vector<4x48xf32>
    %cst_203 = arith.constant 1.000000e+00 : f32
    %1160 = vector.broadcast %cst_203 : f32 to vector<4x48xf32>
    %1161 = arith.addf %1160, %1159 : vector<4x48xf32>
    %1162 = arith.divf %1160, %1161 : vector<4x48xf32>
    %1163 = vector.extract_strided_slice %1156 {offsets = [0, 64], sizes = [4, 48], strides = [1, 1]} : vector<4x256xf32> to vector<4x48xf32>
    %1164 = arith.negf %1163 : vector<4x48xf32>
    %1165 = math.exp %1164 : vector<4x48xf32>
    %cst_204 = arith.constant 1.000000e+00 : f32
    %1166 = vector.broadcast %cst_204 : f32 to vector<4x48xf32>
    %1167 = arith.addf %1166, %1165 : vector<4x48xf32>
    %1168 = arith.divf %1166, %1167 : vector<4x48xf32>
    %1169 = vector.extract_strided_slice %1156 {offsets = [0, 128], sizes = [4, 48], strides = [1, 1]} : vector<4x256xf32> to vector<4x48xf32>
    %1170 = math.tanh %1169 : vector<4x48xf32>
    %1171 = vector.extract_strided_slice %1156 {offsets = [0, 192], sizes = [4, 48], strides = [1, 1]} : vector<4x256xf32> to vector<4x48xf32>
    %1172 = arith.negf %1171 : vector<4x48xf32>
    %1173 = math.exp %1172 : vector<4x48xf32>
    %cst_205 = arith.constant 1.000000e+00 : f32
    %1174 = vector.broadcast %cst_205 : f32 to vector<4x48xf32>
    %1175 = arith.addf %1174, %1173 : vector<4x48xf32>
    %1176 = arith.divf %1174, %1175 : vector<4x48xf32>
    %1177 = arith.mulf %1168, %1091 : vector<4x48xf32>
    %1178 = arith.mulf %1162, %1170 : vector<4x48xf32>
    %1179 = arith.addf %1177, %1178 : vector<4x48xf32>
    %1180 = math.tanh %1179 : vector<4x48xf32>
    %1181 = arith.mulf %1176, %1180 : vector<4x48xf32>
    %1182 = tpu.concatenate %1181, %1122 in 1 : vector<4x48xf32>, vector<4x48xf32> -> vector<4x96xf32>
    %1183 = arith.truncf %1182 : vector<4x96xf32> to vector<4x96xbf16>
    %cst_206 = arith.constant dense<0.000000e+00> : vector<4x256xf32>
    %1184 = tpu.matmul %1183, %935, %cst_206 {dimension_numbers = #tpu.dot_dimension_numbers<[1], [0], [0], [1], [0, 0, 1, 1], [], []>} : vector<4x96xbf16>, vector<96x256xbf16>, vector<4x256xf32> -> vector<4x256xf32>
    %1185 = arith.addf %941, %1184 : vector<4x256xf32>
    %1186 = vector.extract_strided_slice %1185 {offsets = [0, 0], sizes = [4, 48], strides = [1, 1]} : vector<4x256xf32> to vector<4x48xf32>
    %1187 = arith.negf %1186 : vector<4x48xf32>
    %1188 = math.exp %1187 : vector<4x48xf32>
    %cst_207 = arith.constant 1.000000e+00 : f32
    %1189 = vector.broadcast %cst_207 : f32 to vector<4x48xf32>
    %1190 = arith.addf %1189, %1188 : vector<4x48xf32>
    %1191 = arith.divf %1189, %1190 : vector<4x48xf32>
    %1192 = vector.extract_strided_slice %1185 {offsets = [0, 64], sizes = [4, 48], strides = [1, 1]} : vector<4x256xf32> to vector<4x48xf32>
    %1193 = arith.negf %1192 : vector<4x48xf32>
    %1194 = math.exp %1193 : vector<4x48xf32>
    %cst_208 = arith.constant 1.000000e+00 : f32
    %1195 = vector.broadcast %cst_208 : f32 to vector<4x48xf32>
    %1196 = arith.addf %1195, %1194 : vector<4x48xf32>
    %1197 = arith.divf %1195, %1196 : vector<4x48xf32>
    %1198 = vector.extract_strided_slice %1185 {offsets = [0, 128], sizes = [4, 48], strides = [1, 1]} : vector<4x256xf32> to vector<4x48xf32>
    %1199 = math.tanh %1198 : vector<4x48xf32>
    %1200 = vector.extract_strided_slice %1185 {offsets = [0, 192], sizes = [4, 48], strides = [1, 1]} : vector<4x256xf32> to vector<4x48xf32>
    %1201 = arith.negf %1200 : vector<4x48xf32>
    %1202 = math.exp %1201 : vector<4x48xf32>
    %cst_209 = arith.constant 1.000000e+00 : f32
    %1203 = vector.broadcast %cst_209 : f32 to vector<4x48xf32>
    %1204 = arith.addf %1203, %1202 : vector<4x48xf32>
    %1205 = arith.divf %1203, %1204 : vector<4x48xf32>
    %1206 = arith.mulf %1197, %1120 : vector<4x48xf32>
    %1207 = arith.mulf %1191, %1199 : vector<4x48xf32>
    %1208 = arith.addf %1206, %1207 : vector<4x48xf32>
    %1209 = math.tanh %1208 : vector<4x48xf32>
    %1210 = arith.mulf %1205, %1209 : vector<4x48xf32>
    %c8 = arith.constant 8 : index
    %c0_210 = arith.constant 0 : index
    %1211 = vector.load %arg9[%c8, %c0_210] : memref<48x48xf32, #tpu.memory_space<vmem>>, vector<4x48xf32>
    tpu.vector_store %arg9[%c8, %c0_210], %1210 {strides = array<i32>} : memref<48x48xf32, #tpu.memory_space<vmem>>, vector<4x48xf32>,
    %1212 = tpu.concatenate %1210, %1152 in 1 : vector<4x48xf32>, vector<4x48xf32> -> vector<4x96xf32>
    %1213 = arith.truncf %1212 : vector<4x96xf32> to vector<4x96xbf16>
    %cst_211 = arith.constant dense<0.000000e+00> : vector<4x256xf32>
    %1214 = tpu.matmul %1213, %931, %cst_211 {dimension_numbers = #tpu.dot_dimension_numbers<[1], [0], [0], [1], [0, 0, 1, 1], [], []>} : vector<4x96xbf16>, vector<96x256xbf16>, vector<4x256xf32> -> vector<4x256xf32>
    %1215 = arith.addf %937, %1214 : vector<4x256xf32>
    %1216 = vector.extract_strided_slice %1215 {offsets = [0, 0], sizes = [4, 48], strides = [1, 1]} : vector<4x256xf32> to vector<4x48xf32>
    %1217 = arith.negf %1216 : vector<4x48xf32>
    %1218 = math.exp %1217 : vector<4x48xf32>
    %cst_212 = arith.constant 1.000000e+00 : f32
    %1219 = vector.broadcast %cst_212 : f32 to vector<4x48xf32>
    %1220 = arith.addf %1219, %1218 : vector<4x48xf32>
    %1221 = arith.divf %1219, %1220 : vector<4x48xf32>
    %1222 = vector.extract_strided_slice %1215 {offsets = [0, 64], sizes = [4, 48], strides = [1, 1]} : vector<4x256xf32> to vector<4x48xf32>
    %1223 = arith.negf %1222 : vector<4x48xf32>
    %1224 = math.exp %1223 : vector<4x48xf32>
    %cst_213 = arith.constant 1.000000e+00 : f32
    %1225 = vector.broadcast %cst_213 : f32 to vector<4x48xf32>
    %1226 = arith.addf %1225, %1224 : vector<4x48xf32>
    %1227 = arith.divf %1225, %1226 : vector<4x48xf32>
    %1228 = vector.extract_strided_slice %1215 {offsets = [0, 128], sizes = [4, 48], strides = [1, 1]} : vector<4x256xf32> to vector<4x48xf32>
    %1229 = math.tanh %1228 : vector<4x48xf32>
    %1230 = vector.extract_strided_slice %1215 {offsets = [0, 192], sizes = [4, 48], strides = [1, 1]} : vector<4x256xf32> to vector<4x48xf32>
    %1231 = arith.negf %1230 : vector<4x48xf32>
    %1232 = math.exp %1231 : vector<4x48xf32>
    %cst_214 = arith.constant 1.000000e+00 : f32
    %1233 = vector.broadcast %cst_214 : f32 to vector<4x48xf32>
    %1234 = arith.addf %1233, %1232 : vector<4x48xf32>
    %1235 = arith.divf %1233, %1234 : vector<4x48xf32>
    %1236 = arith.mulf %1227, %1150 : vector<4x48xf32>
    %1237 = arith.mulf %1221, %1229 : vector<4x48xf32>
    %1238 = arith.addf %1236, %1237 : vector<4x48xf32>
    %1239 = math.tanh %1238 : vector<4x48xf32>
    %1240 = arith.mulf %1235, %1239 : vector<4x48xf32>
    %1241 = tpu.concatenate %1240, %1181 in 1 : vector<4x48xf32>, vector<4x48xf32> -> vector<4x96xf32>
    %1242 = arith.truncf %1241 : vector<4x96xf32> to vector<4x96xbf16>
    %cst_215 = arith.constant dense<0.000000e+00> : vector<4x256xf32>
    %1243 = tpu.matmul %1242, %933, %cst_215 {dimension_numbers = #tpu.dot_dimension_numbers<[1], [0], [0], [1], [0, 0, 1, 1], [], []>} : vector<4x96xbf16>, vector<96x256xbf16>, vector<4x256xf32> -> vector<4x256xf32>
    %1244 = arith.addf %939, %1243 : vector<4x256xf32>
    %1245 = vector.extract_strided_slice %1244 {offsets = [0, 0], sizes = [4, 48], strides = [1, 1]} : vector<4x256xf32> to vector<4x48xf32>
    %1246 = arith.negf %1245 : vector<4x48xf32>
    %1247 = math.exp %1246 : vector<4x48xf32>
    %cst_216 = arith.constant 1.000000e+00 : f32
    %1248 = vector.broadcast %cst_216 : f32 to vector<4x48xf32>
    %1249 = arith.addf %1248, %1247 : vector<4x48xf32>
    %1250 = arith.divf %1248, %1249 : vector<4x48xf32>
    %1251 = vector.extract_strided_slice %1244 {offsets = [0, 64], sizes = [4, 48], strides = [1, 1]} : vector<4x256xf32> to vector<4x48xf32>
    %1252 = arith.negf %1251 : vector<4x48xf32>
    %1253 = math.exp %1252 : vector<4x48xf32>
    %cst_217 = arith.constant 1.000000e+00 : f32
    %1254 = vector.broadcast %cst_217 : f32 to vector<4x48xf32>
    %1255 = arith.addf %1254, %1253 : vector<4x48xf32>
    %1256 = arith.divf %1254, %1255 : vector<4x48xf32>
    %1257 = vector.extract_strided_slice %1244 {offsets = [0, 128], sizes = [4, 48], strides = [1, 1]} : vector<4x256xf32> to vector<4x48xf32>
    %1258 = math.tanh %1257 : vector<4x48xf32>
    %1259 = vector.extract_strided_slice %1244 {offsets = [0, 192], sizes = [4, 48], strides = [1, 1]} : vector<4x256xf32> to vector<4x48xf32>
    %1260 = arith.negf %1259 : vector<4x48xf32>
    %1261 = math.exp %1260 : vector<4x48xf32>
    %cst_218 = arith.constant 1.000000e+00 : f32
    %1262 = vector.broadcast %cst_218 : f32 to vector<4x48xf32>
    %1263 = arith.addf %1262, %1261 : vector<4x48xf32>
    %1264 = arith.divf %1262, %1263 : vector<4x48xf32>
    %1265 = arith.mulf %1256, %1179 : vector<4x48xf32>
    %1266 = arith.mulf %1250, %1258 : vector<4x48xf32>
    %1267 = arith.addf %1265, %1266 : vector<4x48xf32>
    %1268 = math.tanh %1267 : vector<4x48xf32>
    %1269 = arith.mulf %1264, %1268 : vector<4x48xf32>
    %1270 = tpu.concatenate %1269, %1210 in 1 : vector<4x48xf32>, vector<4x48xf32> -> vector<4x96xf32>
    %1271 = arith.truncf %1270 : vector<4x96xf32> to vector<4x96xbf16>
    %cst_219 = arith.constant dense<0.000000e+00> : vector<4x256xf32>
    %1272 = tpu.matmul %1271, %935, %cst_219 {dimension_numbers = #tpu.dot_dimension_numbers<[1], [0], [0], [1], [0, 0, 1, 1], [], []>} : vector<4x96xbf16>, vector<96x256xbf16>, vector<4x256xf32> -> vector<4x256xf32>
    %1273 = arith.addf %941, %1272 : vector<4x256xf32>
    %1274 = vector.extract_strided_slice %1273 {offsets = [0, 0], sizes = [4, 48], strides = [1, 1]} : vector<4x256xf32> to vector<4x48xf32>
    %1275 = arith.negf %1274 : vector<4x48xf32>
    %1276 = math.exp %1275 : vector<4x48xf32>
    %cst_220 = arith.constant 1.000000e+00 : f32
    %1277 = vector.broadcast %cst_220 : f32 to vector<4x48xf32>
    %1278 = arith.addf %1277, %1276 : vector<4x48xf32>
    %1279 = arith.divf %1277, %1278 : vector<4x48xf32>
    %1280 = vector.extract_strided_slice %1273 {offsets = [0, 64], sizes = [4, 48], strides = [1, 1]} : vector<4x256xf32> to vector<4x48xf32>
    %1281 = arith.negf %1280 : vector<4x48xf32>
    %1282 = math.exp %1281 : vector<4x48xf32>
    %cst_221 = arith.constant 1.000000e+00 : f32
    %1283 = vector.broadcast %cst_221 : f32 to vector<4x48xf32>
    %1284 = arith.addf %1283, %1282 : vector<4x48xf32>
    %1285 = arith.divf %1283, %1284 : vector<4x48xf32>
    %1286 = vector.extract_strided_slice %1273 {offsets = [0, 128], sizes = [4, 48], strides = [1, 1]} : vector<4x256xf32> to vector<4x48xf32>
    %1287 = math.tanh %1286 : vector<4x48xf32>
    %1288 = vector.extract_strided_slice %1273 {offsets = [0, 192], sizes = [4, 48], strides = [1, 1]} : vector<4x256xf32> to vector<4x48xf32>
    %1289 = arith.negf %1288 : vector<4x48xf32>
    %1290 = math.exp %1289 : vector<4x48xf32>
    %cst_222 = arith.constant 1.000000e+00 : f32
    %1291 = vector.broadcast %cst_222 : f32 to vector<4x48xf32>
    %1292 = arith.addf %1291, %1290 : vector<4x48xf32>
    %1293 = arith.divf %1291, %1292 : vector<4x48xf32>
    %1294 = arith.mulf %1285, %1208 : vector<4x48xf32>
    %1295 = arith.mulf %1279, %1287 : vector<4x48xf32>
    %1296 = arith.addf %1294, %1295 : vector<4x48xf32>
    %1297 = math.tanh %1296 : vector<4x48xf32>
    %1298 = arith.mulf %1293, %1297 : vector<4x48xf32>
    %c12 = arith.constant 12 : index
    %c0_223 = arith.constant 0 : index
    %1299 = vector.load %arg9[%c12, %c0_223] : memref<48x48xf32, #tpu.memory_space<vmem>>, vector<4x48xf32>
    tpu.vector_store %arg9[%c12, %c0_223], %1298 {strides = array<i32>} : memref<48x48xf32, #tpu.memory_space<vmem>>, vector<4x48xf32>,
    %1300 = tpu.concatenate %1298, %1240 in 1 : vector<4x48xf32>, vector<4x48xf32> -> vector<4x96xf32>
    %1301 = arith.truncf %1300 : vector<4x96xf32> to vector<4x96xbf16>
    %cst_224 = arith.constant dense<0.000000e+00> : vector<4x256xf32>
    %1302 = tpu.matmul %1301, %931, %cst_224 {dimension_numbers = #tpu.dot_dimension_numbers<[1], [0], [0], [1], [0, 0, 1, 1], [], []>} : vector<4x96xbf16>, vector<96x256xbf16>, vector<4x256xf32> -> vector<4x256xf32>
    %1303 = arith.addf %937, %1302 : vector<4x256xf32>
    %1304 = vector.extract_strided_slice %1303 {offsets = [0, 0], sizes = [4, 48], strides = [1, 1]} : vector<4x256xf32> to vector<4x48xf32>
    %1305 = arith.negf %1304 : vector<4x48xf32>
    %1306 = math.exp %1305 : vector<4x48xf32>
    %cst_225 = arith.constant 1.000000e+00 : f32
    %1307 = vector.broadcast %cst_225 : f32 to vector<4x48xf32>
    %1308 = arith.addf %1307, %1306 : vector<4x48xf32>
    %1309 = arith.divf %1307, %1308 : vector<4x48xf32>
    %1310 = vector.extract_strided_slice %1303 {offsets = [0, 64], sizes = [4, 48], strides = [1, 1]} : vector<4x256xf32> to vector<4x48xf32>
    %1311 = arith.negf %1310 : vector<4x48xf32>
    %1312 = math.exp %1311 : vector<4x48xf32>
    %cst_226 = arith.constant 1.000000e+00 : f32
    %1313 = vector.broadcast %cst_226 : f32 to vector<4x48xf32>
    %1314 = arith.addf %1313, %1312 : vector<4x48xf32>
    %1315 = arith.divf %1313, %1314 : vector<4x48xf32>
    %1316 = vector.extract_strided_slice %1303 {offsets = [0, 128], sizes = [4, 48], strides = [1, 1]} : vector<4x256xf32> to vector<4x48xf32>
    %1317 = math.tanh %1316 : vector<4x48xf32>
    %1318 = vector.extract_strided_slice %1303 {offsets = [0, 192], sizes = [4, 48], strides = [1, 1]} : vector<4x256xf32> to vector<4x48xf32>
    %1319 = arith.negf %1318 : vector<4x48xf32>
    %1320 = math.exp %1319 : vector<4x48xf32>
    %cst_227 = arith.constant 1.000000e+00 : f32
    %1321 = vector.broadcast %cst_227 : f32 to vector<4x48xf32>
    %1322 = arith.addf %1321, %1320 : vector<4x48xf32>
    %1323 = arith.divf %1321, %1322 : vector<4x48xf32>
    %1324 = arith.mulf %1315, %1238 : vector<4x48xf32>
    %1325 = arith.mulf %1309, %1317 : vector<4x48xf32>
    %1326 = arith.addf %1324, %1325 : vector<4x48xf32>
    %1327 = math.tanh %1326 : vector<4x48xf32>
    %1328 = arith.mulf %1323, %1327 : vector<4x48xf32>
    %1329 = tpu.concatenate %1328, %1269 in 1 : vector<4x48xf32>, vector<4x48xf32> -> vector<4x96xf32>
    %1330 = arith.truncf %1329 : vector<4x96xf32> to vector<4x96xbf16>
    %cst_228 = arith.constant dense<0.000000e+00> : vector<4x256xf32>
    %1331 = tpu.matmul %1330, %933, %cst_228 {dimension_numbers = #tpu.dot_dimension_numbers<[1], [0], [0], [1], [0, 0, 1, 1], [], []>} : vector<4x96xbf16>, vector<96x256xbf16>, vector<4x256xf32> -> vector<4x256xf32>
    %1332 = arith.addf %939, %1331 : vector<4x256xf32>
    %1333 = vector.extract_strided_slice %1332 {offsets = [0, 0], sizes = [4, 48], strides = [1, 1]} : vector<4x256xf32> to vector<4x48xf32>
    %1334 = arith.negf %1333 : vector<4x48xf32>
    %1335 = math.exp %1334 : vector<4x48xf32>
    %cst_229 = arith.constant 1.000000e+00 : f32
    %1336 = vector.broadcast %cst_229 : f32 to vector<4x48xf32>
    %1337 = arith.addf %1336, %1335 : vector<4x48xf32>
    %1338 = arith.divf %1336, %1337 : vector<4x48xf32>
    %1339 = vector.extract_strided_slice %1332 {offsets = [0, 64], sizes = [4, 48], strides = [1, 1]} : vector<4x256xf32> to vector<4x48xf32>
    %1340 = arith.negf %1339 : vector<4x48xf32>
    %1341 = math.exp %1340 : vector<4x48xf32>
    %cst_230 = arith.constant 1.000000e+00 : f32
    %1342 = vector.broadcast %cst_230 : f32 to vector<4x48xf32>
    %1343 = arith.addf %1342, %1341 : vector<4x48xf32>
    %1344 = arith.divf %1342, %1343 : vector<4x48xf32>
    %1345 = vector.extract_strided_slice %1332 {offsets = [0, 128], sizes = [4, 48], strides = [1, 1]} : vector<4x256xf32> to vector<4x48xf32>
    %1346 = math.tanh %1345 : vector<4x48xf32>
    %1347 = vector.extract_strided_slice %1332 {offsets = [0, 192], sizes = [4, 48], strides = [1, 1]} : vector<4x256xf32> to vector<4x48xf32>
    %1348 = arith.negf %1347 : vector<4x48xf32>
    %1349 = math.exp %1348 : vector<4x48xf32>
    %cst_231 = arith.constant 1.000000e+00 : f32
    %1350 = vector.broadcast %cst_231 : f32 to vector<4x48xf32>
    %1351 = arith.addf %1350, %1349 : vector<4x48xf32>
    %1352 = arith.divf %1350, %1351 : vector<4x48xf32>
    %1353 = arith.mulf %1344, %1267 : vector<4x48xf32>
    %1354 = arith.mulf %1338, %1346 : vector<4x48xf32>
    %1355 = arith.addf %1353, %1354 : vector<4x48xf32>
    %1356 = math.tanh %1355 : vector<4x48xf32>
    %1357 = arith.mulf %1352, %1356 : vector<4x48xf32>
    %1358 = tpu.concatenate %1357, %1298 in 1 : vector<4x48xf32>, vector<4x48xf32> -> vector<4x96xf32>
    %1359 = arith.truncf %1358 : vector<4x96xf32> to vector<4x96xbf16>
    %cst_232 = arith.constant dense<0.000000e+00> : vector<4x256xf32>
    %1360 = tpu.matmul %1359, %935, %cst_232 {dimension_numbers = #tpu.dot_dimension_numbers<[1], [0], [0], [1], [0, 0, 1, 1], [], []>} : vector<4x96xbf16>, vector<96x256xbf16>, vector<4x256xf32> -> vector<4x256xf32>
    %1361 = arith.addf %941, %1360 : vector<4x256xf32>
    %1362 = vector.extract_strided_slice %1361 {offsets = [0, 0], sizes = [4, 48], strides = [1, 1]} : vector<4x256xf32> to vector<4x48xf32>
    %1363 = arith.negf %1362 : vector<4x48xf32>
    %1364 = math.exp %1363 : vector<4x48xf32>
    %cst_233 = arith.constant 1.000000e+00 : f32
    %1365 = vector.broadcast %cst_233 : f32 to vector<4x48xf32>
    %1366 = arith.addf %1365, %1364 : vector<4x48xf32>
    %1367 = arith.divf %1365, %1366 : vector<4x48xf32>
    %1368 = vector.extract_strided_slice %1361 {offsets = [0, 64], sizes = [4, 48], strides = [1, 1]} : vector<4x256xf32> to vector<4x48xf32>
    %1369 = arith.negf %1368 : vector<4x48xf32>
    %1370 = math.exp %1369 : vector<4x48xf32>
    %cst_234 = arith.constant 1.000000e+00 : f32
    %1371 = vector.broadcast %cst_234 : f32 to vector<4x48xf32>
    %1372 = arith.addf %1371, %1370 : vector<4x48xf32>
    %1373 = arith.divf %1371, %1372 : vector<4x48xf32>
    %1374 = vector.extract_strided_slice %1361 {offsets = [0, 128], sizes = [4, 48], strides = [1, 1]} : vector<4x256xf32> to vector<4x48xf32>
    %1375 = math.tanh %1374 : vector<4x48xf32>
    %1376 = vector.extract_strided_slice %1361 {offsets = [0, 192], sizes = [4, 48], strides = [1, 1]} : vector<4x256xf32> to vector<4x48xf32>
    %1377 = arith.negf %1376 : vector<4x48xf32>
    %1378 = math.exp %1377 : vector<4x48xf32>
    %cst_235 = arith.constant 1.000000e+00 : f32
    %1379 = vector.broadcast %cst_235 : f32 to vector<4x48xf32>
    %1380 = arith.addf %1379, %1378 : vector<4x48xf32>
    %1381 = arith.divf %1379, %1380 : vector<4x48xf32>
    %1382 = arith.mulf %1373, %1296 : vector<4x48xf32>
    %1383 = arith.mulf %1367, %1375 : vector<4x48xf32>
    %1384 = arith.addf %1382, %1383 : vector<4x48xf32>
    %1385 = math.tanh %1384 : vector<4x48xf32>
    %1386 = arith.mulf %1381, %1385 : vector<4x48xf32>
    %c16 = arith.constant 16 : index
    %c0_236 = arith.constant 0 : index
    %1387 = vector.load %arg9[%c16, %c0_236] : memref<48x48xf32, #tpu.memory_space<vmem>>, vector<4x48xf32>
    tpu.vector_store %arg9[%c16, %c0_236], %1386 {strides = array<i32>} : memref<48x48xf32, #tpu.memory_space<vmem>>, vector<4x48xf32>,
    %1388 = tpu.concatenate %1386, %1328 in 1 : vector<4x48xf32>, vector<4x48xf32> -> vector<4x96xf32>
    %1389 = arith.truncf %1388 : vector<4x96xf32> to vector<4x96xbf16>
    %cst_237 = arith.constant dense<0.000000e+00> : vector<4x256xf32>
    %1390 = tpu.matmul %1389, %931, %cst_237 {dimension_numbers = #tpu.dot_dimension_numbers<[1], [0], [0], [1], [0, 0, 1, 1], [], []>} : vector<4x96xbf16>, vector<96x256xbf16>, vector<4x256xf32> -> vector<4x256xf32>
    %1391 = arith.addf %937, %1390 : vector<4x256xf32>
    %1392 = vector.extract_strided_slice %1391 {offsets = [0, 0], sizes = [4, 48], strides = [1, 1]} : vector<4x256xf32> to vector<4x48xf32>
    %1393 = arith.negf %1392 : vector<4x48xf32>
    %1394 = math.exp %1393 : vector<4x48xf32>
    %cst_238 = arith.constant 1.000000e+00 : f32
    %1395 = vector.broadcast %cst_238 : f32 to vector<4x48xf32>
    %1396 = arith.addf %1395, %1394 : vector<4x48xf32>
    %1397 = arith.divf %1395, %1396 : vector<4x48xf32>
    %1398 = vector.extract_strided_slice %1391 {offsets = [0, 64], sizes = [4, 48], strides = [1, 1]} : vector<4x256xf32> to vector<4x48xf32>
    %1399 = arith.negf %1398 : vector<4x48xf32>
    %1400 = math.exp %1399 : vector<4x48xf32>
    %cst_239 = arith.constant 1.000000e+00 : f32
    %1401 = vector.broadcast %cst_239 : f32 to vector<4x48xf32>
    %1402 = arith.addf %1401, %1400 : vector<4x48xf32>
    %1403 = arith.divf %1401, %1402 : vector<4x48xf32>
    %1404 = vector.extract_strided_slice %1391 {offsets = [0, 128], sizes = [4, 48], strides = [1, 1]} : vector<4x256xf32> to vector<4x48xf32>
    %1405 = math.tanh %1404 : vector<4x48xf32>
    %1406 = vector.extract_strided_slice %1391 {offsets = [0, 192], sizes = [4, 48], strides = [1, 1]} : vector<4x256xf32> to vector<4x48xf32>
    %1407 = arith.negf %1406 : vector<4x48xf32>
    %1408 = math.exp %1407 : vector<4x48xf32>
    %cst_240 = arith.constant 1.000000e+00 : f32
    %1409 = vector.broadcast %cst_240 : f32 to vector<4x48xf32>
    %1410 = arith.addf %1409, %1408 : vector<4x48xf32>
    %1411 = arith.divf %1409, %1410 : vector<4x48xf32>
    %1412 = arith.mulf %1403, %1326 : vector<4x48xf32>
    %1413 = arith.mulf %1397, %1405 : vector<4x48xf32>
    %1414 = arith.addf %1412, %1413 : vector<4x48xf32>
    %1415 = math.tanh %1414 : vector<4x48xf32>
    %1416 = arith.mulf %1411, %1415 : vector<4x48xf32>
    %1417 = tpu.concatenate %1416, %1357 in 1 : vector<4x48xf32>, vector<4x48xf32> -> vector<4x96xf32>
    %1418 = arith.truncf %1417 : vector<4x96xf32> to vector<4x96xbf16>
    %cst_241 = arith.constant dense<0.000000e+00> : vector<4x256xf32>
    %1419 = tpu.matmul %1418, %933, %cst_241 {dimension_numbers = #tpu.dot_dimension_numbers<[1], [0], [0], [1], [0, 0, 1, 1], [], []>} : vector<4x96xbf16>, vector<96x256xbf16>, vector<4x256xf32> -> vector<4x256xf32>
    %1420 = arith.addf %939, %1419 : vector<4x256xf32>
    %1421 = vector.extract_strided_slice %1420 {offsets = [0, 0], sizes = [4, 48], strides = [1, 1]} : vector<4x256xf32> to vector<4x48xf32>
    %1422 = arith.negf %1421 : vector<4x48xf32>
    %1423 = math.exp %1422 : vector<4x48xf32>
    %cst_242 = arith.constant 1.000000e+00 : f32
    %1424 = vector.broadcast %cst_242 : f32 to vector<4x48xf32>
    %1425 = arith.addf %1424, %1423 : vector<4x48xf32>
    %1426 = arith.divf %1424, %1425 : vector<4x48xf32>
    %1427 = vector.extract_strided_slice %1420 {offsets = [0, 64], sizes = [4, 48], strides = [1, 1]} : vector<4x256xf32> to vector<4x48xf32>
    %1428 = arith.negf %1427 : vector<4x48xf32>
    %1429 = math.exp %1428 : vector<4x48xf32>
    %cst_243 = arith.constant 1.000000e+00 : f32
    %1430 = vector.broadcast %cst_243 : f32 to vector<4x48xf32>
    %1431 = arith.addf %1430, %1429 : vector<4x48xf32>
    %1432 = arith.divf %1430, %1431 : vector<4x48xf32>
    %1433 = vector.extract_strided_slice %1420 {offsets = [0, 128], sizes = [4, 48], strides = [1, 1]} : vector<4x256xf32> to vector<4x48xf32>
    %1434 = math.tanh %1433 : vector<4x48xf32>
    %1435 = vector.extract_strided_slice %1420 {offsets = [0, 192], sizes = [4, 48], strides = [1, 1]} : vector<4x256xf32> to vector<4x48xf32>
    %1436 = arith.negf %1435 : vector<4x48xf32>
    %1437 = math.exp %1436 : vector<4x48xf32>
    %cst_244 = arith.constant 1.000000e+00 : f32
    %1438 = vector.broadcast %cst_244 : f32 to vector<4x48xf32>
    %1439 = arith.addf %1438, %1437 : vector<4x48xf32>
    %1440 = arith.divf %1438, %1439 : vector<4x48xf32>
    %1441 = arith.mulf %1432, %1355 : vector<4x48xf32>
    %1442 = arith.mulf %1426, %1434 : vector<4x48xf32>
    %1443 = arith.addf %1441, %1442 : vector<4x48xf32>
    %1444 = math.tanh %1443 : vector<4x48xf32>
    %1445 = arith.mulf %1440, %1444 : vector<4x48xf32>
    %1446 = tpu.concatenate %1445, %1386 in 1 : vector<4x48xf32>, vector<4x48xf32> -> vector<4x96xf32>
    %1447 = arith.truncf %1446 : vector<4x96xf32> to vector<4x96xbf16>
    %cst_245 = arith.constant dense<0.000000e+00> : vector<4x256xf32>
    %1448 = tpu.matmul %1447, %935, %cst_245 {dimension_numbers = #tpu.dot_dimension_numbers<[1], [0], [0], [1], [0, 0, 1, 1], [], []>} : vector<4x96xbf16>, vector<96x256xbf16>, vector<4x256xf32> -> vector<4x256xf32>
    %1449 = arith.addf %941, %1448 : vector<4x256xf32>
    %1450 = vector.extract_strided_slice %1449 {offsets = [0, 0], sizes = [4, 48], strides = [1, 1]} : vector<4x256xf32> to vector<4x48xf32>
    %1451 = arith.negf %1450 : vector<4x48xf32>
    %1452 = math.exp %1451 : vector<4x48xf32>
    %cst_246 = arith.constant 1.000000e+00 : f32
    %1453 = vector.broadcast %cst_246 : f32 to vector<4x48xf32>
    %1454 = arith.addf %1453, %1452 : vector<4x48xf32>
    %1455 = arith.divf %1453, %1454 : vector<4x48xf32>
    %1456 = vector.extract_strided_slice %1449 {offsets = [0, 64], sizes = [4, 48], strides = [1, 1]} : vector<4x256xf32> to vector<4x48xf32>
    %1457 = arith.negf %1456 : vector<4x48xf32>
    %1458 = math.exp %1457 : vector<4x48xf32>
    %cst_247 = arith.constant 1.000000e+00 : f32
    %1459 = vector.broadcast %cst_247 : f32 to vector<4x48xf32>
    %1460 = arith.addf %1459, %1458 : vector<4x48xf32>
    %1461 = arith.divf %1459, %1460 : vector<4x48xf32>
    %1462 = vector.extract_strided_slice %1449 {offsets = [0, 128], sizes = [4, 48], strides = [1, 1]} : vector<4x256xf32> to vector<4x48xf32>
    %1463 = math.tanh %1462 : vector<4x48xf32>
    %1464 = vector.extract_strided_slice %1449 {offsets = [0, 192], sizes = [4, 48], strides = [1, 1]} : vector<4x256xf32> to vector<4x48xf32>
    %1465 = arith.negf %1464 : vector<4x48xf32>
    %1466 = math.exp %1465 : vector<4x48xf32>
    %cst_248 = arith.constant 1.000000e+00 : f32
    %1467 = vector.broadcast %cst_248 : f32 to vector<4x48xf32>
    %1468 = arith.addf %1467, %1466 : vector<4x48xf32>
    %1469 = arith.divf %1467, %1468 : vector<4x48xf32>
    %1470 = arith.mulf %1461, %1384 : vector<4x48xf32>
    %1471 = arith.mulf %1455, %1463 : vector<4x48xf32>
    %1472 = arith.addf %1470, %1471 : vector<4x48xf32>
    %1473 = math.tanh %1472 : vector<4x48xf32>
    %1474 = arith.mulf %1469, %1473 : vector<4x48xf32>
    %c20 = arith.constant 20 : index
    %c0_249 = arith.constant 0 : index
    %1475 = vector.load %arg9[%c20, %c0_249] : memref<48x48xf32, #tpu.memory_space<vmem>>, vector<4x48xf32>
    tpu.vector_store %arg9[%c20, %c0_249], %1474 {strides = array<i32>} : memref<48x48xf32, #tpu.memory_space<vmem>>, vector<4x48xf32>,
    %1476 = tpu.concatenate %1474, %1416 in 1 : vector<4x48xf32>, vector<4x48xf32> -> vector<4x96xf32>
    %1477 = arith.truncf %1476 : vector<4x96xf32> to vector<4x96xbf16>
    %cst_250 = arith.constant dense<0.000000e+00> : vector<4x256xf32>
    %1478 = tpu.matmul %1477, %931, %cst_250 {dimension_numbers = #tpu.dot_dimension_numbers<[1], [0], [0], [1], [0, 0, 1, 1], [], []>} : vector<4x96xbf16>, vector<96x256xbf16>, vector<4x256xf32> -> vector<4x256xf32>
    %1479 = arith.addf %937, %1478 : vector<4x256xf32>
    %1480 = vector.extract_strided_slice %1479 {offsets = [0, 0], sizes = [4, 48], strides = [1, 1]} : vector<4x256xf32> to vector<4x48xf32>
    %1481 = arith.negf %1480 : vector<4x48xf32>
    %1482 = math.exp %1481 : vector<4x48xf32>
    %cst_251 = arith.constant 1.000000e+00 : f32
    %1483 = vector.broadcast %cst_251 : f32 to vector<4x48xf32>
    %1484 = arith.addf %1483, %1482 : vector<4x48xf32>
    %1485 = arith.divf %1483, %1484 : vector<4x48xf32>
    %1486 = vector.extract_strided_slice %1479 {offsets = [0, 64], sizes = [4, 48], strides = [1, 1]} : vector<4x256xf32> to vector<4x48xf32>
    %1487 = arith.negf %1486 : vector<4x48xf32>
    %1488 = math.exp %1487 : vector<4x48xf32>
    %cst_252 = arith.constant 1.000000e+00 : f32
    %1489 = vector.broadcast %cst_252 : f32 to vector<4x48xf32>
    %1490 = arith.addf %1489, %1488 : vector<4x48xf32>
    %1491 = arith.divf %1489, %1490 : vector<4x48xf32>
    %1492 = vector.extract_strided_slice %1479 {offsets = [0, 128], sizes = [4, 48], strides = [1, 1]} : vector<4x256xf32> to vector<4x48xf32>
    %1493 = math.tanh %1492 : vector<4x48xf32>
    %1494 = vector.extract_strided_slice %1479 {offsets = [0, 192], sizes = [4, 48], strides = [1, 1]} : vector<4x256xf32> to vector<4x48xf32>
    %1495 = arith.negf %1494 : vector<4x48xf32>
    %1496 = math.exp %1495 : vector<4x48xf32>
    %cst_253 = arith.constant 1.000000e+00 : f32
    %1497 = vector.broadcast %cst_253 : f32 to vector<4x48xf32>
    %1498 = arith.addf %1497, %1496 : vector<4x48xf32>
    %1499 = arith.divf %1497, %1498 : vector<4x48xf32>
    %1500 = arith.mulf %1491, %1414 : vector<4x48xf32>
    %1501 = arith.mulf %1485, %1493 : vector<4x48xf32>
    %1502 = arith.addf %1500, %1501 : vector<4x48xf32>
    %1503 = math.tanh %1502 : vector<4x48xf32>
    %1504 = arith.mulf %1499, %1503 : vector<4x48xf32>
    %1505 = tpu.concatenate %1504, %1445 in 1 : vector<4x48xf32>, vector<4x48xf32> -> vector<4x96xf32>
    %1506 = arith.truncf %1505 : vector<4x96xf32> to vector<4x96xbf16>
    %cst_254 = arith.constant dense<0.000000e+00> : vector<4x256xf32>
    %1507 = tpu.matmul %1506, %933, %cst_254 {dimension_numbers = #tpu.dot_dimension_numbers<[1], [0], [0], [1], [0, 0, 1, 1], [], []>} : vector<4x96xbf16>, vector<96x256xbf16>, vector<4x256xf32> -> vector<4x256xf32>
    %1508 = arith.addf %939, %1507 : vector<4x256xf32>
    %1509 = vector.extract_strided_slice %1508 {offsets = [0, 0], sizes = [4, 48], strides = [1, 1]} : vector<4x256xf32> to vector<4x48xf32>
    %1510 = arith.negf %1509 : vector<4x48xf32>
    %1511 = math.exp %1510 : vector<4x48xf32>
    %cst_255 = arith.constant 1.000000e+00 : f32
    %1512 = vector.broadcast %cst_255 : f32 to vector<4x48xf32>
    %1513 = arith.addf %1512, %1511 : vector<4x48xf32>
    %1514 = arith.divf %1512, %1513 : vector<4x48xf32>
    %1515 = vector.extract_strided_slice %1508 {offsets = [0, 64], sizes = [4, 48], strides = [1, 1]} : vector<4x256xf32> to vector<4x48xf32>
    %1516 = arith.negf %1515 : vector<4x48xf32>
    %1517 = math.exp %1516 : vector<4x48xf32>
    %cst_256 = arith.constant 1.000000e+00 : f32
    %1518 = vector.broadcast %cst_256 : f32 to vector<4x48xf32>
    %1519 = arith.addf %1518, %1517 : vector<4x48xf32>
    %1520 = arith.divf %1518, %1519 : vector<4x48xf32>
    %1521 = vector.extract_strided_slice %1508 {offsets = [0, 128], sizes = [4, 48], strides = [1, 1]} : vector<4x256xf32> to vector<4x48xf32>
    %1522 = math.tanh %1521 : vector<4x48xf32>
    %1523 = vector.extract_strided_slice %1508 {offsets = [0, 192], sizes = [4, 48], strides = [1, 1]} : vector<4x256xf32> to vector<4x48xf32>
    %1524 = arith.negf %1523 : vector<4x48xf32>
    %1525 = math.exp %1524 : vector<4x48xf32>
    %cst_257 = arith.constant 1.000000e+00 : f32
    %1526 = vector.broadcast %cst_257 : f32 to vector<4x48xf32>
    %1527 = arith.addf %1526, %1525 : vector<4x48xf32>
    %1528 = arith.divf %1526, %1527 : vector<4x48xf32>
    %1529 = arith.mulf %1520, %1443 : vector<4x48xf32>
    %1530 = arith.mulf %1514, %1522 : vector<4x48xf32>
    %1531 = arith.addf %1529, %1530 : vector<4x48xf32>
    %1532 = math.tanh %1531 : vector<4x48xf32>
    %1533 = arith.mulf %1528, %1532 : vector<4x48xf32>
    %1534 = tpu.concatenate %1533, %1474 in 1 : vector<4x48xf32>, vector<4x48xf32> -> vector<4x96xf32>
    %1535 = arith.truncf %1534 : vector<4x96xf32> to vector<4x96xbf16>
    %cst_258 = arith.constant dense<0.000000e+00> : vector<4x256xf32>
    %1536 = tpu.matmul %1535, %935, %cst_258 {dimension_numbers = #tpu.dot_dimension_numbers<[1], [0], [0], [1], [0, 0, 1, 1], [], []>} : vector<4x96xbf16>, vector<96x256xbf16>, vector<4x256xf32> -> vector<4x256xf32>
    %1537 = arith.addf %941, %1536 : vector<4x256xf32>
    %1538 = vector.extract_strided_slice %1537 {offsets = [0, 0], sizes = [4, 48], strides = [1, 1]} : vector<4x256xf32> to vector<4x48xf32>
    %1539 = arith.negf %1538 : vector<4x48xf32>
    %1540 = math.exp %1539 : vector<4x48xf32>
    %cst_259 = arith.constant 1.000000e+00 : f32
    %1541 = vector.broadcast %cst_259 : f32 to vector<4x48xf32>
    %1542 = arith.addf %1541, %1540 : vector<4x48xf32>
    %1543 = arith.divf %1541, %1542 : vector<4x48xf32>
    %1544 = vector.extract_strided_slice %1537 {offsets = [0, 64], sizes = [4, 48], strides = [1, 1]} : vector<4x256xf32> to vector<4x48xf32>
    %1545 = arith.negf %1544 : vector<4x48xf32>
    %1546 = math.exp %1545 : vector<4x48xf32>
    %cst_260 = arith.constant 1.000000e+00 : f32
    %1547 = vector.broadcast %cst_260 : f32 to vector<4x48xf32>
    %1548 = arith.addf %1547, %1546 : vector<4x48xf32>
    %1549 = arith.divf %1547, %1548 : vector<4x48xf32>
    %1550 = vector.extract_strided_slice %1537 {offsets = [0, 128], sizes = [4, 48], strides = [1, 1]} : vector<4x256xf32> to vector<4x48xf32>
    %1551 = math.tanh %1550 : vector<4x48xf32>
    %1552 = vector.extract_strided_slice %1537 {offsets = [0, 192], sizes = [4, 48], strides = [1, 1]} : vector<4x256xf32> to vector<4x48xf32>
    %1553 = arith.negf %1552 : vector<4x48xf32>
    %1554 = math.exp %1553 : vector<4x48xf32>
    %cst_261 = arith.constant 1.000000e+00 : f32
    %1555 = vector.broadcast %cst_261 : f32 to vector<4x48xf32>
    %1556 = arith.addf %1555, %1554 : vector<4x48xf32>
    %1557 = arith.divf %1555, %1556 : vector<4x48xf32>
    %1558 = arith.mulf %1549, %1472 : vector<4x48xf32>
    %1559 = arith.mulf %1543, %1551 : vector<4x48xf32>
    %1560 = arith.addf %1558, %1559 : vector<4x48xf32>
    %1561 = math.tanh %1560 : vector<4x48xf32>
    %1562 = arith.mulf %1557, %1561 : vector<4x48xf32>
    %c24 = arith.constant 24 : index
    %c0_262 = arith.constant 0 : index
    %1563 = vector.load %arg9[%c24, %c0_262] : memref<48x48xf32, #tpu.memory_space<vmem>>, vector<4x48xf32>
    tpu.vector_store %arg9[%c24, %c0_262], %1562 {strides = array<i32>} : memref<48x48xf32, #tpu.memory_space<vmem>>, vector<4x48xf32>,
    %1564 = tpu.concatenate %1562, %1504 in 1 : vector<4x48xf32>, vector<4x48xf32> -> vector<4x96xf32>
    %1565 = arith.truncf %1564 : vector<4x96xf32> to vector<4x96xbf16>
    %cst_263 = arith.constant dense<0.000000e+00> : vector<4x256xf32>
    %1566 = tpu.matmul %1565, %931, %cst_263 {dimension_numbers = #tpu.dot_dimension_numbers<[1], [0], [0], [1], [0, 0, 1, 1], [], []>} : vector<4x96xbf16>, vector<96x256xbf16>, vector<4x256xf32> -> vector<4x256xf32>
    %1567 = arith.addf %937, %1566 : vector<4x256xf32>
    %1568 = vector.extract_strided_slice %1567 {offsets = [0, 0], sizes = [4, 48], strides = [1, 1]} : vector<4x256xf32> to vector<4x48xf32>
    %1569 = arith.negf %1568 : vector<4x48xf32>
    %1570 = math.exp %1569 : vector<4x48xf32>
    %cst_264 = arith.constant 1.000000e+00 : f32
    %1571 = vector.broadcast %cst_264 : f32 to vector<4x48xf32>
    %1572 = arith.addf %1571, %1570 : vector<4x48xf32>
    %1573 = arith.divf %1571, %1572 : vector<4x48xf32>
    %1574 = vector.extract_strided_slice %1567 {offsets = [0, 64], sizes = [4, 48], strides = [1, 1]} : vector<4x256xf32> to vector<4x48xf32>
    %1575 = arith.negf %1574 : vector<4x48xf32>
    %1576 = math.exp %1575 : vector<4x48xf32>
    %cst_265 = arith.constant 1.000000e+00 : f32
    %1577 = vector.broadcast %cst_265 : f32 to vector<4x48xf32>
    %1578 = arith.addf %1577, %1576 : vector<4x48xf32>
    %1579 = arith.divf %1577, %1578 : vector<4x48xf32>
    %1580 = vector.extract_strided_slice %1567 {offsets = [0, 128], sizes = [4, 48], strides = [1, 1]} : vector<4x256xf32> to vector<4x48xf32>
    %1581 = math.tanh %1580 : vector<4x48xf32>
    %1582 = vector.extract_strided_slice %1567 {offsets = [0, 192], sizes = [4, 48], strides = [1, 1]} : vector<4x256xf32> to vector<4x48xf32>
    %1583 = arith.negf %1582 : vector<4x48xf32>
    %1584 = math.exp %1583 : vector<4x48xf32>
    %cst_266 = arith.constant 1.000000e+00 : f32
    %1585 = vector.broadcast %cst_266 : f32 to vector<4x48xf32>
    %1586 = arith.addf %1585, %1584 : vector<4x48xf32>
    %1587 = arith.divf %1585, %1586 : vector<4x48xf32>
    %1588 = arith.mulf %1579, %1502 : vector<4x48xf32>
    %1589 = arith.mulf %1573, %1581 : vector<4x48xf32>
    %1590 = arith.addf %1588, %1589 : vector<4x48xf32>
    %1591 = math.tanh %1590 : vector<4x48xf32>
    %1592 = arith.mulf %1587, %1591 : vector<4x48xf32>
    %1593 = tpu.concatenate %1592, %1533 in 1 : vector<4x48xf32>, vector<4x48xf32> -> vector<4x96xf32>
    %1594 = arith.truncf %1593 : vector<4x96xf32> to vector<4x96xbf16>
    %cst_267 = arith.constant dense<0.000000e+00> : vector<4x256xf32>
    %1595 = tpu.matmul %1594, %933, %cst_267 {dimension_numbers = #tpu.dot_dimension_numbers<[1], [0], [0], [1], [0, 0, 1, 1], [], []>} : vector<4x96xbf16>, vector<96x256xbf16>, vector<4x256xf32> -> vector<4x256xf32>
    %1596 = arith.addf %939, %1595 : vector<4x256xf32>
    %1597 = vector.extract_strided_slice %1596 {offsets = [0, 0], sizes = [4, 48], strides = [1, 1]} : vector<4x256xf32> to vector<4x48xf32>
    %1598 = arith.negf %1597 : vector<4x48xf32>
    %1599 = math.exp %1598 : vector<4x48xf32>
    %cst_268 = arith.constant 1.000000e+00 : f32
    %1600 = vector.broadcast %cst_268 : f32 to vector<4x48xf32>
    %1601 = arith.addf %1600, %1599 : vector<4x48xf32>
    %1602 = arith.divf %1600, %1601 : vector<4x48xf32>
    %1603 = vector.extract_strided_slice %1596 {offsets = [0, 64], sizes = [4, 48], strides = [1, 1]} : vector<4x256xf32> to vector<4x48xf32>
    %1604 = arith.negf %1603 : vector<4x48xf32>
    %1605 = math.exp %1604 : vector<4x48xf32>
    %cst_269 = arith.constant 1.000000e+00 : f32
    %1606 = vector.broadcast %cst_269 : f32 to vector<4x48xf32>
    %1607 = arith.addf %1606, %1605 : vector<4x48xf32>
    %1608 = arith.divf %1606, %1607 : vector<4x48xf32>
    %1609 = vector.extract_strided_slice %1596 {offsets = [0, 128], sizes = [4, 48], strides = [1, 1]} : vector<4x256xf32> to vector<4x48xf32>
    %1610 = math.tanh %1609 : vector<4x48xf32>
    %1611 = vector.extract_strided_slice %1596 {offsets = [0, 192], sizes = [4, 48], strides = [1, 1]} : vector<4x256xf32> to vector<4x48xf32>
    %1612 = arith.negf %1611 : vector<4x48xf32>
    %1613 = math.exp %1612 : vector<4x48xf32>
    %cst_270 = arith.constant 1.000000e+00 : f32
    %1614 = vector.broadcast %cst_270 : f32 to vector<4x48xf32>
    %1615 = arith.addf %1614, %1613 : vector<4x48xf32>
    %1616 = arith.divf %1614, %1615 : vector<4x48xf32>
    %1617 = arith.mulf %1608, %1531 : vector<4x48xf32>
    %1618 = arith.mulf %1602, %1610 : vector<4x48xf32>
    %1619 = arith.addf %1617, %1618 : vector<4x48xf32>
    %1620 = math.tanh %1619 : vector<4x48xf32>
    %1621 = arith.mulf %1616, %1620 : vector<4x48xf32>
    %1622 = tpu.concatenate %1621, %1562 in 1 : vector<4x48xf32>, vector<4x48xf32> -> vector<4x96xf32>
    %1623 = arith.truncf %1622 : vector<4x96xf32> to vector<4x96xbf16>
    %cst_271 = arith.constant dense<0.000000e+00> : vector<4x256xf32>
    %1624 = tpu.matmul %1623, %935, %cst_271 {dimension_numbers = #tpu.dot_dimension_numbers<[1], [0], [0], [1], [0, 0, 1, 1], [], []>} : vector<4x96xbf16>, vector<96x256xbf16>, vector<4x256xf32> -> vector<4x256xf32>
    %1625 = arith.addf %941, %1624 : vector<4x256xf32>
    %1626 = vector.extract_strided_slice %1625 {offsets = [0, 0], sizes = [4, 48], strides = [1, 1]} : vector<4x256xf32> to vector<4x48xf32>
    %1627 = arith.negf %1626 : vector<4x48xf32>
    %1628 = math.exp %1627 : vector<4x48xf32>
    %cst_272 = arith.constant 1.000000e+00 : f32
    %1629 = vector.broadcast %cst_272 : f32 to vector<4x48xf32>
    %1630 = arith.addf %1629, %1628 : vector<4x48xf32>
    %1631 = arith.divf %1629, %1630 : vector<4x48xf32>
    %1632 = vector.extract_strided_slice %1625 {offsets = [0, 64], sizes = [4, 48], strides = [1, 1]} : vector<4x256xf32> to vector<4x48xf32>
    %1633 = arith.negf %1632 : vector<4x48xf32>
    %1634 = math.exp %1633 : vector<4x48xf32>
    %cst_273 = arith.constant 1.000000e+00 : f32
    %1635 = vector.broadcast %cst_273 : f32 to vector<4x48xf32>
    %1636 = arith.addf %1635, %1634 : vector<4x48xf32>
    %1637 = arith.divf %1635, %1636 : vector<4x48xf32>
    %1638 = vector.extract_strided_slice %1625 {offsets = [0, 128], sizes = [4, 48], strides = [1, 1]} : vector<4x256xf32> to vector<4x48xf32>
    %1639 = math.tanh %1638 : vector<4x48xf32>
    %1640 = vector.extract_strided_slice %1625 {offsets = [0, 192], sizes = [4, 48], strides = [1, 1]} : vector<4x256xf32> to vector<4x48xf32>
    %1641 = arith.negf %1640 : vector<4x48xf32>
    %1642 = math.exp %1641 : vector<4x48xf32>
    %cst_274 = arith.constant 1.000000e+00 : f32
    %1643 = vector.broadcast %cst_274 : f32 to vector<4x48xf32>
    %1644 = arith.addf %1643, %1642 : vector<4x48xf32>
    %1645 = arith.divf %1643, %1644 : vector<4x48xf32>
    %1646 = arith.mulf %1637, %1560 : vector<4x48xf32>
    %1647 = arith.mulf %1631, %1639 : vector<4x48xf32>
    %1648 = arith.addf %1646, %1647 : vector<4x48xf32>
    %1649 = math.tanh %1648 : vector<4x48xf32>
    %1650 = arith.mulf %1645, %1649 : vector<4x48xf32>
    %c28 = arith.constant 28 : index
    %c0_275 = arith.constant 0 : index
    %1651 = vector.load %arg9[%c28, %c0_275] : memref<48x48xf32, #tpu.memory_space<vmem>>, vector<4x48xf32>
    tpu.vector_store %arg9[%c28, %c0_275], %1650 {strides = array<i32>} : memref<48x48xf32, #tpu.memory_space<vmem>>, vector<4x48xf32>,
    %1652 = tpu.concatenate %1650, %1592 in 1 : vector<4x48xf32>, vector<4x48xf32> -> vector<4x96xf32>
    %1653 = arith.truncf %1652 : vector<4x96xf32> to vector<4x96xbf16>
    %cst_276 = arith.constant dense<0.000000e+00> : vector<4x256xf32>
    %1654 = tpu.matmul %1653, %931, %cst_276 {dimension_numbers = #tpu.dot_dimension_numbers<[1], [0], [0], [1], [0, 0, 1, 1], [], []>} : vector<4x96xbf16>, vector<96x256xbf16>, vector<4x256xf32> -> vector<4x256xf32>
    %1655 = arith.addf %937, %1654 : vector<4x256xf32>
    %1656 = vector.extract_strided_slice %1655 {offsets = [0, 0], sizes = [4, 48], strides = [1, 1]} : vector<4x256xf32> to vector<4x48xf32>
    %1657 = arith.negf %1656 : vector<4x48xf32>
    %1658 = math.exp %1657 : vector<4x48xf32>
    %cst_277 = arith.constant 1.000000e+00 : f32
    %1659 = vector.broadcast %cst_277 : f32 to vector<4x48xf32>
    %1660 = arith.addf %1659, %1658 : vector<4x48xf32>
    %1661 = arith.divf %1659, %1660 : vector<4x48xf32>
    %1662 = vector.extract_strided_slice %1655 {offsets = [0, 64], sizes = [4, 48], strides = [1, 1]} : vector<4x256xf32> to vector<4x48xf32>
    %1663 = arith.negf %1662 : vector<4x48xf32>
    %1664 = math.exp %1663 : vector<4x48xf32>
    %cst_278 = arith.constant 1.000000e+00 : f32
    %1665 = vector.broadcast %cst_278 : f32 to vector<4x48xf32>
    %1666 = arith.addf %1665, %1664 : vector<4x48xf32>
    %1667 = arith.divf %1665, %1666 : vector<4x48xf32>
    %1668 = vector.extract_strided_slice %1655 {offsets = [0, 128], sizes = [4, 48], strides = [1, 1]} : vector<4x256xf32> to vector<4x48xf32>
    %1669 = math.tanh %1668 : vector<4x48xf32>
    %1670 = vector.extract_strided_slice %1655 {offsets = [0, 192], sizes = [4, 48], strides = [1, 1]} : vector<4x256xf32> to vector<4x48xf32>
    %1671 = arith.negf %1670 : vector<4x48xf32>
    %1672 = math.exp %1671 : vector<4x48xf32>
    %cst_279 = arith.constant 1.000000e+00 : f32
    %1673 = vector.broadcast %cst_279 : f32 to vector<4x48xf32>
    %1674 = arith.addf %1673, %1672 : vector<4x48xf32>
    %1675 = arith.divf %1673, %1674 : vector<4x48xf32>
    %1676 = arith.mulf %1667, %1590 : vector<4x48xf32>
    %1677 = arith.mulf %1661, %1669 : vector<4x48xf32>
    %1678 = arith.addf %1676, %1677 : vector<4x48xf32>
    %1679 = math.tanh %1678 : vector<4x48xf32>
    %1680 = arith.mulf %1675, %1679 : vector<4x48xf32>
    %1681 = tpu.concatenate %1680, %1621 in 1 : vector<4x48xf32>, vector<4x48xf32> -> vector<4x96xf32>
    %1682 = arith.truncf %1681 : vector<4x96xf32> to vector<4x96xbf16>
    %cst_280 = arith.constant dense<0.000000e+00> : vector<4x256xf32>
    %1683 = tpu.matmul %1682, %933, %cst_280 {dimension_numbers = #tpu.dot_dimension_numbers<[1], [0], [0], [1], [0, 0, 1, 1], [], []>} : vector<4x96xbf16>, vector<96x256xbf16>, vector<4x256xf32> -> vector<4x256xf32>
    %1684 = arith.addf %939, %1683 : vector<4x256xf32>
    %1685 = vector.extract_strided_slice %1684 {offsets = [0, 0], sizes = [4, 48], strides = [1, 1]} : vector<4x256xf32> to vector<4x48xf32>
    %1686 = arith.negf %1685 : vector<4x48xf32>
    %1687 = math.exp %1686 : vector<4x48xf32>
    %cst_281 = arith.constant 1.000000e+00 : f32
    %1688 = vector.broadcast %cst_281 : f32 to vector<4x48xf32>
    %1689 = arith.addf %1688, %1687 : vector<4x48xf32>
    %1690 = arith.divf %1688, %1689 : vector<4x48xf32>
    %1691 = vector.extract_strided_slice %1684 {offsets = [0, 64], sizes = [4, 48], strides = [1, 1]} : vector<4x256xf32> to vector<4x48xf32>
    %1692 = arith.negf %1691 : vector<4x48xf32>
    %1693 = math.exp %1692 : vector<4x48xf32>
    %cst_282 = arith.constant 1.000000e+00 : f32
    %1694 = vector.broadcast %cst_282 : f32 to vector<4x48xf32>
    %1695 = arith.addf %1694, %1693 : vector<4x48xf32>
    %1696 = arith.divf %1694, %1695 : vector<4x48xf32>
    %1697 = vector.extract_strided_slice %1684 {offsets = [0, 128], sizes = [4, 48], strides = [1, 1]} : vector<4x256xf32> to vector<4x48xf32>
    %1698 = math.tanh %1697 : vector<4x48xf32>
    %1699 = vector.extract_strided_slice %1684 {offsets = [0, 192], sizes = [4, 48], strides = [1, 1]} : vector<4x256xf32> to vector<4x48xf32>
    %1700 = arith.negf %1699 : vector<4x48xf32>
    %1701 = math.exp %1700 : vector<4x48xf32>
    %cst_283 = arith.constant 1.000000e+00 : f32
    %1702 = vector.broadcast %cst_283 : f32 to vector<4x48xf32>
    %1703 = arith.addf %1702, %1701 : vector<4x48xf32>
    %1704 = arith.divf %1702, %1703 : vector<4x48xf32>
    %1705 = arith.mulf %1696, %1619 : vector<4x48xf32>
    %1706 = arith.mulf %1690, %1698 : vector<4x48xf32>
    %1707 = arith.addf %1705, %1706 : vector<4x48xf32>
    %1708 = math.tanh %1707 : vector<4x48xf32>
    %1709 = arith.mulf %1704, %1708 : vector<4x48xf32>
    %1710 = tpu.concatenate %1709, %1650 in 1 : vector<4x48xf32>, vector<4x48xf32> -> vector<4x96xf32>
    %1711 = arith.truncf %1710 : vector<4x96xf32> to vector<4x96xbf16>
    %cst_284 = arith.constant dense<0.000000e+00> : vector<4x256xf32>
    %1712 = tpu.matmul %1711, %935, %cst_284 {dimension_numbers = #tpu.dot_dimension_numbers<[1], [0], [0], [1], [0, 0, 1, 1], [], []>} : vector<4x96xbf16>, vector<96x256xbf16>, vector<4x256xf32> -> vector<4x256xf32>
    %1713 = arith.addf %941, %1712 : vector<4x256xf32>
    %1714 = vector.extract_strided_slice %1713 {offsets = [0, 0], sizes = [4, 48], strides = [1, 1]} : vector<4x256xf32> to vector<4x48xf32>
    %1715 = arith.negf %1714 : vector<4x48xf32>
    %1716 = math.exp %1715 : vector<4x48xf32>
    %cst_285 = arith.constant 1.000000e+00 : f32
    %1717 = vector.broadcast %cst_285 : f32 to vector<4x48xf32>
    %1718 = arith.addf %1717, %1716 : vector<4x48xf32>
    %1719 = arith.divf %1717, %1718 : vector<4x48xf32>
    %1720 = vector.extract_strided_slice %1713 {offsets = [0, 64], sizes = [4, 48], strides = [1, 1]} : vector<4x256xf32> to vector<4x48xf32>
    %1721 = arith.negf %1720 : vector<4x48xf32>
    %1722 = math.exp %1721 : vector<4x48xf32>
    %cst_286 = arith.constant 1.000000e+00 : f32
    %1723 = vector.broadcast %cst_286 : f32 to vector<4x48xf32>
    %1724 = arith.addf %1723, %1722 : vector<4x48xf32>
    %1725 = arith.divf %1723, %1724 : vector<4x48xf32>
    %1726 = vector.extract_strided_slice %1713 {offsets = [0, 128], sizes = [4, 48], strides = [1, 1]} : vector<4x256xf32> to vector<4x48xf32>
    %1727 = math.tanh %1726 : vector<4x48xf32>
    %1728 = vector.extract_strided_slice %1713 {offsets = [0, 192], sizes = [4, 48], strides = [1, 1]} : vector<4x256xf32> to vector<4x48xf32>
    %1729 = arith.negf %1728 : vector<4x48xf32>
    %1730 = math.exp %1729 : vector<4x48xf32>
    %cst_287 = arith.constant 1.000000e+00 : f32
    %1731 = vector.broadcast %cst_287 : f32 to vector<4x48xf32>
    %1732 = arith.addf %1731, %1730 : vector<4x48xf32>
    %1733 = arith.divf %1731, %1732 : vector<4x48xf32>
    %1734 = arith.mulf %1725, %1648 : vector<4x48xf32>
    %1735 = arith.mulf %1719, %1727 : vector<4x48xf32>
    %1736 = arith.addf %1734, %1735 : vector<4x48xf32>
    %1737 = math.tanh %1736 : vector<4x48xf32>
    %1738 = arith.mulf %1733, %1737 : vector<4x48xf32>
    %c32 = arith.constant 32 : index
    %c0_288 = arith.constant 0 : index
    %1739 = vector.load %arg9[%c32, %c0_288] : memref<48x48xf32, #tpu.memory_space<vmem>>, vector<4x48xf32>
    tpu.vector_store %arg9[%c32, %c0_288], %1738 {strides = array<i32>} : memref<48x48xf32, #tpu.memory_space<vmem>>, vector<4x48xf32>,
    %1740 = tpu.concatenate %1738, %1680 in 1 : vector<4x48xf32>, vector<4x48xf32> -> vector<4x96xf32>
    %1741 = arith.truncf %1740 : vector<4x96xf32> to vector<4x96xbf16>
    %cst_289 = arith.constant dense<0.000000e+00> : vector<4x256xf32>
    %1742 = tpu.matmul %1741, %931, %cst_289 {dimension_numbers = #tpu.dot_dimension_numbers<[1], [0], [0], [1], [0, 0, 1, 1], [], []>} : vector<4x96xbf16>, vector<96x256xbf16>, vector<4x256xf32> -> vector<4x256xf32>
    %1743 = arith.addf %937, %1742 : vector<4x256xf32>
    %1744 = vector.extract_strided_slice %1743 {offsets = [0, 0], sizes = [4, 48], strides = [1, 1]} : vector<4x256xf32> to vector<4x48xf32>
    %1745 = arith.negf %1744 : vector<4x48xf32>
    %1746 = math.exp %1745 : vector<4x48xf32>
    %cst_290 = arith.constant 1.000000e+00 : f32
    %1747 = vector.broadcast %cst_290 : f32 to vector<4x48xf32>
    %1748 = arith.addf %1747, %1746 : vector<4x48xf32>
    %1749 = arith.divf %1747, %1748 : vector<4x48xf32>
    %1750 = vector.extract_strided_slice %1743 {offsets = [0, 64], sizes = [4, 48], strides = [1, 1]} : vector<4x256xf32> to vector<4x48xf32>
    %1751 = arith.negf %1750 : vector<4x48xf32>
    %1752 = math.exp %1751 : vector<4x48xf32>
    %cst_291 = arith.constant 1.000000e+00 : f32
    %1753 = vector.broadcast %cst_291 : f32 to vector<4x48xf32>
    %1754 = arith.addf %1753, %1752 : vector<4x48xf32>
    %1755 = arith.divf %1753, %1754 : vector<4x48xf32>
    %1756 = vector.extract_strided_slice %1743 {offsets = [0, 128], sizes = [4, 48], strides = [1, 1]} : vector<4x256xf32> to vector<4x48xf32>
    %1757 = math.tanh %1756 : vector<4x48xf32>
    %1758 = vector.extract_strided_slice %1743 {offsets = [0, 192], sizes = [4, 48], strides = [1, 1]} : vector<4x256xf32> to vector<4x48xf32>
    %1759 = arith.negf %1758 : vector<4x48xf32>
    %1760 = math.exp %1759 : vector<4x48xf32>
    %cst_292 = arith.constant 1.000000e+00 : f32
    %1761 = vector.broadcast %cst_292 : f32 to vector<4x48xf32>
    %1762 = arith.addf %1761, %1760 : vector<4x48xf32>
    %1763 = arith.divf %1761, %1762 : vector<4x48xf32>
    %1764 = arith.mulf %1755, %1678 : vector<4x48xf32>
    %1765 = arith.mulf %1749, %1757 : vector<4x48xf32>
    %1766 = arith.addf %1764, %1765 : vector<4x48xf32>
    %1767 = math.tanh %1766 : vector<4x48xf32>
    %1768 = arith.mulf %1763, %1767 : vector<4x48xf32>
    %1769 = tpu.concatenate %1768, %1709 in 1 : vector<4x48xf32>, vector<4x48xf32> -> vector<4x96xf32>
    %1770 = arith.truncf %1769 : vector<4x96xf32> to vector<4x96xbf16>
    %cst_293 = arith.constant dense<0.000000e+00> : vector<4x256xf32>
    %1771 = tpu.matmul %1770, %933, %cst_293 {dimension_numbers = #tpu.dot_dimension_numbers<[1], [0], [0], [1], [0, 0, 1, 1], [], []>} : vector<4x96xbf16>, vector<96x256xbf16>, vector<4x256xf32> -> vector<4x256xf32>
    %1772 = arith.addf %939, %1771 : vector<4x256xf32>
    %1773 = vector.extract_strided_slice %1772 {offsets = [0, 0], sizes = [4, 48], strides = [1, 1]} : vector<4x256xf32> to vector<4x48xf32>
    %1774 = arith.negf %1773 : vector<4x48xf32>
    %1775 = math.exp %1774 : vector<4x48xf32>
    %cst_294 = arith.constant 1.000000e+00 : f32
    %1776 = vector.broadcast %cst_294 : f32 to vector<4x48xf32>
    %1777 = arith.addf %1776, %1775 : vector<4x48xf32>
    %1778 = arith.divf %1776, %1777 : vector<4x48xf32>
    %1779 = vector.extract_strided_slice %1772 {offsets = [0, 64], sizes = [4, 48], strides = [1, 1]} : vector<4x256xf32> to vector<4x48xf32>
    %1780 = arith.negf %1779 : vector<4x48xf32>
    %1781 = math.exp %1780 : vector<4x48xf32>
    %cst_295 = arith.constant 1.000000e+00 : f32
    %1782 = vector.broadcast %cst_295 : f32 to vector<4x48xf32>
    %1783 = arith.addf %1782, %1781 : vector<4x48xf32>
    %1784 = arith.divf %1782, %1783 : vector<4x48xf32>
    %1785 = vector.extract_strided_slice %1772 {offsets = [0, 128], sizes = [4, 48], strides = [1, 1]} : vector<4x256xf32> to vector<4x48xf32>
    %1786 = math.tanh %1785 : vector<4x48xf32>
    %1787 = vector.extract_strided_slice %1772 {offsets = [0, 192], sizes = [4, 48], strides = [1, 1]} : vector<4x256xf32> to vector<4x48xf32>
    %1788 = arith.negf %1787 : vector<4x48xf32>
    %1789 = math.exp %1788 : vector<4x48xf32>
    %cst_296 = arith.constant 1.000000e+00 : f32
    %1790 = vector.broadcast %cst_296 : f32 to vector<4x48xf32>
    %1791 = arith.addf %1790, %1789 : vector<4x48xf32>
    %1792 = arith.divf %1790, %1791 : vector<4x48xf32>
    %1793 = arith.mulf %1784, %1707 : vector<4x48xf32>
    %1794 = arith.mulf %1778, %1786 : vector<4x48xf32>
    %1795 = arith.addf %1793, %1794 : vector<4x48xf32>
    %1796 = math.tanh %1795 : vector<4x48xf32>
    %1797 = arith.mulf %1792, %1796 : vector<4x48xf32>
    %1798 = tpu.concatenate %1797, %1738 in 1 : vector<4x48xf32>, vector<4x48xf32> -> vector<4x96xf32>
    %1799 = arith.truncf %1798 : vector<4x96xf32> to vector<4x96xbf16>
    %cst_297 = arith.constant dense<0.000000e+00> : vector<4x256xf32>
    %1800 = tpu.matmul %1799, %935, %cst_297 {dimension_numbers = #tpu.dot_dimension_numbers<[1], [0], [0], [1], [0, 0, 1, 1], [], []>} : vector<4x96xbf16>, vector<96x256xbf16>, vector<4x256xf32> -> vector<4x256xf32>
    %1801 = arith.addf %941, %1800 : vector<4x256xf32>
    %1802 = vector.extract_strided_slice %1801 {offsets = [0, 0], sizes = [4, 48], strides = [1, 1]} : vector<4x256xf32> to vector<4x48xf32>
    %1803 = arith.negf %1802 : vector<4x48xf32>
    %1804 = math.exp %1803 : vector<4x48xf32>
    %cst_298 = arith.constant 1.000000e+00 : f32
    %1805 = vector.broadcast %cst_298 : f32 to vector<4x48xf32>
    %1806 = arith.addf %1805, %1804 : vector<4x48xf32>
    %1807 = arith.divf %1805, %1806 : vector<4x48xf32>
    %1808 = vector.extract_strided_slice %1801 {offsets = [0, 64], sizes = [4, 48], strides = [1, 1]} : vector<4x256xf32> to vector<4x48xf32>
    %1809 = arith.negf %1808 : vector<4x48xf32>
    %1810 = math.exp %1809 : vector<4x48xf32>
    %cst_299 = arith.constant 1.000000e+00 : f32
    %1811 = vector.broadcast %cst_299 : f32 to vector<4x48xf32>
    %1812 = arith.addf %1811, %1810 : vector<4x48xf32>
    %1813 = arith.divf %1811, %1812 : vector<4x48xf32>
    %1814 = vector.extract_strided_slice %1801 {offsets = [0, 128], sizes = [4, 48], strides = [1, 1]} : vector<4x256xf32> to vector<4x48xf32>
    %1815 = math.tanh %1814 : vector<4x48xf32>
    %1816 = vector.extract_strided_slice %1801 {offsets = [0, 192], sizes = [4, 48], strides = [1, 1]} : vector<4x256xf32> to vector<4x48xf32>
    %1817 = arith.negf %1816 : vector<4x48xf32>
    %1818 = math.exp %1817 : vector<4x48xf32>
    %cst_300 = arith.constant 1.000000e+00 : f32
    %1819 = vector.broadcast %cst_300 : f32 to vector<4x48xf32>
    %1820 = arith.addf %1819, %1818 : vector<4x48xf32>
    %1821 = arith.divf %1819, %1820 : vector<4x48xf32>
    %1822 = arith.mulf %1813, %1736 : vector<4x48xf32>
    %1823 = arith.mulf %1807, %1815 : vector<4x48xf32>
    %1824 = arith.addf %1822, %1823 : vector<4x48xf32>
    %1825 = math.tanh %1824 : vector<4x48xf32>
    %1826 = arith.mulf %1821, %1825 : vector<4x48xf32>
    %c36 = arith.constant 36 : index
    %c0_301 = arith.constant 0 : index
    %1827 = vector.load %arg9[%c36, %c0_301] : memref<48x48xf32, #tpu.memory_space<vmem>>, vector<4x48xf32>
    tpu.vector_store %arg9[%c36, %c0_301], %1826 {strides = array<i32>} : memref<48x48xf32, #tpu.memory_space<vmem>>, vector<4x48xf32>,
    %1828 = tpu.concatenate %1826, %1768 in 1 : vector<4x48xf32>, vector<4x48xf32> -> vector<4x96xf32>
    %1829 = arith.truncf %1828 : vector<4x96xf32> to vector<4x96xbf16>
    %cst_302 = arith.constant dense<0.000000e+00> : vector<4x256xf32>
    %1830 = tpu.matmul %1829, %931, %cst_302 {dimension_numbers = #tpu.dot_dimension_numbers<[1], [0], [0], [1], [0, 0, 1, 1], [], []>} : vector<4x96xbf16>, vector<96x256xbf16>, vector<4x256xf32> -> vector<4x256xf32>
    %1831 = arith.addf %937, %1830 : vector<4x256xf32>
    %1832 = vector.extract_strided_slice %1831 {offsets = [0, 0], sizes = [4, 48], strides = [1, 1]} : vector<4x256xf32> to vector<4x48xf32>
    %1833 = arith.negf %1832 : vector<4x48xf32>
    %1834 = math.exp %1833 : vector<4x48xf32>
    %cst_303 = arith.constant 1.000000e+00 : f32
    %1835 = vector.broadcast %cst_303 : f32 to vector<4x48xf32>
    %1836 = arith.addf %1835, %1834 : vector<4x48xf32>
    %1837 = arith.divf %1835, %1836 : vector<4x48xf32>
    %1838 = vector.extract_strided_slice %1831 {offsets = [0, 64], sizes = [4, 48], strides = [1, 1]} : vector<4x256xf32> to vector<4x48xf32>
    %1839 = arith.negf %1838 : vector<4x48xf32>
    %1840 = math.exp %1839 : vector<4x48xf32>
    %cst_304 = arith.constant 1.000000e+00 : f32
    %1841 = vector.broadcast %cst_304 : f32 to vector<4x48xf32>
    %1842 = arith.addf %1841, %1840 : vector<4x48xf32>
    %1843 = arith.divf %1841, %1842 : vector<4x48xf32>
    %1844 = vector.extract_strided_slice %1831 {offsets = [0, 128], sizes = [4, 48], strides = [1, 1]} : vector<4x256xf32> to vector<4x48xf32>
    %1845 = math.tanh %1844 : vector<4x48xf32>
    %1846 = vector.extract_strided_slice %1831 {offsets = [0, 192], sizes = [4, 48], strides = [1, 1]} : vector<4x256xf32> to vector<4x48xf32>
    %1847 = arith.negf %1846 : vector<4x48xf32>
    %1848 = math.exp %1847 : vector<4x48xf32>
    %cst_305 = arith.constant 1.000000e+00 : f32
    %1849 = vector.broadcast %cst_305 : f32 to vector<4x48xf32>
    %1850 = arith.addf %1849, %1848 : vector<4x48xf32>
    %1851 = arith.divf %1849, %1850 : vector<4x48xf32>
    %1852 = arith.mulf %1843, %1766 : vector<4x48xf32>
    %1853 = arith.mulf %1837, %1845 : vector<4x48xf32>
    %1854 = arith.addf %1852, %1853 : vector<4x48xf32>
    %1855 = math.tanh %1854 : vector<4x48xf32>
    %1856 = arith.mulf %1851, %1855 : vector<4x48xf32>
    %1857 = tpu.concatenate %1856, %1797 in 1 : vector<4x48xf32>, vector<4x48xf32> -> vector<4x96xf32>
    %1858 = arith.truncf %1857 : vector<4x96xf32> to vector<4x96xbf16>
    %cst_306 = arith.constant dense<0.000000e+00> : vector<4x256xf32>
    %1859 = tpu.matmul %1858, %933, %cst_306 {dimension_numbers = #tpu.dot_dimension_numbers<[1], [0], [0], [1], [0, 0, 1, 1], [], []>} : vector<4x96xbf16>, vector<96x256xbf16>, vector<4x256xf32> -> vector<4x256xf32>
    %1860 = arith.addf %939, %1859 : vector<4x256xf32>
    %1861 = vector.extract_strided_slice %1860 {offsets = [0, 0], sizes = [4, 48], strides = [1, 1]} : vector<4x256xf32> to vector<4x48xf32>
    %1862 = arith.negf %1861 : vector<4x48xf32>
    %1863 = math.exp %1862 : vector<4x48xf32>
    %cst_307 = arith.constant 1.000000e+00 : f32
    %1864 = vector.broadcast %cst_307 : f32 to vector<4x48xf32>
    %1865 = arith.addf %1864, %1863 : vector<4x48xf32>
    %1866 = arith.divf %1864, %1865 : vector<4x48xf32>
    %1867 = vector.extract_strided_slice %1860 {offsets = [0, 64], sizes = [4, 48], strides = [1, 1]} : vector<4x256xf32> to vector<4x48xf32>
    %1868 = arith.negf %1867 : vector<4x48xf32>
    %1869 = math.exp %1868 : vector<4x48xf32>
    %cst_308 = arith.constant 1.000000e+00 : f32
    %1870 = vector.broadcast %cst_308 : f32 to vector<4x48xf32>
    %1871 = arith.addf %1870, %1869 : vector<4x48xf32>
    %1872 = arith.divf %1870, %1871 : vector<4x48xf32>
    %1873 = vector.extract_strided_slice %1860 {offsets = [0, 128], sizes = [4, 48], strides = [1, 1]} : vector<4x256xf32> to vector<4x48xf32>
    %1874 = math.tanh %1873 : vector<4x48xf32>
    %1875 = vector.extract_strided_slice %1860 {offsets = [0, 192], sizes = [4, 48], strides = [1, 1]} : vector<4x256xf32> to vector<4x48xf32>
    %1876 = arith.negf %1875 : vector<4x48xf32>
    %1877 = math.exp %1876 : vector<4x48xf32>
    %cst_309 = arith.constant 1.000000e+00 : f32
    %1878 = vector.broadcast %cst_309 : f32 to vector<4x48xf32>
    %1879 = arith.addf %1878, %1877 : vector<4x48xf32>
    %1880 = arith.divf %1878, %1879 : vector<4x48xf32>
    %1881 = arith.mulf %1872, %1795 : vector<4x48xf32>
    %1882 = arith.mulf %1866, %1874 : vector<4x48xf32>
    %1883 = arith.addf %1881, %1882 : vector<4x48xf32>
    %1884 = math.tanh %1883 : vector<4x48xf32>
    %1885 = arith.mulf %1880, %1884 : vector<4x48xf32>
    %1886 = tpu.concatenate %1885, %1826 in 1 : vector<4x48xf32>, vector<4x48xf32> -> vector<4x96xf32>
    %1887 = arith.truncf %1886 : vector<4x96xf32> to vector<4x96xbf16>
    %cst_310 = arith.constant dense<0.000000e+00> : vector<4x256xf32>
    %1888 = tpu.matmul %1887, %935, %cst_310 {dimension_numbers = #tpu.dot_dimension_numbers<[1], [0], [0], [1], [0, 0, 1, 1], [], []>} : vector<4x96xbf16>, vector<96x256xbf16>, vector<4x256xf32> -> vector<4x256xf32>
    %1889 = arith.addf %941, %1888 : vector<4x256xf32>
    %1890 = vector.extract_strided_slice %1889 {offsets = [0, 0], sizes = [4, 48], strides = [1, 1]} : vector<4x256xf32> to vector<4x48xf32>
    %1891 = arith.negf %1890 : vector<4x48xf32>
    %1892 = math.exp %1891 : vector<4x48xf32>
    %cst_311 = arith.constant 1.000000e+00 : f32
    %1893 = vector.broadcast %cst_311 : f32 to vector<4x48xf32>
    %1894 = arith.addf %1893, %1892 : vector<4x48xf32>
    %1895 = arith.divf %1893, %1894 : vector<4x48xf32>
    %1896 = vector.extract_strided_slice %1889 {offsets = [0, 64], sizes = [4, 48], strides = [1, 1]} : vector<4x256xf32> to vector<4x48xf32>
    %1897 = arith.negf %1896 : vector<4x48xf32>
    %1898 = math.exp %1897 : vector<4x48xf32>
    %cst_312 = arith.constant 1.000000e+00 : f32
    %1899 = vector.broadcast %cst_312 : f32 to vector<4x48xf32>
    %1900 = arith.addf %1899, %1898 : vector<4x48xf32>
    %1901 = arith.divf %1899, %1900 : vector<4x48xf32>
    %1902 = vector.extract_strided_slice %1889 {offsets = [0, 128], sizes = [4, 48], strides = [1, 1]} : vector<4x256xf32> to vector<4x48xf32>
    %1903 = math.tanh %1902 : vector<4x48xf32>
    %1904 = vector.extract_strided_slice %1889 {offsets = [0, 192], sizes = [4, 48], strides = [1, 1]} : vector<4x256xf32> to vector<4x48xf32>
    %1905 = arith.negf %1904 : vector<4x48xf32>
    %1906 = math.exp %1905 : vector<4x48xf32>
    %cst_313 = arith.constant 1.000000e+00 : f32
    %1907 = vector.broadcast %cst_313 : f32 to vector<4x48xf32>
    %1908 = arith.addf %1907, %1906 : vector<4x48xf32>
    %1909 = arith.divf %1907, %1908 : vector<4x48xf32>
    %1910 = arith.mulf %1901, %1824 : vector<4x48xf32>
    %1911 = arith.mulf %1895, %1903 : vector<4x48xf32>
    %1912 = arith.addf %1910, %1911 : vector<4x48xf32>
    %1913 = math.tanh %1912 : vector<4x48xf32>
    %1914 = arith.mulf %1909, %1913 : vector<4x48xf32>
    %c40 = arith.constant 40 : index
    %c0_314 = arith.constant 0 : index
    %1915 = vector.load %arg9[%c40, %c0_314] : memref<48x48xf32, #tpu.memory_space<vmem>>, vector<4x48xf32>
    tpu.vector_store %arg9[%c40, %c0_314], %1914 {strides = array<i32>} : memref<48x48xf32, #tpu.memory_space<vmem>>, vector<4x48xf32>,
    %1916 = tpu.concatenate %1914, %1856 in 1 : vector<4x48xf32>, vector<4x48xf32> -> vector<4x96xf32>
    %1917 = arith.truncf %1916 : vector<4x96xf32> to vector<4x96xbf16>
    %cst_315 = arith.constant dense<0.000000e+00> : vector<4x256xf32>
    %1918 = tpu.matmul %1917, %931, %cst_315 {dimension_numbers = #tpu.dot_dimension_numbers<[1], [0], [0], [1], [0, 0, 1, 1], [], []>} : vector<4x96xbf16>, vector<96x256xbf16>, vector<4x256xf32> -> vector<4x256xf32>
    %1919 = arith.addf %937, %1918 : vector<4x256xf32>
    %1920 = vector.extract_strided_slice %1919 {offsets = [0, 0], sizes = [4, 48], strides = [1, 1]} : vector<4x256xf32> to vector<4x48xf32>
    %1921 = arith.negf %1920 : vector<4x48xf32>
    %1922 = math.exp %1921 : vector<4x48xf32>
    %cst_316 = arith.constant 1.000000e+00 : f32
    %1923 = vector.broadcast %cst_316 : f32 to vector<4x48xf32>
    %1924 = arith.addf %1923, %1922 : vector<4x48xf32>
    %1925 = arith.divf %1923, %1924 : vector<4x48xf32>
    %1926 = vector.extract_strided_slice %1919 {offsets = [0, 64], sizes = [4, 48], strides = [1, 1]} : vector<4x256xf32> to vector<4x48xf32>
    %1927 = arith.negf %1926 : vector<4x48xf32>
    %1928 = math.exp %1927 : vector<4x48xf32>
    %cst_317 = arith.constant 1.000000e+00 : f32
    %1929 = vector.broadcast %cst_317 : f32 to vector<4x48xf32>
    %1930 = arith.addf %1929, %1928 : vector<4x48xf32>
    %1931 = arith.divf %1929, %1930 : vector<4x48xf32>
    %1932 = vector.extract_strided_slice %1919 {offsets = [0, 128], sizes = [4, 48], strides = [1, 1]} : vector<4x256xf32> to vector<4x48xf32>
    %1933 = math.tanh %1932 : vector<4x48xf32>
    %1934 = vector.extract_strided_slice %1919 {offsets = [0, 192], sizes = [4, 48], strides = [1, 1]} : vector<4x256xf32> to vector<4x48xf32>
    %1935 = arith.negf %1934 : vector<4x48xf32>
    %1936 = math.exp %1935 : vector<4x48xf32>
    %cst_318 = arith.constant 1.000000e+00 : f32
    %1937 = vector.broadcast %cst_318 : f32 to vector<4x48xf32>
    %1938 = arith.addf %1937, %1936 : vector<4x48xf32>
    %1939 = arith.divf %1937, %1938 : vector<4x48xf32>
    %1940 = arith.mulf %1931, %1854 : vector<4x48xf32>
    %1941 = arith.mulf %1925, %1933 : vector<4x48xf32>
    %1942 = arith.addf %1940, %1941 : vector<4x48xf32>
    %1943 = math.tanh %1942 : vector<4x48xf32>
    %1944 = arith.mulf %1939, %1943 : vector<4x48xf32>
    %1945 = tpu.concatenate %1944, %1885 in 1 : vector<4x48xf32>, vector<4x48xf32> -> vector<4x96xf32>
    %1946 = arith.truncf %1945 : vector<4x96xf32> to vector<4x96xbf16>
    %cst_319 = arith.constant dense<0.000000e+00> : vector<4x256xf32>
    %1947 = tpu.matmul %1946, %933, %cst_319 {dimension_numbers = #tpu.dot_dimension_numbers<[1], [0], [0], [1], [0, 0, 1, 1], [], []>} : vector<4x96xbf16>, vector<96x256xbf16>, vector<4x256xf32> -> vector<4x256xf32>
    %1948 = arith.addf %939, %1947 : vector<4x256xf32>
    %1949 = vector.extract_strided_slice %1948 {offsets = [0, 0], sizes = [4, 48], strides = [1, 1]} : vector<4x256xf32> to vector<4x48xf32>
    %1950 = arith.negf %1949 : vector<4x48xf32>
    %1951 = math.exp %1950 : vector<4x48xf32>
    %cst_320 = arith.constant 1.000000e+00 : f32
    %1952 = vector.broadcast %cst_320 : f32 to vector<4x48xf32>
    %1953 = arith.addf %1952, %1951 : vector<4x48xf32>
    %1954 = arith.divf %1952, %1953 : vector<4x48xf32>
    %1955 = vector.extract_strided_slice %1948 {offsets = [0, 64], sizes = [4, 48], strides = [1, 1]} : vector<4x256xf32> to vector<4x48xf32>
    %1956 = arith.negf %1955 : vector<4x48xf32>
    %1957 = math.exp %1956 : vector<4x48xf32>
    %cst_321 = arith.constant 1.000000e+00 : f32
    %1958 = vector.broadcast %cst_321 : f32 to vector<4x48xf32>
    %1959 = arith.addf %1958, %1957 : vector<4x48xf32>
    %1960 = arith.divf %1958, %1959 : vector<4x48xf32>
    %1961 = vector.extract_strided_slice %1948 {offsets = [0, 128], sizes = [4, 48], strides = [1, 1]} : vector<4x256xf32> to vector<4x48xf32>
    %1962 = math.tanh %1961 : vector<4x48xf32>
    %1963 = vector.extract_strided_slice %1948 {offsets = [0, 192], sizes = [4, 48], strides = [1, 1]} : vector<4x256xf32> to vector<4x48xf32>
    %1964 = arith.negf %1963 : vector<4x48xf32>
    %1965 = math.exp %1964 : vector<4x48xf32>
    %cst_322 = arith.constant 1.000000e+00 : f32
    %1966 = vector.broadcast %cst_322 : f32 to vector<4x48xf32>
    %1967 = arith.addf %1966, %1965 : vector<4x48xf32>
    %1968 = arith.divf %1966, %1967 : vector<4x48xf32>
    %1969 = arith.mulf %1960, %1883 : vector<4x48xf32>
    %1970 = arith.mulf %1954, %1962 : vector<4x48xf32>
    %1971 = arith.addf %1969, %1970 : vector<4x48xf32>
    %1972 = math.tanh %1971 : vector<4x48xf32>
    %1973 = arith.mulf %1968, %1972 : vector<4x48xf32>
    %1974 = tpu.concatenate %1973, %1914 in 1 : vector<4x48xf32>, vector<4x48xf32> -> vector<4x96xf32>
    %1975 = arith.truncf %1974 : vector<4x96xf32> to vector<4x96xbf16>
    %cst_323 = arith.constant dense<0.000000e+00> : vector<4x256xf32>
    %1976 = tpu.matmul %1975, %935, %cst_323 {dimension_numbers = #tpu.dot_dimension_numbers<[1], [0], [0], [1], [0, 0, 1, 1], [], []>} : vector<4x96xbf16>, vector<96x256xbf16>, vector<4x256xf32> -> vector<4x256xf32>
    %1977 = arith.addf %941, %1976 : vector<4x256xf32>
    %1978 = vector.extract_strided_slice %1977 {offsets = [0, 0], sizes = [4, 48], strides = [1, 1]} : vector<4x256xf32> to vector<4x48xf32>
    %1979 = arith.negf %1978 : vector<4x48xf32>
    %1980 = math.exp %1979 : vector<4x48xf32>
    %cst_324 = arith.constant 1.000000e+00 : f32
    %1981 = vector.broadcast %cst_324 : f32 to vector<4x48xf32>
    %1982 = arith.addf %1981, %1980 : vector<4x48xf32>
    %1983 = arith.divf %1981, %1982 : vector<4x48xf32>
    %1984 = vector.extract_strided_slice %1977 {offsets = [0, 64], sizes = [4, 48], strides = [1, 1]} : vector<4x256xf32> to vector<4x48xf32>
    %1985 = arith.negf %1984 : vector<4x48xf32>
    %1986 = math.exp %1985 : vector<4x48xf32>
    %cst_325 = arith.constant 1.000000e+00 : f32
    %1987 = vector.broadcast %cst_325 : f32 to vector<4x48xf32>
    %1988 = arith.addf %1987, %1986 : vector<4x48xf32>
    %1989 = arith.divf %1987, %1988 : vector<4x48xf32>
    %1990 = vector.extract_strided_slice %1977 {offsets = [0, 128], sizes = [4, 48], strides = [1, 1]} : vector<4x256xf32> to vector<4x48xf32>
    %1991 = math.tanh %1990 : vector<4x48xf32>
    %1992 = vector.extract_strided_slice %1977 {offsets = [0, 192], sizes = [4, 48], strides = [1, 1]} : vector<4x256xf32> to vector<4x48xf32>
    %1993 = arith.negf %1992 : vector<4x48xf32>
    %1994 = math.exp %1993 : vector<4x48xf32>
    %cst_326 = arith.constant 1.000000e+00 : f32
    %1995 = vector.broadcast %cst_326 : f32 to vector<4x48xf32>
    %1996 = arith.addf %1995, %1994 : vector<4x48xf32>
    %1997 = arith.divf %1995, %1996 : vector<4x48xf32>
    %1998 = arith.mulf %1989, %1912 : vector<4x48xf32>
    %1999 = arith.mulf %1983, %1991 : vector<4x48xf32>
    %2000 = arith.addf %1998, %1999 : vector<4x48xf32>
    %2001 = math.tanh %2000 : vector<4x48xf32>
    %2002 = arith.mulf %1997, %2001 : vector<4x48xf32>
    %c44 = arith.constant 44 : index
    %c0_327 = arith.constant 0 : index
    %2003 = vector.load %arg9[%c44, %c0_327] : memref<48x48xf32, #tpu.memory_space<vmem>>, vector<4x48xf32>
    tpu.vector_store %arg9[%c44, %c0_327], %2002 {strides = array<i32>} : memref<48x48xf32, #tpu.memory_space<vmem>>, vector<4x48xf32>,
    %c0_328 = arith.constant 0 : index
    %c0_329 = arith.constant 0 : index
    %2004 = vector.load %arg9[%c0_328, %c0_329] : memref<48x48xf32, #tpu.memory_space<vmem>>, vector<48x48xf32>
    %2005 = arith.truncf %2004 : vector<48x48xf32> to vector<48x48xbf16>
    %c0_330 = arith.constant 0 : index
    %c0_331 = arith.constant 0 : index
    %2006 = vector.load %arg6[%c0_330, %c0_331] : memref<48x128xbf16, #tpu.memory_space<vmem>>, vector<48x128xbf16>
    %cst_332 = arith.constant dense<0.000000e+00> : vector<48x128xf32>
    %2007 = tpu.matmul %2005, %2006, %cst_332 {dimension_numbers = #tpu.dot_dimension_numbers<[1], [0], [0], [1], [0, 0, 1, 1], [], []>} : vector<48x48xbf16>, vector<48x128xbf16>, vector<48x128xf32> -> vector<48x128xf32>
    %c0_333 = arith.constant 0 : index
    %c0_334 = arith.constant 0 : index
    %2008 = vector.load %arg7[%c0_333, %c0_334] : memref<1x128xf32, #tpu.memory_space<vmem>>, vector<1x128xf32>
    %2009 = vector.broadcast %2008 : vector<1x128xf32> to vector<48x128xf32>
    %2010 = arith.addf %2007, %2009 : vector<48x128xf32>
    %c0_335 = arith.constant 0 : index
    %c0_336 = arith.constant 0 : index
    %2011 = vector.load %arg8[%c0_335, %c0_336] : memref<48x128xf32, #tpu.memory_space<vmem>>, vector<48x128xf32>
    tpu.vector_store %arg8[%c0_335, %c0_336], %2010 {strides = array<i32>} : memref<48x128xf32, #tpu.memory_space<vmem>>, vector<48x128xf32>,
    return
  }
}

</mosaic_0001>

<llo_original>
// kernel: encoder_trainer_forward.1
$region0: #{encoder_trainer_forward.1}
  #allocation0 [shape = 'u32[]', space=smem, size = 0x4, offset = 0x4, fixed_abs, tag = 'smem constant byte address 0x4 - core index']
  #allocation1 [shape = 'u32[144,128]{1,0:T(1,128)}', space=vmem, size = 0x12000, scoped, tag = 'internal scratch']
  #allocation2 [shape = 'f32[48,48]{1,0:T(8,128)}', space=vmem, size = 0x6000, scoped, tag = 'scratch operand']
  %s0 = inlined_call_operand.vmem [shape: bf16[64,96], index: 0, kind: input, shape index: {}]
  %s1 = inlined_call_operand.vmem [shape: bf16[3,96,128], index: 1, kind: input, shape index: {}]
  %s2 = inlined_call_operand.hbm [shape: bf16[3,48,128], index: 2, kind: input, shape index: {}]
  %s3 = inlined_call_operand.vmem [shape: f32[3,8,128], index: 3, kind: input, shape index: {}]
  %s4 = inlined_call_operand.hbm [shape: bf16[3,96,256], index: 4, kind: input, shape index: {}]
  %s5 = inlined_call_operand.hbm [shape: f32[3,4,256], index: 5, kind: input, shape index: {}]
  %s6 = inlined_call_operand.hbm [shape: bf16[48,128], index: 6, kind: input, shape index: {}]
  %s7 = inlined_call_operand.vmem [shape: f32[1,128], index: 7, kind: input, shape index: {}]
  %s8 = inlined_call_operand.vmem [shape: f32[48,128], index: 8, kind: output, shape index: {}]
  %s9 = sld [smem:[#allocation0]]
  $region58: #{encoder_trainer_forward.1} parent=0
    _
  %s11 = ssub.s32 1, %s9
  %s12 = scalar_select 0, %s11, %s9
  $region1: #{encoder_trainer_forward.1} parent=0
    #allocation3 [shape = 'u8[36864]{0}', space=vmem, size = 0x9000, scoped, tag = 'input window, operand 2, single buffered']
    #allocation4 [shape = 's32[1]{0}', space=sflag, size = 0x4, scoped, tag = 'scoped memory for encoder_trainer_forward.1']
    #allocation5 [shape = 'u8[147456]{0}', space=vmem, size = 0x24000, scoped, tag = 'input window, operand 4, single buffered']
    #allocation6 [shape = 's32[1]{0}', space=sflag, size = 0x4, scoped, tag = 'scoped memory for encoder_trainer_forward.1']
    #allocation7 [shape = 'u8[12288]{0}', space=vmem, size = 0x3000, scoped, tag = 'input window, operand 5, single buffered']
    #allocation8 [shape = 'u8[12288]{0}', space=vmem, size = 0x3000, scoped, tag = 'input window, operand 6, single buffered']
    #allocation9 [shape = 's32[1]{0}', space=sflag, size = 0x4, scoped, tag = 'scoped memory for encoder_trainer_forward.1']
    %13 = vsyncpa [#allocation4], 0
    %14 = vsyncpa [#allocation6], 0
    %15 = vsyncpa [#allocation9], 0
    // Predicated region
    $region2: #{encoder_trainer_forward.1} parent=1 // pred_check
      _
    $region3: #{encoder_trainer_forward.1} parent=1 // pred_check_branch
      %17 = sbr.rel (0) target = $region5
    $region4: #{encoder_trainer_forward.1} parent=1 // pred_region
      _
    $region5: #{encoder_trainer_forward.1} parent=1 // pred_fallthru
      _
    // Predicated region
    $region6: #{encoder_trainer_forward.1} parent=1 // pred_check
      _
    $region7: #{encoder_trainer_forward.1} parent=1 // pred_check_branch
      %19 = sbr.rel (0) target = $region9
    $region8: #{encoder_trainer_forward.1} parent=1 // pred_region
      _
    $region9: #{encoder_trainer_forward.1} parent=1 // pred_fallthru
      _
    // Predicated region
    $region10: #{encoder_trainer_forward.1} parent=1 // pred_check
      _
    $region11: #{encoder_trainer_forward.1} parent=1 // pred_check_branch
      %21 = sbr.rel (0) target = $region13
    $region12: #{encoder_trainer_forward.1} parent=1 // pred_region
      %s23 = ssub.s32 1152, 1152
      %24 = vsyncadd [#allocation4], %s23
      %s25 = sshll.u32 [#allocation3], 4
      %s26 = int_to_ptr.vmem [resolvable:$true] %s25
      %31 = dma.hbm_to_vmem [thread:$0]  %s2, 1152, %s26, [#allocation4], 64, 64, 4
    $region13: #{encoder_trainer_forward.1} parent=1 // pred_fallthru
      _
    // Predicated region
    $region14: #{encoder_trainer_forward.1} parent=1 // pred_check
      _
    $region15: #{encoder_trainer_forward.1} parent=1 // pred_check_branch
      %33 = sbr.rel (0) target = $region17
    $region16: #{encoder_trainer_forward.1} parent=1 // pred_region
      _
    $region17: #{encoder_trainer_forward.1} parent=1 // pred_fallthru
      _
    // Predicated region
    $region18: #{encoder_trainer_forward.1} parent=1 // pred_check
      _
    $region19: #{encoder_trainer_forward.1} parent=1 // pred_check_branch
      %35 = sbr.rel (0) target = $region21
    $region20: #{encoder_trainer_forward.1} parent=1 // pred_region
      %s37 = ssub.s32 4608, 4608
      %38 = vsyncadd [#allocation6], %s37
      %s39 = sshll.u32 [#allocation5], 4
      %s40 = int_to_ptr.vmem [resolvable:$true] %s39
      %45 = dma.hbm_to_vmem [thread:$0]  %s4, 4608, %s40, [#allocation6], 128, 128, 8
    $region21: #{encoder_trainer_forward.1} parent=1 // pred_fallthru
      _
    // Predicated region
    $region22: #{encoder_trainer_forward.1} parent=1 // pred_check
      _
    $region23: #{encoder_trainer_forward.1} parent=1 // pred_check_branch
      %47 = sbr.rel (0) target = $region25
    $region24: #{encoder_trainer_forward.1} parent=1 // pred_region
      %s49 = ssub.s32 384, 384
      %50 = vsyncadd [#allocation6], %s49
      %s51 = sshll.u32 [#allocation7], 4
      %s52 = int_to_ptr.vmem [resolvable:$true] %s51
      %57 = dma.hbm_to_vmem [thread:$0]  %s5, 384, %s52, [#allocation6], 128, 128, 8
    $region25: #{encoder_trainer_forward.1} parent=1 // pred_fallthru
      _
    // Predicated region
    $region26: #{encoder_trainer_forward.1} parent=1 // pred_check
      _
    $region27: #{encoder_trainer_forward.1} parent=1 // pred_check_branch
      %59 = sbr.rel (0) target = $region29
    $region28: #{encoder_trainer_forward.1} parent=1 // pred_region
      %s61 = ssub.s32 384, 384
      %62 = vsyncadd [#allocation9], %s61
      %s63 = sshll.u32 [#allocation8], 4
      %s64 = int_to_ptr.vmem [resolvable:$true] %s63
      %69 = dma.hbm_to_vmem [thread:$0]  %s6, 384, %s64, [#allocation9], 64, 64, 4
    $region29: #{encoder_trainer_forward.1} parent=1 // pred_fallthru
      _
    // Predicated region
    $region30: #{encoder_trainer_forward.1} parent=1 // pred_check
      _
    $region31: #{encoder_trainer_forward.1} parent=1 // pred_check_branch
      %71 = sbr.rel (0) target = $region33
    $region32: #{encoder_trainer_forward.1} parent=1 // pred_region
      _
    $region33: #{encoder_trainer_forward.1} parent=1 // pred_fallthru
      _
    // Predicated region
    $region34: #{encoder_trainer_forward.1} parent=1 // pred_check
      _
    $region35: #{encoder_trainer_forward.1} parent=1 // pred_check_branch
      %73 = sbr.rel (0) target = $region37
    $region36: #{encoder_trainer_forward.1} parent=1 // pred_region
      %74 = dma.done [#allocation4], 1152
    $region37: #{encoder_trainer_forward.1} parent=1 // pred_fallthru
      _
    // Predicated region
    $region38: #{encoder_trainer_forward.1} parent=1 // pred_check
      _
    $region39: #{encoder_trainer_forward.1} parent=1 // pred_check_branch
      %76 = sbr.rel (0) target = $region41
    $region40: #{encoder_trainer_forward.1} parent=1 // pred_region
      %77 = dma.done [#allocation6], 4608
    $region41: #{encoder_trainer_forward.1} parent=1 // pred_fallthru
      _
    // Predicated region
    $region42: #{encoder_trainer_forward.1} parent=1 // pred_check
      _
    $region43: #{encoder_trainer_forward.1} parent=1 // pred_check_branch
      %79 = sbr.rel (0) target = $region45
    $region44: #{encoder_trainer_forward.1} parent=1 // pred_region
      %80 = dma.done [#allocation6], 384
    $region45: #{encoder_trainer_forward.1} parent=1 // pred_fallthru
      _
    // Predicated region
    $region46: #{encoder_trainer_forward.1} parent=1 // pred_check
      _
    $region47: #{encoder_trainer_forward.1} parent=1 // pred_check_branch
      %82 = sbr.rel (0) target = $region49
    $region48: #{encoder_trainer_forward.1} parent=1 // pred_region
      %83 = dma.done [#allocation9], 384
    $region49: #{encoder_trainer_forward.1} parent=1 // pred_fallthru
      _
    %v85 = vlaneseq
    %v86 = vshrl.u32 %v85, 7
    %vm87 = vcmp.lt.s32.totalorder %v86, 4
    %v88 = vsel %vm87, 1, 0
    %v89 = vcvt.s32.f32 %v88
    %v90 = vsub.f32 1.0, %v89
    %v91 = vld [vmem:[%s0] sm:$0xf]
    %v92 = vld [vmem:[%s0 + $0x4] sm:$0xf]
    %v93 = vld [vmem:[%s0 + $0x8] sm:$0xf]
    %v94 = vld [vmem:[%s0 + $0xc] sm:$0xf]
    %v95 = vld [vmem:[%s0 + $0x10] sm:$0xf]
    %v96 = vld [vmem:[%s0 + $0x14] sm:$0xf]
    %v97 = vld [vmem:[%s0 + $0x18] sm:$0xf]
    %v98 = vld [vmem:[%s0 + $0x1c] sm:$0xf]
    %v99 = vld [vmem:[%s1] sm:$0xf]
    %v100 = vld [vmem:[%s1 + $0x4] sm:$0xf]
    %v101 = vld [vmem:[%s1 + $0x8] sm:$0xf]
    %v102 = vld [vmem:[%s1 + $0xc] sm:$0xf]
    %v103 = vld [vmem:[%s1 + $0x10] sm:$0xf]
    %v104 = vld [vmem:[%s1 + $0x14] sm:$0xf]
    %v105 = vld [vmem:[%s1 + $0x18] sm:$0xf]
    %v106 = vld [vmem:[%s1 + $0x1c] sm:$0xf]
    %v107 = vld [vmem:[%s1 + $0x20] sm:$0xf]
    %v108 = vld [vmem:[%s1 + $0x24] sm:$0xf]
    %v109 = vld [vmem:[%s1 + $0x28] sm:$0xf]
    %v110 = vld [vmem:[%s1 + $0x2c] sm:$0xf]
    %v119 = vunpack.c.l.b16 %v91
    %v120 = vunpack.c.l.b16 %v92
    %v121 = vunpack.c.l.b16 %v93
    %v122 = vunpack.c.l.b16 %v94
    %v123 = vunpack.c.l.b16 %v95
    %v124 = vunpack.c.l.b16 %v96
    %v125 = vunpack.c.l.b16 %v97
    %v126 = vunpack.c.l.b16 %v98
    %v127 = vpack.c.b16 %v120, %v119
    %v128 = vpack.c.b16 %v122, %v121
    %v129 = vpack.c.b16 %v124, %v123
    %v130 = vpack.c.b16 %v126, %v125
    %v143 = vunpack.c.l.b16 %v99
    %v144 = vunpack.c.l.b16 %v100
    %v145 = vunpack.c.l.b16 %v101
    %v146 = vunpack.c.l.b16 %v102
    %v147 = vunpack.c.l.b16 %v103
    %v148 = vunpack.c.l.b16 %v104
    %v149 = vunpack.c.l.b16 %v105
    %v150 = vunpack.c.l.b16 %v106
    %v151 = vunpack.c.l.b16 %v107
    %v152 = vunpack.c.l.b16 %v108
    %v153 = vunpack.c.l.b16 %v109
    %v154 = vunpack.c.l.b16 %v110
    %v155 = vpack.c.b16 %v144, %v143
    %v156 = vpack.c.b16 %v146, %v145
    %v157 = vpack.c.b16 %v148, %v147
    %v158 = vpack.c.b16 %v150, %v149
    %v159 = vpack.c.b16 %v152, %v151
    %v160 = vpack.c.b16 %v154, %v153
    %vm167 = vcmask 785408
    %v169 = vsel %vm167, %v127, 0
    %v172 = vsel %vm167, %v128, 0
    %v175 = vsel %vm167, %v129, 0
    %v178 = vsel %vm167, %v130, 0
    %180 = vmatprep.subr.bf16.mxu0 0
    %181 = vmatpush1.bf16.msra.mxu0 %v155
    %182 = vmatprep.subr.bf16.mxu0 0
    %183 = vmatpush1.bf16.msra.mxu0 %v156
    %184 = vmatprep.subr.bf16.mxu0 0
    %185 = vmatpush1.bf16.msra.mxu0 %v157
    %186 = vmatprep.subr.bf16.mxu0 0
    %187 = vmatpush1.bf16.msra.mxu0 %v158
    %188 = vmatprep.subr.bf16.mxu0 0
    %189 = vmatpush1.bf16.msra.mxu0 %v159
    %190 = vmatprep.subr.bf16.mxu0 0
    %191 = vmatpush1.bf16.msra.mxu0 %v160
    %192 = vmatprep.subr.bf16.mxu0 0
    %193 = vmatpush1.bf16.msra.mxu0 0
    %194 = vmatprep.subr.bf16.mxu0 0
    %195 = vmatpush1.bf16.msra.mxu0 0
    %196 = vmatprep.subr.bf16.mxu0 0
    %197 = vmatpush1.bf16.msra.mxu0 0
    %198 = vmatprep.subr.bf16.mxu0 0
    %199 = vmatpush1.bf16.msra.mxu0 0
    %200 = vmatprep.subr.bf16.mxu0 0
    %201 = vmatpush1.bf16.msra.mxu0 0
    %202 = vmatprep.subr.bf16.mxu0 0
    %203 = vmatpush1.bf16.msra.mxu0 0
    %204 = vmatprep.subr.bf16.mxu0 0
    %205 = vmatpush1.bf16.msra.mxu0 0
    %206 = vmatprep.subr.bf16.mxu0 0
    %207 = vmatpush1.bf16.msra.mxu0 0
    %208 = vmatprep.subr.bf16.mxu0 0
    %209 = vmatpush1.bf16.msra.mxu0 0
    %210 = vmatprep.subr.bf16.mxu0 0
    %211 = vmatpush1.bf16.msra.mxu0 0
    %212 = vmatprep.mubr.bf16.mxu0 0
    %213 = vmatmul.mubr.bf16.gmra.mrb[0].mxu0 %v169
    %v214 = vpop.f32.mrb[0].mxu0
    %v215 = vadd.f32 0.0, %v214
    %v216 = vpop.f32.mrb[0].mxu0
    %v217 = vpop.f32.mrb[0].mxu0
    %v218 = vadd.f32 0.0, %v217
    %v219 = vpop.f32.mrb[0].mxu0
    %220 = vmatprep.mubr.bf16.mxu0 0
    %221 = vmatmul.mubr.bf16.gmra.mrb[0].mxu0 %v172
    %v222 = vpop.f32.mrb[0].mxu0
    %v223 = vadd.f32 0.0, %v222
    %v224 = vpop.f32.mrb[0].mxu0
    %v225 = vpop.f32.mrb[0].mxu0
    %v226 = vadd.f32 0.0, %v225
    %v227 = vpop.f32.mrb[0].mxu0
    %228 = vmatprep.mubr.bf16.mxu0 0
    %229 = vmatmul.mubr.bf16.gmra.mrb[0].mxu0 %v175
    %v230 = vpop.f32.mrb[0].mxu0
    %v231 = vadd.f32 0.0, %v230
    %v232 = vpop.f32.mrb[0].mxu0
    %v233 = vpop.f32.mrb[0].mxu0
    %v234 = vadd.f32 0.0, %v233
    %v235 = vpop.f32.mrb[0].mxu0
    %236 = vmatprep.mubr.bf16.mxu0 0
    %237 = vmatmul.mubr.bf16.gmra.mrb[0].mxu0 %v178
    %v238 = vpop.f32.mrb[0].mxu0
    %v239 = vadd.f32 0.0, %v238
    %v240 = vpop.f32.mrb[0].mxu0
    %v241 = vpop.f32.mrb[0].mxu0
    %v242 = vadd.f32 0.0, %v241
    %v243 = vpop.f32.mrb[0].mxu0
    %244 = vdwg.mxu0
    %v245 = vld [vmem:[#allocation3] sm:$0xf]
    %v246 = vld [vmem:[#allocation3 + $0x4] sm:$0xf]
    %v247 = vld [vmem:[#allocation3 + $0x8] sm:$0xf]
    %v248 = vld [vmem:[#allocation3 + $0xc] sm:$0xf]
    %v249 = vld [vmem:[#allocation3 + $0x10] sm:$0xf]
    %v250 = vld [vmem:[#allocation3 + $0x14] sm:$0xf]
    %v251 = vld [vmem:[%s3] sm:$0xff]
    %v252 = vmul.f32 %v89, 0.0
    %v253 = vmul.f32 %v90, 0.0
    %vm254 = vcmask 195584
    %v255 = vsel %vm254, %v252, %v253
    %v256 = vadd.f32 %v215, %v251
    %v257 = vpack.c.bf16 %v255, %v255
    %v264 = vunpack.c.l.b16 %v245
    %v265 = vunpack.c.l.b16 %v246
    %v266 = vunpack.c.l.b16 %v247
    %v267 = vunpack.c.l.b16 %v248
    %v268 = vunpack.c.l.b16 %v249
    %v269 = vunpack.c.l.b16 %v250
    %v270 = vpack.c.b16 %v265, %v264
    %v271 = vpack.c.b16 %v267, %v266
    %v272 = vpack.c.b16 %v269, %v268
    %vm276 = vcmask 392192
    %v278 = vsel %vm276, %v257, 0
    %280 = vmatprep.subr.bf16.mxu0 0
    %281 = vmatpush1.bf16.msra.mxu0 %v270
    %282 = vmatprep.subr.bf16.mxu0 0
    %283 = vmatpush1.bf16.msra.mxu0 %v271
    %284 = vmatprep.subr.bf16.mxu0 0
    %285 = vmatpush1.bf16.msra.mxu0 %v272
    %286 = vmatprep.subr.bf16.mxu0 0
    %287 = vmatpush1.bf16.msra.mxu0 0
    %288 = vmatprep.subr.bf16.mxu0 0
    %289 = vmatpush1.bf16.msra.mxu0 0
    %290 = vmatprep.subr.bf16.mxu0 0
    %291 = vmatpush1.bf16.msra.mxu0 0
    %292 = vmatprep.subr.bf16.mxu0 0
    %293 = vmatpush1.bf16.msra.mxu0 0
    %294 = vmatprep.subr.bf16.mxu0 0
    %295 = vmatpush1.bf16.msra.mxu0 0
    %296 = vmatprep.subr.bf16.mxu0 0
    %297 = vmatpush1.bf16.msra.mxu0 0
    %298 = vmatprep.subr.bf16.mxu0 0
    %299 = vmatpush1.bf16.msra.mxu0 0
    %300 = vmatprep.subr.bf16.mxu0 0
    %301 = vmatpush1.bf16.msra.mxu0 0
    %302 = vmatprep.subr.bf16.mxu0 0
    %303 = vmatpush1.bf16.msra.mxu0 0
    %304 = vmatprep.subr.bf16.mxu0 0
    %305 = vmatpush1.bf16.msra.mxu0 0
    %306 = vmatprep.subr.bf16.mxu0 0
    %307 = vmatpush1.bf16.msra.mxu0 0
    %308 = vmatprep.subr.bf16.mxu0 0
    %309 = vmatpush1.bf16.msra.mxu0 0
    %310 = vmatprep.subr.bf16.mxu0 0
    %311 = vmatpush1.bf16.msra.mxu0 0
    %312 = vmatprep.mubr.bf16.mxu0 0
    %313 = vmatmul.mubr.bf16.gmra.mrb[0].mxu0 %v278
    %v314 = vpop.f32.mrb[0].mxu0
    %v315 = vadd.f32 0.0, %v314
    %v316 = vpop.f32.mrb[0].mxu0
    %v317 = vpop.f32.mrb[0].mxu0
    %v318 = vpop.f32.mrb[0].mxu0
    %319 = vdwg.mxu0
    %v320 = vadd.f32 %v256, %v315
    %v321 = vxor.u32 %v320, 2147483648
    %v322 = vmul.f32 %v321, 1.442695
    %v323 = vpow.pop %v322
    %v324 = vadd.f32 %v323, 1.0
    %v325 = vrcp.pop %v324
    %v326 = vmul.f32 1.0, %v325
    %v327 = vtanh.pop %v320
    %v328 = vmul.f32 %v326, 0.0
    %330 = vrot.lane.b32.xlu0 %v327, 64
    %v331 = vpop.permute.xlu0 %330
    %v333 = vmul.f32 %v326, %v331
    %335 = vrot.lane.b32.xlu0 %v333, 32
    %v336 = vpop.permute.xlu0 %335
    %v338 = vadd.f32 %v328, %v336
    %v339 = vtanh.pop %v338
    %341 = vrot.lane.b32.xlu0 %v339, 64
    %v342 = vpop.permute.xlu0 %341
    %v344 = vmul.f32 %v326, %v342
    %v345 = vmul.f32 %v344, %v89
    %v346 = vmul.f32 %v344, %v90
    %348 = vrot.lane.b32.xlu0 %v345, 32
    %v349 = vpop.permute.xlu0 %348
    %352 = vrot.lane.b32.xlu0 %v346, 56
    %v353 = vpop.permute.xlu0 %352
    %v355 = vsel %vm254, %v349, %v353
    %v356 = vadd.f32 %v218, %v251
    %v357 = vpack.c.bf16 %v355, %v355
    %v359 = vsel %vm276, %v357, 0
    %361 = vmatprep.subr.bf16.mxu0 0
    %362 = vmatpush1.bf16.msra.mxu0 %v270
    %363 = vmatprep.subr.bf16.mxu0 0
    %364 = vmatpush1.bf16.msra.mxu0 %v271
    %365 = vmatprep.subr.bf16.mxu0 0
    %366 = vmatpush1.bf16.msra.mxu0 %v272
    %367 = vmatprep.subr.bf16.mxu0 0
    %368 = vmatpush1.bf16.msra.mxu0 0
    %369 = vmatprep.subr.bf16.mxu0 0
    %370 = vmatpush1.bf16.msra.mxu0 0
    %371 = vmatprep.subr.bf16.mxu0 0
    %372 = vmatpush1.bf16.msra.mxu0 0
    %373 = vmatprep.subr.bf16.mxu0 0
    %374 = vmatpush1.bf16.msra.mxu0 0
    %375 = vmatprep.subr.bf16.mxu0 0
    %376 = vmatpush1.bf16.msra.mxu0 0
    %377 = vmatprep.subr.bf16.mxu0 0
    %378 = vmatpush1.bf16.msra.mxu0 0
    %379 = vmatprep.subr.bf16.mxu0 0
    %380 = vmatpush1.bf16.msra.mxu0 0
    %381 = vmatprep.subr.bf16.mxu0 0
    %382 = vmatpush1.bf16.msra.mxu0 0
    %383 = vmatprep.subr.bf16.mxu0 0
    %384 = vmatpush1.bf16.msra.mxu0 0
    %385 = vmatprep.subr.bf16.mxu0 0
    %386 = vmatpush1.bf16.msra.mxu0 0
    %387 = vmatprep.subr.bf16.mxu0 0
    %388 = vmatpush1.bf16.msra.mxu0 0
    %389 = vmatprep.subr.bf16.mxu0 0
    %390 = vmatpush1.bf16.msra.mxu0 0
    %391 = vmatprep.subr.bf16.mxu0 0
    %392 = vmatpush1.bf16.msra.mxu0 0
    %393 = vmatprep.mubr.bf16.mxu0 0
    %394 = vmatmul.mubr.bf16.gmra.mrb[0].mxu0 %v359
    %v395 = vpop.f32.mrb[0].mxu0
    %v396 = vadd.f32 0.0, %v395
    %v397 = vpop.f32.mrb[0].mxu0
    %v398 = vpop.f32.mrb[0].mxu0
    %v399 = vpop.f32.mrb[0].mxu0
    %400 = vdwg.mxu0
    %v401 = vadd.f32 %v356, %v396
    %v402 = vxor.u32 %v401, 2147483648
    %v403 = vmul.f32 %v402, 1.442695
    %v404 = vpow.pop %v403
    %v405 = vadd.f32 %v404, 1.0
    %v406 = vrcp.pop %v405
    %v407 = vmul.f32 1.0, %v406
    %v408 = vtanh.pop %v401
    %v409 = vmul.f32 %v407, %v338
    %411 = vrot.lane.b32.xlu0 %v408, 64
    %v412 = vpop.permute.xlu0 %411
    %v414 = vmul.f32 %v407, %v412
    %416 = vrot.lane.b32.xlu0 %v414, 32
    %v417 = vpop.permute.xlu0 %416
    %v419 = vadd.f32 %v409, %v417
    %v420 = vtanh.pop %v419
    %422 = vrot.lane.b32.xlu0 %v420, 64
    %v423 = vpop.permute.xlu0 %422
    %v425 = vmul.f32 %v407, %v423
    %v426 = vmul.f32 %v425, %v89
    %v427 = vmul.f32 %v425, %v90
    %429 = vrot.lane.b32.xlu0 %v426, 32
    %v430 = vpop.permute.xlu0 %429
    %433 = vrot.lane.b32.xlu0 %v427, 56
    %v434 = vpop.permute.xlu0 %433
    %v436 = vsel %vm254, %v430, %v434
    %v437 = vadd.f32 %v223, %v251
    %v438 = vpack.c.bf16 %v436, %v436
    %v440 = vsel %vm276, %v438, 0
    %442 = vmatprep.subr.bf16.mxu0 0
    %443 = vmatpush1.bf16.msra.mxu0 %v270
    %444 = vmatprep.subr.bf16.mxu0 0
    %445 = vmatpush1.bf16.msra.mxu0 %v271
    %446 = vmatprep.subr.bf16.mxu0 0
    %447 = vmatpush1.bf16.msra.mxu0 %v272
    %448 = vmatprep.subr.bf16.mxu0 0
    %449 = vmatpush1.bf16.msra.mxu0 0
    %450 = vmatprep.subr.bf16.mxu0 0
    %451 = vmatpush1.bf16.msra.mxu0 0
    %452 = vmatprep.subr.bf16.mxu0 0
    %453 = vmatpush1.bf16.msra.mxu0 0
    %454 = vmatprep.subr.bf16.mxu0 0
    %455 = vmatpush1.bf16.msra.mxu0 0
    %456 = vmatprep.subr.bf16.mxu0 0
    %457 = vmatpush1.bf16.msra.mxu0 0
    %458 = vmatprep.subr.bf16.mxu0 0
    %459 = vmatpush1.bf16.msra.mxu0 0
    %460 = vmatprep.subr.bf16.mxu0 0
    %461 = vmatpush1.bf16.msra.mxu0 0
    %462 = vmatprep.subr.bf16.mxu0 0
    %463 = vmatpush1.bf16.msra.mxu0 0
    %464 = vmatprep.subr.bf16.mxu0 0
    %465 = vmatpush1.bf16.msra.mxu0 0
    %466 = vmatprep.subr.bf16.mxu0 0
    %467 = vmatpush1.bf16.msra.mxu0 0
    %468 = vmatprep.subr.bf16.mxu0 0
    %469 = vmatpush1.bf16.msra.mxu0 0
    %470 = vmatprep.subr.bf16.mxu0 0
    %471 = vmatpush1.bf16.msra.mxu0 0
    %472 = vmatprep.subr.bf16.mxu0 0
    %473 = vmatpush1.bf16.msra.mxu0 0
    %474 = vmatprep.mubr.bf16.mxu0 0
    %475 = vmatmul.mubr.bf16.gmra.mrb[0].mxu0 %v440
    %v476 = vpop.f32.mrb[0].mxu0
    %v477 = vadd.f32 0.0, %v476
    %v478 = vpop.f32.mrb[0].mxu0
    %v479 = vpop.f32.mrb[0].mxu0
    %v480 = vpop.f32.mrb[0].mxu0
    %481 = vdwg.mxu0
    %v482 = vadd.f32 %v437, %v477
    %v483 = vxor.u32 %v482, 2147483648
    %v484 = vmul.f32 %v483, 1.442695
    %v485 = vpow.pop %v484
    %v486 = vadd.f32 %v485, 1.0
    %v487 = vrcp.pop %v486
    %v488 = vmul.f32 1.0, %v487
    %v489 = vtanh.pop %v482
    %v490 = vmul.f32 %v488, %v419
    %492 = vrot.lane.b32.xlu0 %v489, 64
    %v493 = vpop.permute.xlu0 %492
    %v495 = vmul.f32 %v488, %v493
    %497 = vrot.lane.b32.xlu0 %v495, 32
    %v498 = vpop.permute.xlu0 %497
    %v500 = vadd.f32 %v490, %v498
    %v501 = vtanh.pop %v500
    %503 = vrot.lane.b32.xlu0 %v501, 64
    %v504 = vpop.permute.xlu0 %503
    %v506 = vmul.f32 %v488, %v504
    %v507 = vmul.f32 %v506, %v89
    %v508 = vmul.f32 %v506, %v90
    %510 = vrot.lane.b32.xlu0 %v507, 32
    %v511 = vpop.permute.xlu0 %510
    %514 = vrot.lane.b32.xlu0 %v508, 56
    %v515 = vpop.permute.xlu0 %514
    %v517 = vsel %vm254, %v511, %v515
    %v518 = vadd.f32 %v226, %v251
    %v519 = vpack.c.bf16 %v517, %v517
    %v521 = vsel %vm276, %v519, 0
    %523 = vmatprep.subr.bf16.mxu0 0
    %524 = vmatpush1.bf16.msra.mxu0 %v270
    %525 = vmatprep.subr.bf16.mxu0 0
    %526 = vmatpush1.bf16.msra.mxu0 %v271
    %527 = vmatprep.subr.bf16.mxu0 0
    %528 = vmatpush1.bf16.msra.mxu0 %v272
    %529 = vmatprep.subr.bf16.mxu0 0
    %530 = vmatpush1.bf16.msra.mxu0 0
    %531 = vmatprep.subr.bf16.mxu0 0
    %532 = vmatpush1.bf16.msra.mxu0 0
    %533 = vmatprep.subr.bf16.mxu0 0
    %534 = vmatpush1.bf16.msra.mxu0 0
    %535 = vmatprep.subr.bf16.mxu0 0
    %536 = vmatpush1.bf16.msra.mxu0 0
    %537 = vmatprep.subr.bf16.mxu0 0
    %538 = vmatpush1.bf16.msra.mxu0 0
    %539 = vmatprep.subr.bf16.mxu0 0
    %540 = vmatpush1.bf16.msra.mxu0 0
    %541 = vmatprep.subr.bf16.mxu0 0
    %542 = vmatpush1.bf16.msra.mxu0 0
    %543 = vmatprep.subr.bf16.mxu0 0
    %544 = vmatpush1.bf16.msra.mxu0 0
    %545 = vmatprep.subr.bf16.mxu0 0
    %546 = vmatpush1.bf16.msra.mxu0 0
    %547 = vmatprep.subr.bf16.mxu0 0
    %548 = vmatpush1.bf16.msra.mxu0 0
    %549 = vmatprep.subr.bf16.mxu0 0
    %550 = vmatpush1.bf16.msra.mxu0 0
    %551 = vmatprep.subr.bf16.mxu0 0
    %552 = vmatpush1.bf16.msra.mxu0 0
    %553 = vmatprep.subr.bf16.mxu0 0
    %554 = vmatpush1.bf16.msra.mxu0 0
    %555 = vmatprep.mubr.bf16.mxu0 0
    %556 = vmatmul.mubr.bf16.gmra.mrb[0].mxu0 %v521
    %v557 = vpop.f32.mrb[0].mxu0
    %v558 = vadd.f32 0.0, %v557
    %v559 = vpop.f32.mrb[0].mxu0
    %v560 = vpop.f32.mrb[0].mxu0
    %v561 = vpop.f32.mrb[0].mxu0
    %562 = vdwg.mxu0
    %v563 = vadd.f32 %v518, %v558
    %v564 = vxor.u32 %v563, 2147483648
    %v565 = vmul.f32 %v564, 1.442695
    %v566 = vpow.pop %v565
    %v567 = vadd.f32 %v566, 1.0
    %v568 = vrcp.pop %v567
    %v569 = vmul.f32 1.0, %v568
    %v570 = vtanh.pop %v563
    %v571 = vmul.f32 %v569, %v500
    %573 = vrot.lane.b32.xlu0 %v570, 64
    %v574 = vpop.permute.xlu0 %573
    %v576 = vmul.f32 %v569, %v574
    %578 = vrot.lane.b32.xlu0 %v576, 32
    %v579 = vpop.permute.xlu0 %578
    %v581 = vadd.f32 %v571, %v579
    %v582 = vtanh.pop %v581
    %584 = vrot.lane.b32.xlu0 %v582, 64
    %v585 = vpop.permute.xlu0 %584
    %v587 = vmul.f32 %v569, %v585
    %v588 = vmul.f32 %v587, %v89
    %v589 = vmul.f32 %v587, %v90
    %591 = vrot.lane.b32.xlu0 %v588, 32
    %v592 = vpop.permute.xlu0 %591
    %595 = vrot.lane.b32.xlu0 %v589, 56
    %v596 = vpop.permute.xlu0 %595
    %v598 = vsel %vm254, %v592, %v596
    %v599 = vadd.f32 %v231, %v251
    %v600 = vpack.c.bf16 %v598, %v598
    %v602 = vsel %vm276, %v600, 0
    %604 = vmatprep.subr.bf16.mxu0 0
    %605 = vmatpush1.bf16.msra.mxu0 %v270
    %606 = vmatprep.subr.bf16.mxu0 0
    %607 = vmatpush1.bf16.msra.mxu0 %v271
    %608 = vmatprep.subr.bf16.mxu0 0
    %609 = vmatpush1.bf16.msra.mxu0 %v272
    %610 = vmatprep.subr.bf16.mxu0 0
    %611 = vmatpush1.bf16.msra.mxu0 0
    %612 = vmatprep.subr.bf16.mxu0 0
    %613 = vmatpush1.bf16.msra.mxu0 0
    %614 = vmatprep.subr.bf16.mxu0 0
    %615 = vmatpush1.bf16.msra.mxu0 0
    %616 = vmatprep.subr.bf16.mxu0 0
    %617 = vmatpush1.bf16.msra.mxu0 0
    %618 = vmatprep.subr.bf16.mxu0 0
    %619 = vmatpush1.bf16.msra.mxu0 0
    %620 = vmatprep.subr.bf16.mxu0 0
    %621 = vmatpush1.bf16.msra.mxu0 0
    %622 = vmatprep.subr.bf16.mxu0 0
    %623 = vmatpush1.bf16.msra.mxu0 0
    %624 = vmatprep.subr.bf16.mxu0 0
    %625 = vmatpush1.bf16.msra.mxu0 0
    %626 = vmatprep.subr.bf16.mxu0 0
    %627 = vmatpush1.bf16.msra.mxu0 0
    %628 = vmatprep.subr.bf16.mxu0 0
    %629 = vmatpush1.bf16.msra.mxu0 0
    %630 = vmatprep.subr.bf16.mxu0 0
    %631 = vmatpush1.bf16.msra.mxu0 0
    %632 = vmatprep.subr.bf16.mxu0 0
    %633 = vmatpush1.bf16.msra.mxu0 0
    %634 = vmatprep.subr.bf16.mxu0 0
    %635 = vmatpush1.bf16.msra.mxu0 0
    %636 = vmatprep.mubr.bf16.mxu0 0
    %637 = vmatmul.mubr.bf16.gmra.mrb[0].mxu0 %v602
    %v638 = vpop.f32.mrb[0].mxu0
    %v639 = vadd.f32 0.0, %v638
    %v640 = vpop.f32.mrb[0].mxu0
    %v641 = vpop.f32.mrb[0].mxu0
    %v642 = vpop.f32.mrb[0].mxu0
    %643 = vdwg.mxu0
    %v644 = vadd.f32 %v599, %v639
    %v645 = vxor.u32 %v644, 2147483648
    %v646 = vmul.f32 %v645, 1.442695
    %v647 = vpow.pop %v646
    %v648 = vadd.f32 %v647, 1.0
    %v649 = vrcp.pop %v648
    %v650 = vmul.f32 1.0, %v649
    %v651 = vtanh.pop %v644
    %v652 = vmul.f32 %v650, %v581
    %654 = vrot.lane.b32.xlu0 %v651, 64
    %v655 = vpop.permute.xlu0 %654
    %v657 = vmul.f32 %v650, %v655
    %659 = vrot.lane.b32.xlu0 %v657, 32
    %v660 = vpop.permute.xlu0 %659
    %v662 = vadd.f32 %v652, %v660
    %v663 = vtanh.pop %v662
    %665 = vrot.lane.b32.xlu0 %v663, 64
    %v666 = vpop.permute.xlu0 %665
    %v668 = vmul.f32 %v650, %v666
    %v669 = vmul.f32 %v668, %v89
    %v670 = vmul.f32 %v668, %v90
    %672 = vrot.lane.b32.xlu0 %v669, 32
    %v673 = vpop.permute.xlu0 %672
    %676 = vrot.lane.b32.xlu0 %v670, 56
    %v677 = vpop.permute.xlu0 %676
    %v679 = vsel %vm254, %v673, %v677
    %v680 = vadd.f32 %v234, %v251
    %v681 = vpack.c.bf16 %v679, %v679
    %v683 = vsel %vm276, %v681, 0
    %685 = vmatprep.subr.bf16.mxu0 0
    %686 = vmatpush1.bf16.msra.mxu0 %v270
    %687 = vmatprep.subr.bf16.mxu0 0
    %688 = vmatpush1.bf16.msra.mxu0 %v271
    %689 = vmatprep.subr.bf16.mxu0 0
    %690 = vmatpush1.bf16.msra.mxu0 %v272
    %691 = vmatprep.subr.bf16.mxu0 0
    %692 = vmatpush1.bf16.msra.mxu0 0
    %693 = vmatprep.subr.bf16.mxu0 0
    %694 = vmatpush1.bf16.msra.mxu0 0
    %695 = vmatprep.subr.bf16.mxu0 0
    %696 = vmatpush1.bf16.msra.mxu0 0
    %697 = vmatprep.subr.bf16.mxu0 0
    %698 = vmatpush1.bf16.msra.mxu0 0
    %699 = vmatprep.subr.bf16.mxu0 0
    %700 = vmatpush1.bf16.msra.mxu0 0
    %701 = vmatprep.subr.bf16.mxu0 0
    %702 = vmatpush1.bf16.msra.mxu0 0
    %703 = vmatprep.subr.bf16.mxu0 0
    %704 = vmatpush1.bf16.msra.mxu0 0
    %705 = vmatprep.subr.bf16.mxu0 0
    %706 = vmatpush1.bf16.msra.mxu0 0
    %707 = vmatprep.subr.bf16.mxu0 0
    %708 = vmatpush1.bf16.msra.mxu0 0
    %709 = vmatprep.subr.bf16.mxu0 0
    %710 = vmatpush1.bf16.msra.mxu0 0
    %711 = vmatprep.subr.bf16.mxu0 0
    %712 = vmatpush1.bf16.msra.mxu0 0
    %713 = vmatprep.subr.bf16.mxu0 0
    %714 = vmatpush1.bf16.msra.mxu0 0
    %715 = vmatprep.subr.bf16.mxu0 0
    %716 = vmatpush1.bf16.msra.mxu0 0
    %717 = vmatprep.mubr.bf16.mxu0 0
    %718 = vmatmul.mubr.bf16.gmra.mrb[0].mxu0 %v683
    %v719 = vpop.f32.mrb[0].mxu0
    %v720 = vadd.f32 0.0, %v719
    %v721 = vpop.f32.mrb[0].mxu0
    %v722 = vpop.f32.mrb[0].mxu0
    %v723 = vpop.f32.mrb[0].mxu0
    %724 = vdwg.mxu0
    %v725 = vadd.f32 %v680, %v720
    %v726 = vxor.u32 %v725, 2147483648
    %v727 = vmul.f32 %v726, 1.442695
    %v728 = vpow.pop %v727
    %v729 = vadd.f32 %v728, 1.0
    %v730 = vrcp.pop %v729
    %v731 = vmul.f32 1.0, %v730
    %v732 = vtanh.pop %v725
    %v733 = vmul.f32 %v731, %v662
    %735 = vrot.lane.b32.xlu0 %v732, 64
    %v736 = vpop.permute.xlu0 %735
    %v738 = vmul.f32 %v731, %v736
    %740 = vrot.lane.b32.xlu0 %v738, 32
    %v741 = vpop.permute.xlu0 %740
    %v743 = vadd.f32 %v733, %v741
    %v744 = vtanh.pop %v743
    %746 = vrot.lane.b32.xlu0 %v744, 64
    %v747 = vpop.permute.xlu0 %746
    %v749 = vmul.f32 %v731, %v747
    %v750 = vmul.f32 %v749, %v89
    %v751 = vmul.f32 %v749, %v90
    %753 = vrot.lane.b32.xlu0 %v750, 32
    %v754 = vpop.permute.xlu0 %753
    %757 = vrot.lane.b32.xlu0 %v751, 56
    %v758 = vpop.permute.xlu0 %757
    %v760 = vsel %vm254, %v754, %v758
    %v761 = vadd.f32 %v239, %v251
    %v762 = vpack.c.bf16 %v760, %v760
    %v764 = vsel %vm276, %v762, 0
    %766 = vmatprep.subr.bf16.mxu0 0
    %767 = vmatpush1.bf16.msra.mxu0 %v270
    %768 = vmatprep.subr.bf16.mxu0 0
    %769 = vmatpush1.bf16.msra.mxu0 %v271
    %770 = vmatprep.subr.bf16.mxu0 0
    %771 = vmatpush1.bf16.msra.mxu0 %v272
    %772 = vmatprep.subr.bf16.mxu0 0
    %773 = vmatpush1.bf16.msra.mxu0 0
    %774 = vmatprep.subr.bf16.mxu0 0
    %775 = vmatpush1.bf16.msra.mxu0 0
    %776 = vmatprep.subr.bf16.mxu0 0
    %777 = vmatpush1.bf16.msra.mxu0 0
    %778 = vmatprep.subr.bf16.mxu0 0
    %779 = vmatpush1.bf16.msra.mxu0 0
    %780 = vmatprep.subr.bf16.mxu0 0
    %781 = vmatpush1.bf16.msra.mxu0 0
    %782 = vmatprep.subr.bf16.mxu0 0
    %783 = vmatpush1.bf16.msra.mxu0 0
    %784 = vmatprep.subr.bf16.mxu0 0
    %785 = vmatpush1.bf16.msra.mxu0 0
    %786 = vmatprep.subr.bf16.mxu0 0
    %787 = vmatpush1.bf16.msra.mxu0 0
    %788 = vmatprep.subr.bf16.mxu0 0
    %789 = vmatpush1.bf16.msra.mxu0 0
    %790 = vmatprep.subr.bf16.mxu0 0
    %791 = vmatpush1.bf16.msra.mxu0 0
    %792 = vmatprep.subr.bf16.mxu0 0
    %793 = vmatpush1.bf16.msra.mxu0 0
    %794 = vmatprep.subr.bf16.mxu0 0
    %795 = vmatpush1.bf16.msra.mxu0 0
    %796 = vmatprep.subr.bf16.mxu0 0
    %797 = vmatpush1.bf16.msra.mxu0 0
    %798 = vmatprep.mubr.bf16.mxu0 0
    %799 = vmatmul.mubr.bf16.gmra.mrb[0].mxu0 %v764
    %v800 = vpop.f32.mrb[0].mxu0
    %v801 = vadd.f32 0.0, %v800
    %v802 = vpop.f32.mrb[0].mxu0
    %v803 = vpop.f32.mrb[0].mxu0
    %v804 = vpop.f32.mrb[0].mxu0
    %805 = vdwg.mxu0
    %v806 = vadd.f32 %v761, %v801
    %v807 = vxor.u32 %v806, 2147483648
    %v808 = vmul.f32 %v807, 1.442695
    %v809 = vpow.pop %v808
    %v810 = vadd.f32 %v809, 1.0
    %v811 = vrcp.pop %v810
    %v812 = vmul.f32 1.0, %v811
    %v813 = vtanh.pop %v806
    %v814 = vmul.f32 %v812, %v743
    %816 = vrot.lane.b32.xlu0 %v813, 64
    %v817 = vpop.permute.xlu0 %816
    %v819 = vmul.f32 %v812, %v817
    %821 = vrot.lane.b32.xlu0 %v819, 32
    %v822 = vpop.permute.xlu0 %821
    %v824 = vadd.f32 %v814, %v822
    %v825 = vtanh.pop %v824
    %827 = vrot.lane.b32.xlu0 %v825, 64
    %v828 = vpop.permute.xlu0 %827
    %v830 = vmul.f32 %v812, %v828
    %v831 = vmul.f32 %v830, %v89
    %v832 = vmul.f32 %v830, %v90
    %834 = vrot.lane.b32.xlu0 %v831, 32
    %v835 = vpop.permute.xlu0 %834
    %838 = vrot.lane.b32.xlu0 %v832, 56
    %v839 = vpop.permute.xlu0 %838
    %v841 = vsel %vm254, %v835, %v839
    %v842 = vadd.f32 %v242, %v251
    %v843 = vpack.c.bf16 %v841, %v841
    %v845 = vsel %vm276, %v843, 0
    %847 = vmatprep.subr.bf16.mxu0 0
    %848 = vmatpush1.bf16.msra.mxu0 %v270
    %849 = vmatprep.subr.bf16.mxu0 0
    %850 = vmatpush1.bf16.msra.mxu0 %v271
    %851 = vmatprep.subr.bf16.mxu0 0
    %852 = vmatpush1.bf16.msra.mxu0 %v272
    %853 = vmatprep.subr.bf16.mxu0 0
    %854 = vmatpush1.bf16.msra.mxu0 0
    %855 = vmatprep.subr.bf16.mxu0 0
    %856 = vmatpush1.bf16.msra.mxu0 0
    %857 = vmatprep.subr.bf16.mxu0 0
    %858 = vmatpush1.bf16.msra.mxu0 0
    %859 = vmatprep.subr.bf16.mxu0 0
    %860 = vmatpush1.bf16.msra.mxu0 0
    %861 = vmatprep.subr.bf16.mxu0 0
    %862 = vmatpush1.bf16.msra.mxu0 0
    %863 = vmatprep.subr.bf16.mxu0 0
    %864 = vmatpush1.bf16.msra.mxu0 0
    %865 = vmatprep.subr.bf16.mxu0 0
    %866 = vmatpush1.bf16.msra.mxu0 0
    %867 = vmatprep.subr.bf16.mxu0 0
    %868 = vmatpush1.bf16.msra.mxu0 0
    %869 = vmatprep.subr.bf16.mxu0 0
    %870 = vmatpush1.bf16.msra.mxu0 0
    %871 = vmatprep.subr.bf16.mxu0 0
    %872 = vmatpush1.bf16.msra.mxu0 0
    %873 = vmatprep.subr.bf16.mxu0 0
    %874 = vmatpush1.bf16.msra.mxu0 0
    %875 = vmatprep.subr.bf16.mxu0 0
    %876 = vmatpush1.bf16.msra.mxu0 0
    %877 = vmatprep.subr.bf16.mxu0 0
    %878 = vmatpush1.bf16.msra.mxu0 0
    %879 = vmatprep.mubr.bf16.mxu0 0
    %880 = vmatmul.mubr.bf16.gmra.mrb[0].mxu0 %v845
    %v881 = vpop.f32.mrb[0].mxu0
    %v882 = vadd.f32 0.0, %v881
    %v883 = vpop.f32.mrb[0].mxu0
    %v884 = vpop.f32.mrb[0].mxu0
    %v885 = vpop.f32.mrb[0].mxu0
    %886 = vdwg.mxu0
    %v887 = vadd.f32 %v842, %v882
    %v888 = vxor.u32 %v887, 2147483648
    %v889 = vmul.f32 %v888, 1.442695
    %v890 = vpow.pop %v889
    %v891 = vadd.f32 %v890, 1.0
    %v892 = vrcp.pop %v891
    %v893 = vmul.f32 1.0, %v892
    %v894 = vtanh.pop %v887
    %v895 = vmul.f32 %v893, %v824
    %897 = vrot.lane.b32.xlu0 %v894, 64
    %v898 = vpop.permute.xlu0 %897
    %v900 = vmul.f32 %v893, %v898
    %902 = vrot.lane.b32.xlu0 %v900, 32
    %v903 = vpop.permute.xlu0 %902
    %v905 = vadd.f32 %v895, %v903
    %v906 = vtanh.pop %v905
    %908 = vrot.lane.b32.xlu0 %v906, 64
    %v909 = vpop.permute.xlu0 %908
    %v911 = vmul.f32 %v893, %v909
    %913 = vrot.lane.b32.xlu0 %v911, 32
    %v914 = vpop.permute.xlu0 %913
    %v916 = vrot.slane %v914, 4
    %v917 = vmul.f32 %v916, %v89
    %v918 = vmul.f32 %v916, %v90
    %920 = vrot.lane.b32.xlu0 %v917, 24
    %v921 = vpop.permute.xlu0 %920
    %924 = vrot.lane.b32.xlu0 %v918, 48
    %v925 = vpop.permute.xlu0 %924
    %927 = vrot.lane.b32.xlu0 %v346, 104
    %v928 = vpop.permute.xlu0 %927
    %v930 = vsel %vm254, %v349, %v921
    %v931 = vsel %vm276, %v930, %v925
    %vm932 = vcmask 588800
    %v933 = vsel %vm932, %v931, %v928
    %935 = vrot.lane.b32.xlu0 %v830, 32
    %v936 = vpop.permute.xlu0 %935
    %v938 = vrot.slane %v936, 4
    %v939 = vmul.f32 %v938, %v89
    %v940 = vmul.f32 %v938, %v90
    %942 = vrot.lane.b32.xlu0 %v939, 24
    %v943 = vpop.permute.xlu0 %942
    %946 = vrot.lane.b32.xlu0 %v940, 48
    %v947 = vpop.permute.xlu0 %946
    %949 = vrot.lane.b32.xlu0 %v427, 104
    %v950 = vpop.permute.xlu0 %949
    %v952 = vsel %vm254, %v430, %v943
    %v953 = vsel %vm276, %v952, %v947
    %v954 = vsel %vm932, %v953, %v950
    %956 = vrot.lane.b32.xlu0 %v749, 32
    %v957 = vpop.permute.xlu0 %956
    %v959 = vrot.slane %v957, 4
    %v960 = vmul.f32 %v959, %v89
    %v961 = vmul.f32 %v959, %v90
    %963 = vrot.lane.b32.xlu0 %v960, 24
    %v964 = vpop.permute.xlu0 %963
    %967 = vrot.lane.b32.xlu0 %v961, 48
    %v968 = vpop.permute.xlu0 %967
    %970 = vrot.lane.b32.xlu0 %v508, 104
    %v971 = vpop.permute.xlu0 %970
    %v973 = vsel %vm254, %v511, %v964
    %v974 = vsel %vm276, %v973, %v968
    %v975 = vsel %vm932, %v974, %v971
    %977 = vrot.lane.b32.xlu0 %v668, 32
    %v978 = vpop.permute.xlu0 %977
    %v980 = vrot.slane %v978, 4
    %v981 = vmul.f32 %v980, %v89
    %v982 = vmul.f32 %v980, %v90
    %984 = vrot.lane.b32.xlu0 %v981, 24
    %v985 = vpop.permute.xlu0 %984
    %988 = vrot.lane.b32.xlu0 %v982, 48
    %v989 = vpop.permute.xlu0 %988
    %991 = vrot.lane.b32.xlu0 %v589, 104
    %v992 = vpop.permute.xlu0 %991
    %v994 = vsel %vm254, %v592, %v985
    %v995 = vsel %vm276, %v994, %v989
    %v996 = vsel %vm932, %v995, %v992
    %998 = vrot.lane.b32.xlu0 %v587, 32
    %v999 = vpop.permute.xlu0 %998
    %v1001 = vrot.slane %v999, 4
    %v1002 = vmul.f32 %v1001, %v89
    %v1003 = vmul.f32 %v1001, %v90
    %1005 = vrot.lane.b32.xlu0 %v1002, 24
    %v1006 = vpop.permute.xlu0 %1005
    %1009 = vrot.lane.b32.xlu0 %v1003, 48
    %v1010 = vpop.permute.xlu0 %1009
    %1012 = vrot.lane.b32.xlu0 %v670, 104
    %v1013 = vpop.permute.xlu0 %1012
    %v1015 = vsel %vm254, %v673, %v1006
    %v1016 = vsel %vm276, %v1015, %v1010
    %v1017 = vsel %vm932, %v1016, %v1013
    %1019 = vrot.lane.b32.xlu0 %v506, 32
    %v1020 = vpop.permute.xlu0 %1019
    %v1022 = vrot.slane %v1020, 4
    %v1023 = vmul.f32 %v1022, %v89
    %v1024 = vmul.f32 %v1022, %v90
    %1026 = vrot.lane.b32.xlu0 %v1023, 24
    %v1027 = vpop.permute.xlu0 %1026
    %1030 = vrot.lane.b32.xlu0 %v1024, 48
    %v1031 = vpop.permute.xlu0 %1030
    %1033 = vrot.lane.b32.xlu0 %v751, 104
    %v1034 = vpop.permute.xlu0 %1033
    %v1036 = vsel %vm254, %v754, %v1027
    %v1037 = vsel %vm276, %v1036, %v1031
    %v1038 = vsel %vm932, %v1037, %v1034
    %1040 = vrot.lane.b32.xlu0 %v425, 32
    %v1041 = vpop.permute.xlu0 %1040
    %v1043 = vrot.slane %v1041, 4
    %v1044 = vmul.f32 %v1043, %v89
    %v1045 = vmul.f32 %v1043, %v90
    %1047 = vrot.lane.b32.xlu0 %v1044, 24
    %v1048 = vpop.permute.xlu0 %1047
    %1051 = vrot.lane.b32.xlu0 %v1045, 48
    %v1052 = vpop.permute.xlu0 %1051
    %1054 = vrot.lane.b32.xlu0 %v832, 104
    %v1055 = vpop.permute.xlu0 %1054
    %v1057 = vsel %vm254, %v835, %v1048
    %v1058 = vsel %vm276, %v1057, %v1052
    %v1059 = vsel %vm932, %v1058, %v1055
    %1061 = vrot.lane.b32.xlu0 %v344, 32
    %v1062 = vpop.permute.xlu0 %1061
    %v1064 = vrot.slane %v1062, 4
    %v1065 = vmul.f32 %v911, %v89
    %v1066 = vmul.f32 %v1064, %v89
    %v1067 = vmul.f32 %v1064, %v90
    %v1068 = vmul.f32 %v911, %v90
    %1070 = vrot.lane.b32.xlu0 %v1065, 32
    %v1071 = vpop.permute.xlu0 %1070
    %1074 = vrot.lane.b32.xlu0 %v1066, 24
    %v1075 = vpop.permute.xlu0 %1074
    %1078 = vrot.lane.b32.xlu0 %v1067, 48
    %v1079 = vpop.permute.xlu0 %1078
    %1082 = vrot.lane.b32.xlu0 %v1068, 104
    %v1083 = vpop.permute.xlu0 %1082
    %v1085 = vsel %vm254, %v1071, %v1075
    %v1086 = vsel %vm276, %v1085, %v1079
    %v1087 = vsel %vm932, %v1086, %v1083
    %v1088 = vpack.c.bf16 %v954, %v933
    %v1089 = vpack.c.bf16 %v996, %v975
    %v1090 = vpack.c.bf16 %v1038, %v1017
    %v1091 = vpack.c.bf16 %v1087, %v1059
    %s1092 = scalar_lea.vmem %s1, 48
    %v1093 = vld [vmem:[%s1092] sm:$0xf]
    %v1094 = vld [vmem:[%s1092 + $0x4] sm:$0xf]
    %v1095 = vld [vmem:[%s1092 + $0x8] sm:$0xf]
    %v1096 = vld [vmem:[%s1092 + $0xc] sm:$0xf]
    %v1097 = vld [vmem:[%s1092 + $0x10] sm:$0xf]
    %v1098 = vld [vmem:[%s1092 + $0x14] sm:$0xf]
    %v1099 = vld [vmem:[%s1092 + $0x18] sm:$0xf]
    %v1100 = vld [vmem:[%s1092 + $0x1c] sm:$0xf]
    %v1101 = vld [vmem:[%s1092 + $0x20] sm:$0xf]
    %v1102 = vld [vmem:[%s1092 + $0x24] sm:$0xf]
    %v1103 = vld [vmem:[%s1092 + $0x28] sm:$0xf]
    %v1104 = vld [vmem:[%s1092 + $0x2c] sm:$0xf]
    %v1117 = vunpack.c.l.b16 %v1093
    %v1118 = vunpack.c.l.b16 %v1094
    %v1119 = vunpack.c.l.b16 %v1095
    %v1120 = vunpack.c.l.b16 %v1096
    %v1121 = vunpack.c.l.b16 %v1097
    %v1122 = vunpack.c.l.b16 %v1098
    %v1123 = vunpack.c.l.b16 %v1099
    %v1124 = vunpack.c.l.b16 %v1100
    %v1125 = vunpack.c.l.b16 %v1101
    %v1126 = vunpack.c.l.b16 %v1102
    %v1127 = vunpack.c.l.b16 %v1103
    %v1128 = vunpack.c.l.b16 %v1104
    %v1129 = vpack.c.b16 %v1118, %v1117
    %v1130 = vpack.c.b16 %v1120, %v1119
    %v1131 = vpack.c.b16 %v1122, %v1121
    %v1132 = vpack.c.b16 %v1124, %v1123
    %v1133 = vpack.c.b16 %v1126, %v1125
    %v1134 = vpack.c.b16 %v1128, %v1127
    %v1142 = vsel %vm167, %v1088, 0
    %v1145 = vsel %vm167, %v1089, 0
    %v1148 = vsel %vm167, %v1090, 0
    %v1151 = vsel %vm167, %v1091, 0
    %1153 = vmatprep.subr.bf16.mxu0 0
    %1154 = vmatpush1.bf16.msra.mxu0 %v1129
    %1155 = vmatprep.subr.bf16.mxu0 0
    %1156 = vmatpush1.bf16.msra.mxu0 %v1130
    %1157 = vmatprep.subr.bf16.mxu0 0
    %1158 = vmatpush1.bf16.msra.mxu0 %v1131
    %1159 = vmatprep.subr.bf16.mxu0 0
    %1160 = vmatpush1.bf16.msra.mxu0 %v1132
    %1161 = vmatprep.subr.bf16.mxu0 0
    %1162 = vmatpush1.bf16.msra.mxu0 %v1133
    %1163 = vmatprep.subr.bf16.mxu0 0
    %1164 = vmatpush1.bf16.msra.mxu0 %v1134
    %1165 = vmatprep.subr.bf16.mxu0 0
    %1166 = vmatpush1.bf16.msra.mxu0 0
    %1167 = vmatprep.subr.bf16.mxu0 0
    %1168 = vmatpush1.bf16.msra.mxu0 0
    %1169 = vmatprep.subr.bf16.mxu0 0
    %1170 = vmatpush1.bf16.msra.mxu0 0
    %1171 = vmatprep.subr.bf16.mxu0 0
    %1172 = vmatpush1.bf16.msra.mxu0 0
    %1173 = vmatprep.subr.bf16.mxu0 0
    %1174 = vmatpush1.bf16.msra.mxu0 0
    %1175 = vmatprep.subr.bf16.mxu0 0
    %1176 = vmatpush1.bf16.msra.mxu0 0
    %1177 = vmatprep.subr.bf16.mxu0 0
    %1178 = vmatpush1.bf16.msra.mxu0 0
    %1179 = vmatprep.subr.bf16.mxu0 0
    %1180 = vmatpush1.bf16.msra.mxu0 0
    %1181 = vmatprep.subr.bf16.mxu0 0
    %1182 = vmatpush1.bf16.msra.mxu0 0
    %1183 = vmatprep.subr.bf16.mxu0 0
    %1184 = vmatpush1.bf16.msra.mxu0 0
    %1185 = vmatprep.mubr.bf16.mxu0 0
    %1186 = vmatmul.mubr.bf16.gmra.mrb[0].mxu0 %v1142
    %v1187 = vpop.f32.mrb[0].mxu0
    %v1188 = vadd.f32 0.0, %v1187
    %v1189 = vpop.f32.mrb[0].mxu0
    %v1190 = vpop.f32.mrb[0].mxu0
    %v1191 = vadd.f32 0.0, %v1190
    %v1192 = vpop.f32.mrb[0].mxu0
    %1193 = vmatprep.mubr.bf16.mxu0 0
    %1194 = vmatmul.mubr.bf16.gmra.mrb[0].mxu0 %v1145
    %v1195 = vpop.f32.mrb[0].mxu0
    %v1196 = vadd.f32 0.0, %v1195
    %v1197 = vpop.f32.mrb[0].mxu0
    %v1198 = vpop.f32.mrb[0].mxu0
    %v1199 = vadd.f32 0.0, %v1198
    %v1200 = vpop.f32.mrb[0].mxu0
    %1201 = vmatprep.mubr.bf16.mxu0 0
    %1202 = vmatmul.mubr.bf16.gmra.mrb[0].mxu0 %v1148
    %v1203 = vpop.f32.mrb[0].mxu0
    %v1204 = vadd.f32 0.0, %v1203
    %v1205 = vpop.f32.mrb[0].mxu0
    %v1206 = vpop.f32.mrb[0].mxu0
    %v1207 = vadd.f32 0.0, %v1206
    %v1208 = vpop.f32.mrb[0].mxu0
    %1209 = vmatprep.mubr.bf16.mxu0 0
    %1210 = vmatmul.mubr.bf16.gmra.mrb[0].mxu0 %v1151
    %v1211 = vpop.f32.mrb[0].mxu0
    %v1212 = vadd.f32 0.0, %v1211
    %v1213 = vpop.f32.mrb[0].mxu0
    %v1214 = vpop.f32.mrb[0].mxu0
    %v1215 = vadd.f32 0.0, %v1214
    %v1216 = vpop.f32.mrb[0].mxu0
    %1217 = vdwg.mxu0
    %s1218 = scalar_lea.vmem [#allocation3], 24
    %v1219 = vld [vmem:[%s1218] sm:$0xf]
    %v1220 = vld [vmem:[%s1218 + $0x4] sm:$0xf]
    %v1221 = vld [vmem:[%s1218 + $0x8] sm:$0xf]
    %v1222 = vld [vmem:[%s1218 + $0xc] sm:$0xf]
    %v1223 = vld [vmem:[%s1218 + $0x10] sm:$0xf]
    %v1224 = vld [vmem:[%s1218 + $0x14] sm:$0xf]
    %s1225 = scalar_lea.vmem %s3, 8
    %v1226 = vld [vmem:[%s1225] sm:$0xff]
    %v1227 = vadd.f32 %v1188, %v1226
    %v1234 = vunpack.c.l.b16 %v1219
    %v1235 = vunpack.c.l.b16 %v1220
    %v1236 = vunpack.c.l.b16 %v1221
    %v1237 = vunpack.c.l.b16 %v1222
    %v1238 = vunpack.c.l.b16 %v1223
    %v1239 = vunpack.c.l.b16 %v1224
    %v1240 = vpack.c.b16 %v1235, %v1234
    %v1241 = vpack.c.b16 %v1237, %v1236
    %v1242 = vpack.c.b16 %v1239, %v1238
    %1246 = vmatprep.subr.bf16.mxu0 0
    %1247 = vmatpush1.bf16.msra.mxu0 %v1240
    %1248 = vmatprep.subr.bf16.mxu0 0
    %1249 = vmatpush1.bf16.msra.mxu0 %v1241
    %1250 = vmatprep.subr.bf16.mxu0 0
    %1251 = vmatpush1.bf16.msra.mxu0 %v1242
    %1252 = vmatprep.subr.bf16.mxu0 0
    %1253 = vmatpush1.bf16.msra.mxu0 0
    %1254 = vmatprep.subr.bf16.mxu0 0
    %1255 = vmatpush1.bf16.msra.mxu0 0
    %1256 = vmatprep.subr.bf16.mxu0 0
    %1257 = vmatpush1.bf16.msra.mxu0 0
    %1258 = vmatprep.subr.bf16.mxu0 0
    %1259 = vmatpush1.bf16.msra.mxu0 0
    %1260 = vmatprep.subr.bf16.mxu0 0
    %1261 = vmatpush1.bf16.msra.mxu0 0
    %1262 = vmatprep.subr.bf16.mxu0 0
    %1263 = vmatpush1.bf16.msra.mxu0 0
    %1264 = vmatprep.subr.bf16.mxu0 0
    %1265 = vmatpush1.bf16.msra.mxu0 0
    %1266 = vmatprep.subr.bf16.mxu0 0
    %1267 = vmatpush1.bf16.msra.mxu0 0
    %1268 = vmatprep.subr.bf16.mxu0 0
    %1269 = vmatpush1.bf16.msra.mxu0 0
    %1270 = vmatprep.subr.bf16.mxu0 0
    %1271 = vmatpush1.bf16.msra.mxu0 0
    %1272 = vmatprep.subr.bf16.mxu0 0
    %1273 = vmatpush1.bf16.msra.mxu0 0
    %1274 = vmatprep.subr.bf16.mxu0 0
    %1275 = vmatpush1.bf16.msra.mxu0 0
    %1276 = vmatprep.subr.bf16.mxu0 0
    %1277 = vmatpush1.bf16.msra.mxu0 0
    %1278 = vmatprep.mubr.bf16.mxu0 0
    %1279 = vmatmul.mubr.bf16.gmra.mrb[0].mxu0 %v278
    %v1280 = vpop.f32.mrb[0].mxu0
    %v1281 = vadd.f32 0.0, %v1280
    %v1282 = vpop.f32.mrb[0].mxu0
    %v1283 = vpop.f32.mrb[0].mxu0
    %v1284 = vpop.f32.mrb[0].mxu0
    %1285 = vdwg.mxu0
    %v1286 = vadd.f32 %v1227, %v1281
    %v1287 = vxor.u32 %v1286, 2147483648
    %v1288 = vmul.f32 %v1287, 1.442695
    %v1289 = vpow.pop %v1288
    %v1290 = vadd.f32 %v1289, 1.0
    %v1291 = vrcp.pop %v1290
    %v1292 = vmul.f32 1.0, %v1291
    %v1293 = vtanh.pop %v1286
    %v1294 = vmul.f32 %v1292, 0.0
    %1296 = vrot.lane.b32.xlu0 %v1293, 64
    %v1297 = vpop.permute.xlu0 %1296
    %v1299 = vmul.f32 %v1292, %v1297
    %1301 = vrot.lane.b32.xlu0 %v1299, 32
    %v1302 = vpop.permute.xlu0 %1301
    %v1304 = vadd.f32 %v1294, %v1302
    %v1305 = vtanh.pop %v1304
    %1307 = vrot.lane.b32.xlu0 %v1305, 64
    %v1308 = vpop.permute.xlu0 %1307
    %v1310 = vmul.f32 %v1292, %v1308
    %v1311 = vmul.f32 %v1310, %v89
    %v1312 = vmul.f32 %v1310, %v90
    %1314 = vrot.lane.b32.xlu0 %v1311, 32
    %v1315 = vpop.permute.xlu0 %1314
    %1318 = vrot.lane.b32.xlu0 %v1312, 56
    %v1319 = vpop.permute.xlu0 %1318
    %v1321 = vsel %vm254, %v1315, %v1319
    %v1322 = vadd.f32 %v1191, %v1226
    %v1323 = vpack.c.bf16 %v1321, %v1321
    %v1325 = vsel %vm276, %v1323, 0
    %1327 = vmatprep.subr.bf16.mxu0 0
    %1328 = vmatpush1.bf16.msra.mxu0 %v1240
    %1329 = vmatprep.subr.bf16.mxu0 0
    %1330 = vmatpush1.bf16.msra.mxu0 %v1241
    %1331 = vmatprep.subr.bf16.mxu0 0
    %1332 = vmatpush1.bf16.msra.mxu0 %v1242
    %1333 = vmatprep.subr.bf16.mxu0 0
    %1334 = vmatpush1.bf16.msra.mxu0 0
    %1335 = vmatprep.subr.bf16.mxu0 0
    %1336 = vmatpush1.bf16.msra.mxu0 0
    %1337 = vmatprep.subr.bf16.mxu0 0
    %1338 = vmatpush1.bf16.msra.mxu0 0
    %1339 = vmatprep.subr.bf16.mxu0 0
    %1340 = vmatpush1.bf16.msra.mxu0 0
    %1341 = vmatprep.subr.bf16.mxu0 0
    %1342 = vmatpush1.bf16.msra.mxu0 0
    %1343 = vmatprep.subr.bf16.mxu0 0
    %1344 = vmatpush1.bf16.msra.mxu0 0
    %1345 = vmatprep.subr.bf16.mxu0 0
    %1346 = vmatpush1.bf16.msra.mxu0 0
    %1347 = vmatprep.subr.bf16.mxu0 0
    %1348 = vmatpush1.bf16.msra.mxu0 0
    %1349 = vmatprep.subr.bf16.mxu0 0
    %1350 = vmatpush1.bf16.msra.mxu0 0
    %1351 = vmatprep.subr.bf16.mxu0 0
    %1352 = vmatpush1.bf16.msra.mxu0 0
    %1353 = vmatprep.subr.bf16.mxu0 0
    %1354 = vmatpush1.bf16.msra.mxu0 0
    %1355 = vmatprep.subr.bf16.mxu0 0
    %1356 = vmatpush1.bf16.msra.mxu0 0
    %1357 = vmatprep.subr.bf16.mxu0 0
    %1358 = vmatpush1.bf16.msra.mxu0 0
    %1359 = vmatprep.mubr.bf16.mxu0 0
    %1360 = vmatmul.mubr.bf16.gmra.mrb[0].mxu0 %v1325
    %v1361 = vpop.f32.mrb[0].mxu0
    %v1362 = vadd.f32 0.0, %v1361
    %v1363 = vpop.f32.mrb[0].mxu0
    %v1364 = vpop.f32.mrb[0].mxu0
    %v1365 = vpop.f32.mrb[0].mxu0
    %1366 = vdwg.mxu0
    %v1367 = vadd.f32 %v1322, %v1362
    %v1368 = vxor.u32 %v1367, 2147483648
    %v1369 = vmul.f32 %v1368, 1.442695
    %v1370 = vpow.pop %v1369
    %v1371 = vadd.f32 %v1370, 1.0
    %v1372 = vrcp.pop %v1371
    %v1373 = vmul.f32 1.0, %v1372
    %v1374 = vtanh.pop %v1367
    %v1375 = vmul.f32 %v1373, %v1304
    %1377 = vrot.lane.b32.xlu0 %v1374, 64
    %v1378 = vpop.permute.xlu0 %1377
    %v1380 = vmul.f32 %v1373, %v1378
    %1382 = vrot.lane.b32.xlu0 %v1380, 32
    %v1383 = vpop.permute.xlu0 %1382
    %v1385 = vadd.f32 %v1375, %v1383
    %v1386 = vtanh.pop %v1385
    %1388 = vrot.lane.b32.xlu0 %v1386, 64
    %v1389 = vpop.permute.xlu0 %1388
    %v1391 = vmul.f32 %v1373, %v1389
    %v1392 = vmul.f32 %v1391, %v89
    %v1393 = vmul.f32 %v1391, %v90
    %1395 = vrot.lane.b32.xlu0 %v1392, 32
    %v1396 = vpop.permute.xlu0 %1395
    %1399 = vrot.lane.b32.xlu0 %v1393, 56
    %v1400 = vpop.permute.xlu0 %1399
    %v1402 = vsel %vm254, %v1396, %v1400
    %v1403 = vadd.f32 %v1196, %v1226
    %v1404 = vpack.c.bf16 %v1402, %v1402
    %v1406 = vsel %vm276, %v1404, 0
    %1408 = vmatprep.subr.bf16.mxu0 0
    %1409 = vmatpush1.bf16.msra.mxu0 %v1240
    %1410 = vmatprep.subr.bf16.mxu0 0
    %1411 = vmatpush1.bf16.msra.mxu0 %v1241
    %1412 = vmatprep.subr.bf16.mxu0 0
    %1413 = vmatpush1.bf16.msra.mxu0 %v1242
    %1414 = vmatprep.subr.bf16.mxu0 0
    %1415 = vmatpush1.bf16.msra.mxu0 0
    %1416 = vmatprep.subr.bf16.mxu0 0
    %1417 = vmatpush1.bf16.msra.mxu0 0
    %1418 = vmatprep.subr.bf16.mxu0 0
    %1419 = vmatpush1.bf16.msra.mxu0 0
    %1420 = vmatprep.subr.bf16.mxu0 0
    %1421 = vmatpush1.bf16.msra.mxu0 0
    %1422 = vmatprep.subr.bf16.mxu0 0
    %1423 = vmatpush1.bf16.msra.mxu0 0
    %1424 = vmatprep.subr.bf16.mxu0 0
    %1425 = vmatpush1.bf16.msra.mxu0 0
    %1426 = vmatprep.subr.bf16.mxu0 0
    %1427 = vmatpush1.bf16.msra.mxu0 0
    %1428 = vmatprep.subr.bf16.mxu0 0
    %1429 = vmatpush1.bf16.msra.mxu0 0
    %1430 = vmatprep.subr.bf16.mxu0 0
    %1431 = vmatpush1.bf16.msra.mxu0 0
    %1432 = vmatprep.subr.bf16.mxu0 0
    %1433 = vmatpush1.bf16.msra.mxu0 0
    %1434 = vmatprep.subr.bf16.mxu0 0
    %1435 = vmatpush1.bf16.msra.mxu0 0
    %1436 = vmatprep.subr.bf16.mxu0 0
    %1437 = vmatpush1.bf16.msra.mxu0 0
    %1438 = vmatprep.subr.bf16.mxu0 0
    %1439 = vmatpush1.bf16.msra.mxu0 0
    %1440 = vmatprep.mubr.bf16.mxu0 0
    %1441 = vmatmul.mubr.bf16.gmra.mrb[0].mxu0 %v1406
    %v1442 = vpop.f32.mrb[0].mxu0
    %v1443 = vadd.f32 0.0, %v1442
    %v1444 = vpop.f32.mrb[0].mxu0
    %v1445 = vpop.f32.mrb[0].mxu0
    %v1446 = vpop.f32.mrb[0].mxu0
    %1447 = vdwg.mxu0
    %v1448 = vadd.f32 %v1403, %v1443
    %v1449 = vxor.u32 %v1448, 2147483648
    %v1450 = vmul.f32 %v1449, 1.442695
    %v1451 = vpow.pop %v1450
    %v1452 = vadd.f32 %v1451, 1.0
    %v1453 = vrcp.pop %v1452
    %v1454 = vmul.f32 1.0, %v1453
    %v1455 = vtanh.pop %v1448
    %v1456 = vmul.f32 %v1454, %v1385
    %1458 = vrot.lane.b32.xlu0 %v1455, 64
    %v1459 = vpop.permute.xlu0 %1458
    %v1461 = vmul.f32 %v1454, %v1459
    %1463 = vrot.lane.b32.xlu0 %v1461, 32
    %v1464 = vpop.permute.xlu0 %1463
    %v1466 = vadd.f32 %v1456, %v1464
    %v1467 = vtanh.pop %v1466
    %1469 = vrot.lane.b32.xlu0 %v1467, 64
    %v1470 = vpop.permute.xlu0 %1469
    %v1472 = vmul.f32 %v1454, %v1470
    %v1473 = vmul.f32 %v1472, %v89
    %v1474 = vmul.f32 %v1472, %v90
    %1476 = vrot.lane.b32.xlu0 %v1473, 32
    %v1477 = vpop.permute.xlu0 %1476
    %1480 = vrot.lane.b32.xlu0 %v1474, 56
    %v1481 = vpop.permute.xlu0 %1480
    %v1483 = vsel %vm254, %v1477, %v1481
    %v1484 = vadd.f32 %v1199, %v1226
    %v1485 = vpack.c.bf16 %v1483, %v1483
    %v1487 = vsel %vm276, %v1485, 0
    %1489 = vmatprep.subr.bf16.mxu0 0
    %1490 = vmatpush1.bf16.msra.mxu0 %v1240
    %1491 = vmatprep.subr.bf16.mxu0 0
    %1492 = vmatpush1.bf16.msra.mxu0 %v1241
    %1493 = vmatprep.subr.bf16.mxu0 0
    %1494 = vmatpush1.bf16.msra.mxu0 %v1242
    %1495 = vmatprep.subr.bf16.mxu0 0
    %1496 = vmatpush1.bf16.msra.mxu0 0
    %1497 = vmatprep.subr.bf16.mxu0 0
    %1498 = vmatpush1.bf16.msra.mxu0 0
    %1499 = vmatprep.subr.bf16.mxu0 0
    %1500 = vmatpush1.bf16.msra.mxu0 0
    %1501 = vmatprep.subr.bf16.mxu0 0
    %1502 = vmatpush1.bf16.msra.mxu0 0
    %1503 = vmatprep.subr.bf16.mxu0 0
    %1504 = vmatpush1.bf16.msra.mxu0 0
    %1505 = vmatprep.subr.bf16.mxu0 0
    %1506 = vmatpush1.bf16.msra.mxu0 0
    %1507 = vmatprep.subr.bf16.mxu0 0
    %1508 = vmatpush1.bf16.msra.mxu0 0
    %1509 = vmatprep.subr.bf16.mxu0 0
    %1510 = vmatpush1.bf16.msra.mxu0 0
    %1511 = vmatprep.subr.bf16.mxu0 0
    %1512 = vmatpush1.bf16.msra.mxu0 0
    %1513 = vmatprep.subr.bf16.mxu0 0
    %1514 = vmatpush1.bf16.msra.mxu0 0
    %1515 = vmatprep.subr.bf16.mxu0 0
    %1516 = vmatpush1.bf16.msra.mxu0 0
    %1517 = vmatprep.subr.bf16.mxu0 0
    %1518 = vmatpush1.bf16.msra.mxu0 0
    %1519 = vmatprep.subr.bf16.mxu0 0
    %1520 = vmatpush1.bf16.msra.mxu0 0
    %1521 = vmatprep.mubr.bf16.mxu0 0
    %1522 = vmatmul.mubr.bf16.gmra.mrb[0].mxu0 %v1487
    %v1523 = vpop.f32.mrb[0].mxu0
    %v1524 = vadd.f32 0.0, %v1523
    %v1525 = vpop.f32.mrb[0].mxu0
    %v1526 = vpop.f32.mrb[0].mxu0
    %v1527 = vpop.f32.mrb[0].mxu0
    %1528 = vdwg.mxu0
    %v1529 = vadd.f32 %v1484, %v1524
    %v1530 = vxor.u32 %v1529, 2147483648
    %v1531 = vmul.f32 %v1530, 1.442695
    %v1532 = vpow.pop %v1531
    %v1533 = vadd.f32 %v1532, 1.0
    %v1534 = vrcp.pop %v1533
    %v1535 = vmul.f32 1.0, %v1534
    %v1536 = vtanh.pop %v1529
    %v1537 = vmul.f32 %v1535, %v1466
    %1539 = vrot.lane.b32.xlu0 %v1536, 64
    %v1540 = vpop.permute.xlu0 %1539
    %v1542 = vmul.f32 %v1535, %v1540
    %1544 = vrot.lane.b32.xlu0 %v1542, 32
    %v1545 = vpop.permute.xlu0 %1544
    %v1547 = vadd.f32 %v1537, %v1545
    %v1548 = vtanh.pop %v1547
    %1550 = vrot.lane.b32.xlu0 %v1548, 64
    %v1551 = vpop.permute.xlu0 %1550
    %v1553 = vmul.f32 %v1535, %v1551
    %v1554 = vmul.f32 %v1553, %v89
    %v1555 = vmul.f32 %v1553, %v90
    %1557 = vrot.lane.b32.xlu0 %v1554, 32
    %v1558 = vpop.permute.xlu0 %1557
    %1561 = vrot.lane.b32.xlu0 %v1555, 56
    %v1562 = vpop.permute.xlu0 %1561
    %v1564 = vsel %vm254, %v1558, %v1562
    %v1565 = vadd.f32 %v1204, %v1226
    %v1566 = vpack.c.bf16 %v1564, %v1564
    %v1568 = vsel %vm276, %v1566, 0
    %1570 = vmatprep.subr.bf16.mxu0 0
    %1571 = vmatpush1.bf16.msra.mxu0 %v1240
    %1572 = vmatprep.subr.bf16.mxu0 0
    %1573 = vmatpush1.bf16.msra.mxu0 %v1241
    %1574 = vmatprep.subr.bf16.mxu0 0
    %1575 = vmatpush1.bf16.msra.mxu0 %v1242
    %1576 = vmatprep.subr.bf16.mxu0 0
    %1577 = vmatpush1.bf16.msra.mxu0 0
    %1578 = vmatprep.subr.bf16.mxu0 0
    %1579 = vmatpush1.bf16.msra.mxu0 0
    %1580 = vmatprep.subr.bf16.mxu0 0
    %1581 = vmatpush1.bf16.msra.mxu0 0
    %1582 = vmatprep.subr.bf16.mxu0 0
    %1583 = vmatpush1.bf16.msra.mxu0 0
    %1584 = vmatprep.subr.bf16.mxu0 0
    %1585 = vmatpush1.bf16.msra.mxu0 0
    %1586 = vmatprep.subr.bf16.mxu0 0
    %1587 = vmatpush1.bf16.msra.mxu0 0
    %1588 = vmatprep.subr.bf16.mxu0 0
    %1589 = vmatpush1.bf16.msra.mxu0 0
    %1590 = vmatprep.subr.bf16.mxu0 0
    %1591 = vmatpush1.bf16.msra.mxu0 0
    %1592 = vmatprep.subr.bf16.mxu0 0
    %1593 = vmatpush1.bf16.msra.mxu0 0
    %1594 = vmatprep.subr.bf16.mxu0 0
    %1595 = vmatpush1.bf16.msra.mxu0 0
    %1596 = vmatprep.subr.bf16.mxu0 0
    %1597 = vmatpush1.bf16.msra.mxu0 0
    %1598 = vmatprep.subr.bf16.mxu0 0
    %1599 = vmatpush1.bf16.msra.mxu0 0
    %1600 = vmatprep.subr.bf16.mxu0 0
    %1601 = vmatpush1.bf16.msra.mxu0 0
    %1602 = vmatprep.mubr.bf16.mxu0 0
    %1603 = vmatmul.mubr.bf16.gmra.mrb[0].mxu0 %v1568
    %v1604 = vpop.f32.mrb[0].mxu0
    %v1605 = vadd.f32 0.0, %v1604
    %v1606 = vpop.f32.mrb[0].mxu0
    %v1607 = vpop.f32.mrb[0].mxu0
    %v1608 = vpop.f32.mrb[0].mxu0
    %1609 = vdwg.mxu0
    %v1610 = vadd.f32 %v1565, %v1605
    %v1611 = vxor.u32 %v1610, 2147483648
    %v1612 = vmul.f32 %v1611, 1.442695
    %v1613 = vpow.pop %v1612
    %v1614 = vadd.f32 %v1613, 1.0
    %v1615 = vrcp.pop %v1614
    %v1616 = vmul.f32 1.0, %v1615
    %v1617 = vtanh.pop %v1610
    %v1618 = vmul.f32 %v1616, %v1547
    %1620 = vrot.lane.b32.xlu0 %v1617, 64
    %v1621 = vpop.permute.xlu0 %1620
    %v1623 = vmul.f32 %v1616, %v1621
    %1625 = vrot.lane.b32.xlu0 %v1623, 32
    %v1626 = vpop.permute.xlu0 %1625
    %v1628 = vadd.f32 %v1618, %v1626
    %v1629 = vtanh.pop %v1628
    %1631 = vrot.lane.b32.xlu0 %v1629, 64
    %v1632 = vpop.permute.xlu0 %1631
    %v1634 = vmul.f32 %v1616, %v1632
    %v1635 = vmul.f32 %v1634, %v89
    %v1636 = vmul.f32 %v1634, %v90
    %1638 = vrot.lane.b32.xlu0 %v1635, 32
    %v1639 = vpop.permute.xlu0 %1638
    %1642 = vrot.lane.b32.xlu0 %v1636, 56
    %v1643 = vpop.permute.xlu0 %1642
    %v1645 = vsel %vm254, %v1639, %v1643
    %v1646 = vadd.f32 %v1207, %v1226
    %v1647 = vpack.c.bf16 %v1645, %v1645
    %v1649 = vsel %vm276, %v1647, 0
    %1651 = vmatprep.subr.bf16.mxu0 0
    %1652 = vmatpush1.bf16.msra.mxu0 %v1240
    %1653 = vmatprep.subr.bf16.mxu0 0
    %1654 = vmatpush1.bf16.msra.mxu0 %v1241
    %1655 = vmatprep.subr.bf16.mxu0 0
    %1656 = vmatpush1.bf16.msra.mxu0 %v1242
    %1657 = vmatprep.subr.bf16.mxu0 0
    %1658 = vmatpush1.bf16.msra.mxu0 0
    %1659 = vmatprep.subr.bf16.mxu0 0
    %1660 = vmatpush1.bf16.msra.mxu0 0
    %1661 = vmatprep.subr.bf16.mxu0 0
    %1662 = vmatpush1.bf16.msra.mxu0 0
    %1663 = vmatprep.subr.bf16.mxu0 0
    %1664 = vmatpush1.bf16.msra.mxu0 0
    %1665 = vmatprep.subr.bf16.mxu0 0
    %1666 = vmatpush1.bf16.msra.mxu0 0
    %1667 = vmatprep.subr.bf16.mxu0 0
    %1668 = vmatpush1.bf16.msra.mxu0 0
    %1669 = vmatprep.subr.bf16.mxu0 0
    %1670 = vmatpush1.bf16.msra.mxu0 0
    %1671 = vmatprep.subr.bf16.mxu0 0
    %1672 = vmatpush1.bf16.msra.mxu0 0
    %1673 = vmatprep.subr.bf16.mxu0 0
    %1674 = vmatpush1.bf16.msra.mxu0 0
    %1675 = vmatprep.subr.bf16.mxu0 0
    %1676 = vmatpush1.bf16.msra.mxu0 0
    %1677 = vmatprep.subr.bf16.mxu0 0
    %1678 = vmatpush1.bf16.msra.mxu0 0
    %1679 = vmatprep.subr.bf16.mxu0 0
    %1680 = vmatpush1.bf16.msra.mxu0 0
    %1681 = vmatprep.subr.bf16.mxu0 0
    %1682 = vmatpush1.bf16.msra.mxu0 0
    %1683 = vmatprep.mubr.bf16.mxu0 0
    %1684 = vmatmul.mubr.bf16.gmra.mrb[0].mxu0 %v1649
    %v1685 = vpop.f32.mrb[0].mxu0
    %v1686 = vadd.f32 0.0, %v1685
    %v1687 = vpop.f32.mrb[0].mxu0
    %v1688 = vpop.f32.mrb[0].mxu0
    %v1689 = vpop.f32.mrb[0].mxu0
    %1690 = vdwg.mxu0
    %v1691 = vadd.f32 %v1646, %v1686
    %v1692 = vxor.u32 %v1691, 2147483648
    %v1693 = vmul.f32 %v1692, 1.442695
    %v1694 = vpow.pop %v1693
    %v1695 = vadd.f32 %v1694, 1.0
    %v1696 = vrcp.pop %v1695
    %v1697 = vmul.f32 1.0, %v1696
    %v1698 = vtanh.pop %v1691
    %v1699 = vmul.f32 %v1697, %v1628
    %1701 = vrot.lane.b32.xlu0 %v1698, 64
    %v1702 = vpop.permute.xlu0 %1701
    %v1704 = vmul.f32 %v1697, %v1702
    %1706 = vrot.lane.b32.xlu0 %v1704, 32
    %v1707 = vpop.permute.xlu0 %1706
    %v1709 = vadd.f32 %v1699, %v1707
    %v1710 = vtanh.pop %v1709
    %1712 = vrot.lane.b32.xlu0 %v1710, 64
    %v1713 = vpop.permute.xlu0 %1712
    %v1715 = vmul.f32 %v1697, %v1713
    %v1716 = vmul.f32 %v1715, %v89
    %v1717 = vmul.f32 %v1715, %v90
    %1719 = vrot.lane.b32.xlu0 %v1716, 32
    %v1720 = vpop.permute.xlu0 %1719
    %1723 = vrot.lane.b32.xlu0 %v1717, 56
    %v1724 = vpop.permute.xlu0 %1723
    %v1726 = vsel %vm254, %v1720, %v1724
    %v1727 = vadd.f32 %v1212, %v1226
    %v1728 = vpack.c.bf16 %v1726, %v1726
    %v1730 = vsel %vm276, %v1728, 0
    %1732 = vmatprep.subr.bf16.mxu0 0
    %1733 = vmatpush1.bf16.msra.mxu0 %v1240
    %1734 = vmatprep.subr.bf16.mxu0 0
    %1735 = vmatpush1.bf16.msra.mxu0 %v1241
    %1736 = vmatprep.subr.bf16.mxu0 0
    %1737 = vmatpush1.bf16.msra.mxu0 %v1242
    %1738 = vmatprep.subr.bf16.mxu0 0
    %1739 = vmatpush1.bf16.msra.mxu0 0
    %1740 = vmatprep.subr.bf16.mxu0 0
    %1741 = vmatpush1.bf16.msra.mxu0 0
    %1742 = vmatprep.subr.bf16.mxu0 0
    %1743 = vmatpush1.bf16.msra.mxu0 0
    %1744 = vmatprep.subr.bf16.mxu0 0
    %1745 = vmatpush1.bf16.msra.mxu0 0
    %1746 = vmatprep.subr.bf16.mxu0 0
    %1747 = vmatpush1.bf16.msra.mxu0 0
    %1748 = vmatprep.subr.bf16.mxu0 0
    %1749 = vmatpush1.bf16.msra.mxu0 0
    %1750 = vmatprep.subr.bf16.mxu0 0
    %1751 = vmatpush1.bf16.msra.mxu0 0
    %1752 = vmatprep.subr.bf16.mxu0 0
    %1753 = vmatpush1.bf16.msra.mxu0 0
    %1754 = vmatprep.subr.bf16.mxu0 0
    %1755 = vmatpush1.bf16.msra.mxu0 0
    %1756 = vmatprep.subr.bf16.mxu0 0
    %1757 = vmatpush1.bf16.msra.mxu0 0
    %1758 = vmatprep.subr.bf16.mxu0 0
    %1759 = vmatpush1.bf16.msra.mxu0 0
    %1760 = vmatprep.subr.bf16.mxu0 0
    %1761 = vmatpush1.bf16.msra.mxu0 0
    %1762 = vmatprep.subr.bf16.mxu0 0
    %1763 = vmatpush1.bf16.msra.mxu0 0
    %1764 = vmatprep.mubr.bf16.mxu0 0
    %1765 = vmatmul.mubr.bf16.gmra.mrb[0].mxu0 %v1730
    %v1766 = vpop.f32.mrb[0].mxu0
    %v1767 = vadd.f32 0.0, %v1766
    %v1768 = vpop.f32.mrb[0].mxu0
    %v1769 = vpop.f32.mrb[0].mxu0
    %v1770 = vpop.f32.mrb[0].mxu0
    %1771 = vdwg.mxu0
    %v1772 = vadd.f32 %v1727, %v1767
    %v1773 = vxor.u32 %v1772, 2147483648
    %v1774 = vmul.f32 %v1773, 1.442695
    %v1775 = vpow.pop %v1774
    %v1776 = vadd.f32 %v1775, 1.0
    %v1777 = vrcp.pop %v1776
    %v1778 = vmul.f32 1.0, %v1777
    %v1779 = vtanh.pop %v1772
    %v1780 = vmul.f32 %v1778, %v1709
    %1782 = vrot.lane.b32.xlu0 %v1779, 64
    %v1783 = vpop.permute.xlu0 %1782
    %v1785 = vmul.f32 %v1778, %v1783
    %1787 = vrot.lane.b32.xlu0 %v1785, 32
    %v1788 = vpop.permute.xlu0 %1787
    %v1790 = vadd.f32 %v1780, %v1788
    %v1791 = vtanh.pop %v1790
    %1793 = vrot.lane.b32.xlu0 %v1791, 64
    %v1794 = vpop.permute.xlu0 %1793
    %v1796 = vmul.f32 %v1778, %v1794
    %v1797 = vmul.f32 %v1796, %v89
    %v1798 = vmul.f32 %v1796, %v90
    %1800 = vrot.lane.b32.xlu0 %v1797, 32
    %v1801 = vpop.permute.xlu0 %1800
    %1804 = vrot.lane.b32.xlu0 %v1798, 56
    %v1805 = vpop.permute.xlu0 %1804
    %v1807 = vsel %vm254, %v1801, %v1805
    %v1808 = vadd.f32 %v1215, %v1226
    %v1809 = vpack.c.bf16 %v1807, %v1807
    %v1811 = vsel %vm276, %v1809, 0
    %1813 = vmatprep.subr.bf16.mxu0 0
    %1814 = vmatpush1.bf16.msra.mxu0 %v1240
    %1815 = vmatprep.subr.bf16.mxu0 0
    %1816 = vmatpush1.bf16.msra.mxu0 %v1241
    %1817 = vmatprep.subr.bf16.mxu0 0
    %1818 = vmatpush1.bf16.msra.mxu0 %v1242
    %1819 = vmatprep.subr.bf16.mxu0 0
    %1820 = vmatpush1.bf16.msra.mxu0 0
    %1821 = vmatprep.subr.bf16.mxu0 0
    %1822 = vmatpush1.bf16.msra.mxu0 0
    %1823 = vmatprep.subr.bf16.mxu0 0
    %1824 = vmatpush1.bf16.msra.mxu0 0
    %1825 = vmatprep.subr.bf16.mxu0 0
    %1826 = vmatpush1.bf16.msra.mxu0 0
    %1827 = vmatprep.subr.bf16.mxu0 0
    %1828 = vmatpush1.bf16.msra.mxu0 0
    %1829 = vmatprep.subr.bf16.mxu0 0
    %1830 = vmatpush1.bf16.msra.mxu0 0
    %1831 = vmatprep.subr.bf16.mxu0 0
    %1832 = vmatpush1.bf16.msra.mxu0 0
    %1833 = vmatprep.subr.bf16.mxu0 0
    %1834 = vmatpush1.bf16.msra.mxu0 0
    %1835 = vmatprep.subr.bf16.mxu0 0
    %1836 = vmatpush1.bf16.msra.mxu0 0
    %1837 = vmatprep.subr.bf16.mxu0 0
    %1838 = vmatpush1.bf16.msra.mxu0 0
    %1839 = vmatprep.subr.bf16.mxu0 0
    %1840 = vmatpush1.bf16.msra.mxu0 0
    %1841 = vmatprep.subr.bf16.mxu0 0
    %1842 = vmatpush1.bf16.msra.mxu0 0
    %1843 = vmatprep.subr.bf16.mxu0 0
    %1844 = vmatpush1.bf16.msra.mxu0 0
    %1845 = vmatprep.mubr.bf16.mxu0 0
    %1846 = vmatmul.mubr.bf16.gmra.mrb[0].mxu0 %v1811
    %v1847 = vpop.f32.mrb[0].mxu0
    %v1848 = vadd.f32 0.0, %v1847
    %v1849 = vpop.f32.mrb[0].mxu0
    %v1850 = vpop.f32.mrb[0].mxu0
    %v1851 = vpop.f32.mrb[0].mxu0
    %1852 = vdwg.mxu0
    %v1853 = vadd.f32 %v1808, %v1848
    %v1854 = vxor.u32 %v1853, 2147483648
    %v1855 = vmul.f32 %v1854, 1.442695
    %v1856 = vpow.pop %v1855
    %v1857 = vadd.f32 %v1856, 1.0
    %v1858 = vrcp.pop %v1857
    %v1859 = vmul.f32 1.0, %v1858
    %v1860 = vtanh.pop %v1853
    %v1861 = vmul.f32 %v1859, %v1790
    %1863 = vrot.lane.b32.xlu0 %v1860, 64
    %v1864 = vpop.permute.xlu0 %1863
    %v1866 = vmul.f32 %v1859, %v1864
    %1868 = vrot.lane.b32.xlu0 %v1866, 32
    %v1869 = vpop.permute.xlu0 %1868
    %v1871 = vadd.f32 %v1861, %v1869
    %v1872 = vtanh.pop %v1871
    %1874 = vrot.lane.b32.xlu0 %v1872, 64
    %v1875 = vpop.permute.xlu0 %1874
    %v1877 = vmul.f32 %v1859, %v1875
    %1879 = vrot.lane.b32.xlu0 %v1877, 32
    %v1880 = vpop.permute.xlu0 %1879
    %v1882 = vrot.slane %v1880, 4
    %v1883 = vmul.f32 %v1882, %v89
    %v1884 = vmul.f32 %v1882, %v90
    %1886 = vrot.lane.b32.xlu0 %v1883, 24
    %v1887 = vpop.permute.xlu0 %1886
    %1890 = vrot.lane.b32.xlu0 %v1884, 48
    %v1891 = vpop.permute.xlu0 %1890
    %1893 = vrot.lane.b32.xlu0 %v1312, 104
    %v1894 = vpop.permute.xlu0 %1893
    %v1896 = vsel %vm254, %v1315, %v1887
    %v1897 = vsel %vm276, %v1896, %v1891
    %v1898 = vsel %vm932, %v1897, %v1894
    %1900 = vrot.lane.b32.xlu0 %v1796, 32
    %v1901 = vpop.permute.xlu0 %1900
    %v1903 = vrot.slane %v1901, 4
    %v1904 = vmul.f32 %v1903, %v89
    %v1905 = vmul.f32 %v1903, %v90
    %1907 = vrot.lane.b32.xlu0 %v1904, 24
    %v1908 = vpop.permute.xlu0 %1907
    %1911 = vrot.lane.b32.xlu0 %v1905, 48
    %v1912 = vpop.permute.xlu0 %1911
    %1914 = vrot.lane.b32.xlu0 %v1393, 104
    %v1915 = vpop.permute.xlu0 %1914
    %v1917 = vsel %vm254, %v1396, %v1908
    %v1918 = vsel %vm276, %v1917, %v1912
    %v1919 = vsel %vm932, %v1918, %v1915
    %1921 = vrot.lane.b32.xlu0 %v1715, 32
    %v1922 = vpop.permute.xlu0 %1921
    %v1924 = vrot.slane %v1922, 4
    %v1925 = vmul.f32 %v1924, %v89
    %v1926 = vmul.f32 %v1924, %v90
    %1928 = vrot.lane.b32.xlu0 %v1925, 24
    %v1929 = vpop.permute.xlu0 %1928
    %1932 = vrot.lane.b32.xlu0 %v1926, 48
    %v1933 = vpop.permute.xlu0 %1932
    %1935 = vrot.lane.b32.xlu0 %v1474, 104
    %v1936 = vpop.permute.xlu0 %1935
    %v1938 = vsel %vm254, %v1477, %v1929
    %v1939 = vsel %vm276, %v1938, %v1933
    %v1940 = vsel %vm932, %v1939, %v1936
    %1942 = vrot.lane.b32.xlu0 %v1634, 32
    %v1943 = vpop.permute.xlu0 %1942
    %v1945 = vrot.slane %v1943, 4
    %v1946 = vmul.f32 %v1945, %v89
    %v1947 = vmul.f32 %v1945, %v90
    %1949 = vrot.lane.b32.xlu0 %v1946, 24
    %v1950 = vpop.permute.xlu0 %1949
    %1953 = vrot.lane.b32.xlu0 %v1947, 48
    %v1954 = vpop.permute.xlu0 %1953
    %1956 = vrot.lane.b32.xlu0 %v1555, 104
    %v1957 = vpop.permute.xlu0 %1956
    %v1959 = vsel %vm254, %v1558, %v1950
    %v1960 = vsel %vm276, %v1959, %v1954
    %v1961 = vsel %vm932, %v1960, %v1957
    %1963 = vrot.lane.b32.xlu0 %v1553, 32
    %v1964 = vpop.permute.xlu0 %1963
    %v1966 = vrot.slane %v1964, 4
    %v1967 = vmul.f32 %v1966, %v89
    %v1968 = vmul.f32 %v1966, %v90
    %1970 = vrot.lane.b32.xlu0 %v1967, 24
    %v1971 = vpop.permute.xlu0 %1970
    %1974 = vrot.lane.b32.xlu0 %v1968, 48
    %v1975 = vpop.permute.xlu0 %1974
    %1977 = vrot.lane.b32.xlu0 %v1636, 104
    %v1978 = vpop.permute.xlu0 %1977
    %v1980 = vsel %vm254, %v1639, %v1971
    %v1981 = vsel %vm276, %v1980, %v1975
    %v1982 = vsel %vm932, %v1981, %v1978
    %1984 = vrot.lane.b32.xlu0 %v1472, 32
    %v1985 = vpop.permute.xlu0 %1984
    %v1987 = vrot.slane %v1985, 4
    %v1988 = vmul.f32 %v1987, %v89
    %v1989 = vmul.f32 %v1987, %v90
    %1991 = vrot.lane.b32.xlu0 %v1988, 24
    %v1992 = vpop.permute.xlu0 %1991
    %1995 = vrot.lane.b32.xlu0 %v1989, 48
    %v1996 = vpop.permute.xlu0 %1995
    %1998 = vrot.lane.b32.xlu0 %v1717, 104
    %v1999 = vpop.permute.xlu0 %1998
    %v2001 = vsel %vm254, %v1720, %v1992
    %v2002 = vsel %vm276, %v2001, %v1996
    %v2003 = vsel %vm932, %v2002, %v1999
    %2005 = vrot.lane.b32.xlu0 %v1391, 32
    %v2006 = vpop.permute.xlu0 %2005
    %v2008 = vrot.slane %v2006, 4
    %v2009 = vmul.f32 %v2008, %v89
    %v2010 = vmul.f32 %v2008, %v90
    %2012 = vrot.lane.b32.xlu0 %v2009, 24
    %v2013 = vpop.permute.xlu0 %2012
    %2016 = vrot.lane.b32.xlu0 %v2010, 48
    %v2017 = vpop.permute.xlu0 %2016
    %2019 = vrot.lane.b32.xlu0 %v1798, 104
    %v2020 = vpop.permute.xlu0 %2019
    %v2022 = vsel %vm254, %v1801, %v2013
    %v2023 = vsel %vm276, %v2022, %v2017
    %v2024 = vsel %vm932, %v2023, %v2020
    %2026 = vrot.lane.b32.xlu0 %v1310, 32
    %v2027 = vpop.permute.xlu0 %2026
    %v2029 = vrot.slane %v2027, 4
    %v2030 = vmul.f32 %v1877, %v89
    %v2031 = vmul.f32 %v2029, %v89
    %v2032 = vmul.f32 %v2029, %v90
    %v2033 = vmul.f32 %v1877, %v90
    %2035 = vrot.lane.b32.xlu0 %v2030, 32
    %v2036 = vpop.permute.xlu0 %2035
    %2039 = vrot.lane.b32.xlu0 %v2031, 24
    %v2040 = vpop.permute.xlu0 %2039
    %2043 = vrot.lane.b32.xlu0 %v2032, 48
    %v2044 = vpop.permute.xlu0 %2043
    %2047 = vrot.lane.b32.xlu0 %v2033, 104
    %v2048 = vpop.permute.xlu0 %2047
    %v2050 = vsel %vm254, %v2036, %v2040
    %v2051 = vsel %vm276, %v2050, %v2044
    %v2052 = vsel %vm932, %v2051, %v2048
    %v2053 = vpack.c.bf16 %v1919, %v1898
    %v2054 = vpack.c.bf16 %v1961, %v1940
    %v2055 = vpack.c.bf16 %v2003, %v1982
    %v2056 = vpack.c.bf16 %v2052, %v2024
    %s2057 = scalar_lea.vmem %s1, 96
    %v2058 = vld [vmem:[%s2057] sm:$0xf]
    %v2059 = vld [vmem:[%s2057 + $0x4] sm:$0xf]
    %v2060 = vld [vmem:[%s2057 + $0x8] sm:$0xf]
    %v2061 = vld [vmem:[%s2057 + $0xc] sm:$0xf]
    %v2062 = vld [vmem:[%s2057 + $0x10] sm:$0xf]
    %v2063 = vld [vmem:[%s2057 + $0x14] sm:$0xf]
    %v2064 = vld [vmem:[%s2057 + $0x18] sm:$0xf]
    %v2065 = vld [vmem:[%s2057 + $0x1c] sm:$0xf]
    %v2066 = vld [vmem:[%s2057 + $0x20] sm:$0xf]
    %v2067 = vld [vmem:[%s2057 + $0x24] sm:$0xf]
    %v2068 = vld [vmem:[%s2057 + $0x28] sm:$0xf]
    %v2069 = vld [vmem:[%s2057 + $0x2c] sm:$0xf]
    %v2082 = vunpack.c.l.b16 %v2058
    %v2083 = vunpack.c.l.b16 %v2059
    %v2084 = vunpack.c.l.b16 %v2060
    %v2085 = vunpack.c.l.b16 %v2061
    %v2086 = vunpack.c.l.b16 %v2062
    %v2087 = vunpack.c.l.b16 %v2063
    %v2088 = vunpack.c.l.b16 %v2064
    %v2089 = vunpack.c.l.b16 %v2065
    %v2090 = vunpack.c.l.b16 %v2066
    %v2091 = vunpack.c.l.b16 %v2067
    %v2092 = vunpack.c.l.b16 %v2068
    %v2093 = vunpack.c.l.b16 %v2069
    %v2094 = vpack.c.b16 %v2083, %v2082
    %v2095 = vpack.c.b16 %v2085, %v2084
    %v2096 = vpack.c.b16 %v2087, %v2086
    %v2097 = vpack.c.b16 %v2089, %v2088
    %v2098 = vpack.c.b16 %v2091, %v2090
    %v2099 = vpack.c.b16 %v2093, %v2092
    %v2107 = vsel %vm167, %v2053, 0
    %v2110 = vsel %vm167, %v2054, 0
    %v2113 = vsel %vm167, %v2055, 0
    %v2116 = vsel %vm167, %v2056, 0
    %2118 = vmatprep.subr.bf16.mxu0 0
    %2119 = vmatpush1.bf16.msra.mxu0 %v2094
    %2120 = vmatprep.subr.bf16.mxu0 0
    %2121 = vmatpush1.bf16.msra.mxu0 %v2095
    %2122 = vmatprep.subr.bf16.mxu0 0
    %2123 = vmatpush1.bf16.msra.mxu0 %v2096
    %2124 = vmatprep.subr.bf16.mxu0 0
    %2125 = vmatpush1.bf16.msra.mxu0 %v2097
    %2126 = vmatprep.subr.bf16.mxu0 0
    %2127 = vmatpush1.bf16.msra.mxu0 %v2098
    %2128 = vmatprep.subr.bf16.mxu0 0
    %2129 = vmatpush1.bf16.msra.mxu0 %v2099
    %2130 = vmatprep.subr.bf16.mxu0 0
    %2131 = vmatpush1.bf16.msra.mxu0 0
    %2132 = vmatprep.subr.bf16.mxu0 0
    %2133 = vmatpush1.bf16.msra.mxu0 0
    %2134 = vmatprep.subr.bf16.mxu0 0
    %2135 = vmatpush1.bf16.msra.mxu0 0
    %2136 = vmatprep.subr.bf16.mxu0 0
    %2137 = vmatpush1.bf16.msra.mxu0 0
    %2138 = vmatprep.subr.bf16.mxu0 0
    %2139 = vmatpush1.bf16.msra.mxu0 0
    %2140 = vmatprep.subr.bf16.mxu0 0
    %2141 = vmatpush1.bf16.msra.mxu0 0
    %2142 = vmatprep.subr.bf16.mxu0 0
    %2143 = vmatpush1.bf16.msra.mxu0 0
    %2144 = vmatprep.subr.bf16.mxu0 0
    %2145 = vmatpush1.bf16.msra.mxu0 0
    %2146 = vmatprep.subr.bf16.mxu0 0
    %2147 = vmatpush1.bf16.msra.mxu0 0
    %2148 = vmatprep.subr.bf16.mxu0 0
    %2149 = vmatpush1.bf16.msra.mxu0 0
    %2150 = vmatprep.mubr.bf16.mxu0 0
    %2151 = vmatmul.mubr.bf16.gmra.mrb[0].mxu0 %v2107
    %v2152 = vpop.f32.mrb[0].mxu0
    %v2153 = vadd.f32 0.0, %v2152
    %v2154 = vpop.f32.mrb[0].mxu0
    %v2155 = vpop.f32.mrb[0].mxu0
    %v2156 = vadd.f32 0.0, %v2155
    %v2157 = vpop.f32.mrb[0].mxu0
    %2158 = vmatprep.mubr.bf16.mxu0 0
    %2159 = vmatmul.mubr.bf16.gmra.mrb[0].mxu0 %v2110
    %v2160 = vpop.f32.mrb[0].mxu0
    %v2161 = vadd.f32 0.0, %v2160
    %v2162 = vpop.f32.mrb[0].mxu0
    %v2163 = vpop.f32.mrb[0].mxu0
    %v2164 = vadd.f32 0.0, %v2163
    %v2165 = vpop.f32.mrb[0].mxu0
    %2166 = vmatprep.mubr.bf16.mxu0 0
    %2167 = vmatmul.mubr.bf16.gmra.mrb[0].mxu0 %v2113
    %v2168 = vpop.f32.mrb[0].mxu0
    %v2169 = vadd.f32 0.0, %v2168
    %v2170 = vpop.f32.mrb[0].mxu0
    %v2171 = vpop.f32.mrb[0].mxu0
    %v2172 = vadd.f32 0.0, %v2171
    %v2173 = vpop.f32.mrb[0].mxu0
    %2174 = vmatprep.mubr.bf16.mxu0 0
    %2175 = vmatmul.mubr.bf16.gmra.mrb[0].mxu0 %v2116
    %v2176 = vpop.f32.mrb[0].mxu0
    %v2177 = vadd.f32 0.0, %v2176
    %v2178 = vpop.f32.mrb[0].mxu0
    %v2179 = vpop.f32.mrb[0].mxu0
    %v2180 = vadd.f32 0.0, %v2179
    %v2181 = vpop.f32.mrb[0].mxu0
    %2182 = vdwg.mxu0
    %s2183 = scalar_lea.vmem [#allocation3], 48
    %v2184 = vld [vmem:[%s2183] sm:$0xf]
    %v2185 = vld [vmem:[%s2183 + $0x4] sm:$0xf]
    %v2186 = vld [vmem:[%s2183 + $0x8] sm:$0xf]
    %v2187 = vld [vmem:[%s2183 + $0xc] sm:$0xf]
    %v2188 = vld [vmem:[%s2183 + $0x10] sm:$0xf]
    %v2189 = vld [vmem:[%s2183 + $0x14] sm:$0xf]
    %s2190 = scalar_lea.vmem %s3, 16
    %v2191 = vld [vmem:[%s2190] sm:$0xff]
    %v2192 = vadd.f32 %v2153, %v2191
    %v2199 = vunpack.c.l.b16 %v2184
    %v2200 = vunpack.c.l.b16 %v2185
    %v2201 = vunpack.c.l.b16 %v2186
    %v2202 = vunpack.c.l.b16 %v2187
    %v2203 = vunpack.c.l.b16 %v2188
    %v2204 = vunpack.c.l.b16 %v2189
    %v2205 = vpack.c.b16 %v2200, %v2199
    %v2206 = vpack.c.b16 %v2202, %v2201
    %v2207 = vpack.c.b16 %v2204, %v2203
    %2211 = vmatprep.subr.bf16.mxu0 0
    %2212 = vmatpush1.bf16.msra.mxu0 %v2205
    %2213 = vmatprep.subr.bf16.mxu0 0
    %2214 = vmatpush1.bf16.msra.mxu0 %v2206
    %2215 = vmatprep.subr.bf16.mxu0 0
    %2216 = vmatpush1.bf16.msra.mxu0 %v2207
    %2217 = vmatprep.subr.bf16.mxu0 0
    %2218 = vmatpush1.bf16.msra.mxu0 0
    %2219 = vmatprep.subr.bf16.mxu0 0
    %2220 = vmatpush1.bf16.msra.mxu0 0
    %2221 = vmatprep.subr.bf16.mxu0 0
    %2222 = vmatpush1.bf16.msra.mxu0 0
    %2223 = vmatprep.subr.bf16.mxu0 0
    %2224 = vmatpush1.bf16.msra.mxu0 0
    %2225 = vmatprep.subr.bf16.mxu0 0
    %2226 = vmatpush1.bf16.msra.mxu0 0
    %2227 = vmatprep.subr.bf16.mxu0 0
    %2228 = vmatpush1.bf16.msra.mxu0 0
    %2229 = vmatprep.subr.bf16.mxu0 0
    %2230 = vmatpush1.bf16.msra.mxu0 0
    %2231 = vmatprep.subr.bf16.mxu0 0
    %2232 = vmatpush1.bf16.msra.mxu0 0
    %2233 = vmatprep.subr.bf16.mxu0 0
    %2234 = vmatpush1.bf16.msra.mxu0 0
    %2235 = vmatprep.subr.bf16.mxu0 0
    %2236 = vmatpush1.bf16.msra.mxu0 0
    %2237 = vmatprep.subr.bf16.mxu0 0
    %2238 = vmatpush1.bf16.msra.mxu0 0
    %2239 = vmatprep.subr.bf16.mxu0 0
    %2240 = vmatpush1.bf16.msra.mxu0 0
    %2241 = vmatprep.subr.bf16.mxu0 0
    %2242 = vmatpush1.bf16.msra.mxu0 0
    %2243 = vmatprep.mubr.bf16.mxu0 0
    %2244 = vmatmul.mubr.bf16.gmra.mrb[0].mxu0 %v278
    %v2245 = vpop.f32.mrb[0].mxu0
    %v2246 = vadd.f32 0.0, %v2245
    %v2247 = vpop.f32.mrb[0].mxu0
    %v2248 = vpop.f32.mrb[0].mxu0
    %v2249 = vpop.f32.mrb[0].mxu0
    %2250 = vdwg.mxu0
    %v2251 = vadd.f32 %v2192, %v2246
    %v2252 = vxor.u32 %v2251, 2147483648
    %v2253 = vmul.f32 %v2252, 1.442695
    %v2254 = vpow.pop %v2253
    %v2255 = vadd.f32 %v2254, 1.0
    %v2256 = vrcp.pop %v2255
    %v2257 = vmul.f32 1.0, %v2256
    %v2258 = vtanh.pop %v2251
    %v2259 = vmul.f32 %v2257, 0.0
    %2261 = vrot.lane.b32.xlu0 %v2258, 64
    %v2262 = vpop.permute.xlu0 %2261
    %v2264 = vmul.f32 %v2257, %v2262
    %2266 = vrot.lane.b32.xlu0 %v2264, 32
    %v2267 = vpop.permute.xlu0 %2266
    %v2269 = vadd.f32 %v2259, %v2267
    %v2270 = vtanh.pop %v2269
    %2272 = vrot.lane.b32.xlu0 %v2270, 64
    %v2273 = vpop.permute.xlu0 %2272
    %v2275 = vmul.f32 %v2257, %v2273
    %v2276 = vmul.f32 %v2275, %v89
    %v2277 = vmul.f32 %v2275, %v90
    %2279 = vrot.lane.b32.xlu0 %v2276, 32
    %v2280 = vpop.permute.xlu0 %2279
    %2283 = vrot.lane.b32.xlu0 %v2277, 56
    %v2284 = vpop.permute.xlu0 %2283
    %v2286 = vsel %vm254, %v2280, %v2284
    %v2287 = vadd.f32 %v2156, %v2191
    %v2288 = vpack.c.bf16 %v2286, %v2286
    %v2290 = vsel %vm276, %v2288, 0
    %2292 = vmatprep.subr.bf16.mxu0 0
    %2293 = vmatpush1.bf16.msra.mxu0 %v2205
    %2294 = vmatprep.subr.bf16.mxu0 0
    %2295 = vmatpush1.bf16.msra.mxu0 %v2206
    %2296 = vmatprep.subr.bf16.mxu0 0
    %2297 = vmatpush1.bf16.msra.mxu0 %v2207
    %2298 = vmatprep.subr.bf16.mxu0 0
    %2299 = vmatpush1.bf16.msra.mxu0 0
    %2300 = vmatprep.subr.bf16.mxu0 0
    %2301 = vmatpush1.bf16.msra.mxu0 0
    %2302 = vmatprep.subr.bf16.mxu0 0
    %2303 = vmatpush1.bf16.msra.mxu0 0
    %2304 = vmatprep.subr.bf16.mxu0 0
    %2305 = vmatpush1.bf16.msra.mxu0 0
    %2306 = vmatprep.subr.bf16.mxu0 0
    %2307 = vmatpush1.bf16.msra.mxu0 0
    %2308 = vmatprep.subr.bf16.mxu0 0
    %2309 = vmatpush1.bf16.msra.mxu0 0
    %2310 = vmatprep.subr.bf16.mxu0 0
    %2311 = vmatpush1.bf16.msra.mxu0 0
    %2312 = vmatprep.subr.bf16.mxu0 0
    %2313 = vmatpush1.bf16.msra.mxu0 0
    %2314 = vmatprep.subr.bf16.mxu0 0
    %2315 = vmatpush1.bf16.msra.mxu0 0
    %2316 = vmatprep.subr.bf16.mxu0 0
    %2317 = vmatpush1.bf16.msra.mxu0 0
    %2318 = vmatprep.subr.bf16.mxu0 0
    %2319 = vmatpush1.bf16.msra.mxu0 0
    %2320 = vmatprep.subr.bf16.mxu0 0
    %2321 = vmatpush1.bf16.msra.mxu0 0
    %2322 = vmatprep.subr.bf16.mxu0 0
    %2323 = vmatpush1.bf16.msra.mxu0 0
    %2324 = vmatprep.mubr.bf16.mxu0 0
    %2325 = vmatmul.mubr.bf16.gmra.mrb[0].mxu0 %v2290
    %v2326 = vpop.f32.mrb[0].mxu0
    %v2327 = vadd.f32 0.0, %v2326
    %v2328 = vpop.f32.mrb[0].mxu0
    %v2329 = vpop.f32.mrb[0].mxu0
    %v2330 = vpop.f32.mrb[0].mxu0
    %2331 = vdwg.mxu0
    %v2332 = vadd.f32 %v2287, %v2327
    %v2333 = vxor.u32 %v2332, 2147483648
    %v2334 = vmul.f32 %v2333, 1.442695
    %v2335 = vpow.pop %v2334
    %v2336 = vadd.f32 %v2335, 1.0
    %v2337 = vrcp.pop %v2336
    %v2338 = vmul.f32 1.0, %v2337
    %v2339 = vtanh.pop %v2332
    %v2340 = vmul.f32 %v2338, %v2269
    %2342 = vrot.lane.b32.xlu0 %v2339, 64
    %v2343 = vpop.permute.xlu0 %2342
    %v2345 = vmul.f32 %v2338, %v2343
    %2347 = vrot.lane.b32.xlu0 %v2345, 32
    %v2348 = vpop.permute.xlu0 %2347
    %v2350 = vadd.f32 %v2340, %v2348
    %v2351 = vtanh.pop %v2350
    %2353 = vrot.lane.b32.xlu0 %v2351, 64
    %v2354 = vpop.permute.xlu0 %2353
    %v2356 = vmul.f32 %v2338, %v2354
    %v2357 = vmul.f32 %v2356, %v89
    %v2358 = vmul.f32 %v2356, %v90
    %2360 = vrot.lane.b32.xlu0 %v2357, 32
    %v2361 = vpop.permute.xlu0 %2360
    %2364 = vrot.lane.b32.xlu0 %v2358, 56
    %v2365 = vpop.permute.xlu0 %2364
    %v2367 = vsel %vm254, %v2361, %v2365
    %v2368 = vadd.f32 %v2161, %v2191
    %v2369 = vpack.c.bf16 %v2367, %v2367
    %v2371 = vsel %vm276, %v2369, 0
    %2373 = vmatprep.subr.bf16.mxu0 0
    %2374 = vmatpush1.bf16.msra.mxu0 %v2205
    %2375 = vmatprep.subr.bf16.mxu0 0
    %2376 = vmatpush1.bf16.msra.mxu0 %v2206
    %2377 = vmatprep.subr.bf16.mxu0 0
    %2378 = vmatpush1.bf16.msra.mxu0 %v2207
    %2379 = vmatprep.subr.bf16.mxu0 0
    %2380 = vmatpush1.bf16.msra.mxu0 0
    %2381 = vmatprep.subr.bf16.mxu0 0
    %2382 = vmatpush1.bf16.msra.mxu0 0
    %2383 = vmatprep.subr.bf16.mxu0 0
    %2384 = vmatpush1.bf16.msra.mxu0 0
    %2385 = vmatprep.subr.bf16.mxu0 0
    %2386 = vmatpush1.bf16.msra.mxu0 0
    %2387 = vmatprep.subr.bf16.mxu0 0
    %2388 = vmatpush1.bf16.msra.mxu0 0
    %2389 = vmatprep.subr.bf16.mxu0 0
    %2390 = vmatpush1.bf16.msra.mxu0 0
    %2391 = vmatprep.subr.bf16.mxu0 0
    %2392 = vmatpush1.bf16.msra.mxu0 0
    %2393 = vmatprep.subr.bf16.mxu0 0
    %2394 = vmatpush1.bf16.msra.mxu0 0
    %2395 = vmatprep.subr.bf16.mxu0 0
    %2396 = vmatpush1.bf16.msra.mxu0 0
    %2397 = vmatprep.subr.bf16.mxu0 0
    %2398 = vmatpush1.bf16.msra.mxu0 0
    %2399 = vmatprep.subr.bf16.mxu0 0
    %2400 = vmatpush1.bf16.msra.mxu0 0
    %2401 = vmatprep.subr.bf16.mxu0 0
    %2402 = vmatpush1.bf16.msra.mxu0 0
    %2403 = vmatprep.subr.bf16.mxu0 0
    %2404 = vmatpush1.bf16.msra.mxu0 0
    %2405 = vmatprep.mubr.bf16.mxu0 0
    %2406 = vmatmul.mubr.bf16.gmra.mrb[0].mxu0 %v2371
    %v2407 = vpop.f32.mrb[0].mxu0
    %v2408 = vadd.f32 0.0, %v2407
    %v2409 = vpop.f32.mrb[0].mxu0
    %v2410 = vpop.f32.mrb[0].mxu0
    %v2411 = vpop.f32.mrb[0].mxu0
    %2412 = vdwg.mxu0
    %v2413 = vadd.f32 %v2368, %v2408
    %v2414 = vxor.u32 %v2413, 2147483648
    %v2415 = vmul.f32 %v2414, 1.442695
    %v2416 = vpow.pop %v2415
    %v2417 = vadd.f32 %v2416, 1.0
    %v2418 = vrcp.pop %v2417
    %v2419 = vmul.f32 1.0, %v2418
    %v2420 = vtanh.pop %v2413
    %v2421 = vmul.f32 %v2419, %v2350
    %2423 = vrot.lane.b32.xlu0 %v2420, 64
    %v2424 = vpop.permute.xlu0 %2423
    %v2426 = vmul.f32 %v2419, %v2424
    %2428 = vrot.lane.b32.xlu0 %v2426, 32
    %v2429 = vpop.permute.xlu0 %2428
    %v2431 = vadd.f32 %v2421, %v2429
    %v2432 = vtanh.pop %v2431
    %2434 = vrot.lane.b32.xlu0 %v2432, 64
    %v2435 = vpop.permute.xlu0 %2434
    %v2437 = vmul.f32 %v2419, %v2435
    %v2438 = vmul.f32 %v2437, %v89
    %v2439 = vmul.f32 %v2437, %v90
    %2441 = vrot.lane.b32.xlu0 %v2438, 32
    %v2442 = vpop.permute.xlu0 %2441
    %2445 = vrot.lane.b32.xlu0 %v2439, 56
    %v2446 = vpop.permute.xlu0 %2445
    %v2448 = vsel %vm254, %v2442, %v2446
    %v2449 = vadd.f32 %v2164, %v2191
    %v2450 = vpack.c.bf16 %v2448, %v2448
    %v2452 = vsel %vm276, %v2450, 0
    %2454 = vmatprep.subr.bf16.mxu0 0
    %2455 = vmatpush1.bf16.msra.mxu0 %v2205
    %2456 = vmatprep.subr.bf16.mxu0 0
    %2457 = vmatpush1.bf16.msra.mxu0 %v2206
    %2458 = vmatprep.subr.bf16.mxu0 0
    %2459 = vmatpush1.bf16.msra.mxu0 %v2207
    %2460 = vmatprep.subr.bf16.mxu0 0
    %2461 = vmatpush1.bf16.msra.mxu0 0
    %2462 = vmatprep.subr.bf16.mxu0 0
    %2463 = vmatpush1.bf16.msra.mxu0 0
    %2464 = vmatprep.subr.bf16.mxu0 0
    %2465 = vmatpush1.bf16.msra.mxu0 0
    %2466 = vmatprep.subr.bf16.mxu0 0
    %2467 = vmatpush1.bf16.msra.mxu0 0
    %2468 = vmatprep.subr.bf16.mxu0 0
    %2469 = vmatpush1.bf16.msra.mxu0 0
    %2470 = vmatprep.subr.bf16.mxu0 0
    %2471 = vmatpush1.bf16.msra.mxu0 0
    %2472 = vmatprep.subr.bf16.mxu0 0
    %2473 = vmatpush1.bf16.msra.mxu0 0
    %2474 = vmatprep.subr.bf16.mxu0 0
    %2475 = vmatpush1.bf16.msra.mxu0 0
    %2476 = vmatprep.subr.bf16.mxu0 0
    %2477 = vmatpush1.bf16.msra.mxu0 0
    %2478 = vmatprep.subr.bf16.mxu0 0
    %2479 = vmatpush1.bf16.msra.mxu0 0
    %2480 = vmatprep.subr.bf16.mxu0 0
    %2481 = vmatpush1.bf16.msra.mxu0 0
    %2482 = vmatprep.subr.bf16.mxu0 0
    %2483 = vmatpush1.bf16.msra.mxu0 0
    %2484 = vmatprep.subr.bf16.mxu0 0
    %2485 = vmatpush1.bf16.msra.mxu0 0
    %2486 = vmatprep.mubr.bf16.mxu0 0
    %2487 = vmatmul.mubr.bf16.gmra.mrb[0].mxu0 %v2452
    %v2488 = vpop.f32.mrb[0].mxu0
    %v2489 = vadd.f32 0.0, %v2488
    %v2490 = vpop.f32.mrb[0].mxu0
    %v2491 = vpop.f32.mrb[0].mxu0
    %v2492 = vpop.f32.mrb[0].mxu0
    %2493 = vdwg.mxu0
    %v2494 = vadd.f32 %v2449, %v2489
    %v2495 = vxor.u32 %v2494, 2147483648
    %v2496 = vmul.f32 %v2495, 1.442695
    %v2497 = vpow.pop %v2496
    %v2498 = vadd.f32 %v2497, 1.0
    %v2499 = vrcp.pop %v2498
    %v2500 = vmul.f32 1.0, %v2499
    %v2501 = vtanh.pop %v2494
    %v2502 = vmul.f32 %v2500, %v2431
    %2504 = vrot.lane.b32.xlu0 %v2501, 64
    %v2505 = vpop.permute.xlu0 %2504
    %v2507 = vmul.f32 %v2500, %v2505
    %2509 = vrot.lane.b32.xlu0 %v2507, 32
    %v2510 = vpop.permute.xlu0 %2509
    %v2512 = vadd.f32 %v2502, %v2510
    %v2513 = vtanh.pop %v2512
    %2515 = vrot.lane.b32.xlu0 %v2513, 64
    %v2516 = vpop.permute.xlu0 %2515
    %v2518 = vmul.f32 %v2500, %v2516
    %v2519 = vmul.f32 %v2518, %v89
    %v2520 = vmul.f32 %v2518, %v90
    %2522 = vrot.lane.b32.xlu0 %v2519, 32
    %v2523 = vpop.permute.xlu0 %2522
    %2526 = vrot.lane.b32.xlu0 %v2520, 56
    %v2527 = vpop.permute.xlu0 %2526
    %v2529 = vsel %vm254, %v2523, %v2527
    %v2530 = vadd.f32 %v2169, %v2191
    %v2531 = vpack.c.bf16 %v2529, %v2529
    %v2533 = vsel %vm276, %v2531, 0
    %2535 = vmatprep.subr.bf16.mxu0 0
    %2536 = vmatpush1.bf16.msra.mxu0 %v2205
    %2537 = vmatprep.subr.bf16.mxu0 0
    %2538 = vmatpush1.bf16.msra.mxu0 %v2206
    %2539 = vmatprep.subr.bf16.mxu0 0
    %2540 = vmatpush1.bf16.msra.mxu0 %v2207
    %2541 = vmatprep.subr.bf16.mxu0 0
    %2542 = vmatpush1.bf16.msra.mxu0 0
    %2543 = vmatprep.subr.bf16.mxu0 0
    %2544 = vmatpush1.bf16.msra.mxu0 0
    %2545 = vmatprep.subr.bf16.mxu0 0
    %2546 = vmatpush1.bf16.msra.mxu0 0
    %2547 = vmatprep.subr.bf16.mxu0 0
    %2548 = vmatpush1.bf16.msra.mxu0 0
    %2549 = vmatprep.subr.bf16.mxu0 0
    %2550 = vmatpush1.bf16.msra.mxu0 0
    %2551 = vmatprep.subr.bf16.mxu0 0
    %2552 = vmatpush1.bf16.msra.mxu0 0
    %2553 = vmatprep.subr.bf16.mxu0 0
    %2554 = vmatpush1.bf16.msra.mxu0 0
    %2555 = vmatprep.subr.bf16.mxu0 0
    %2556 = vmatpush1.bf16.msra.mxu0 0
    %2557 = vmatprep.subr.bf16.mxu0 0
    %2558 = vmatpush1.bf16.msra.mxu0 0
    %2559 = vmatprep.subr.bf16.mxu0 0
    %2560 = vmatpush1.bf16.msra.mxu0 0
    %2561 = vmatprep.subr.bf16.mxu0 0
    %2562 = vmatpush1.bf16.msra.mxu0 0
    %2563 = vmatprep.subr.bf16.mxu0 0
    %2564 = vmatpush1.bf16.msra.mxu0 0
    %2565 = vmatprep.subr.bf16.mxu0 0
    %2566 = vmatpush1.bf16.msra.mxu0 0
    %2567 = vmatprep.mubr.bf16.mxu0 0
    %2568 = vmatmul.mubr.bf16.gmra.mrb[0].mxu0 %v2533
    %v2569 = vpop.f32.mrb[0].mxu0
    %v2570 = vadd.f32 0.0, %v2569
    %v2571 = vpop.f32.mrb[0].mxu0
    %v2572 = vpop.f32.mrb[0].mxu0
    %v2573 = vpop.f32.mrb[0].mxu0
    %2574 = vdwg.mxu0
    %v2575 = vadd.f32 %v2530, %v2570
    %v2576 = vxor.u32 %v2575, 2147483648
    %v2577 = vmul.f32 %v2576, 1.442695
    %v2578 = vpow.pop %v2577
    %v2579 = vadd.f32 %v2578, 1.0
    %v2580 = vrcp.pop %v2579
    %v2581 = vmul.f32 1.0, %v2580
    %v2582 = vtanh.pop %v2575
    %v2583 = vmul.f32 %v2581, %v2512
    %2585 = vrot.lane.b32.xlu0 %v2582, 64
    %v2586 = vpop.permute.xlu0 %2585
    %v2588 = vmul.f32 %v2581, %v2586
    %2590 = vrot.lane.b32.xlu0 %v2588, 32
    %v2591 = vpop.permute.xlu0 %2590
    %v2593 = vadd.f32 %v2583, %v2591
    %v2594 = vtanh.pop %v2593
    %2596 = vrot.lane.b32.xlu0 %v2594, 64
    %v2597 = vpop.permute.xlu0 %2596
    %v2599 = vmul.f32 %v2581, %v2597
    %v2600 = vmul.f32 %v2599, %v89
    %v2601 = vmul.f32 %v2599, %v90
    %2603 = vrot.lane.b32.xlu0 %v2600, 32
    %v2604 = vpop.permute.xlu0 %2603
    %2607 = vrot.lane.b32.xlu0 %v2601, 56
    %v2608 = vpop.permute.xlu0 %2607
    %v2610 = vsel %vm254, %v2604, %v2608
    %v2611 = vadd.f32 %v2172, %v2191
    %v2612 = vpack.c.bf16 %v2610, %v2610
    %v2614 = vsel %vm276, %v2612, 0
    %2616 = vmatprep.subr.bf16.mxu0 0
    %2617 = vmatpush1.bf16.msra.mxu0 %v2205
    %2618 = vmatprep.subr.bf16.mxu0 0
    %2619 = vmatpush1.bf16.msra.mxu0 %v2206
    %2620 = vmatprep.subr.bf16.mxu0 0
    %2621 = vmatpush1.bf16.msra.mxu0 %v2207
    %2622 = vmatprep.subr.bf16.mxu0 0
    %2623 = vmatpush1.bf16.msra.mxu0 0
    %2624 = vmatprep.subr.bf16.mxu0 0
    %2625 = vmatpush1.bf16.msra.mxu0 0
    %2626 = vmatprep.subr.bf16.mxu0 0
    %2627 = vmatpush1.bf16.msra.mxu0 0
    %2628 = vmatprep.subr.bf16.mxu0 0
    %2629 = vmatpush1.bf16.msra.mxu0 0
    %2630 = vmatprep.subr.bf16.mxu0 0
    %2631 = vmatpush1.bf16.msra.mxu0 0
    %2632 = vmatprep.subr.bf16.mxu0 0
    %2633 = vmatpush1.bf16.msra.mxu0 0
    %2634 = vmatprep.subr.bf16.mxu0 0
    %2635 = vmatpush1.bf16.msra.mxu0 0
    %2636 = vmatprep.subr.bf16.mxu0 0
    %2637 = vmatpush1.bf16.msra.mxu0 0
    %2638 = vmatprep.subr.bf16.mxu0 0
    %2639 = vmatpush1.bf16.msra.mxu0 0
    %2640 = vmatprep.subr.bf16.mxu0 0
    %2641 = vmatpush1.bf16.msra.mxu0 0
    %2642 = vmatprep.subr.bf16.mxu0 0
    %2643 = vmatpush1.bf16.msra.mxu0 0
    %2644 = vmatprep.subr.bf16.mxu0 0
    %2645 = vmatpush1.bf16.msra.mxu0 0
    %2646 = vmatprep.subr.bf16.mxu0 0
    %2647 = vmatpush1.bf16.msra.mxu0 0
    %2648 = vmatprep.mubr.bf16.mxu0 0
    %2649 = vmatmul.mubr.bf16.gmra.mrb[0].mxu0 %v2614
    %v2650 = vpop.f32.mrb[0].mxu0
    %v2651 = vadd.f32 0.0, %v2650
    %v2652 = vpop.f32.mrb[0].mxu0
    %v2653 = vpop.f32.mrb[0].mxu0
    %v2654 = vpop.f32.mrb[0].mxu0
    %2655 = vdwg.mxu0
    %v2656 = vadd.f32 %v2611, %v2651
    %v2657 = vxor.u32 %v2656, 2147483648
    %v2658 = vmul.f32 %v2657, 1.442695
    %v2659 = vpow.pop %v2658
    %v2660 = vadd.f32 %v2659, 1.0
    %v2661 = vrcp.pop %v2660
    %v2662 = vmul.f32 1.0, %v2661
    %v2663 = vtanh.pop %v2656
    %v2664 = vmul.f32 %v2662, %v2593
    %2666 = vrot.lane.b32.xlu0 %v2663, 64
    %v2667 = vpop.permute.xlu0 %2666
    %v2669 = vmul.f32 %v2662, %v2667
    %2671 = vrot.lane.b32.xlu0 %v2669, 32
    %v2672 = vpop.permute.xlu0 %2671
    %v2674 = vadd.f32 %v2664, %v2672
    %v2675 = vtanh.pop %v2674
    %2677 = vrot.lane.b32.xlu0 %v2675, 64
    %v2678 = vpop.permute.xlu0 %2677
    %v2680 = vmul.f32 %v2662, %v2678
    %v2681 = vmul.f32 %v2680, %v89
    %v2682 = vmul.f32 %v2680, %v90
    %2684 = vrot.lane.b32.xlu0 %v2681, 32
    %v2685 = vpop.permute.xlu0 %2684
    %2688 = vrot.lane.b32.xlu0 %v2682, 56
    %v2689 = vpop.permute.xlu0 %2688
    %v2691 = vsel %vm254, %v2685, %v2689
    %v2692 = vadd.f32 %v2177, %v2191
    %v2693 = vpack.c.bf16 %v2691, %v2691
    %v2695 = vsel %vm276, %v2693, 0
    %2697 = vmatprep.subr.bf16.mxu0 0
    %2698 = vmatpush1.bf16.msra.mxu0 %v2205
    %2699 = vmatprep.subr.bf16.mxu0 0
    %2700 = vmatpush1.bf16.msra.mxu0 %v2206
    %2701 = vmatprep.subr.bf16.mxu0 0
    %2702 = vmatpush1.bf16.msra.mxu0 %v2207
    %2703 = vmatprep.subr.bf16.mxu0 0
    %2704 = vmatpush1.bf16.msra.mxu0 0
    %2705 = vmatprep.subr.bf16.mxu0 0
    %2706 = vmatpush1.bf16.msra.mxu0 0
    %2707 = vmatprep.subr.bf16.mxu0 0
    %2708 = vmatpush1.bf16.msra.mxu0 0
    %2709 = vmatprep.subr.bf16.mxu0 0
    %2710 = vmatpush1.bf16.msra.mxu0 0
    %2711 = vmatprep.subr.bf16.mxu0 0
    %2712 = vmatpush1.bf16.msra.mxu0 0
    %2713 = vmatprep.subr.bf16.mxu0 0
    %2714 = vmatpush1.bf16.msra.mxu0 0
    %2715 = vmatprep.subr.bf16.mxu0 0
    %2716 = vmatpush1.bf16.msra.mxu0 0
    %2717 = vmatprep.subr.bf16.mxu0 0
    %2718 = vmatpush1.bf16.msra.mxu0 0
    %2719 = vmatprep.subr.bf16.mxu0 0
    %2720 = vmatpush1.bf16.msra.mxu0 0
    %2721 = vmatprep.subr.bf16.mxu0 0
    %2722 = vmatpush1.bf16.msra.mxu0 0
    %2723 = vmatprep.subr.bf16.mxu0 0
    %2724 = vmatpush1.bf16.msra.mxu0 0
    %2725 = vmatprep.subr.bf16.mxu0 0
    %2726 = vmatpush1.bf16.msra.mxu0 0
    %2727 = vmatprep.subr.bf16.mxu0 0
    %2728 = vmatpush1.bf16.msra.mxu0 0
    %2729 = vmatprep.mubr.bf16.mxu0 0
    %2730 = vmatmul.mubr.bf16.gmra.mrb[0].mxu0 %v2695
    %v2731 = vpop.f32.mrb[0].mxu0
    %v2732 = vadd.f32 0.0, %v2731
    %v2733 = vpop.f32.mrb[0].mxu0
    %v2734 = vpop.f32.mrb[0].mxu0
    %v2735 = vpop.f32.mrb[0].mxu0
    %2736 = vdwg.mxu0
    %v2737 = vadd.f32 %v2692, %v2732
    %v2738 = vxor.u32 %v2737, 2147483648
    %v2739 = vmul.f32 %v2738, 1.442695
    %v2740 = vpow.pop %v2739
    %v2741 = vadd.f32 %v2740, 1.0
    %v2742 = vrcp.pop %v2741
    %v2743 = vmul.f32 1.0, %v2742
    %v2744 = vtanh.pop %v2737
    %v2745 = vmul.f32 %v2743, %v2674
    %2747 = vrot.lane.b32.xlu0 %v2744, 64
    %v2748 = vpop.permute.xlu0 %2747
    %v2750 = vmul.f32 %v2743, %v2748
    %2752 = vrot.lane.b32.xlu0 %v2750, 32
    %v2753 = vpop.permute.xlu0 %2752
    %v2755 = vadd.f32 %v2745, %v2753
    %v2756 = vtanh.pop %v2755
    %2758 = vrot.lane.b32.xlu0 %v2756, 64
    %v2759 = vpop.permute.xlu0 %2758
    %v2761 = vmul.f32 %v2743, %v2759
    %v2762 = vmul.f32 %v2761, %v89
    %v2763 = vmul.f32 %v2761, %v90
    %2765 = vrot.lane.b32.xlu0 %v2762, 32
    %v2766 = vpop.permute.xlu0 %2765
    %2769 = vrot.lane.b32.xlu0 %v2763, 56
    %v2770 = vpop.permute.xlu0 %2769
    %v2772 = vsel %vm254, %v2766, %v2770
    %v2773 = vadd.f32 %v2180, %v2191
    %v2774 = vpack.c.bf16 %v2772, %v2772
    %v2776 = vsel %vm276, %v2774, 0
    %2778 = vmatprep.subr.bf16.mxu0 0
    %2779 = vmatpush1.bf16.msra.mxu0 %v2205
    %2780 = vmatprep.subr.bf16.mxu0 0
    %2781 = vmatpush1.bf16.msra.mxu0 %v2206
    %2782 = vmatprep.subr.bf16.mxu0 0
    %2783 = vmatpush1.bf16.msra.mxu0 %v2207
    %2784 = vmatprep.subr.bf16.mxu0 0
    %2785 = vmatpush1.bf16.msra.mxu0 0
    %2786 = vmatprep.subr.bf16.mxu0 0
    %2787 = vmatpush1.bf16.msra.mxu0 0
    %2788 = vmatprep.subr.bf16.mxu0 0
    %2789 = vmatpush1.bf16.msra.mxu0 0
    %2790 = vmatprep.subr.bf16.mxu0 0
    %2791 = vmatpush1.bf16.msra.mxu0 0
    %2792 = vmatprep.subr.bf16.mxu0 0
    %2793 = vmatpush1.bf16.msra.mxu0 0
    %2794 = vmatprep.subr.bf16.mxu0 0
    %2795 = vmatpush1.bf16.msra.mxu0 0
    %2796 = vmatprep.subr.bf16.mxu0 0
    %2797 = vmatpush1.bf16.msra.mxu0 0
    %2798 = vmatprep.subr.bf16.mxu0 0
    %2799 = vmatpush1.bf16.msra.mxu0 0
    %2800 = vmatprep.subr.bf16.mxu0 0
    %2801 = vmatpush1.bf16.msra.mxu0 0
    %2802 = vmatprep.subr.bf16.mxu0 0
    %2803 = vmatpush1.bf16.msra.mxu0 0
    %2804 = vmatprep.subr.bf16.mxu0 0
    %2805 = vmatpush1.bf16.msra.mxu0 0
    %2806 = vmatprep.subr.bf16.mxu0 0
    %2807 = vmatpush1.bf16.msra.mxu0 0
    %2808 = vmatprep.subr.bf16.mxu0 0
    %2809 = vmatpush1.bf16.msra.mxu0 0
    %2810 = vmatprep.mubr.bf16.mxu0 0
    %2811 = vmatmul.mubr.bf16.gmra.mrb[0].mxu0 %v2776
    %v2812 = vpop.f32.mrb[0].mxu0
    %v2813 = vadd.f32 0.0, %v2812
    %v2814 = vpop.f32.mrb[0].mxu0
    %v2815 = vpop.f32.mrb[0].mxu0
    %v2816 = vpop.f32.mrb[0].mxu0
    %2817 = vdwg.mxu0
    %v2818 = vadd.f32 %v2773, %v2813
    %v2819 = vxor.u32 %v2818, 2147483648
    %v2820 = vmul.f32 %v2819, 1.442695
    %v2821 = vpow.pop %v2820
    %v2822 = vadd.f32 %v2821, 1.0
    %v2823 = vrcp.pop %v2822
    %v2824 = vmul.f32 1.0, %v2823
    %v2825 = vtanh.pop %v2818
    %v2826 = vmul.f32 %v2824, %v2755
    %2828 = vrot.lane.b32.xlu0 %v2825, 64
    %v2829 = vpop.permute.xlu0 %2828
    %v2831 = vmul.f32 %v2824, %v2829
    %2833 = vrot.lane.b32.xlu0 %v2831, 32
    %v2834 = vpop.permute.xlu0 %2833
    %v2836 = vadd.f32 %v2826, %v2834
    %v2837 = vtanh.pop %v2836
    %2839 = vrot.lane.b32.xlu0 %v2837, 64
    %v2840 = vpop.permute.xlu0 %2839
    %v2842 = vmul.f32 %v2824, %v2840
    %2844 = vrot.lane.b32.xlu0 %v2842, 32
    %v2845 = vpop.permute.xlu0 %2844
    %v2848 = vrot.slane %v2275, 4
    %2849 = vrot.lane.b32.xlu0 %v2848, 56
    %v2850 = vpop.permute.xlu0 %2849
    %v2852 = vsel %vm254, %v2845, %v2850
    %v2853 = vld [vmem:[#allocation5] sm:$0xff]
    %v2854 = vld [vmem:[#allocation5 + $0x8] sm:$0xff]
    %v2855 = vld [vmem:[#allocation5 + $0x10] sm:$0xff]
    %v2856 = vld [vmem:[#allocation5 + $0x18] sm:$0xff]
    %v2857 = vld [vmem:[#allocation5 + $0x20] sm:$0xff]
    %v2858 = vld [vmem:[#allocation5 + $0x28] sm:$0xff]
    %v2859 = vld [vmem:[#allocation5 + $0x30] sm:$0xff]
    %v2860 = vld [vmem:[#allocation5 + $0x38] sm:$0xff]
    %v2861 = vld [vmem:[#allocation5 + $0x40] sm:$0xff]
    %v2862 = vld [vmem:[#allocation5 + $0x48] sm:$0xff]
    %v2863 = vld [vmem:[#allocation5 + $0x50] sm:$0xff]
    %v2864 = vld [vmem:[#allocation5 + $0x58] sm:$0xff]
    %s2865 = scalar_lea.vmem [#allocation5], 96
    %v2866 = vld [vmem:[%s2865] sm:$0xff]
    %v2867 = vld [vmem:[%s2865 + $0x8] sm:$0xff]
    %v2868 = vld [vmem:[%s2865 + $0x10] sm:$0xff]
    %v2869 = vld [vmem:[%s2865 + $0x18] sm:$0xff]
    %v2870 = vld [vmem:[%s2865 + $0x20] sm:$0xff]
    %v2871 = vld [vmem:[%s2865 + $0x28] sm:$0xff]
    %v2872 = vld [vmem:[%s2865 + $0x30] sm:$0xff]
    %v2873 = vld [vmem:[%s2865 + $0x38] sm:$0xff]
    %v2874 = vld [vmem:[%s2865 + $0x40] sm:$0xff]
    %v2875 = vld [vmem:[%s2865 + $0x48] sm:$0xff]
    %v2876 = vld [vmem:[%s2865 + $0x50] sm:$0xff]
    %v2877 = vld [vmem:[%s2865 + $0x58] sm:$0xff]
    %s2878 = scalar_lea.vmem [#allocation5], 192
    %v2879 = vld [vmem:[%s2878] sm:$0xff]
    %v2880 = vld [vmem:[%s2878 + $0x8] sm:$0xff]
    %v2881 = vld [vmem:[%s2878 + $0x10] sm:$0xff]
    %v2882 = vld [vmem:[%s2878 + $0x18] sm:$0xff]
    %v2883 = vld [vmem:[%s2878 + $0x20] sm:$0xff]
    %v2884 = vld [vmem:[%s2878 + $0x28] sm:$0xff]
    %v2885 = vld [vmem:[%s2878 + $0x30] sm:$0xff]
    %v2886 = vld [vmem:[%s2878 + $0x38] sm:$0xff]
    %v2887 = vld [vmem:[%s2878 + $0x40] sm:$0xff]
    %v2888 = vld [vmem:[%s2878 + $0x48] sm:$0xff]
    %v2889 = vld [vmem:[%s2878 + $0x50] sm:$0xff]
    %v2890 = vld [vmem:[%s2878 + $0x58] sm:$0xff]
    %v2891 = vld [vmem:[#allocation7] sm:$0xff]
    %s2892 = scalar_lea.vmem [#allocation7], 8
    %v2893 = vld [vmem:[%s2892] sm:$0xff]
    %s2894 = scalar_lea.vmem [#allocation7], 16
    %v2895 = vld [vmem:[%s2894] sm:$0xff]
    %v2896 = vsel %vm276, %v2852, 0.0
    %v2897 = vpack.c.bf16 %v2896, %v2896
    %v2910 = vunpack.c.l.b16 %v2853
    %v2911 = vunpack.c.h.b16 %v2853
    %v2912 = vunpack.c.l.b16 %v2854
    %v2913 = vunpack.c.h.b16 %v2854
    %v2914 = vunpack.c.l.b16 %v2855
    %v2915 = vunpack.c.h.b16 %v2855
    %v2916 = vunpack.c.l.b16 %v2856
    %v2917 = vunpack.c.h.b16 %v2856
    %v2918 = vunpack.c.l.b16 %v2857
    %v2919 = vunpack.c.h.b16 %v2857
    %v2920 = vunpack.c.l.b16 %v2858
    %v2921 = vunpack.c.h.b16 %v2858
    %v2922 = vunpack.c.l.b16 %v2859
    %v2923 = vunpack.c.h.b16 %v2859
    %v2924 = vunpack.c.l.b16 %v2860
    %v2925 = vunpack.c.h.b16 %v2860
    %v2926 = vunpack.c.l.b16 %v2861
    %v2927 = vunpack.c.h.b16 %v2861
    %v2928 = vunpack.c.l.b16 %v2862
    %v2929 = vunpack.c.h.b16 %v2862
    %v2930 = vunpack.c.l.b16 %v2863
    %v2931 = vunpack.c.h.b16 %v2863
    %v2932 = vunpack.c.l.b16 %v2864
    %v2933 = vunpack.c.h.b16 %v2864
    %v2934 = vpack.c.b16 %v2912, %v2910
    %v2935 = vpack.c.b16 %v2913, %v2911
    %v2936 = vpack.c.b16 %v2916, %v2914
    %v2937 = vpack.c.b16 %v2917, %v2915
    %v2938 = vpack.c.b16 %v2920, %v2918
    %v2939 = vpack.c.b16 %v2921, %v2919
    %v2940 = vpack.c.b16 %v2924, %v2922
    %v2941 = vpack.c.b16 %v2925, %v2923
    %v2942 = vpack.c.b16 %v2928, %v2926
    %v2943 = vpack.c.b16 %v2929, %v2927
    %v2944 = vpack.c.b16 %v2932, %v2930
    %v2945 = vpack.c.b16 %v2933, %v2931
    %v2959 = vsel %vm167, %v2897, 0
    %2961 = vmatprep.subr.bf16.mxu0 %v2935
    %2962 = vmatpush1.bf16.msra.mxu0 %v2934
    %2963 = vmatprep.subr.bf16.mxu0 %v2937
    %2964 = vmatpush1.bf16.msra.mxu0 %v2936
    %2965 = vmatprep.subr.bf16.mxu0 %v2939
    %2966 = vmatpush1.bf16.msra.mxu0 %v2938
    %2967 = vmatprep.subr.bf16.mxu0 %v2941
    %2968 = vmatpush1.bf16.msra.mxu0 %v2940
    %2969 = vmatprep.subr.bf16.mxu0 %v2943
    %2970 = vmatpush1.bf16.msra.mxu0 %v2942
    %2971 = vmatprep.subr.bf16.mxu0 %v2945
    %2972 = vmatpush1.bf16.msra.mxu0 %v2944
    %2973 = vmatprep.subr.bf16.mxu0 0
    %2974 = vmatpush1.bf16.msra.mxu0 0
    %2975 = vmatprep.subr.bf16.mxu0 0
    %2976 = vmatpush1.bf16.msra.mxu0 0
    %2977 = vmatprep.subr.bf16.mxu0 0
    %2978 = vmatpush1.bf16.msra.mxu0 0
    %2979 = vmatprep.subr.bf16.mxu0 0
    %2980 = vmatpush1.bf16.msra.mxu0 0
    %2981 = vmatprep.subr.bf16.mxu0 0
    %2982 = vmatpush1.bf16.msra.mxu0 0
    %2983 = vmatprep.subr.bf16.mxu0 0
    %2984 = vmatpush1.bf16.msra.mxu0 0
    %2985 = vmatprep.subr.bf16.mxu0 0
    %2986 = vmatpush1.bf16.msra.mxu0 0
    %2987 = vmatprep.subr.bf16.mxu0 0
    %2988 = vmatpush1.bf16.msra.mxu0 0
    %2989 = vmatprep.subr.bf16.mxu0 0
    %2990 = vmatpush1.bf16.msra.mxu0 0
    %2991 = vmatprep.subr.bf16.mxu0 0
    %2992 = vmatpush1.bf16.msra.mxu0 0
    %2993 = vmatprep.mubr.bf16.mxu0 0
    %2994 = vmatmul.mubr.bf16.gmra.mrb[0].mxu0 %v2959
    %v2995 = vpop.f32.mrb[0].mxu0
    %v2996 = vadd.f32 0.0, %v2995
    %v2997 = vpop.f32.mrb[0].mxu0
    %v2998 = vadd.f32 0.0, %v2997
    %v2999 = vpop.f32.mrb[0].mxu0
    %v3000 = vpop.f32.mrb[0].mxu0
    %3001 = vdwg.mxu0
    %v3004 = vcombine.low %v2996, %v2998
    %v3006 = vadd.f32 %v2891, %v3004
    %v3007 = vxor.u32 %v3006, 2147483648
    %v3008 = vmul.f32 %v3007, 1.442695
    %v3009 = vpow.pop %v3008
    %v3010 = vadd.f32 %v3009, 1.0
    %v3011 = vrcp.pop %v3010
    %v3012 = vmul.f32 1.0, %v3011
    %v3014 = vrot.slane %v3006, 4
    %v3016 = vtanh.pop %v3014
    %3017 = vrot.lane.b32.xlu0 %v3006, 64
    %v3018 = vpop.permute.xlu0 %3017
    %v3019 = vrot.slane %v3018, 4
    %v3021 = vxor.u32 %v3019, 2147483648
    %v3022 = vmul.f32 %v3021, 1.442695
    %v3023 = vpow.pop %v3022
    %v3024 = vadd.f32 %v3023, 1.0
    %v3025 = vrcp.pop %v3024
    %v3026 = vmul.f32 1.0, %v3025
    %v3027 = vmul.f32 %v3012, 0.0
    %v3028 = vmul.f32 %v3012, %v3016
    %3030 = vrot.lane.b32.xlu0 %v3028, 64
    %v3031 = vpop.permute.xlu0 %3030
    %v3033 = vadd.f32 %v3027, %v3031
    %v3034 = vtanh.pop %v3033
    %3036 = vrot.lane.b32.xlu0 %v3034, 64
    %v3037 = vpop.permute.xlu0 %3036
    %v3039 = vmul.f32 %v3026, %v3037
    %v3040 = vsel %vm276, %v3039, 0.0
    %v3041 = vpack.c.bf16 %v3040, %v3040
    %v3054 = vunpack.c.l.b16 %v2866
    %v3055 = vunpack.c.h.b16 %v2866
    %v3056 = vunpack.c.l.b16 %v2867
    %v3057 = vunpack.c.h.b16 %v2867
    %v3058 = vunpack.c.l.b16 %v2868
    %v3059 = vunpack.c.h.b16 %v2868
    %v3060 = vunpack.c.l.b16 %v2869
    %v3061 = vunpack.c.h.b16 %v2869
    %v3062 = vunpack.c.l.b16 %v2870
    %v3063 = vunpack.c.h.b16 %v2870
    %v3064 = vunpack.c.l.b16 %v2871
    %v3065 = vunpack.c.h.b16 %v2871
    %v3066 = vunpack.c.l.b16 %v2872
    %v3067 = vunpack.c.h.b16 %v2872
    %v3068 = vunpack.c.l.b16 %v2873
    %v3069 = vunpack.c.h.b16 %v2873
    %v3070 = vunpack.c.l.b16 %v2874
    %v3071 = vunpack.c.h.b16 %v2874
    %v3072 = vunpack.c.l.b16 %v2875
    %v3073 = vunpack.c.h.b16 %v2875
    %v3074 = vunpack.c.l.b16 %v2876
    %v3075 = vunpack.c.h.b16 %v2876
    %v3076 = vunpack.c.l.b16 %v2877
    %v3077 = vunpack.c.h.b16 %v2877
    %v3078 = vpack.c.b16 %v3056, %v3054
    %v3079 = vpack.c.b16 %v3057, %v3055
    %v3080 = vpack.c.b16 %v3060, %v3058
    %v3081 = vpack.c.b16 %v3061, %v3059
    %v3082 = vpack.c.b16 %v3064, %v3062
    %v3083 = vpack.c.b16 %v3065, %v3063
    %v3084 = vpack.c.b16 %v3068, %v3066
    %v3085 = vpack.c.b16 %v3069, %v3067
    %v3086 = vpack.c.b16 %v3072, %v3070
    %v3087 = vpack.c.b16 %v3073, %v3071
    %v3088 = vpack.c.b16 %v3076, %v3074
    %v3089 = vpack.c.b16 %v3077, %v3075
    %v3103 = vsel %vm167, %v3041, 0
    %3105 = vmatprep.subr.bf16.mxu0 %v3079
    %3106 = vmatpush1.bf16.msra.mxu0 %v3078
    %3107 = vmatprep.subr.bf16.mxu0 %v3081
    %3108 = vmatpush1.bf16.msra.mxu0 %v3080
    %3109 = vmatprep.subr.bf16.mxu0 %v3083
    %3110 = vmatpush1.bf16.msra.mxu0 %v3082
    %3111 = vmatprep.subr.bf16.mxu0 %v3085
    %3112 = vmatpush1.bf16.msra.mxu0 %v3084
    %3113 = vmatprep.subr.bf16.mxu0 %v3087
    %3114 = vmatpush1.bf16.msra.mxu0 %v3086
    %3115 = vmatprep.subr.bf16.mxu0 %v3089
    %3116 = vmatpush1.bf16.msra.mxu0 %v3088
    %3117 = vmatprep.subr.bf16.mxu0 0
    %3118 = vmatpush1.bf16.msra.mxu0 0
    %3119 = vmatprep.subr.bf16.mxu0 0
    %3120 = vmatpush1.bf16.msra.mxu0 0
    %3121 = vmatprep.subr.bf16.mxu0 0
    %3122 = vmatpush1.bf16.msra.mxu0 0
    %3123 = vmatprep.subr.bf16.mxu0 0
    %3124 = vmatpush1.bf16.msra.mxu0 0
    %3125 = vmatprep.subr.bf16.mxu0 0
    %3126 = vmatpush1.bf16.msra.mxu0 0
    %3127 = vmatprep.subr.bf16.mxu0 0
    %3128 = vmatpush1.bf16.msra.mxu0 0
    %3129 = vmatprep.subr.bf16.mxu0 0
    %3130 = vmatpush1.bf16.msra.mxu0 0
    %3131 = vmatprep.subr.bf16.mxu0 0
    %3132 = vmatpush1.bf16.msra.mxu0 0
    %3133 = vmatprep.subr.bf16.mxu0 0
    %3134 = vmatpush1.bf16.msra.mxu0 0
    %3135 = vmatprep.subr.bf16.mxu0 0
    %3136 = vmatpush1.bf16.msra.mxu0 0
    %3137 = vmatprep.mubr.bf16.mxu0 0
    %3138 = vmatmul.mubr.bf16.gmra.mrb[0].mxu0 %v3103
    %v3139 = vpop.f32.mrb[0].mxu0
    %v3140 = vadd.f32 0.0, %v3139
    %v3141 = vpop.f32.mrb[0].mxu0
    %v3142 = vadd.f32 0.0, %v3141
    %v3143 = vpop.f32.mrb[0].mxu0
    %v3144 = vpop.f32.mrb[0].mxu0
    %3145 = vdwg.mxu0
    %v3148 = vcombine.low %v3140, %v3142
    %v3150 = vadd.f32 %v2893, %v3148
    %v3151 = vxor.u32 %v3150, 2147483648
    %v3152 = vmul.f32 %v3151, 1.442695
    %v3153 = vpow.pop %v3152
    %v3154 = vadd.f32 %v3153, 1.0
    %v3155 = vrcp.pop %v3154
    %v3156 = vmul.f32 1.0, %v3155
    %v3158 = vrot.slane %v3150, 4
    %v3160 = vtanh.pop %v3158
    %3161 = vrot.lane.b32.xlu0 %v3150, 64
    %v3162 = vpop.permute.xlu0 %3161
    %v3163 = vrot.slane %v3162, 4
    %v3165 = vxor.u32 %v3163, 2147483648
    %v3166 = vmul.f32 %v3165, 1.442695
    %v3167 = vpow.pop %v3166
    %v3168 = vadd.f32 %v3167, 1.0
    %v3169 = vrcp.pop %v3168
    %v3170 = vmul.f32 1.0, %v3169
    %v3171 = vmul.f32 %v3156, 0.0
    %v3172 = vmul.f32 %v3156, %v3160
    %3174 = vrot.lane.b32.xlu0 %v3172, 64
    %v3175 = vpop.permute.xlu0 %3174
    %v3177 = vadd.f32 %v3171, %v3175
    %v3178 = vtanh.pop %v3177
    %3180 = vrot.lane.b32.xlu0 %v3178, 64
    %v3181 = vpop.permute.xlu0 %3180
    %v3183 = vmul.f32 %v3170, %v3181
    %v3184 = vsel %vm276, %v3183, 0.0
    %v3185 = vpack.c.bf16 %v3184, %v3184
    %v3198 = vunpack.c.l.b16 %v2879
    %v3199 = vunpack.c.h.b16 %v2879
    %v3200 = vunpack.c.l.b16 %v2880
    %v3201 = vunpack.c.h.b16 %v2880
    %v3202 = vunpack.c.l.b16 %v2881
    %v3203 = vunpack.c.h.b16 %v2881
    %v3204 = vunpack.c.l.b16 %v2882
    %v3205 = vunpack.c.h.b16 %v2882
    %v3206 = vunpack.c.l.b16 %v2883
    %v3207 = vunpack.c.h.b16 %v2883
    %v3208 = vunpack.c.l.b16 %v2884
    %v3209 = vunpack.c.h.b16 %v2884
    %v3210 = vunpack.c.l.b16 %v2885
    %v3211 = vunpack.c.h.b16 %v2885
    %v3212 = vunpack.c.l.b16 %v2886
    %v3213 = vunpack.c.h.b16 %v2886
    %v3214 = vunpack.c.l.b16 %v2887
    %v3215 = vunpack.c.h.b16 %v2887
    %v3216 = vunpack.c.l.b16 %v2888
    %v3217 = vunpack.c.h.b16 %v2888
    %v3218 = vunpack.c.l.b16 %v2889
    %v3219 = vunpack.c.h.b16 %v2889
    %v3220 = vunpack.c.l.b16 %v2890
    %v3221 = vunpack.c.h.b16 %v2890
    %v3222 = vpack.c.b16 %v3200, %v3198
    %v3223 = vpack.c.b16 %v3201, %v3199
    %v3224 = vpack.c.b16 %v3204, %v3202
    %v3225 = vpack.c.b16 %v3205, %v3203
    %v3226 = vpack.c.b16 %v3208, %v3206
    %v3227 = vpack.c.b16 %v3209, %v3207
    %v3228 = vpack.c.b16 %v3212, %v3210
    %v3229 = vpack.c.b16 %v3213, %v3211
    %v3230 = vpack.c.b16 %v3216, %v3214
    %v3231 = vpack.c.b16 %v3217, %v3215
    %v3232 = vpack.c.b16 %v3220, %v3218
    %v3233 = vpack.c.b16 %v3221, %v3219
    %v3247 = vsel %vm167, %v3185, 0
    %3249 = vmatprep.subr.bf16.mxu0 %v3223
    %3250 = vmatpush1.bf16.msra.mxu0 %v3222
    %3251 = vmatprep.subr.bf16.mxu0 %v3225
    %3252 = vmatpush1.bf16.msra.mxu0 %v3224
    %3253 = vmatprep.subr.bf16.mxu0 %v3227
    %3254 = vmatpush1.bf16.msra.mxu0 %v3226
    %3255 = vmatprep.subr.bf16.mxu0 %v3229
    %3256 = vmatpush1.bf16.msra.mxu0 %v3228
    %3257 = vmatprep.subr.bf16.mxu0 %v3231
    %3258 = vmatpush1.bf16.msra.mxu0 %v3230
    %3259 = vmatprep.subr.bf16.mxu0 %v3233
    %3260 = vmatpush1.bf16.msra.mxu0 %v3232
    %3261 = vmatprep.subr.bf16.mxu0 0
    %3262 = vmatpush1.bf16.msra.mxu0 0
    %3263 = vmatprep.subr.bf16.mxu0 0
    %3264 = vmatpush1.bf16.msra.mxu0 0
    %3265 = vmatprep.subr.bf16.mxu0 0
    %3266 = vmatpush1.bf16.msra.mxu0 0
    %3267 = vmatprep.subr.bf16.mxu0 0
    %3268 = vmatpush1.bf16.msra.mxu0 0
    %3269 = vmatprep.subr.bf16.mxu0 0
    %3270 = vmatpush1.bf16.msra.mxu0 0
    %3271 = vmatprep.subr.bf16.mxu0 0
    %3272 = vmatpush1.bf16.msra.mxu0 0
    %3273 = vmatprep.subr.bf16.mxu0 0
    %3274 = vmatpush1.bf16.msra.mxu0 0
    %3275 = vmatprep.subr.bf16.mxu0 0
    %3276 = vmatpush1.bf16.msra.mxu0 0
    %3277 = vmatprep.subr.bf16.mxu0 0
    %3278 = vmatpush1.bf16.msra.mxu0 0
    %3279 = vmatprep.subr.bf16.mxu0 0
    %3280 = vmatpush1.bf16.msra.mxu0 0
    %3281 = vmatprep.mubr.bf16.mxu0 0
    %3282 = vmatmul.mubr.bf16.gmra.mrb[0].mxu0 %v3247
    %v3283 = vpop.f32.mrb[0].mxu0
    %v3284 = vadd.f32 0.0, %v3283
    %v3285 = vpop.f32.mrb[0].mxu0
    %v3286 = vadd.f32 0.0, %v3285
    %v3287 = vpop.f32.mrb[0].mxu0
    %v3288 = vpop.f32.mrb[0].mxu0
    %3289 = vdwg.mxu0
    %v3292 = vcombine.low %v3284, %v3286
    %v3294 = vadd.f32 %v2895, %v3292
    %v3295 = vxor.u32 %v3294, 2147483648
    %v3296 = vmul.f32 %v3295, 1.442695
    %v3297 = vpow.pop %v3296
    %v3298 = vadd.f32 %v3297, 1.0
    %v3299 = vrcp.pop %v3298
    %v3300 = vmul.f32 1.0, %v3299
    %v3302 = vrot.slane %v3294, 4
    %v3304 = vtanh.pop %v3302
    %3305 = vrot.lane.b32.xlu0 %v3294, 64
    %v3306 = vpop.permute.xlu0 %3305
    %v3307 = vrot.slane %v3306, 4
    %v3309 = vxor.u32 %v3307, 2147483648
    %v3310 = vmul.f32 %v3309, 1.442695
    %v3311 = vpow.pop %v3310
    %v3312 = vadd.f32 %v3311, 1.0
    %v3313 = vrcp.pop %v3312
    %v3314 = vmul.f32 1.0, %v3313
    %v3315 = vmul.f32 %v3300, 0.0
    %v3316 = vmul.f32 %v3300, %v3304
    %3318 = vrot.lane.b32.xlu0 %v3316, 64
    %v3319 = vpop.permute.xlu0 %3318
    %v3321 = vadd.f32 %v3315, %v3319
    %v3322 = vtanh.pop %v3321
    %3324 = vrot.lane.b32.xlu0 %v3322, 64
    %v3325 = vpop.permute.xlu0 %3324
    %v3327 = vmul.f32 %v3314, %v3325
    %vm3328 = vcmask 388096
    %3329 = vst.msk [vmem:[#allocation2] sm:$0xf] %vm3328, %v3327
    %3331 = vrot.lane.b32.xlu0 %v3039, 48
    %v3332 = vpop.permute.xlu0 %3331
    %v3334 = vsel %vm276, %v3327, %v3332
    %v3335 = vpack.c.bf16 %v3334, %v3334
    %v3337 = vsel %vm167, %v3335, 0
    %3339 = vmatprep.subr.bf16.mxu0 %v2935
    %3340 = vmatpush1.bf16.msra.mxu0 %v2934
    %3341 = vmatprep.subr.bf16.mxu0 %v2937
    %3342 = vmatpush1.bf16.msra.mxu0 %v2936
    %3343 = vmatprep.subr.bf16.mxu0 %v2939
    %3344 = vmatpush1.bf16.msra.mxu0 %v2938
    %3345 = vmatprep.subr.bf16.mxu0 %v2941
    %3346 = vmatpush1.bf16.msra.mxu0 %v2940
    %3347 = vmatprep.subr.bf16.mxu0 %v2943
    %3348 = vmatpush1.bf16.msra.mxu0 %v2942
    %3349 = vmatprep.subr.bf16.mxu0 %v2945
    %3350 = vmatpush1.bf16.msra.mxu0 %v2944
    %3351 = vmatprep.subr.bf16.mxu0 0
    %3352 = vmatpush1.bf16.msra.mxu0 0
    %3353 = vmatprep.subr.bf16.mxu0 0
    %3354 = vmatpush1.bf16.msra.mxu0 0
    %3355 = vmatprep.subr.bf16.mxu0 0
    %3356 = vmatpush1.bf16.msra.mxu0 0
    %3357 = vmatprep.subr.bf16.mxu0 0
    %3358 = vmatpush1.bf16.msra.mxu0 0
    %3359 = vmatprep.subr.bf16.mxu0 0
    %3360 = vmatpush1.bf16.msra.mxu0 0
    %3361 = vmatprep.subr.bf16.mxu0 0
    %3362 = vmatpush1.bf16.msra.mxu0 0
    %3363 = vmatprep.subr.bf16.mxu0 0
    %3364 = vmatpush1.bf16.msra.mxu0 0
    %3365 = vmatprep.subr.bf16.mxu0 0
    %3366 = vmatpush1.bf16.msra.mxu0 0
    %3367 = vmatprep.subr.bf16.mxu0 0
    %3368 = vmatpush1.bf16.msra.mxu0 0
    %3369 = vmatprep.subr.bf16.mxu0 0
    %3370 = vmatpush1.bf16.msra.mxu0 0
    %3371 = vmatprep.mubr.bf16.mxu0 0
    %3372 = vmatmul.mubr.bf16.gmra.mrb[0].mxu0 %v3337
    %v3373 = vpop.f32.mrb[0].mxu0
    %v3374 = vadd.f32 0.0, %v3373
    %v3375 = vpop.f32.mrb[0].mxu0
    %v3376 = vadd.f32 0.0, %v3375
    %v3377 = vpop.f32.mrb[0].mxu0
    %v3378 = vpop.f32.mrb[0].mxu0
    %3379 = vdwg.mxu0
    %v3382 = vcombine.low %v3374, %v3376
    %v3384 = vadd.f32 %v2891, %v3382
    %v3385 = vxor.u32 %v3384, 2147483648
    %v3386 = vmul.f32 %v3385, 1.442695
    %v3387 = vpow.pop %v3386
    %v3388 = vadd.f32 %v3387, 1.0
    %v3389 = vrcp.pop %v3388
    %v3390 = vmul.f32 1.0, %v3389
    %v3392 = vrot.slane %v3384, 4
    %v3394 = vtanh.pop %v3392
    %3395 = vrot.lane.b32.xlu0 %v3384, 64
    %v3396 = vpop.permute.xlu0 %3395
    %v3397 = vrot.slane %v3396, 4
    %v3399 = vxor.u32 %v3397, 2147483648
    %v3400 = vmul.f32 %v3399, 1.442695
    %v3401 = vpow.pop %v3400
    %v3402 = vadd.f32 %v3401, 1.0
    %v3403 = vrcp.pop %v3402
    %v3404 = vmul.f32 1.0, %v3403
    %v3405 = vmul.f32 %v3390, %v3033
    %v3406 = vmul.f32 %v3390, %v3394
    %3408 = vrot.lane.b32.xlu0 %v3406, 64
    %v3409 = vpop.permute.xlu0 %3408
    %v3411 = vadd.f32 %v3405, %v3409
    %v3412 = vtanh.pop %v3411
    %3414 = vrot.lane.b32.xlu0 %v3412, 64
    %v3415 = vpop.permute.xlu0 %3414
    %v3417 = vmul.f32 %v3404, %v3415
    %3419 = vrot.lane.b32.xlu0 %v3183, 48
    %v3420 = vpop.permute.xlu0 %3419
    %v3422 = vsel %vm276, %v3417, %v3420
    %v3423 = vpack.c.bf16 %v3422, %v3422
    %v3425 = vsel %vm167, %v3423, 0
    %3427 = vmatprep.subr.bf16.mxu0 %v3079
    %3428 = vmatpush1.bf16.msra.mxu0 %v3078
    %3429 = vmatprep.subr.bf16.mxu0 %v3081
    %3430 = vmatpush1.bf16.msra.mxu0 %v3080
    %3431 = vmatprep.subr.bf16.mxu0 %v3083
    %3432 = vmatpush1.bf16.msra.mxu0 %v3082
    %3433 = vmatprep.subr.bf16.mxu0 %v3085
    %3434 = vmatpush1.bf16.msra.mxu0 %v3084
    %3435 = vmatprep.subr.bf16.mxu0 %v3087
    %3436 = vmatpush1.bf16.msra.mxu0 %v3086
    %3437 = vmatprep.subr.bf16.mxu0 %v3089
    %3438 = vmatpush1.bf16.msra.mxu0 %v3088
    %3439 = vmatprep.subr.bf16.mxu0 0
    %3440 = vmatpush1.bf16.msra.mxu0 0
    %3441 = vmatprep.subr.bf16.mxu0 0
    %3442 = vmatpush1.bf16.msra.mxu0 0
    %3443 = vmatprep.subr.bf16.mxu0 0
    %3444 = vmatpush1.bf16.msra.mxu0 0
    %3445 = vmatprep.subr.bf16.mxu0 0
    %3446 = vmatpush1.bf16.msra.mxu0 0
    %3447 = vmatprep.subr.bf16.mxu0 0
    %3448 = vmatpush1.bf16.msra.mxu0 0
    %3449 = vmatprep.subr.bf16.mxu0 0
    %3450 = vmatpush1.bf16.msra.mxu0 0
    %3451 = vmatprep.subr.bf16.mxu0 0
    %3452 = vmatpush1.bf16.msra.mxu0 0
    %3453 = vmatprep.subr.bf16.mxu0 0
    %3454 = vmatpush1.bf16.msra.mxu0 0
    %3455 = vmatprep.subr.bf16.mxu0 0
    %3456 = vmatpush1.bf16.msra.mxu0 0
    %3457 = vmatprep.subr.bf16.mxu0 0
    %3458 = vmatpush1.bf16.msra.mxu0 0
    %3459 = vmatprep.mubr.bf16.mxu0 0
    %3460 = vmatmul.mubr.bf16.gmra.mrb[0].mxu0 %v3425
    %v3461 = vpop.f32.mrb[0].mxu0
    %v3462 = vadd.f32 0.0, %v3461
    %v3463 = vpop.f32.mrb[0].mxu0
    %v3464 = vadd.f32 0.0, %v3463
    %v3465 = vpop.f32.mrb[0].mxu0
    %v3466 = vpop.f32.mrb[0].mxu0
    %3467 = vdwg.mxu0
    %v3470 = vcombine.low %v3462, %v3464
    %v3472 = vadd.f32 %v2893, %v3470
    %v3473 = vxor.u32 %v3472, 2147483648
    %v3474 = vmul.f32 %v3473, 1.442695
    %v3475 = vpow.pop %v3474
    %v3476 = vadd.f32 %v3475, 1.0
    %v3477 = vrcp.pop %v3476
    %v3478 = vmul.f32 1.0, %v3477
    %v3480 = vrot.slane %v3472, 4
    %v3482 = vtanh.pop %v3480
    %3483 = vrot.lane.b32.xlu0 %v3472, 64
    %v3484 = vpop.permute.xlu0 %3483
    %v3485 = vrot.slane %v3484, 4
    %v3487 = vxor.u32 %v3485, 2147483648
    %v3488 = vmul.f32 %v3487, 1.442695
    %v3489 = vpow.pop %v3488
    %v3490 = vadd.f32 %v3489, 1.0
    %v3491 = vrcp.pop %v3490
    %v3492 = vmul.f32 1.0, %v3491
    %v3493 = vmul.f32 %v3478, %v3177
    %v3494 = vmul.f32 %v3478, %v3482
    %3496 = vrot.lane.b32.xlu0 %v3494, 64
    %v3497 = vpop.permute.xlu0 %3496
    %v3499 = vadd.f32 %v3493, %v3497
    %v3500 = vtanh.pop %v3499
    %3502 = vrot.lane.b32.xlu0 %v3500, 64
    %v3503 = vpop.permute.xlu0 %3502
    %v3505 = vmul.f32 %v3492, %v3503
    %3507 = vrot.lane.b32.xlu0 %v3327, 48
    %v3508 = vpop.permute.xlu0 %3507
    %v3510 = vsel %vm276, %v3505, %v3508
    %v3511 = vpack.c.bf16 %v3510, %v3510
    %v3513 = vsel %vm167, %v3511, 0
    %3515 = vmatprep.subr.bf16.mxu0 %v3223
    %3516 = vmatpush1.bf16.msra.mxu0 %v3222
    %3517 = vmatprep.subr.bf16.mxu0 %v3225
    %3518 = vmatpush1.bf16.msra.mxu0 %v3224
    %3519 = vmatprep.subr.bf16.mxu0 %v3227
    %3520 = vmatpush1.bf16.msra.mxu0 %v3226
    %3521 = vmatprep.subr.bf16.mxu0 %v3229
    %3522 = vmatpush1.bf16.msra.mxu0 %v3228
    %3523 = vmatprep.subr.bf16.mxu0 %v3231
    %3524 = vmatpush1.bf16.msra.mxu0 %v3230
    %3525 = vmatprep.subr.bf16.mxu0 %v3233
    %3526 = vmatpush1.bf16.msra.mxu0 %v3232
    %3527 = vmatprep.subr.bf16.mxu0 0
    %3528 = vmatpush1.bf16.msra.mxu0 0
    %3529 = vmatprep.subr.bf16.mxu0 0
    %3530 = vmatpush1.bf16.msra.mxu0 0
    %3531 = vmatprep.subr.bf16.mxu0 0
    %3532 = vmatpush1.bf16.msra.mxu0 0
    %3533 = vmatprep.subr.bf16.mxu0 0
    %3534 = vmatpush1.bf16.msra.mxu0 0
    %3535 = vmatprep.subr.bf16.mxu0 0
    %3536 = vmatpush1.bf16.msra.mxu0 0
    %3537 = vmatprep.subr.bf16.mxu0 0
    %3538 = vmatpush1.bf16.msra.mxu0 0
    %3539 = vmatprep.subr.bf16.mxu0 0
    %3540 = vmatpush1.bf16.msra.mxu0 0
    %3541 = vmatprep.subr.bf16.mxu0 0
    %3542 = vmatpush1.bf16.msra.mxu0 0
    %3543 = vmatprep.subr.bf16.mxu0 0
    %3544 = vmatpush1.bf16.msra.mxu0 0
    %3545 = vmatprep.subr.bf16.mxu0 0
    %3546 = vmatpush1.bf16.msra.mxu0 0
    %3547 = vmatprep.mubr.bf16.mxu0 0
    %3548 = vmatmul.mubr.bf16.gmra.mrb[0].mxu0 %v3513
    %v3549 = vpop.f32.mrb[0].mxu0
    %v3550 = vadd.f32 0.0, %v3549
    %v3551 = vpop.f32.mrb[0].mxu0
    %v3552 = vadd.f32 0.0, %v3551
    %v3553 = vpop.f32.mrb[0].mxu0
    %v3554 = vpop.f32.mrb[0].mxu0
    %3555 = vdwg.mxu0
    %v3558 = vcombine.low %v3550, %v3552
    %v3560 = vadd.f32 %v2895, %v3558
    %v3561 = vxor.u32 %v3560, 2147483648
    %v3562 = vmul.f32 %v3561, 1.442695
    %v3563 = vpow.pop %v3562
    %v3564 = vadd.f32 %v3563, 1.0
    %v3565 = vrcp.pop %v3564
    %v3566 = vmul.f32 1.0, %v3565
    %v3568 = vrot.slane %v3560, 4
    %v3570 = vtanh.pop %v3568
    %3571 = vrot.lane.b32.xlu0 %v3560, 64
    %v3572 = vpop.permute.xlu0 %3571
    %v3573 = vrot.slane %v3572, 4
    %v3575 = vxor.u32 %v3573, 2147483648
    %v3576 = vmul.f32 %v3575, 1.442695
    %v3577 = vpow.pop %v3576
    %v3578 = vadd.f32 %v3577, 1.0
    %v3579 = vrcp.pop %v3578
    %v3580 = vmul.f32 1.0, %v3579
    %v3581 = vmul.f32 %v3566, %v3321
    %v3582 = vmul.f32 %v3566, %v3570
    %3584 = vrot.lane.b32.xlu0 %v3582, 64
    %v3585 = vpop.permute.xlu0 %3584
    %v3587 = vadd.f32 %v3581, %v3585
    %v3588 = vtanh.pop %v3587
    %3590 = vrot.lane.b32.xlu0 %v3588, 64
    %v3591 = vpop.permute.xlu0 %3590
    %v3593 = vmul.f32 %v3580, %v3591
    %3594 = vst.msk [vmem:[#allocation2 + $0x4] sm:$0xf] %vm3328, %v3593
    %3596 = vrot.lane.b32.xlu0 %v3417, 48
    %v3597 = vpop.permute.xlu0 %3596
    %v3599 = vsel %vm276, %v3593, %v3597
    %v3600 = vpack.c.bf16 %v3599, %v3599
    %v3602 = vsel %vm167, %v3600, 0
    %3604 = vmatprep.subr.bf16.mxu0 %v2935
    %3605 = vmatpush1.bf16.msra.mxu0 %v2934
    %3606 = vmatprep.subr.bf16.mxu0 %v2937
    %3607 = vmatpush1.bf16.msra.mxu0 %v2936
    %3608 = vmatprep.subr.bf16.mxu0 %v2939
    %3609 = vmatpush1.bf16.msra.mxu0 %v2938
    %3610 = vmatprep.subr.bf16.mxu0 %v2941
    %3611 = vmatpush1.bf16.msra.mxu0 %v2940
    %3612 = vmatprep.subr.bf16.mxu0 %v2943
    %3613 = vmatpush1.bf16.msra.mxu0 %v2942
    %3614 = vmatprep.subr.bf16.mxu0 %v2945
    %3615 = vmatpush1.bf16.msra.mxu0 %v2944
    %3616 = vmatprep.subr.bf16.mxu0 0
    %3617 = vmatpush1.bf16.msra.mxu0 0
    %3618 = vmatprep.subr.bf16.mxu0 0
    %3619 = vmatpush1.bf16.msra.mxu0 0
    %3620 = vmatprep.subr.bf16.mxu0 0
    %3621 = vmatpush1.bf16.msra.mxu0 0
    %3622 = vmatprep.subr.bf16.mxu0 0
    %3623 = vmatpush1.bf16.msra.mxu0 0
    %3624 = vmatprep.subr.bf16.mxu0 0
    %3625 = vmatpush1.bf16.msra.mxu0 0
    %3626 = vmatprep.subr.bf16.mxu0 0
    %3627 = vmatpush1.bf16.msra.mxu0 0
    %3628 = vmatprep.subr.bf16.mxu0 0
    %3629 = vmatpush1.bf16.msra.mxu0 0
    %3630 = vmatprep.subr.bf16.mxu0 0
    %3631 = vmatpush1.bf16.msra.mxu0 0
    %3632 = vmatprep.subr.bf16.mxu0 0
    %3633 = vmatpush1.bf16.msra.mxu0 0
    %3634 = vmatprep.subr.bf16.mxu0 0
    %3635 = vmatpush1.bf16.msra.mxu0 0
    %3636 = vmatprep.mubr.bf16.mxu0 0
    %3637 = vmatmul.mubr.bf16.gmra.mrb[0].mxu0 %v3602
    %v3638 = vpop.f32.mrb[0].mxu0
    %v3639 = vadd.f32 0.0, %v3638
    %v3640 = vpop.f32.mrb[0].mxu0
    %v3641 = vadd.f32 0.0, %v3640
    %v3642 = vpop.f32.mrb[0].mxu0
    %v3643 = vpop.f32.mrb[0].mxu0
    %3644 = vdwg.mxu0
    %v3647 = vcombine.low %v3639, %v3641
    %v3649 = vadd.f32 %v2891, %v3647
    %v3650 = vxor.u32 %v3649, 2147483648
    %v3651 = vmul.f32 %v3650, 1.442695
    %v3652 = vpow.pop %v3651
    %v3653 = vadd.f32 %v3652, 1.0
    %v3654 = vrcp.pop %v3653
    %v3655 = vmul.f32 1.0, %v3654
    %v3657 = vrot.slane %v3649, 4
    %v3659 = vtanh.pop %v3657
    %3660 = vrot.lane.b32.xlu0 %v3649, 64
    %v3661 = vpop.permute.xlu0 %3660
    %v3662 = vrot.slane %v3661, 4
    %v3664 = vxor.u32 %v3662, 2147483648
    %v3665 = vmul.f32 %v3664, 1.442695
    %v3666 = vpow.pop %v3665
    %v3667 = vadd.f32 %v3666, 1.0
    %v3668 = vrcp.pop %v3667
    %v3669 = vmul.f32 1.0, %v3668
    %v3670 = vmul.f32 %v3655, %v3411
    %v3671 = vmul.f32 %v3655, %v3659
    %3673 = vrot.lane.b32.xlu0 %v3671, 64
    %v3674 = vpop.permute.xlu0 %3673
    %v3676 = vadd.f32 %v3670, %v3674
    %v3677 = vtanh.pop %v3676
    %3679 = vrot.lane.b32.xlu0 %v3677, 64
    %v3680 = vpop.permute.xlu0 %3679
    %v3682 = vmul.f32 %v3669, %v3680
    %3684 = vrot.lane.b32.xlu0 %v3505, 48
    %v3685 = vpop.permute.xlu0 %3684
    %v3687 = vsel %vm276, %v3682, %v3685
    %v3688 = vpack.c.bf16 %v3687, %v3687
    %v3690 = vsel %vm167, %v3688, 0
    %3692 = vmatprep.subr.bf16.mxu0 %v3079
    %3693 = vmatpush1.bf16.msra.mxu0 %v3078
    %3694 = vmatprep.subr.bf16.mxu0 %v3081
    %3695 = vmatpush1.bf16.msra.mxu0 %v3080
    %3696 = vmatprep.subr.bf16.mxu0 %v3083
    %3697 = vmatpush1.bf16.msra.mxu0 %v3082
    %3698 = vmatprep.subr.bf16.mxu0 %v3085
    %3699 = vmatpush1.bf16.msra.mxu0 %v3084
    %3700 = vmatprep.subr.bf16.mxu0 %v3087
    %3701 = vmatpush1.bf16.msra.mxu0 %v3086
    %3702 = vmatprep.subr.bf16.mxu0 %v3089
    %3703 = vmatpush1.bf16.msra.mxu0 %v3088
    %3704 = vmatprep.subr.bf16.mxu0 0
    %3705 = vmatpush1.bf16.msra.mxu0 0
    %3706 = vmatprep.subr.bf16.mxu0 0
    %3707 = vmatpush1.bf16.msra.mxu0 0
    %3708 = vmatprep.subr.bf16.mxu0 0
    %3709 = vmatpush1.bf16.msra.mxu0 0
    %3710 = vmatprep.subr.bf16.mxu0 0
    %3711 = vmatpush1.bf16.msra.mxu0 0
    %3712 = vmatprep.subr.bf16.mxu0 0
    %3713 = vmatpush1.bf16.msra.mxu0 0
    %3714 = vmatprep.subr.bf16.mxu0 0
    %3715 = vmatpush1.bf16.msra.mxu0 0
    %3716 = vmatprep.subr.bf16.mxu0 0
    %3717 = vmatpush1.bf16.msra.mxu0 0
    %3718 = vmatprep.subr.bf16.mxu0 0
    %3719 = vmatpush1.bf16.msra.mxu0 0
    %3720 = vmatprep.subr.bf16.mxu0 0
    %3721 = vmatpush1.bf16.msra.mxu0 0
    %3722 = vmatprep.subr.bf16.mxu0 0
    %3723 = vmatpush1.bf16.msra.mxu0 0
    %3724 = vmatprep.mubr.bf16.mxu0 0
    %3725 = vmatmul.mubr.bf16.gmra.mrb[0].mxu0 %v3690
    %v3726 = vpop.f32.mrb[0].mxu0
    %v3727 = vadd.f32 0.0, %v3726
    %v3728 = vpop.f32.mrb[0].mxu0
    %v3729 = vadd.f32 0.0, %v3728
    %v3730 = vpop.f32.mrb[0].mxu0
    %v3731 = vpop.f32.mrb[0].mxu0
    %3732 = vdwg.mxu0
    %v3735 = vcombine.low %v3727, %v3729
    %v3737 = vadd.f32 %v2893, %v3735
    %v3738 = vxor.u32 %v3737, 2147483648
    %v3739 = vmul.f32 %v3738, 1.442695
    %v3740 = vpow.pop %v3739
    %v3741 = vadd.f32 %v3740, 1.0
    %v3742 = vrcp.pop %v3741
    %v3743 = vmul.f32 1.0, %v3742
    %v3745 = vrot.slane %v3737, 4
    %v3747 = vtanh.pop %v3745
    %3748 = vrot.lane.b32.xlu0 %v3737, 64
    %v3749 = vpop.permute.xlu0 %3748
    %v3750 = vrot.slane %v3749, 4
    %v3752 = vxor.u32 %v3750, 2147483648
    %v3753 = vmul.f32 %v3752, 1.442695
    %v3754 = vpow.pop %v3753
    %v3755 = vadd.f32 %v3754, 1.0
    %v3756 = vrcp.pop %v3755
    %v3757 = vmul.f32 1.0, %v3756
    %v3758 = vmul.f32 %v3743, %v3499
    %v3759 = vmul.f32 %v3743, %v3747
    %3761 = vrot.lane.b32.xlu0 %v3759, 64
    %v3762 = vpop.permute.xlu0 %3761
    %v3764 = vadd.f32 %v3758, %v3762
    %v3765 = vtanh.pop %v3764
    %3767 = vrot.lane.b32.xlu0 %v3765, 64
    %v3768 = vpop.permute.xlu0 %3767
    %v3770 = vmul.f32 %v3757, %v3768
    %3772 = vrot.lane.b32.xlu0 %v3593, 48
    %v3773 = vpop.permute.xlu0 %3772
    %v3775 = vsel %vm276, %v3770, %v3773
    %v3776 = vpack.c.bf16 %v3775, %v3775
    %v3778 = vsel %vm167, %v3776, 0
    %3780 = vmatprep.subr.bf16.mxu0 %v3223
    %3781 = vmatpush1.bf16.msra.mxu0 %v3222
    %3782 = vmatprep.subr.bf16.mxu0 %v3225
    %3783 = vmatpush1.bf16.msra.mxu0 %v3224
    %3784 = vmatprep.subr.bf16.mxu0 %v3227
    %3785 = vmatpush1.bf16.msra.mxu0 %v3226
    %3786 = vmatprep.subr.bf16.mxu0 %v3229
    %3787 = vmatpush1.bf16.msra.mxu0 %v3228
    %3788 = vmatprep.subr.bf16.mxu0 %v3231
    %3789 = vmatpush1.bf16.msra.mxu0 %v3230
    %3790 = vmatprep.subr.bf16.mxu0 %v3233
    %3791 = vmatpush1.bf16.msra.mxu0 %v3232
    %3792 = vmatprep.subr.bf16.mxu0 0
    %3793 = vmatpush1.bf16.msra.mxu0 0
    %3794 = vmatprep.subr.bf16.mxu0 0
    %3795 = vmatpush1.bf16.msra.mxu0 0
    %3796 = vmatprep.subr.bf16.mxu0 0
    %3797 = vmatpush1.bf16.msra.mxu0 0
    %3798 = vmatprep.subr.bf16.mxu0 0
    %3799 = vmatpush1.bf16.msra.mxu0 0
    %3800 = vmatprep.subr.bf16.mxu0 0
    %3801 = vmatpush1.bf16.msra.mxu0 0
    %3802 = vmatprep.subr.bf16.mxu0 0
    %3803 = vmatpush1.bf16.msra.mxu0 0
    %3804 = vmatprep.subr.bf16.mxu0 0
    %3805 = vmatpush1.bf16.msra.mxu0 0
    %3806 = vmatprep.subr.bf16.mxu0 0
    %3807 = vmatpush1.bf16.msra.mxu0 0
    %3808 = vmatprep.subr.bf16.mxu0 0
    %3809 = vmatpush1.bf16.msra.mxu0 0
    %3810 = vmatprep.subr.bf16.mxu0 0
    %3811 = vmatpush1.bf16.msra.mxu0 0
    %3812 = vmatprep.mubr.bf16.mxu0 0
    %3813 = vmatmul.mubr.bf16.gmra.mrb[0].mxu0 %v3778
    %v3814 = vpop.f32.mrb[0].mxu0
    %v3815 = vadd.f32 0.0, %v3814
    %v3816 = vpop.f32.mrb[0].mxu0
    %v3817 = vadd.f32 0.0, %v3816
    %v3818 = vpop.f32.mrb[0].mxu0
    %v3819 = vpop.f32.mrb[0].mxu0
    %3820 = vdwg.mxu0
    %v3823 = vcombine.low %v3815, %v3817
    %v3825 = vadd.f32 %v2895, %v3823
    %v3826 = vxor.u32 %v3825, 2147483648
    %v3827 = vmul.f32 %v3826, 1.442695
    %v3828 = vpow.pop %v3827
    %v3829 = vadd.f32 %v3828, 1.0
    %v3830 = vrcp.pop %v3829
    %v3831 = vmul.f32 1.0, %v3830
    %v3833 = vrot.slane %v3825, 4
    %v3835 = vtanh.pop %v3833
    %3836 = vrot.lane.b32.xlu0 %v3825, 64
    %v3837 = vpop.permute.xlu0 %3836
    %v3838 = vrot.slane %v3837, 4
    %v3840 = vxor.u32 %v3838, 2147483648
    %v3841 = vmul.f32 %v3840, 1.442695
    %v3842 = vpow.pop %v3841
    %v3843 = vadd.f32 %v3842, 1.0
    %v3844 = vrcp.pop %v3843
    %v3845 = vmul.f32 1.0, %v3844
    %v3846 = vmul.f32 %v3831, %v3587
    %v3847 = vmul.f32 %v3831, %v3835
    %3849 = vrot.lane.b32.xlu0 %v3847, 64
    %v3850 = vpop.permute.xlu0 %3849
    %v3852 = vadd.f32 %v3846, %v3850
    %v3853 = vtanh.pop %v3852
    %3855 = vrot.lane.b32.xlu0 %v3853, 64
    %v3856 = vpop.permute.xlu0 %3855
    %v3858 = vmul.f32 %v3845, %v3856
    %3859 = vst.msk [vmem:[#allocation2 + $0x8] sm:$0xf] %vm3328, %v3858
    %3861 = vrot.lane.b32.xlu0 %v3682, 48
    %v3862 = vpop.permute.xlu0 %3861
    %v3864 = vsel %vm276, %v3858, %v3862
    %v3865 = vpack.c.bf16 %v3864, %v3864
    %v3867 = vsel %vm167, %v3865, 0
    %3869 = vmatprep.subr.bf16.mxu0 %v2935
    %3870 = vmatpush1.bf16.msra.mxu0 %v2934
    %3871 = vmatprep.subr.bf16.mxu0 %v2937
    %3872 = vmatpush1.bf16.msra.mxu0 %v2936
    %3873 = vmatprep.subr.bf16.mxu0 %v2939
    %3874 = vmatpush1.bf16.msra.mxu0 %v2938
    %3875 = vmatprep.subr.bf16.mxu0 %v2941
    %3876 = vmatpush1.bf16.msra.mxu0 %v2940
    %3877 = vmatprep.subr.bf16.mxu0 %v2943
    %3878 = vmatpush1.bf16.msra.mxu0 %v2942
    %3879 = vmatprep.subr.bf16.mxu0 %v2945
    %3880 = vmatpush1.bf16.msra.mxu0 %v2944
    %3881 = vmatprep.subr.bf16.mxu0 0
    %3882 = vmatpush1.bf16.msra.mxu0 0
    %3883 = vmatprep.subr.bf16.mxu0 0
    %3884 = vmatpush1.bf16.msra.mxu0 0
    %3885 = vmatprep.subr.bf16.mxu0 0
    %3886 = vmatpush1.bf16.msra.mxu0 0
    %3887 = vmatprep.subr.bf16.mxu0 0
    %3888 = vmatpush1.bf16.msra.mxu0 0
    %3889 = vmatprep.subr.bf16.mxu0 0
    %3890 = vmatpush1.bf16.msra.mxu0 0
    %3891 = vmatprep.subr.bf16.mxu0 0
    %3892 = vmatpush1.bf16.msra.mxu0 0
    %3893 = vmatprep.subr.bf16.mxu0 0
    %3894 = vmatpush1.bf16.msra.mxu0 0
    %3895 = vmatprep.subr.bf16.mxu0 0
    %3896 = vmatpush1.bf16.msra.mxu0 0
    %3897 = vmatprep.subr.bf16.mxu0 0
    %3898 = vmatpush1.bf16.msra.mxu0 0
    %3899 = vmatprep.subr.bf16.mxu0 0
    %3900 = vmatpush1.bf16.msra.mxu0 0
    %3901 = vmatprep.mubr.bf16.mxu0 0
    %3902 = vmatmul.mubr.bf16.gmra.mrb[0].mxu0 %v3867
    %v3903 = vpop.f32.mrb[0].mxu0
    %v3904 = vadd.f32 0.0, %v3903
    %v3905 = vpop.f32.mrb[0].mxu0
    %v3906 = vadd.f32 0.0, %v3905
    %v3907 = vpop.f32.mrb[0].mxu0
    %v3908 = vpop.f32.mrb[0].mxu0
    %3909 = vdwg.mxu0
    %v3912 = vcombine.low %v3904, %v3906
    %v3914 = vadd.f32 %v2891, %v3912
    %v3915 = vxor.u32 %v3914, 2147483648
    %v3916 = vmul.f32 %v3915, 1.442695
    %v3917 = vpow.pop %v3916
    %v3918 = vadd.f32 %v3917, 1.0
    %v3919 = vrcp.pop %v3918
    %v3920 = vmul.f32 1.0, %v3919
    %v3922 = vrot.slane %v3914, 4
    %v3924 = vtanh.pop %v3922
    %3925 = vrot.lane.b32.xlu0 %v3914, 64
    %v3926 = vpop.permute.xlu0 %3925
    %v3927 = vrot.slane %v3926, 4
    %v3929 = vxor.u32 %v3927, 2147483648
    %v3930 = vmul.f32 %v3929, 1.442695
    %v3931 = vpow.pop %v3930
    %v3932 = vadd.f32 %v3931, 1.0
    %v3933 = vrcp.pop %v3932
    %v3934 = vmul.f32 1.0, %v3933
    %v3935 = vmul.f32 %v3920, %v3676
    %v3936 = vmul.f32 %v3920, %v3924
    %3938 = vrot.lane.b32.xlu0 %v3936, 64
    %v3939 = vpop.permute.xlu0 %3938
    %v3941 = vadd.f32 %v3935, %v3939
    %v3942 = vtanh.pop %v3941
    %3944 = vrot.lane.b32.xlu0 %v3942, 64
    %v3945 = vpop.permute.xlu0 %3944
    %v3947 = vmul.f32 %v3934, %v3945
    %3949 = vrot.lane.b32.xlu0 %v3770, 48
    %v3950 = vpop.permute.xlu0 %3949
    %v3952 = vsel %vm276, %v3947, %v3950
    %v3953 = vpack.c.bf16 %v3952, %v3952
    %v3955 = vsel %vm167, %v3953, 0
    %3957 = vmatprep.subr.bf16.mxu0 %v3079
    %3958 = vmatpush1.bf16.msra.mxu0 %v3078
    %3959 = vmatprep.subr.bf16.mxu0 %v3081
    %3960 = vmatpush1.bf16.msra.mxu0 %v3080
    %3961 = vmatprep.subr.bf16.mxu0 %v3083
    %3962 = vmatpush1.bf16.msra.mxu0 %v3082
    %3963 = vmatprep.subr.bf16.mxu0 %v3085
    %3964 = vmatpush1.bf16.msra.mxu0 %v3084
    %3965 = vmatprep.subr.bf16.mxu0 %v3087
    %3966 = vmatpush1.bf16.msra.mxu0 %v3086
    %3967 = vmatprep.subr.bf16.mxu0 %v3089
    %3968 = vmatpush1.bf16.msra.mxu0 %v3088
    %3969 = vmatprep.subr.bf16.mxu0 0
    %3970 = vmatpush1.bf16.msra.mxu0 0
    %3971 = vmatprep.subr.bf16.mxu0 0
    %3972 = vmatpush1.bf16.msra.mxu0 0
    %3973 = vmatprep.subr.bf16.mxu0 0
    %3974 = vmatpush1.bf16.msra.mxu0 0
    %3975 = vmatprep.subr.bf16.mxu0 0
    %3976 = vmatpush1.bf16.msra.mxu0 0
    %3977 = vmatprep.subr.bf16.mxu0 0
    %3978 = vmatpush1.bf16.msra.mxu0 0
    %3979 = vmatprep.subr.bf16.mxu0 0
    %3980 = vmatpush1.bf16.msra.mxu0 0
    %3981 = vmatprep.subr.bf16.mxu0 0
    %3982 = vmatpush1.bf16.msra.mxu0 0
    %3983 = vmatprep.subr.bf16.mxu0 0
    %3984 = vmatpush1.bf16.msra.mxu0 0
    %3985 = vmatprep.subr.bf16.mxu0 0
    %3986 = vmatpush1.bf16.msra.mxu0 0
    %3987 = vmatprep.subr.bf16.mxu0 0
    %3988 = vmatpush1.bf16.msra.mxu0 0
    %3989 = vmatprep.mubr.bf16.mxu0 0
    %3990 = vmatmul.mubr.bf16.gmra.mrb[0].mxu0 %v3955
    %v3991 = vpop.f32.mrb[0].mxu0
    %v3992 = vadd.f32 0.0, %v3991
    %v3993 = vpop.f32.mrb[0].mxu0
    %v3994 = vadd.f32 0.0, %v3993
    %v3995 = vpop.f32.mrb[0].mxu0
    %v3996 = vpop.f32.mrb[0].mxu0
    %3997 = vdwg.mxu0
    %v4000 = vcombine.low %v3992, %v3994
    %v4002 = vadd.f32 %v2893, %v4000
    %v4003 = vxor.u32 %v4002, 2147483648
    %v4004 = vmul.f32 %v4003, 1.442695
    %v4005 = vpow.pop %v4004
    %v4006 = vadd.f32 %v4005, 1.0
    %v4007 = vrcp.pop %v4006
    %v4008 = vmul.f32 1.0, %v4007
    %v4010 = vrot.slane %v4002, 4
    %v4012 = vtanh.pop %v4010
    %4013 = vrot.lane.b32.xlu0 %v4002, 64
    %v4014 = vpop.permute.xlu0 %4013
    %v4015 = vrot.slane %v4014, 4
    %v4017 = vxor.u32 %v4015, 2147483648
    %v4018 = vmul.f32 %v4017, 1.442695
    %v4019 = vpow.pop %v4018
    %v4020 = vadd.f32 %v4019, 1.0
    %v4021 = vrcp.pop %v4020
    %v4022 = vmul.f32 1.0, %v4021
    %v4023 = vmul.f32 %v4008, %v3764
    %v4024 = vmul.f32 %v4008, %v4012
    %4026 = vrot.lane.b32.xlu0 %v4024, 64
    %v4027 = vpop.permute.xlu0 %4026
    %v4029 = vadd.f32 %v4023, %v4027
    %v4030 = vtanh.pop %v4029
    %4032 = vrot.lane.b32.xlu0 %v4030, 64
    %v4033 = vpop.permute.xlu0 %4032
    %v4035 = vmul.f32 %v4022, %v4033
    %4037 = vrot.lane.b32.xlu0 %v3858, 48
    %v4038 = vpop.permute.xlu0 %4037
    %v4040 = vsel %vm276, %v4035, %v4038
    %v4041 = vpack.c.bf16 %v4040, %v4040
    %v4043 = vsel %vm167, %v4041, 0
    %4045 = vmatprep.subr.bf16.mxu0 %v3223
    %4046 = vmatpush1.bf16.msra.mxu0 %v3222
    %4047 = vmatprep.subr.bf16.mxu0 %v3225
    %4048 = vmatpush1.bf16.msra.mxu0 %v3224
    %4049 = vmatprep.subr.bf16.mxu0 %v3227
    %4050 = vmatpush1.bf16.msra.mxu0 %v3226
    %4051 = vmatprep.subr.bf16.mxu0 %v3229
    %4052 = vmatpush1.bf16.msra.mxu0 %v3228
    %4053 = vmatprep.subr.bf16.mxu0 %v3231
    %4054 = vmatpush1.bf16.msra.mxu0 %v3230
    %4055 = vmatprep.subr.bf16.mxu0 %v3233
    %4056 = vmatpush1.bf16.msra.mxu0 %v3232
    %4057 = vmatprep.subr.bf16.mxu0 0
    %4058 = vmatpush1.bf16.msra.mxu0 0
    %4059 = vmatprep.subr.bf16.mxu0 0
    %4060 = vmatpush1.bf16.msra.mxu0 0
    %4061 = vmatprep.subr.bf16.mxu0 0
    %4062 = vmatpush1.bf16.msra.mxu0 0
    %4063 = vmatprep.subr.bf16.mxu0 0
    %4064 = vmatpush1.bf16.msra.mxu0 0
    %4065 = vmatprep.subr.bf16.mxu0 0
    %4066 = vmatpush1.bf16.msra.mxu0 0
    %4067 = vmatprep.subr.bf16.mxu0 0
    %4068 = vmatpush1.bf16.msra.mxu0 0
    %4069 = vmatprep.subr.bf16.mxu0 0
    %4070 = vmatpush1.bf16.msra.mxu0 0
    %4071 = vmatprep.subr.bf16.mxu0 0
    %4072 = vmatpush1.bf16.msra.mxu0 0
    %4073 = vmatprep.subr.bf16.mxu0 0
    %4074 = vmatpush1.bf16.msra.mxu0 0
    %4075 = vmatprep.subr.bf16.mxu0 0
    %4076 = vmatpush1.bf16.msra.mxu0 0
    %4077 = vmatprep.mubr.bf16.mxu0 0
    %4078 = vmatmul.mubr.bf16.gmra.mrb[0].mxu0 %v4043
    %v4079 = vpop.f32.mrb[0].mxu0
    %v4080 = vadd.f32 0.0, %v4079
    %v4081 = vpop.f32.mrb[0].mxu0
    %v4082 = vadd.f32 0.0, %v4081
    %v4083 = vpop.f32.mrb[0].mxu0
    %v4084 = vpop.f32.mrb[0].mxu0
    %4085 = vdwg.mxu0
    %v4088 = vcombine.low %v4080, %v4082
    %v4090 = vadd.f32 %v2895, %v4088
    %v4091 = vxor.u32 %v4090, 2147483648
    %v4092 = vmul.f32 %v4091, 1.442695
    %v4093 = vpow.pop %v4092
    %v4094 = vadd.f32 %v4093, 1.0
    %v4095 = vrcp.pop %v4094
    %v4096 = vmul.f32 1.0, %v4095
    %v4098 = vrot.slane %v4090, 4
    %v4100 = vtanh.pop %v4098
    %4101 = vrot.lane.b32.xlu0 %v4090, 64
    %v4102 = vpop.permute.xlu0 %4101
    %v4103 = vrot.slane %v4102, 4
    %v4105 = vxor.u32 %v4103, 2147483648
    %v4106 = vmul.f32 %v4105, 1.442695
    %v4107 = vpow.pop %v4106
    %v4108 = vadd.f32 %v4107, 1.0
    %v4109 = vrcp.pop %v4108
    %v4110 = vmul.f32 1.0, %v4109
    %v4111 = vmul.f32 %v4096, %v3852
    %v4112 = vmul.f32 %v4096, %v4100
    %4114 = vrot.lane.b32.xlu0 %v4112, 64
    %v4115 = vpop.permute.xlu0 %4114
    %v4117 = vadd.f32 %v4111, %v4115
    %v4118 = vtanh.pop %v4117
    %4120 = vrot.lane.b32.xlu0 %v4118, 64
    %v4121 = vpop.permute.xlu0 %4120
    %v4123 = vmul.f32 %v4110, %v4121
    %4124 = vst.msk [vmem:[#allocation2 + $0xc] sm:$0xf] %vm3328, %v4123
    %4126 = vrot.lane.b32.xlu0 %v3947, 48
    %v4127 = vpop.permute.xlu0 %4126
    %v4129 = vsel %vm276, %v4123, %v4127
    %v4130 = vpack.c.bf16 %v4129, %v4129
    %v4132 = vsel %vm167, %v4130, 0
    %4134 = vmatprep.subr.bf16.mxu0 %v2935
    %4135 = vmatpush1.bf16.msra.mxu0 %v2934
    %4136 = vmatprep.subr.bf16.mxu0 %v2937
    %4137 = vmatpush1.bf16.msra.mxu0 %v2936
    %4138 = vmatprep.subr.bf16.mxu0 %v2939
    %4139 = vmatpush1.bf16.msra.mxu0 %v2938
    %4140 = vmatprep.subr.bf16.mxu0 %v2941
    %4141 = vmatpush1.bf16.msra.mxu0 %v2940
    %4142 = vmatprep.subr.bf16.mxu0 %v2943
    %4143 = vmatpush1.bf16.msra.mxu0 %v2942
    %4144 = vmatprep.subr.bf16.mxu0 %v2945
    %4145 = vmatpush1.bf16.msra.mxu0 %v2944
    %4146 = vmatprep.subr.bf16.mxu0 0
    %4147 = vmatpush1.bf16.msra.mxu0 0
    %4148 = vmatprep.subr.bf16.mxu0 0
    %4149 = vmatpush1.bf16.msra.mxu0 0
    %4150 = vmatprep.subr.bf16.mxu0 0
    %4151 = vmatpush1.bf16.msra.mxu0 0
    %4152 = vmatprep.subr.bf16.mxu0 0
    %4153 = vmatpush1.bf16.msra.mxu0 0
    %4154 = vmatprep.subr.bf16.mxu0 0
    %4155 = vmatpush1.bf16.msra.mxu0 0
    %4156 = vmatprep.subr.bf16.mxu0 0
    %4157 = vmatpush1.bf16.msra.mxu0 0
    %4158 = vmatprep.subr.bf16.mxu0 0
    %4159 = vmatpush1.bf16.msra.mxu0 0
    %4160 = vmatprep.subr.bf16.mxu0 0
    %4161 = vmatpush1.bf16.msra.mxu0 0
    %4162 = vmatprep.subr.bf16.mxu0 0
    %4163 = vmatpush1.bf16.msra.mxu0 0
    %4164 = vmatprep.subr.bf16.mxu0 0
    %4165 = vmatpush1.bf16.msra.mxu0 0
    %4166 = vmatprep.mubr.bf16.mxu0 0
    %4167 = vmatmul.mubr.bf16.gmra.mrb[0].mxu0 %v4132
    %v4168 = vpop.f32.mrb[0].mxu0
    %v4169 = vadd.f32 0.0, %v4168
    %v4170 = vpop.f32.mrb[0].mxu0
    %v4171 = vadd.f32 0.0, %v4170
    %v4172 = vpop.f32.mrb[0].mxu0
    %v4173 = vpop.f32.mrb[0].mxu0
    %4174 = vdwg.mxu0
    %v4177 = vcombine.low %v4169, %v4171
    %v4179 = vadd.f32 %v2891, %v4177
    %v4180 = vxor.u32 %v4179, 2147483648
    %v4181 = vmul.f32 %v4180, 1.442695
    %v4182 = vpow.pop %v4181
    %v4183 = vadd.f32 %v4182, 1.0
    %v4184 = vrcp.pop %v4183
    %v4185 = vmul.f32 1.0, %v4184
    %v4187 = vrot.slane %v4179, 4
    %v4189 = vtanh.pop %v4187
    %4190 = vrot.lane.b32.xlu0 %v4179, 64
    %v4191 = vpop.permute.xlu0 %4190
    %v4192 = vrot.slane %v4191, 4
    %v4194 = vxor.u32 %v4192, 2147483648
    %v4195 = vmul.f32 %v4194, 1.442695
    %v4196 = vpow.pop %v4195
    %v4197 = vadd.f32 %v4196, 1.0
    %v4198 = vrcp.pop %v4197
    %v4199 = vmul.f32 1.0, %v4198
    %v4200 = vmul.f32 %v4185, %v3941
    %v4201 = vmul.f32 %v4185, %v4189
    %4203 = vrot.lane.b32.xlu0 %v4201, 64
    %v4204 = vpop.permute.xlu0 %4203
    %v4206 = vadd.f32 %v4200, %v4204
    %v4207 = vtanh.pop %v4206
    %4209 = vrot.lane.b32.xlu0 %v4207, 64
    %v4210 = vpop.permute.xlu0 %4209
    %v4212 = vmul.f32 %v4199, %v4210
    %4214 = vrot.lane.b32.xlu0 %v4035, 48
    %v4215 = vpop.permute.xlu0 %4214
    %v4217 = vsel %vm276, %v4212, %v4215
    %v4218 = vpack.c.bf16 %v4217, %v4217
    %v4220 = vsel %vm167, %v4218, 0
    %4222 = vmatprep.subr.bf16.mxu0 %v3079
    %4223 = vmatpush1.bf16.msra.mxu0 %v3078
    %4224 = vmatprep.subr.bf16.mxu0 %v3081
    %4225 = vmatpush1.bf16.msra.mxu0 %v3080
    %4226 = vmatprep.subr.bf16.mxu0 %v3083
    %4227 = vmatpush1.bf16.msra.mxu0 %v3082
    %4228 = vmatprep.subr.bf16.mxu0 %v3085
    %4229 = vmatpush1.bf16.msra.mxu0 %v3084
    %4230 = vmatprep.subr.bf16.mxu0 %v3087
    %4231 = vmatpush1.bf16.msra.mxu0 %v3086
    %4232 = vmatprep.subr.bf16.mxu0 %v3089
    %4233 = vmatpush1.bf16.msra.mxu0 %v3088
    %4234 = vmatprep.subr.bf16.mxu0 0
    %4235 = vmatpush1.bf16.msra.mxu0 0
    %4236 = vmatprep.subr.bf16.mxu0 0
    %4237 = vmatpush1.bf16.msra.mxu0 0
    %4238 = vmatprep.subr.bf16.mxu0 0
    %4239 = vmatpush1.bf16.msra.mxu0 0
    %4240 = vmatprep.subr.bf16.mxu0 0
    %4241 = vmatpush1.bf16.msra.mxu0 0
    %4242 = vmatprep.subr.bf16.mxu0 0
    %4243 = vmatpush1.bf16.msra.mxu0 0
    %4244 = vmatprep.subr.bf16.mxu0 0
    %4245 = vmatpush1.bf16.msra.mxu0 0
    %4246 = vmatprep.subr.bf16.mxu0 0
    %4247 = vmatpush1.bf16.msra.mxu0 0
    %4248 = vmatprep.subr.bf16.mxu0 0
    %4249 = vmatpush1.bf16.msra.mxu0 0
    %4250 = vmatprep.subr.bf16.mxu0 0
    %4251 = vmatpush1.bf16.msra.mxu0 0
    %4252 = vmatprep.subr.bf16.mxu0 0
    %4253 = vmatpush1.bf16.msra.mxu0 0
    %4254 = vmatprep.mubr.bf16.mxu0 0
    %4255 = vmatmul.mubr.bf16.gmra.mrb[0].mxu0 %v4220
    %v4256 = vpop.f32.mrb[0].mxu0
    %v4257 = vadd.f32 0.0, %v4256
    %v4258 = vpop.f32.mrb[0].mxu0
    %v4259 = vadd.f32 0.0, %v4258
    %v4260 = vpop.f32.mrb[0].mxu0
    %v4261 = vpop.f32.mrb[0].mxu0
    %4262 = vdwg.mxu0
    %v4265 = vcombine.low %v4257, %v4259
    %v4267 = vadd.f32 %v2893, %v4265
    %v4268 = vxor.u32 %v4267, 2147483648
    %v4269 = vmul.f32 %v4268, 1.442695
    %v4270 = vpow.pop %v4269
    %v4271 = vadd.f32 %v4270, 1.0
    %v4272 = vrcp.pop %v4271
    %v4273 = vmul.f32 1.0, %v4272
    %v4275 = vrot.slane %v4267, 4
    %v4277 = vtanh.pop %v4275
    %4278 = vrot.lane.b32.xlu0 %v4267, 64
    %v4279 = vpop.permute.xlu0 %4278
    %v4280 = vrot.slane %v4279, 4
    %v4282 = vxor.u32 %v4280, 2147483648
    %v4283 = vmul.f32 %v4282, 1.442695
    %v4284 = vpow.pop %v4283
    %v4285 = vadd.f32 %v4284, 1.0
    %v4286 = vrcp.pop %v4285
    %v4287 = vmul.f32 1.0, %v4286
    %v4288 = vmul.f32 %v4273, %v4029
    %v4289 = vmul.f32 %v4273, %v4277
    %4291 = vrot.lane.b32.xlu0 %v4289, 64
    %v4292 = vpop.permute.xlu0 %4291
    %v4294 = vadd.f32 %v4288, %v4292
    %v4295 = vtanh.pop %v4294
    %4297 = vrot.lane.b32.xlu0 %v4295, 64
    %v4298 = vpop.permute.xlu0 %4297
    %v4300 = vmul.f32 %v4287, %v4298
    %4302 = vrot.lane.b32.xlu0 %v4123, 48
    %v4303 = vpop.permute.xlu0 %4302
    %v4305 = vsel %vm276, %v4300, %v4303
    %v4306 = vpack.c.bf16 %v4305, %v4305
    %v4308 = vsel %vm167, %v4306, 0
    %4310 = vmatprep.subr.bf16.mxu0 %v3223
    %4311 = vmatpush1.bf16.msra.mxu0 %v3222
    %4312 = vmatprep.subr.bf16.mxu0 %v3225
    %4313 = vmatpush1.bf16.msra.mxu0 %v3224
    %4314 = vmatprep.subr.bf16.mxu0 %v3227
    %4315 = vmatpush1.bf16.msra.mxu0 %v3226
    %4316 = vmatprep.subr.bf16.mxu0 %v3229
    %4317 = vmatpush1.bf16.msra.mxu0 %v3228
    %4318 = vmatprep.subr.bf16.mxu0 %v3231
    %4319 = vmatpush1.bf16.msra.mxu0 %v3230
    %4320 = vmatprep.subr.bf16.mxu0 %v3233
    %4321 = vmatpush1.bf16.msra.mxu0 %v3232
    %4322 = vmatprep.subr.bf16.mxu0 0
    %4323 = vmatpush1.bf16.msra.mxu0 0
    %4324 = vmatprep.subr.bf16.mxu0 0
    %4325 = vmatpush1.bf16.msra.mxu0 0
    %4326 = vmatprep.subr.bf16.mxu0 0
    %4327 = vmatpush1.bf16.msra.mxu0 0
    %4328 = vmatprep.subr.bf16.mxu0 0
    %4329 = vmatpush1.bf16.msra.mxu0 0
    %4330 = vmatprep.subr.bf16.mxu0 0
    %4331 = vmatpush1.bf16.msra.mxu0 0
    %4332 = vmatprep.subr.bf16.mxu0 0
    %4333 = vmatpush1.bf16.msra.mxu0 0
    %4334 = vmatprep.subr.bf16.mxu0 0
    %4335 = vmatpush1.bf16.msra.mxu0 0
    %4336 = vmatprep.subr.bf16.mxu0 0
    %4337 = vmatpush1.bf16.msra.mxu0 0
    %4338 = vmatprep.subr.bf16.mxu0 0
    %4339 = vmatpush1.bf16.msra.mxu0 0
    %4340 = vmatprep.subr.bf16.mxu0 0
    %4341 = vmatpush1.bf16.msra.mxu0 0
    %4342 = vmatprep.mubr.bf16.mxu0 0
    %4343 = vmatmul.mubr.bf16.gmra.mrb[0].mxu0 %v4308
    %v4344 = vpop.f32.mrb[0].mxu0
    %v4345 = vadd.f32 0.0, %v4344
    %v4346 = vpop.f32.mrb[0].mxu0
    %v4347 = vadd.f32 0.0, %v4346
    %v4348 = vpop.f32.mrb[0].mxu0
    %v4349 = vpop.f32.mrb[0].mxu0
    %4350 = vdwg.mxu0
    %v4353 = vcombine.low %v4345, %v4347
    %v4355 = vadd.f32 %v2895, %v4353
    %v4356 = vxor.u32 %v4355, 2147483648
    %v4357 = vmul.f32 %v4356, 1.442695
    %v4358 = vpow.pop %v4357
    %v4359 = vadd.f32 %v4358, 1.0
    %v4360 = vrcp.pop %v4359
    %v4361 = vmul.f32 1.0, %v4360
    %v4363 = vrot.slane %v4355, 4
    %v4365 = vtanh.pop %v4363
    %4366 = vrot.lane.b32.xlu0 %v4355, 64
    %v4367 = vpop.permute.xlu0 %4366
    %v4368 = vrot.slane %v4367, 4
    %v4370 = vxor.u32 %v4368, 2147483648
    %v4371 = vmul.f32 %v4370, 1.442695
    %v4372 = vpow.pop %v4371
    %v4373 = vadd.f32 %v4372, 1.0
    %v4374 = vrcp.pop %v4373
    %v4375 = vmul.f32 1.0, %v4374
    %v4376 = vmul.f32 %v4361, %v4117
    %v4377 = vmul.f32 %v4361, %v4365
    %4379 = vrot.lane.b32.xlu0 %v4377, 64
    %v4380 = vpop.permute.xlu0 %4379
    %v4382 = vadd.f32 %v4376, %v4380
    %v4383 = vtanh.pop %v4382
    %4385 = vrot.lane.b32.xlu0 %v4383, 64
    %v4386 = vpop.permute.xlu0 %4385
    %v4388 = vmul.f32 %v4375, %v4386
    %4389 = vst.msk [vmem:[#allocation2 + $0x10] sm:$0xf] %vm3328, %v4388
    %4391 = vrot.lane.b32.xlu0 %v4212, 48
    %v4392 = vpop.permute.xlu0 %4391
    %v4394 = vsel %vm276, %v4388, %v4392
    %v4395 = vpack.c.bf16 %v4394, %v4394
    %v4397 = vsel %vm167, %v4395, 0
    %4399 = vmatprep.subr.bf16.mxu0 %v2935
    %4400 = vmatpush1.bf16.msra.mxu0 %v2934
    %4401 = vmatprep.subr.bf16.mxu0 %v2937
    %4402 = vmatpush1.bf16.msra.mxu0 %v2936
    %4403 = vmatprep.subr.bf16.mxu0 %v2939
    %4404 = vmatpush1.bf16.msra.mxu0 %v2938
    %4405 = vmatprep.subr.bf16.mxu0 %v2941
    %4406 = vmatpush1.bf16.msra.mxu0 %v2940
    %4407 = vmatprep.subr.bf16.mxu0 %v2943
    %4408 = vmatpush1.bf16.msra.mxu0 %v2942
    %4409 = vmatprep.subr.bf16.mxu0 %v2945
    %4410 = vmatpush1.bf16.msra.mxu0 %v2944
    %4411 = vmatprep.subr.bf16.mxu0 0
    %4412 = vmatpush1.bf16.msra.mxu0 0
    %4413 = vmatprep.subr.bf16.mxu0 0
    %4414 = vmatpush1.bf16.msra.mxu0 0
    %4415 = vmatprep.subr.bf16.mxu0 0
    %4416 = vmatpush1.bf16.msra.mxu0 0
    %4417 = vmatprep.subr.bf16.mxu0 0
    %4418 = vmatpush1.bf16.msra.mxu0 0
    %4419 = vmatprep.subr.bf16.mxu0 0
    %4420 = vmatpush1.bf16.msra.mxu0 0
    %4421 = vmatprep.subr.bf16.mxu0 0
    %4422 = vmatpush1.bf16.msra.mxu0 0
    %4423 = vmatprep.subr.bf16.mxu0 0
    %4424 = vmatpush1.bf16.msra.mxu0 0
    %4425 = vmatprep.subr.bf16.mxu0 0
    %4426 = vmatpush1.bf16.msra.mxu0 0
    %4427 = vmatprep.subr.bf16.mxu0 0
    %4428 = vmatpush1.bf16.msra.mxu0 0
    %4429 = vmatprep.subr.bf16.mxu0 0
    %4430 = vmatpush1.bf16.msra.mxu0 0
    %4431 = vmatprep.mubr.bf16.mxu0 0
    %4432 = vmatmul.mubr.bf16.gmra.mrb[0].mxu0 %v4397
    %v4433 = vpop.f32.mrb[0].mxu0
    %v4434 = vadd.f32 0.0, %v4433
    %v4435 = vpop.f32.mrb[0].mxu0
    %v4436 = vadd.f32 0.0, %v4435
    %v4437 = vpop.f32.mrb[0].mxu0
    %v4438 = vpop.f32.mrb[0].mxu0
    %4439 = vdwg.mxu0
    %v4442 = vcombine.low %v4434, %v4436
    %v4444 = vadd.f32 %v2891, %v4442
    %v4445 = vxor.u32 %v4444, 2147483648
    %v4446 = vmul.f32 %v4445, 1.442695
    %v4447 = vpow.pop %v4446
    %v4448 = vadd.f32 %v4447, 1.0
    %v4449 = vrcp.pop %v4448
    %v4450 = vmul.f32 1.0, %v4449
    %v4452 = vrot.slane %v4444, 4
    %v4454 = vtanh.pop %v4452
    %4455 = vrot.lane.b32.xlu0 %v4444, 64
    %v4456 = vpop.permute.xlu0 %4455
    %v4457 = vrot.slane %v4456, 4
    %v4459 = vxor.u32 %v4457, 2147483648
    %v4460 = vmul.f32 %v4459, 1.442695
    %v4461 = vpow.pop %v4460
    %v4462 = vadd.f32 %v4461, 1.0
    %v4463 = vrcp.pop %v4462
    %v4464 = vmul.f32 1.0, %v4463
    %v4465 = vmul.f32 %v4450, %v4206
    %v4466 = vmul.f32 %v4450, %v4454
    %4468 = vrot.lane.b32.xlu0 %v4466, 64
    %v4469 = vpop.permute.xlu0 %4468
    %v4471 = vadd.f32 %v4465, %v4469
    %v4472 = vtanh.pop %v4471
    %4474 = vrot.lane.b32.xlu0 %v4472, 64
    %v4475 = vpop.permute.xlu0 %4474
    %v4477 = vmul.f32 %v4464, %v4475
    %4479 = vrot.lane.b32.xlu0 %v4300, 48
    %v4480 = vpop.permute.xlu0 %4479
    %v4482 = vsel %vm276, %v4477, %v4480
    %v4483 = vpack.c.bf16 %v4482, %v4482
    %v4485 = vsel %vm167, %v4483, 0
    %4487 = vmatprep.subr.bf16.mxu0 %v3079
    %4488 = vmatpush1.bf16.msra.mxu0 %v3078
    %4489 = vmatprep.subr.bf16.mxu0 %v3081
    %4490 = vmatpush1.bf16.msra.mxu0 %v3080
    %4491 = vmatprep.subr.bf16.mxu0 %v3083
    %4492 = vmatpush1.bf16.msra.mxu0 %v3082
    %4493 = vmatprep.subr.bf16.mxu0 %v3085
    %4494 = vmatpush1.bf16.msra.mxu0 %v3084
    %4495 = vmatprep.subr.bf16.mxu0 %v3087
    %4496 = vmatpush1.bf16.msra.mxu0 %v3086
    %4497 = vmatprep.subr.bf16.mxu0 %v3089
    %4498 = vmatpush1.bf16.msra.mxu0 %v3088
    %4499 = vmatprep.subr.bf16.mxu0 0
    %4500 = vmatpush1.bf16.msra.mxu0 0
    %4501 = vmatprep.subr.bf16.mxu0 0
    %4502 = vmatpush1.bf16.msra.mxu0 0
    %4503 = vmatprep.subr.bf16.mxu0 0
    %4504 = vmatpush1.bf16.msra.mxu0 0
    %4505 = vmatprep.subr.bf16.mxu0 0
    %4506 = vmatpush1.bf16.msra.mxu0 0
    %4507 = vmatprep.subr.bf16.mxu0 0
    %4508 = vmatpush1.bf16.msra.mxu0 0
    %4509 = vmatprep.subr.bf16.mxu0 0
    %4510 = vmatpush1.bf16.msra.mxu0 0
    %4511 = vmatprep.subr.bf16.mxu0 0
    %4512 = vmatpush1.bf16.msra.mxu0 0
    %4513 = vmatprep.subr.bf16.mxu0 0
    %4514 = vmatpush1.bf16.msra.mxu0 0
    %4515 = vmatprep.subr.bf16.mxu0 0
    %4516 = vmatpush1.bf16.msra.mxu0 0
    %4517 = vmatprep.subr.bf16.mxu0 0
    %4518 = vmatpush1.bf16.msra.mxu0 0
    %4519 = vmatprep.mubr.bf16.mxu0 0
    %4520 = vmatmul.mubr.bf16.gmra.mrb[0].mxu0 %v4485
    %v4521 = vpop.f32.mrb[0].mxu0
    %v4522 = vadd.f32 0.0, %v4521
    %v4523 = vpop.f32.mrb[0].mxu0
    %v4524 = vadd.f32 0.0, %v4523
    %v4525 = vpop.f32.mrb[0].mxu0
    %v4526 = vpop.f32.mrb[0].mxu0
    %4527 = vdwg.mxu0
    %v4530 = vcombine.low %v4522, %v4524
    %v4532 = vadd.f32 %v2893, %v4530
    %v4533 = vxor.u32 %v4532, 2147483648
    %v4534 = vmul.f32 %v4533, 1.442695
    %v4535 = vpow.pop %v4534
    %v4536 = vadd.f32 %v4535, 1.0
    %v4537 = vrcp.pop %v4536
    %v4538 = vmul.f32 1.0, %v4537
    %v4540 = vrot.slane %v4532, 4
    %v4542 = vtanh.pop %v4540
    %4543 = vrot.lane.b32.xlu0 %v4532, 64
    %v4544 = vpop.permute.xlu0 %4543
    %v4545 = vrot.slane %v4544, 4
    %v4547 = vxor.u32 %v4545, 2147483648
    %v4548 = vmul.f32 %v4547, 1.442695
    %v4549 = vpow.pop %v4548
    %v4550 = vadd.f32 %v4549, 1.0
    %v4551 = vrcp.pop %v4550
    %v4552 = vmul.f32 1.0, %v4551
    %v4553 = vmul.f32 %v4538, %v4294
    %v4554 = vmul.f32 %v4538, %v4542
    %4556 = vrot.lane.b32.xlu0 %v4554, 64
    %v4557 = vpop.permute.xlu0 %4556
    %v4559 = vadd.f32 %v4553, %v4557
    %v4560 = vtanh.pop %v4559
    %4562 = vrot.lane.b32.xlu0 %v4560, 64
    %v4563 = vpop.permute.xlu0 %4562
    %v4565 = vmul.f32 %v4552, %v4563
    %4567 = vrot.lane.b32.xlu0 %v4388, 48
    %v4568 = vpop.permute.xlu0 %4567
    %v4570 = vsel %vm276, %v4565, %v4568
    %v4571 = vpack.c.bf16 %v4570, %v4570
    %v4573 = vsel %vm167, %v4571, 0
    %4575 = vmatprep.subr.bf16.mxu0 %v3223
    %4576 = vmatpush1.bf16.msra.mxu0 %v3222
    %4577 = vmatprep.subr.bf16.mxu0 %v3225
    %4578 = vmatpush1.bf16.msra.mxu0 %v3224
    %4579 = vmatprep.subr.bf16.mxu0 %v3227
    %4580 = vmatpush1.bf16.msra.mxu0 %v3226
    %4581 = vmatprep.subr.bf16.mxu0 %v3229
    %4582 = vmatpush1.bf16.msra.mxu0 %v3228
    %4583 = vmatprep.subr.bf16.mxu0 %v3231
    %4584 = vmatpush1.bf16.msra.mxu0 %v3230
    %4585 = vmatprep.subr.bf16.mxu0 %v3233
    %4586 = vmatpush1.bf16.msra.mxu0 %v3232
    %4587 = vmatprep.subr.bf16.mxu0 0
    %4588 = vmatpush1.bf16.msra.mxu0 0
    %4589 = vmatprep.subr.bf16.mxu0 0
    %4590 = vmatpush1.bf16.msra.mxu0 0
    %4591 = vmatprep.subr.bf16.mxu0 0
    %4592 = vmatpush1.bf16.msra.mxu0 0
    %4593 = vmatprep.subr.bf16.mxu0 0
    %4594 = vmatpush1.bf16.msra.mxu0 0
    %4595 = vmatprep.subr.bf16.mxu0 0
    %4596 = vmatpush1.bf16.msra.mxu0 0
    %4597 = vmatprep.subr.bf16.mxu0 0
    %4598 = vmatpush1.bf16.msra.mxu0 0
    %4599 = vmatprep.subr.bf16.mxu0 0
    %4600 = vmatpush1.bf16.msra.mxu0 0
    %4601 = vmatprep.subr.bf16.mxu0 0
    %4602 = vmatpush1.bf16.msra.mxu0 0
    %4603 = vmatprep.subr.bf16.mxu0 0
    %4604 = vmatpush1.bf16.msra.mxu0 0
    %4605 = vmatprep.subr.bf16.mxu0 0
    %4606 = vmatpush1.bf16.msra.mxu0 0
    %4607 = vmatprep.mubr.bf16.mxu0 0
    %4608 = vmatmul.mubr.bf16.gmra.mrb[0].mxu0 %v4573
    %v4609 = vpop.f32.mrb[0].mxu0
    %v4610 = vadd.f32 0.0, %v4609
    %v4611 = vpop.f32.mrb[0].mxu0
    %v4612 = vadd.f32 0.0, %v4611
    %v4613 = vpop.f32.mrb[0].mxu0
    %v4614 = vpop.f32.mrb[0].mxu0
    %4615 = vdwg.mxu0
    %v4618 = vcombine.low %v4610, %v4612
    %v4620 = vadd.f32 %v2895, %v4618
    %v4621 = vxor.u32 %v4620, 2147483648
    %v4622 = vmul.f32 %v4621, 1.442695
    %v4623 = vpow.pop %v4622
    %v4624 = vadd.f32 %v4623, 1.0
    %v4625 = vrcp.pop %v4624
    %v4626 = vmul.f32 1.0, %v4625
    %v4628 = vrot.slane %v4620, 4
    %v4630 = vtanh.pop %v4628
    %4631 = vrot.lane.b32.xlu0 %v4620, 64
    %v4632 = vpop.permute.xlu0 %4631
    %v4633 = vrot.slane %v4632, 4
    %v4635 = vxor.u32 %v4633, 2147483648
    %v4636 = vmul.f32 %v4635, 1.442695
    %v4637 = vpow.pop %v4636
    %v4638 = vadd.f32 %v4637, 1.0
    %v4639 = vrcp.pop %v4638
    %v4640 = vmul.f32 1.0, %v4639
    %v4641 = vmul.f32 %v4626, %v4382
    %v4642 = vmul.f32 %v4626, %v4630
    %4644 = vrot.lane.b32.xlu0 %v4642, 64
    %v4645 = vpop.permute.xlu0 %4644
    %v4647 = vadd.f32 %v4641, %v4645
    %v4648 = vtanh.pop %v4647
    %4650 = vrot.lane.b32.xlu0 %v4648, 64
    %v4651 = vpop.permute.xlu0 %4650
    %v4653 = vmul.f32 %v4640, %v4651
    %4654 = vst.msk [vmem:[#allocation2 + $0x14] sm:$0xf] %vm3328, %v4653
    %4656 = vrot.lane.b32.xlu0 %v4477, 48
    %v4657 = vpop.permute.xlu0 %4656
    %v4659 = vsel %vm276, %v4653, %v4657
    %v4660 = vpack.c.bf16 %v4659, %v4659
    %v4662 = vsel %vm167, %v4660, 0
    %4664 = vmatprep.subr.bf16.mxu0 %v2935
    %4665 = vmatpush1.bf16.msra.mxu0 %v2934
    %4666 = vmatprep.subr.bf16.mxu0 %v2937
    %4667 = vmatpush1.bf16.msra.mxu0 %v2936
    %4668 = vmatprep.subr.bf16.mxu0 %v2939
    %4669 = vmatpush1.bf16.msra.mxu0 %v2938
    %4670 = vmatprep.subr.bf16.mxu0 %v2941
    %4671 = vmatpush1.bf16.msra.mxu0 %v2940
    %4672 = vmatprep.subr.bf16.mxu0 %v2943
    %4673 = vmatpush1.bf16.msra.mxu0 %v2942
    %4674 = vmatprep.subr.bf16.mxu0 %v2945
    %4675 = vmatpush1.bf16.msra.mxu0 %v2944
    %4676 = vmatprep.subr.bf16.mxu0 0
    %4677 = vmatpush1.bf16.msra.mxu0 0
    %4678 = vmatprep.subr.bf16.mxu0 0
    %4679 = vmatpush1.bf16.msra.mxu0 0
    %4680 = vmatprep.subr.bf16.mxu0 0
    %4681 = vmatpush1.bf16.msra.mxu0 0
    %4682 = vmatprep.subr.bf16.mxu0 0
    %4683 = vmatpush1.bf16.msra.mxu0 0
    %4684 = vmatprep.subr.bf16.mxu0 0
    %4685 = vmatpush1.bf16.msra.mxu0 0
    %4686 = vmatprep.subr.bf16.mxu0 0
    %4687 = vmatpush1.bf16.msra.mxu0 0
    %4688 = vmatprep.subr.bf16.mxu0 0
    %4689 = vmatpush1.bf16.msra.mxu0 0
    %4690 = vmatprep.subr.bf16.mxu0 0
    %4691 = vmatpush1.bf16.msra.mxu0 0
    %4692 = vmatprep.subr.bf16.mxu0 0
    %4693 = vmatpush1.bf16.msra.mxu0 0
    %4694 = vmatprep.subr.bf16.mxu0 0
    %4695 = vmatpush1.bf16.msra.mxu0 0
    %4696 = vmatprep.mubr.bf16.mxu0 0
    %4697 = vmatmul.mubr.bf16.gmra.mrb[0].mxu0 %v4662
    %v4698 = vpop.f32.mrb[0].mxu0
    %v4699 = vadd.f32 0.0, %v4698
    %v4700 = vpop.f32.mrb[0].mxu0
    %v4701 = vadd.f32 0.0, %v4700
    %v4702 = vpop.f32.mrb[0].mxu0
    %v4703 = vpop.f32.mrb[0].mxu0
    %4704 = vdwg.mxu0
    %v4707 = vcombine.low %v4699, %v4701
    %v4709 = vadd.f32 %v2891, %v4707
    %v4710 = vxor.u32 %v4709, 2147483648
    %v4711 = vmul.f32 %v4710, 1.442695
    %v4712 = vpow.pop %v4711
    %v4713 = vadd.f32 %v4712, 1.0
    %v4714 = vrcp.pop %v4713
    %v4715 = vmul.f32 1.0, %v4714
    %v4717 = vrot.slane %v4709, 4
    %v4719 = vtanh.pop %v4717
    %4720 = vrot.lane.b32.xlu0 %v4709, 64
    %v4721 = vpop.permute.xlu0 %4720
    %v4722 = vrot.slane %v4721, 4
    %v4724 = vxor.u32 %v4722, 2147483648
    %v4725 = vmul.f32 %v4724, 1.442695
    %v4726 = vpow.pop %v4725
    %v4727 = vadd.f32 %v4726, 1.0
    %v4728 = vrcp.pop %v4727
    %v4729 = vmul.f32 1.0, %v4728
    %v4730 = vmul.f32 %v4715, %v4471
    %v4731 = vmul.f32 %v4715, %v4719
    %4733 = vrot.lane.b32.xlu0 %v4731, 64
    %v4734 = vpop.permute.xlu0 %4733
    %v4736 = vadd.f32 %v4730, %v4734
    %v4737 = vtanh.pop %v4736
    %4739 = vrot.lane.b32.xlu0 %v4737, 64
    %v4740 = vpop.permute.xlu0 %4739
    %v4742 = vmul.f32 %v4729, %v4740
    %4744 = vrot.lane.b32.xlu0 %v4565, 48
    %v4745 = vpop.permute.xlu0 %4744
    %v4747 = vsel %vm276, %v4742, %v4745
    %v4748 = vpack.c.bf16 %v4747, %v4747
    %v4750 = vsel %vm167, %v4748, 0
    %4752 = vmatprep.subr.bf16.mxu0 %v3079
    %4753 = vmatpush1.bf16.msra.mxu0 %v3078
    %4754 = vmatprep.subr.bf16.mxu0 %v3081
    %4755 = vmatpush1.bf16.msra.mxu0 %v3080
    %4756 = vmatprep.subr.bf16.mxu0 %v3083
    %4757 = vmatpush1.bf16.msra.mxu0 %v3082
    %4758 = vmatprep.subr.bf16.mxu0 %v3085
    %4759 = vmatpush1.bf16.msra.mxu0 %v3084
    %4760 = vmatprep.subr.bf16.mxu0 %v3087
    %4761 = vmatpush1.bf16.msra.mxu0 %v3086
    %4762 = vmatprep.subr.bf16.mxu0 %v3089
    %4763 = vmatpush1.bf16.msra.mxu0 %v3088
    %4764 = vmatprep.subr.bf16.mxu0 0
    %4765 = vmatpush1.bf16.msra.mxu0 0
    %4766 = vmatprep.subr.bf16.mxu0 0
    %4767 = vmatpush1.bf16.msra.mxu0 0
    %4768 = vmatprep.subr.bf16.mxu0 0
    %4769 = vmatpush1.bf16.msra.mxu0 0
    %4770 = vmatprep.subr.bf16.mxu0 0
    %4771 = vmatpush1.bf16.msra.mxu0 0
    %4772 = vmatprep.subr.bf16.mxu0 0
    %4773 = vmatpush1.bf16.msra.mxu0 0
    %4774 = vmatprep.subr.bf16.mxu0 0
    %4775 = vmatpush1.bf16.msra.mxu0 0
    %4776 = vmatprep.subr.bf16.mxu0 0
    %4777 = vmatpush1.bf16.msra.mxu0 0
    %4778 = vmatprep.subr.bf16.mxu0 0
    %4779 = vmatpush1.bf16.msra.mxu0 0
    %4780 = vmatprep.subr.bf16.mxu0 0
    %4781 = vmatpush1.bf16.msra.mxu0 0
    %4782 = vmatprep.subr.bf16.mxu0 0
    %4783 = vmatpush1.bf16.msra.mxu0 0
    %4784 = vmatprep.mubr.bf16.mxu0 0
    %4785 = vmatmul.mubr.bf16.gmra.mrb[0].mxu0 %v4750
    %v4786 = vpop.f32.mrb[0].mxu0
    %v4787 = vadd.f32 0.0, %v4786
    %v4788 = vpop.f32.mrb[0].mxu0
    %v4789 = vadd.f32 0.0, %v4788
    %v4790 = vpop.f32.mrb[0].mxu0
    %v4791 = vpop.f32.mrb[0].mxu0
    %4792 = vdwg.mxu0
    %v4795 = vcombine.low %v4787, %v4789
    %v4797 = vadd.f32 %v2893, %v4795
    %v4798 = vxor.u32 %v4797, 2147483648
    %v4799 = vmul.f32 %v4798, 1.442695
    %v4800 = vpow.pop %v4799
    %v4801 = vadd.f32 %v4800, 1.0
    %v4802 = vrcp.pop %v4801
    %v4803 = vmul.f32 1.0, %v4802
    %v4805 = vrot.slane %v4797, 4
    %v4807 = vtanh.pop %v4805
    %4808 = vrot.lane.b32.xlu0 %v4797, 64
    %v4809 = vpop.permute.xlu0 %4808
    %v4810 = vrot.slane %v4809, 4
    %v4812 = vxor.u32 %v4810, 2147483648
    %v4813 = vmul.f32 %v4812, 1.442695
    %v4814 = vpow.pop %v4813
    %v4815 = vadd.f32 %v4814, 1.0
    %v4816 = vrcp.pop %v4815
    %v4817 = vmul.f32 1.0, %v4816
    %v4818 = vmul.f32 %v4803, %v4559
    %v4819 = vmul.f32 %v4803, %v4807
    %4821 = vrot.lane.b32.xlu0 %v4819, 64
    %v4822 = vpop.permute.xlu0 %4821
    %v4824 = vadd.f32 %v4818, %v4822
    %v4825 = vtanh.pop %v4824
    %4827 = vrot.lane.b32.xlu0 %v4825, 64
    %v4828 = vpop.permute.xlu0 %4827
    %v4830 = vmul.f32 %v4817, %v4828
    %4832 = vrot.lane.b32.xlu0 %v4653, 48
    %v4833 = vpop.permute.xlu0 %4832
    %v4835 = vsel %vm276, %v4830, %v4833
    %v4836 = vpack.c.bf16 %v4835, %v4835
    %v4838 = vsel %vm167, %v4836, 0
    %4840 = vmatprep.subr.bf16.mxu0 %v3223
    %4841 = vmatpush1.bf16.msra.mxu0 %v3222
    %4842 = vmatprep.subr.bf16.mxu0 %v3225
    %4843 = vmatpush1.bf16.msra.mxu0 %v3224
    %4844 = vmatprep.subr.bf16.mxu0 %v3227
    %4845 = vmatpush1.bf16.msra.mxu0 %v3226
    %4846 = vmatprep.subr.bf16.mxu0 %v3229
    %4847 = vmatpush1.bf16.msra.mxu0 %v3228
    %4848 = vmatprep.subr.bf16.mxu0 %v3231
    %4849 = vmatpush1.bf16.msra.mxu0 %v3230
    %4850 = vmatprep.subr.bf16.mxu0 %v3233
    %4851 = vmatpush1.bf16.msra.mxu0 %v3232
    %4852 = vmatprep.subr.bf16.mxu0 0
    %4853 = vmatpush1.bf16.msra.mxu0 0
    %4854 = vmatprep.subr.bf16.mxu0 0
    %4855 = vmatpush1.bf16.msra.mxu0 0
    %4856 = vmatprep.subr.bf16.mxu0 0
    %4857 = vmatpush1.bf16.msra.mxu0 0
    %4858 = vmatprep.subr.bf16.mxu0 0
    %4859 = vmatpush1.bf16.msra.mxu0 0
    %4860 = vmatprep.subr.bf16.mxu0 0
    %4861 = vmatpush1.bf16.msra.mxu0 0
    %4862 = vmatprep.subr.bf16.mxu0 0
    %4863 = vmatpush1.bf16.msra.mxu0 0
    %4864 = vmatprep.subr.bf16.mxu0 0
    %4865 = vmatpush1.bf16.msra.mxu0 0
    %4866 = vmatprep.subr.bf16.mxu0 0
    %4867 = vmatpush1.bf16.msra.mxu0 0
    %4868 = vmatprep.subr.bf16.mxu0 0
    %4869 = vmatpush1.bf16.msra.mxu0 0
    %4870 = vmatprep.subr.bf16.mxu0 0
    %4871 = vmatpush1.bf16.msra.mxu0 0
    %4872 = vmatprep.mubr.bf16.mxu0 0
    %4873 = vmatmul.mubr.bf16.gmra.mrb[0].mxu0 %v4838
    %v4874 = vpop.f32.mrb[0].mxu0
    %v4875 = vadd.f32 0.0, %v4874
    %v4876 = vpop.f32.mrb[0].mxu0
    %v4877 = vadd.f32 0.0, %v4876
    %v4878 = vpop.f32.mrb[0].mxu0
    %v4879 = vpop.f32.mrb[0].mxu0
    %4880 = vdwg.mxu0
    %v4883 = vcombine.low %v4875, %v4877
    %v4885 = vadd.f32 %v2895, %v4883
    %v4886 = vxor.u32 %v4885, 2147483648
    %v4887 = vmul.f32 %v4886, 1.442695
    %v4888 = vpow.pop %v4887
    %v4889 = vadd.f32 %v4888, 1.0
    %v4890 = vrcp.pop %v4889
    %v4891 = vmul.f32 1.0, %v4890
    %v4893 = vrot.slane %v4885, 4
    %v4895 = vtanh.pop %v4893
    %4896 = vrot.lane.b32.xlu0 %v4885, 64
    %v4897 = vpop.permute.xlu0 %4896
    %v4898 = vrot.slane %v4897, 4
    %v4900 = vxor.u32 %v4898, 2147483648
    %v4901 = vmul.f32 %v4900, 1.442695
    %v4902 = vpow.pop %v4901
    %v4903 = vadd.f32 %v4902, 1.0
    %v4904 = vrcp.pop %v4903
    %v4905 = vmul.f32 1.0, %v4904
    %v4906 = vmul.f32 %v4891, %v4647
    %v4907 = vmul.f32 %v4891, %v4895
    %4909 = vrot.lane.b32.xlu0 %v4907, 64
    %v4910 = vpop.permute.xlu0 %4909
    %v4912 = vadd.f32 %v4906, %v4910
    %v4913 = vtanh.pop %v4912
    %4915 = vrot.lane.b32.xlu0 %v4913, 64
    %v4916 = vpop.permute.xlu0 %4915
    %v4918 = vmul.f32 %v4905, %v4916
    %4919 = vst.msk [vmem:[#allocation2 + $0x18] sm:$0xf] %vm3328, %v4918
    %4921 = vrot.lane.b32.xlu0 %v4742, 48
    %v4922 = vpop.permute.xlu0 %4921
    %v4924 = vsel %vm276, %v4918, %v4922
    %v4925 = vpack.c.bf16 %v4924, %v4924
    %v4927 = vsel %vm167, %v4925, 0
    %4929 = vmatprep.subr.bf16.mxu0 %v2935
    %4930 = vmatpush1.bf16.msra.mxu0 %v2934
    %4931 = vmatprep.subr.bf16.mxu0 %v2937
    %4932 = vmatpush1.bf16.msra.mxu0 %v2936
    %4933 = vmatprep.subr.bf16.mxu0 %v2939
    %4934 = vmatpush1.bf16.msra.mxu0 %v2938
    %4935 = vmatprep.subr.bf16.mxu0 %v2941
    %4936 = vmatpush1.bf16.msra.mxu0 %v2940
    %4937 = vmatprep.subr.bf16.mxu0 %v2943
    %4938 = vmatpush1.bf16.msra.mxu0 %v2942
    %4939 = vmatprep.subr.bf16.mxu0 %v2945
    %4940 = vmatpush1.bf16.msra.mxu0 %v2944
    %4941 = vmatprep.subr.bf16.mxu0 0
    %4942 = vmatpush1.bf16.msra.mxu0 0
    %4943 = vmatprep.subr.bf16.mxu0 0
    %4944 = vmatpush1.bf16.msra.mxu0 0
    %4945 = vmatprep.subr.bf16.mxu0 0
    %4946 = vmatpush1.bf16.msra.mxu0 0
    %4947 = vmatprep.subr.bf16.mxu0 0
    %4948 = vmatpush1.bf16.msra.mxu0 0
    %4949 = vmatprep.subr.bf16.mxu0 0
    %4950 = vmatpush1.bf16.msra.mxu0 0
    %4951 = vmatprep.subr.bf16.mxu0 0
    %4952 = vmatpush1.bf16.msra.mxu0 0
    %4953 = vmatprep.subr.bf16.mxu0 0
    %4954 = vmatpush1.bf16.msra.mxu0 0
    %4955 = vmatprep.subr.bf16.mxu0 0
    %4956 = vmatpush1.bf16.msra.mxu0 0
    %4957 = vmatprep.subr.bf16.mxu0 0
    %4958 = vmatpush1.bf16.msra.mxu0 0
    %4959 = vmatprep.subr.bf16.mxu0 0
    %4960 = vmatpush1.bf16.msra.mxu0 0
    %4961 = vmatprep.mubr.bf16.mxu0 0
    %4962 = vmatmul.mubr.bf16.gmra.mrb[0].mxu0 %v4927
    %v4963 = vpop.f32.mrb[0].mxu0
    %v4964 = vadd.f32 0.0, %v4963
    %v4965 = vpop.f32.mrb[0].mxu0
    %v4966 = vadd.f32 0.0, %v4965
    %v4967 = vpop.f32.mrb[0].mxu0
    %v4968 = vpop.f32.mrb[0].mxu0
    %4969 = vdwg.mxu0
    %v4972 = vcombine.low %v4964, %v4966
    %v4974 = vadd.f32 %v2891, %v4972
    %v4975 = vxor.u32 %v4974, 2147483648
    %v4976 = vmul.f32 %v4975, 1.442695
    %v4977 = vpow.pop %v4976
    %v4978 = vadd.f32 %v4977, 1.0
    %v4979 = vrcp.pop %v4978
    %v4980 = vmul.f32 1.0, %v4979
    %v4982 = vrot.slane %v4974, 4
    %v4984 = vtanh.pop %v4982
    %4985 = vrot.lane.b32.xlu0 %v4974, 64
    %v4986 = vpop.permute.xlu0 %4985
    %v4987 = vrot.slane %v4986, 4
    %v4989 = vxor.u32 %v4987, 2147483648
    %v4990 = vmul.f32 %v4989, 1.442695
    %v4991 = vpow.pop %v4990
    %v4992 = vadd.f32 %v4991, 1.0
    %v4993 = vrcp.pop %v4992
    %v4994 = vmul.f32 1.0, %v4993
    %v4995 = vmul.f32 %v4980, %v4736
    %v4996 = vmul.f32 %v4980, %v4984
    %4998 = vrot.lane.b32.xlu0 %v4996, 64
    %v4999 = vpop.permute.xlu0 %4998
    %v5001 = vadd.f32 %v4995, %v4999
    %v5002 = vtanh.pop %v5001
    %5004 = vrot.lane.b32.xlu0 %v5002, 64
    %v5005 = vpop.permute.xlu0 %5004
    %v5007 = vmul.f32 %v4994, %v5005
    %5009 = vrot.lane.b32.xlu0 %v4830, 48
    %v5010 = vpop.permute.xlu0 %5009
    %v5012 = vsel %vm276, %v5007, %v5010
    %v5013 = vpack.c.bf16 %v5012, %v5012
    %v5015 = vsel %vm167, %v5013, 0
    %5017 = vmatprep.subr.bf16.mxu0 %v3079
    %5018 = vmatpush1.bf16.msra.mxu0 %v3078
    %5019 = vmatprep.subr.bf16.mxu0 %v3081
    %5020 = vmatpush1.bf16.msra.mxu0 %v3080
    %5021 = vmatprep.subr.bf16.mxu0 %v3083
    %5022 = vmatpush1.bf16.msra.mxu0 %v3082
    %5023 = vmatprep.subr.bf16.mxu0 %v3085
    %5024 = vmatpush1.bf16.msra.mxu0 %v3084
    %5025 = vmatprep.subr.bf16.mxu0 %v3087
    %5026 = vmatpush1.bf16.msra.mxu0 %v3086
    %5027 = vmatprep.subr.bf16.mxu0 %v3089
    %5028 = vmatpush1.bf16.msra.mxu0 %v3088
    %5029 = vmatprep.subr.bf16.mxu0 0
    %5030 = vmatpush1.bf16.msra.mxu0 0
    %5031 = vmatprep.subr.bf16.mxu0 0
    %5032 = vmatpush1.bf16.msra.mxu0 0
    %5033 = vmatprep.subr.bf16.mxu0 0
    %5034 = vmatpush1.bf16.msra.mxu0 0
    %5035 = vmatprep.subr.bf16.mxu0 0
    %5036 = vmatpush1.bf16.msra.mxu0 0
    %5037 = vmatprep.subr.bf16.mxu0 0
    %5038 = vmatpush1.bf16.msra.mxu0 0
    %5039 = vmatprep.subr.bf16.mxu0 0
    %5040 = vmatpush1.bf16.msra.mxu0 0
    %5041 = vmatprep.subr.bf16.mxu0 0
    %5042 = vmatpush1.bf16.msra.mxu0 0
    %5043 = vmatprep.subr.bf16.mxu0 0
    %5044 = vmatpush1.bf16.msra.mxu0 0
    %5045 = vmatprep.subr.bf16.mxu0 0
    %5046 = vmatpush1.bf16.msra.mxu0 0
    %5047 = vmatprep.subr.bf16.mxu0 0
    %5048 = vmatpush1.bf16.msra.mxu0 0
    %5049 = vmatprep.mubr.bf16.mxu0 0
    %5050 = vmatmul.mubr.bf16.gmra.mrb[0].mxu0 %v5015
    %v5051 = vpop.f32.mrb[0].mxu0
    %v5052 = vadd.f32 0.0, %v5051
    %v5053 = vpop.f32.mrb[0].mxu0
    %v5054 = vadd.f32 0.0, %v5053
    %v5055 = vpop.f32.mrb[0].mxu0
    %v5056 = vpop.f32.mrb[0].mxu0
    %5057 = vdwg.mxu0
    %v5060 = vcombine.low %v5052, %v5054
    %v5062 = vadd.f32 %v2893, %v5060
    %v5063 = vxor.u32 %v5062, 2147483648
    %v5064 = vmul.f32 %v5063, 1.442695
    %v5065 = vpow.pop %v5064
    %v5066 = vadd.f32 %v5065, 1.0
    %v5067 = vrcp.pop %v5066
    %v5068 = vmul.f32 1.0, %v5067
    %v5070 = vrot.slane %v5062, 4
    %v5072 = vtanh.pop %v5070
    %5073 = vrot.lane.b32.xlu0 %v5062, 64
    %v5074 = vpop.permute.xlu0 %5073
    %v5075 = vrot.slane %v5074, 4
    %v5077 = vxor.u32 %v5075, 2147483648
    %v5078 = vmul.f32 %v5077, 1.442695
    %v5079 = vpow.pop %v5078
    %v5080 = vadd.f32 %v5079, 1.0
    %v5081 = vrcp.pop %v5080
    %v5082 = vmul.f32 1.0, %v5081
    %v5083 = vmul.f32 %v5068, %v4824
    %v5084 = vmul.f32 %v5068, %v5072
    %5086 = vrot.lane.b32.xlu0 %v5084, 64
    %v5087 = vpop.permute.xlu0 %5086
    %v5089 = vadd.f32 %v5083, %v5087
    %v5090 = vtanh.pop %v5089
    %5092 = vrot.lane.b32.xlu0 %v5090, 64
    %v5093 = vpop.permute.xlu0 %5092
    %v5095 = vmul.f32 %v5082, %v5093
    %5097 = vrot.lane.b32.xlu0 %v4918, 48
    %v5098 = vpop.permute.xlu0 %5097
    %v5100 = vsel %vm276, %v5095, %v5098
    %v5101 = vpack.c.bf16 %v5100, %v5100
    %v5103 = vsel %vm167, %v5101, 0
    %5105 = vmatprep.subr.bf16.mxu0 %v3223
    %5106 = vmatpush1.bf16.msra.mxu0 %v3222
    %5107 = vmatprep.subr.bf16.mxu0 %v3225
    %5108 = vmatpush1.bf16.msra.mxu0 %v3224
    %5109 = vmatprep.subr.bf16.mxu0 %v3227
    %5110 = vmatpush1.bf16.msra.mxu0 %v3226
    %5111 = vmatprep.subr.bf16.mxu0 %v3229
    %5112 = vmatpush1.bf16.msra.mxu0 %v3228
    %5113 = vmatprep.subr.bf16.mxu0 %v3231
    %5114 = vmatpush1.bf16.msra.mxu0 %v3230
    %5115 = vmatprep.subr.bf16.mxu0 %v3233
    %5116 = vmatpush1.bf16.msra.mxu0 %v3232
    %5117 = vmatprep.subr.bf16.mxu0 0
    %5118 = vmatpush1.bf16.msra.mxu0 0
    %5119 = vmatprep.subr.bf16.mxu0 0
    %5120 = vmatpush1.bf16.msra.mxu0 0
    %5121 = vmatprep.subr.bf16.mxu0 0
    %5122 = vmatpush1.bf16.msra.mxu0 0
    %5123 = vmatprep.subr.bf16.mxu0 0
    %5124 = vmatpush1.bf16.msra.mxu0 0
    %5125 = vmatprep.subr.bf16.mxu0 0
    %5126 = vmatpush1.bf16.msra.mxu0 0
    %5127 = vmatprep.subr.bf16.mxu0 0
    %5128 = vmatpush1.bf16.msra.mxu0 0
    %5129 = vmatprep.subr.bf16.mxu0 0
    %5130 = vmatpush1.bf16.msra.mxu0 0
    %5131 = vmatprep.subr.bf16.mxu0 0
    %5132 = vmatpush1.bf16.msra.mxu0 0
    %5133 = vmatprep.subr.bf16.mxu0 0
    %5134 = vmatpush1.bf16.msra.mxu0 0
    %5135 = vmatprep.subr.bf16.mxu0 0
    %5136 = vmatpush1.bf16.msra.mxu0 0
    %5137 = vmatprep.mubr.bf16.mxu0 0
    %5138 = vmatmul.mubr.bf16.gmra.mrb[0].mxu0 %v5103
    %v5139 = vpop.f32.mrb[0].mxu0
    %v5140 = vadd.f32 0.0, %v5139
    %v5141 = vpop.f32.mrb[0].mxu0
    %v5142 = vadd.f32 0.0, %v5141
    %v5143 = vpop.f32.mrb[0].mxu0
    %v5144 = vpop.f32.mrb[0].mxu0
    %5145 = vdwg.mxu0
    %v5148 = vcombine.low %v5140, %v5142
    %v5150 = vadd.f32 %v2895, %v5148
    %v5151 = vxor.u32 %v5150, 2147483648
    %v5152 = vmul.f32 %v5151, 1.442695
    %v5153 = vpow.pop %v5152
    %v5154 = vadd.f32 %v5153, 1.0
    %v5155 = vrcp.pop %v5154
    %v5156 = vmul.f32 1.0, %v5155
    %v5158 = vrot.slane %v5150, 4
    %v5160 = vtanh.pop %v5158
    %5161 = vrot.lane.b32.xlu0 %v5150, 64
    %v5162 = vpop.permute.xlu0 %5161
    %v5163 = vrot.slane %v5162, 4
    %v5165 = vxor.u32 %v5163, 2147483648
    %v5166 = vmul.f32 %v5165, 1.442695
    %v5167 = vpow.pop %v5166
    %v5168 = vadd.f32 %v5167, 1.0
    %v5169 = vrcp.pop %v5168
    %v5170 = vmul.f32 1.0, %v5169
    %v5171 = vmul.f32 %v5156, %v4912
    %v5172 = vmul.f32 %v5156, %v5160
    %5174 = vrot.lane.b32.xlu0 %v5172, 64
    %v5175 = vpop.permute.xlu0 %5174
    %v5177 = vadd.f32 %v5171, %v5175
    %v5178 = vtanh.pop %v5177
    %5180 = vrot.lane.b32.xlu0 %v5178, 64
    %v5181 = vpop.permute.xlu0 %5180
    %v5183 = vmul.f32 %v5170, %v5181
    %5184 = vst.msk [vmem:[#allocation2 + $0x1c] sm:$0xf] %vm3328, %v5183
    %5186 = vrot.lane.b32.xlu0 %v5007, 48
    %v5187 = vpop.permute.xlu0 %5186
    %v5189 = vsel %vm276, %v5183, %v5187
    %v5190 = vpack.c.bf16 %v5189, %v5189
    %v5192 = vsel %vm167, %v5190, 0
    %5194 = vmatprep.subr.bf16.mxu0 %v2935
    %5195 = vmatpush1.bf16.msra.mxu0 %v2934
    %5196 = vmatprep.subr.bf16.mxu0 %v2937
    %5197 = vmatpush1.bf16.msra.mxu0 %v2936
    %5198 = vmatprep.subr.bf16.mxu0 %v2939
    %5199 = vmatpush1.bf16.msra.mxu0 %v2938
    %5200 = vmatprep.subr.bf16.mxu0 %v2941
    %5201 = vmatpush1.bf16.msra.mxu0 %v2940
    %5202 = vmatprep.subr.bf16.mxu0 %v2943
    %5203 = vmatpush1.bf16.msra.mxu0 %v2942
    %5204 = vmatprep.subr.bf16.mxu0 %v2945
    %5205 = vmatpush1.bf16.msra.mxu0 %v2944
    %5206 = vmatprep.subr.bf16.mxu0 0
    %5207 = vmatpush1.bf16.msra.mxu0 0
    %5208 = vmatprep.subr.bf16.mxu0 0
    %5209 = vmatpush1.bf16.msra.mxu0 0
    %5210 = vmatprep.subr.bf16.mxu0 0
    %5211 = vmatpush1.bf16.msra.mxu0 0
    %5212 = vmatprep.subr.bf16.mxu0 0
    %5213 = vmatpush1.bf16.msra.mxu0 0
    %5214 = vmatprep.subr.bf16.mxu0 0
    %5215 = vmatpush1.bf16.msra.mxu0 0
    %5216 = vmatprep.subr.bf16.mxu0 0
    %5217 = vmatpush1.bf16.msra.mxu0 0
    %5218 = vmatprep.subr.bf16.mxu0 0
    %5219 = vmatpush1.bf16.msra.mxu0 0
    %5220 = vmatprep.subr.bf16.mxu0 0
    %5221 = vmatpush1.bf16.msra.mxu0 0
    %5222 = vmatprep.subr.bf16.mxu0 0
    %5223 = vmatpush1.bf16.msra.mxu0 0
    %5224 = vmatprep.subr.bf16.mxu0 0
    %5225 = vmatpush1.bf16.msra.mxu0 0
    %5226 = vmatprep.mubr.bf16.mxu0 0
    %5227 = vmatmul.mubr.bf16.gmra.mrb[0].mxu0 %v5192
    %v5228 = vpop.f32.mrb[0].mxu0
    %v5229 = vadd.f32 0.0, %v5228
    %v5230 = vpop.f32.mrb[0].mxu0
    %v5231 = vadd.f32 0.0, %v5230
    %v5232 = vpop.f32.mrb[0].mxu0
    %v5233 = vpop.f32.mrb[0].mxu0
    %5234 = vdwg.mxu0
    %v5237 = vcombine.low %v5229, %v5231
    %v5239 = vadd.f32 %v2891, %v5237
    %v5240 = vxor.u32 %v5239, 2147483648
    %v5241 = vmul.f32 %v5240, 1.442695
    %v5242 = vpow.pop %v5241
    %v5243 = vadd.f32 %v5242, 1.0
    %v5244 = vrcp.pop %v5243
    %v5245 = vmul.f32 1.0, %v5244
    %v5247 = vrot.slane %v5239, 4
    %v5249 = vtanh.pop %v5247
    %5250 = vrot.lane.b32.xlu0 %v5239, 64
    %v5251 = vpop.permute.xlu0 %5250
    %v5252 = vrot.slane %v5251, 4
    %v5254 = vxor.u32 %v5252, 2147483648
    %v5255 = vmul.f32 %v5254, 1.442695
    %v5256 = vpow.pop %v5255
    %v5257 = vadd.f32 %v5256, 1.0
    %v5258 = vrcp.pop %v5257
    %v5259 = vmul.f32 1.0, %v5258
    %v5260 = vmul.f32 %v5245, %v5001
    %v5261 = vmul.f32 %v5245, %v5249
    %5263 = vrot.lane.b32.xlu0 %v5261, 64
    %v5264 = vpop.permute.xlu0 %5263
    %v5266 = vadd.f32 %v5260, %v5264
    %v5267 = vtanh.pop %v5266
    %5269 = vrot.lane.b32.xlu0 %v5267, 64
    %v5270 = vpop.permute.xlu0 %5269
    %v5272 = vmul.f32 %v5259, %v5270
    %5274 = vrot.lane.b32.xlu0 %v5095, 48
    %v5275 = vpop.permute.xlu0 %5274
    %v5277 = vsel %vm276, %v5272, %v5275
    %v5278 = vpack.c.bf16 %v5277, %v5277
    %v5280 = vsel %vm167, %v5278, 0
    %5282 = vmatprep.subr.bf16.mxu0 %v3079
    %5283 = vmatpush1.bf16.msra.mxu0 %v3078
    %5284 = vmatprep.subr.bf16.mxu0 %v3081
    %5285 = vmatpush1.bf16.msra.mxu0 %v3080
    %5286 = vmatprep.subr.bf16.mxu0 %v3083
    %5287 = vmatpush1.bf16.msra.mxu0 %v3082
    %5288 = vmatprep.subr.bf16.mxu0 %v3085
    %5289 = vmatpush1.bf16.msra.mxu0 %v3084
    %5290 = vmatprep.subr.bf16.mxu0 %v3087
    %5291 = vmatpush1.bf16.msra.mxu0 %v3086
    %5292 = vmatprep.subr.bf16.mxu0 %v3089
    %5293 = vmatpush1.bf16.msra.mxu0 %v3088
    %5294 = vmatprep.subr.bf16.mxu0 0
    %5295 = vmatpush1.bf16.msra.mxu0 0
    %5296 = vmatprep.subr.bf16.mxu0 0
    %5297 = vmatpush1.bf16.msra.mxu0 0
    %5298 = vmatprep.subr.bf16.mxu0 0
    %5299 = vmatpush1.bf16.msra.mxu0 0
    %5300 = vmatprep.subr.bf16.mxu0 0
    %5301 = vmatpush1.bf16.msra.mxu0 0
    %5302 = vmatprep.subr.bf16.mxu0 0
    %5303 = vmatpush1.bf16.msra.mxu0 0
    %5304 = vmatprep.subr.bf16.mxu0 0
    %5305 = vmatpush1.bf16.msra.mxu0 0
    %5306 = vmatprep.subr.bf16.mxu0 0
    %5307 = vmatpush1.bf16.msra.mxu0 0
    %5308 = vmatprep.subr.bf16.mxu0 0
    %5309 = vmatpush1.bf16.msra.mxu0 0
    %5310 = vmatprep.subr.bf16.mxu0 0
    %5311 = vmatpush1.bf16.msra.mxu0 0
    %5312 = vmatprep.subr.bf16.mxu0 0
    %5313 = vmatpush1.bf16.msra.mxu0 0
    %5314 = vmatprep.mubr.bf16.mxu0 0
    %5315 = vmatmul.mubr.bf16.gmra.mrb[0].mxu0 %v5280
    %v5316 = vpop.f32.mrb[0].mxu0
    %v5317 = vadd.f32 0.0, %v5316
    %v5318 = vpop.f32.mrb[0].mxu0
    %v5319 = vadd.f32 0.0, %v5318
    %v5320 = vpop.f32.mrb[0].mxu0
    %v5321 = vpop.f32.mrb[0].mxu0
    %5322 = vdwg.mxu0
    %v5325 = vcombine.low %v5317, %v5319
    %v5327 = vadd.f32 %v2893, %v5325
    %v5328 = vxor.u32 %v5327, 2147483648
    %v5329 = vmul.f32 %v5328, 1.442695
    %v5330 = vpow.pop %v5329
    %v5331 = vadd.f32 %v5330, 1.0
    %v5332 = vrcp.pop %v5331
    %v5333 = vmul.f32 1.0, %v5332
    %v5335 = vrot.slane %v5327, 4
    %v5337 = vtanh.pop %v5335
    %5338 = vrot.lane.b32.xlu0 %v5327, 64
    %v5339 = vpop.permute.xlu0 %5338
    %v5340 = vrot.slane %v5339, 4
    %v5342 = vxor.u32 %v5340, 2147483648
    %v5343 = vmul.f32 %v5342, 1.442695
    %v5344 = vpow.pop %v5343
    %v5345 = vadd.f32 %v5344, 1.0
    %v5346 = vrcp.pop %v5345
    %v5347 = vmul.f32 1.0, %v5346
    %v5348 = vmul.f32 %v5333, %v5089
    %v5349 = vmul.f32 %v5333, %v5337
    %5351 = vrot.lane.b32.xlu0 %v5349, 64
    %v5352 = vpop.permute.xlu0 %5351
    %v5354 = vadd.f32 %v5348, %v5352
    %v5355 = vtanh.pop %v5354
    %5357 = vrot.lane.b32.xlu0 %v5355, 64
    %v5358 = vpop.permute.xlu0 %5357
    %v5360 = vmul.f32 %v5347, %v5358
    %5362 = vrot.lane.b32.xlu0 %v5183, 48
    %v5363 = vpop.permute.xlu0 %5362
    %v5365 = vsel %vm276, %v5360, %v5363
    %v5366 = vpack.c.bf16 %v5365, %v5365
    %v5368 = vsel %vm167, %v5366, 0
    %5370 = vmatprep.subr.bf16.mxu0 %v3223
    %5371 = vmatpush1.bf16.msra.mxu0 %v3222
    %5372 = vmatprep.subr.bf16.mxu0 %v3225
    %5373 = vmatpush1.bf16.msra.mxu0 %v3224
    %5374 = vmatprep.subr.bf16.mxu0 %v3227
    %5375 = vmatpush1.bf16.msra.mxu0 %v3226
    %5376 = vmatprep.subr.bf16.mxu0 %v3229
    %5377 = vmatpush1.bf16.msra.mxu0 %v3228
    %5378 = vmatprep.subr.bf16.mxu0 %v3231
    %5379 = vmatpush1.bf16.msra.mxu0 %v3230
    %5380 = vmatprep.subr.bf16.mxu0 %v3233
    %5381 = vmatpush1.bf16.msra.mxu0 %v3232
    %5382 = vmatprep.subr.bf16.mxu0 0
    %5383 = vmatpush1.bf16.msra.mxu0 0
    %5384 = vmatprep.subr.bf16.mxu0 0
    %5385 = vmatpush1.bf16.msra.mxu0 0
    %5386 = vmatprep.subr.bf16.mxu0 0
    %5387 = vmatpush1.bf16.msra.mxu0 0
    %5388 = vmatprep.subr.bf16.mxu0 0
    %5389 = vmatpush1.bf16.msra.mxu0 0
    %5390 = vmatprep.subr.bf16.mxu0 0
    %5391 = vmatpush1.bf16.msra.mxu0 0
    %5392 = vmatprep.subr.bf16.mxu0 0
    %5393 = vmatpush1.bf16.msra.mxu0 0
    %5394 = vmatprep.subr.bf16.mxu0 0
    %5395 = vmatpush1.bf16.msra.mxu0 0
    %5396 = vmatprep.subr.bf16.mxu0 0
    %5397 = vmatpush1.bf16.msra.mxu0 0
    %5398 = vmatprep.subr.bf16.mxu0 0
    %5399 = vmatpush1.bf16.msra.mxu0 0
    %5400 = vmatprep.subr.bf16.mxu0 0
    %5401 = vmatpush1.bf16.msra.mxu0 0
    %5402 = vmatprep.mubr.bf16.mxu0 0
    %5403 = vmatmul.mubr.bf16.gmra.mrb[0].mxu0 %v5368
    %v5404 = vpop.f32.mrb[0].mxu0
    %v5405 = vadd.f32 0.0, %v5404
    %v5406 = vpop.f32.mrb[0].mxu0
    %v5407 = vadd.f32 0.0, %v5406
    %v5408 = vpop.f32.mrb[0].mxu0
    %v5409 = vpop.f32.mrb[0].mxu0
    %5410 = vdwg.mxu0
    %v5413 = vcombine.low %v5405, %v5407
    %v5415 = vadd.f32 %v2895, %v5413
    %v5416 = vxor.u32 %v5415, 2147483648
    %v5417 = vmul.f32 %v5416, 1.442695
    %v5418 = vpow.pop %v5417
    %v5419 = vadd.f32 %v5418, 1.0
    %v5420 = vrcp.pop %v5419
    %v5421 = vmul.f32 1.0, %v5420
    %v5423 = vrot.slane %v5415, 4
    %v5425 = vtanh.pop %v5423
    %5426 = vrot.lane.b32.xlu0 %v5415, 64
    %v5427 = vpop.permute.xlu0 %5426
    %v5428 = vrot.slane %v5427, 4
    %v5430 = vxor.u32 %v5428, 2147483648
    %v5431 = vmul.f32 %v5430, 1.442695
    %v5432 = vpow.pop %v5431
    %v5433 = vadd.f32 %v5432, 1.0
    %v5434 = vrcp.pop %v5433
    %v5435 = vmul.f32 1.0, %v5434
    %v5436 = vmul.f32 %v5421, %v5177
    %v5437 = vmul.f32 %v5421, %v5425
    %5439 = vrot.lane.b32.xlu0 %v5437, 64
    %v5440 = vpop.permute.xlu0 %5439
    %v5442 = vadd.f32 %v5436, %v5440
    %v5443 = vtanh.pop %v5442
    %5445 = vrot.lane.b32.xlu0 %v5443, 64
    %v5446 = vpop.permute.xlu0 %5445
    %v5448 = vmul.f32 %v5435, %v5446
    %5449 = vst.msk [vmem:[#allocation2 + $0x20] sm:$0xf] %vm3328, %v5448
    %5451 = vrot.lane.b32.xlu0 %v5272, 48
    %v5452 = vpop.permute.xlu0 %5451
    %v5454 = vsel %vm276, %v5448, %v5452
    %v5455 = vpack.c.bf16 %v5454, %v5454
    %v5457 = vsel %vm167, %v5455, 0
    %5459 = vmatprep.subr.bf16.mxu0 %v2935
    %5460 = vmatpush1.bf16.msra.mxu0 %v2934
    %5461 = vmatprep.subr.bf16.mxu0 %v2937
    %5462 = vmatpush1.bf16.msra.mxu0 %v2936
    %5463 = vmatprep.subr.bf16.mxu0 %v2939
    %5464 = vmatpush1.bf16.msra.mxu0 %v2938
    %5465 = vmatprep.subr.bf16.mxu0 %v2941
    %5466 = vmatpush1.bf16.msra.mxu0 %v2940
    %5467 = vmatprep.subr.bf16.mxu0 %v2943
    %5468 = vmatpush1.bf16.msra.mxu0 %v2942
    %5469 = vmatprep.subr.bf16.mxu0 %v2945
    %5470 = vmatpush1.bf16.msra.mxu0 %v2944
    %5471 = vmatprep.subr.bf16.mxu0 0
    %5472 = vmatpush1.bf16.msra.mxu0 0
    %5473 = vmatprep.subr.bf16.mxu0 0
    %5474 = vmatpush1.bf16.msra.mxu0 0
    %5475 = vmatprep.subr.bf16.mxu0 0
    %5476 = vmatpush1.bf16.msra.mxu0 0
    %5477 = vmatprep.subr.bf16.mxu0 0
    %5478 = vmatpush1.bf16.msra.mxu0 0
    %5479 = vmatprep.subr.bf16.mxu0 0
    %5480 = vmatpush1.bf16.msra.mxu0 0
    %5481 = vmatprep.subr.bf16.mxu0 0
    %5482 = vmatpush1.bf16.msra.mxu0 0
    %5483 = vmatprep.subr.bf16.mxu0 0
    %5484 = vmatpush1.bf16.msra.mxu0 0
    %5485 = vmatprep.subr.bf16.mxu0 0
    %5486 = vmatpush1.bf16.msra.mxu0 0
    %5487 = vmatprep.subr.bf16.mxu0 0
    %5488 = vmatpush1.bf16.msra.mxu0 0
    %5489 = vmatprep.subr.bf16.mxu0 0
    %5490 = vmatpush1.bf16.msra.mxu0 0
    %5491 = vmatprep.mubr.bf16.mxu0 0
    %5492 = vmatmul.mubr.bf16.gmra.mrb[0].mxu0 %v5457
    %v5493 = vpop.f32.mrb[0].mxu0
    %v5494 = vadd.f32 0.0, %v5493
    %v5495 = vpop.f32.mrb[0].mxu0
    %v5496 = vadd.f32 0.0, %v5495
    %v5497 = vpop.f32.mrb[0].mxu0
    %v5498 = vpop.f32.mrb[0].mxu0
    %5499 = vdwg.mxu0
    %v5502 = vcombine.low %v5494, %v5496
    %v5504 = vadd.f32 %v2891, %v5502
    %v5505 = vxor.u32 %v5504, 2147483648
    %v5506 = vmul.f32 %v5505, 1.442695
    %v5507 = vpow.pop %v5506
    %v5508 = vadd.f32 %v5507, 1.0
    %v5509 = vrcp.pop %v5508
    %v5510 = vmul.f32 1.0, %v5509
    %v5512 = vrot.slane %v5504, 4
    %v5514 = vtanh.pop %v5512
    %5515 = vrot.lane.b32.xlu0 %v5504, 64
    %v5516 = vpop.permute.xlu0 %5515
    %v5517 = vrot.slane %v5516, 4
    %v5519 = vxor.u32 %v5517, 2147483648
    %v5520 = vmul.f32 %v5519, 1.442695
    %v5521 = vpow.pop %v5520
    %v5522 = vadd.f32 %v5521, 1.0
    %v5523 = vrcp.pop %v5522
    %v5524 = vmul.f32 1.0, %v5523
    %v5525 = vmul.f32 %v5510, %v5266
    %v5526 = vmul.f32 %v5510, %v5514
    %5528 = vrot.lane.b32.xlu0 %v5526, 64
    %v5529 = vpop.permute.xlu0 %5528
    %v5531 = vadd.f32 %v5525, %v5529
    %v5532 = vtanh.pop %v5531
    %5534 = vrot.lane.b32.xlu0 %v5532, 64
    %v5535 = vpop.permute.xlu0 %5534
    %v5537 = vmul.f32 %v5524, %v5535
    %5539 = vrot.lane.b32.xlu0 %v5360, 48
    %v5540 = vpop.permute.xlu0 %5539
    %v5542 = vsel %vm276, %v5537, %v5540
    %v5543 = vpack.c.bf16 %v5542, %v5542
    %v5545 = vsel %vm167, %v5543, 0
    %5547 = vmatprep.subr.bf16.mxu0 %v3079
    %5548 = vmatpush1.bf16.msra.mxu0 %v3078
    %5549 = vmatprep.subr.bf16.mxu0 %v3081
    %5550 = vmatpush1.bf16.msra.mxu0 %v3080
    %5551 = vmatprep.subr.bf16.mxu0 %v3083
    %5552 = vmatpush1.bf16.msra.mxu0 %v3082
    %5553 = vmatprep.subr.bf16.mxu0 %v3085
    %5554 = vmatpush1.bf16.msra.mxu0 %v3084
    %5555 = vmatprep.subr.bf16.mxu0 %v3087
    %5556 = vmatpush1.bf16.msra.mxu0 %v3086
    %5557 = vmatprep.subr.bf16.mxu0 %v3089
    %5558 = vmatpush1.bf16.msra.mxu0 %v3088
    %5559 = vmatprep.subr.bf16.mxu0 0
    %5560 = vmatpush1.bf16.msra.mxu0 0
    %5561 = vmatprep.subr.bf16.mxu0 0
    %5562 = vmatpush1.bf16.msra.mxu0 0
    %5563 = vmatprep.subr.bf16.mxu0 0
    %5564 = vmatpush1.bf16.msra.mxu0 0
    %5565 = vmatprep.subr.bf16.mxu0 0
    %5566 = vmatpush1.bf16.msra.mxu0 0
    %5567 = vmatprep.subr.bf16.mxu0 0
    %5568 = vmatpush1.bf16.msra.mxu0 0
    %5569 = vmatprep.subr.bf16.mxu0 0
    %5570 = vmatpush1.bf16.msra.mxu0 0
    %5571 = vmatprep.subr.bf16.mxu0 0
    %5572 = vmatpush1.bf16.msra.mxu0 0
    %5573 = vmatprep.subr.bf16.mxu0 0
    %5574 = vmatpush1.bf16.msra.mxu0 0
    %5575 = vmatprep.subr.bf16.mxu0 0
    %5576 = vmatpush1.bf16.msra.mxu0 0
    %5577 = vmatprep.subr.bf16.mxu0 0
    %5578 = vmatpush1.bf16.msra.mxu0 0
    %5579 = vmatprep.mubr.bf16.mxu0 0
    %5580 = vmatmul.mubr.bf16.gmra.mrb[0].mxu0 %v5545
    %v5581 = vpop.f32.mrb[0].mxu0
    %v5582 = vadd.f32 0.0, %v5581
    %v5583 = vpop.f32.mrb[0].mxu0
    %v5584 = vadd.f32 0.0, %v5583
    %v5585 = vpop.f32.mrb[0].mxu0
    %v5586 = vpop.f32.mrb[0].mxu0
    %5587 = vdwg.mxu0
    %v5590 = vcombine.low %v5582, %v5584
    %v5592 = vadd.f32 %v2893, %v5590
    %v5593 = vxor.u32 %v5592, 2147483648
    %v5594 = vmul.f32 %v5593, 1.442695
    %v5595 = vpow.pop %v5594
    %v5596 = vadd.f32 %v5595, 1.0
    %v5597 = vrcp.pop %v5596
    %v5598 = vmul.f32 1.0, %v5597
    %v5600 = vrot.slane %v5592, 4
    %v5602 = vtanh.pop %v5600
    %5603 = vrot.lane.b32.xlu0 %v5592, 64
    %v5604 = vpop.permute.xlu0 %5603
    %v5605 = vrot.slane %v5604, 4
    %v5607 = vxor.u32 %v5605, 2147483648
    %v5608 = vmul.f32 %v5607, 1.442695
    %v5609 = vpow.pop %v5608
    %v5610 = vadd.f32 %v5609, 1.0
    %v5611 = vrcp.pop %v5610
    %v5612 = vmul.f32 1.0, %v5611
    %v5613 = vmul.f32 %v5598, %v5354
    %v5614 = vmul.f32 %v5598, %v5602
    %5616 = vrot.lane.b32.xlu0 %v5614, 64
    %v5617 = vpop.permute.xlu0 %5616
    %v5619 = vadd.f32 %v5613, %v5617
    %v5620 = vtanh.pop %v5619
    %5622 = vrot.lane.b32.xlu0 %v5620, 64
    %v5623 = vpop.permute.xlu0 %5622
    %v5625 = vmul.f32 %v5612, %v5623
    %5627 = vrot.lane.b32.xlu0 %v5448, 48
    %v5628 = vpop.permute.xlu0 %5627
    %v5630 = vsel %vm276, %v5625, %v5628
    %v5631 = vpack.c.bf16 %v5630, %v5630
    %v5633 = vsel %vm167, %v5631, 0
    %5635 = vmatprep.subr.bf16.mxu0 %v3223
    %5636 = vmatpush1.bf16.msra.mxu0 %v3222
    %5637 = vmatprep.subr.bf16.mxu0 %v3225
    %5638 = vmatpush1.bf16.msra.mxu0 %v3224
    %5639 = vmatprep.subr.bf16.mxu0 %v3227
    %5640 = vmatpush1.bf16.msra.mxu0 %v3226
    %5641 = vmatprep.subr.bf16.mxu0 %v3229
    %5642 = vmatpush1.bf16.msra.mxu0 %v3228
    %5643 = vmatprep.subr.bf16.mxu0 %v3231
    %5644 = vmatpush1.bf16.msra.mxu0 %v3230
    %5645 = vmatprep.subr.bf16.mxu0 %v3233
    %5646 = vmatpush1.bf16.msra.mxu0 %v3232
    %5647 = vmatprep.subr.bf16.mxu0 0
    %5648 = vmatpush1.bf16.msra.mxu0 0
    %5649 = vmatprep.subr.bf16.mxu0 0
    %5650 = vmatpush1.bf16.msra.mxu0 0
    %5651 = vmatprep.subr.bf16.mxu0 0
    %5652 = vmatpush1.bf16.msra.mxu0 0
    %5653 = vmatprep.subr.bf16.mxu0 0
    %5654 = vmatpush1.bf16.msra.mxu0 0
    %5655 = vmatprep.subr.bf16.mxu0 0
    %5656 = vmatpush1.bf16.msra.mxu0 0
    %5657 = vmatprep.subr.bf16.mxu0 0
    %5658 = vmatpush1.bf16.msra.mxu0 0
    %5659 = vmatprep.subr.bf16.mxu0 0
    %5660 = vmatpush1.bf16.msra.mxu0 0
    %5661 = vmatprep.subr.bf16.mxu0 0
    %5662 = vmatpush1.bf16.msra.mxu0 0
    %5663 = vmatprep.subr.bf16.mxu0 0
    %5664 = vmatpush1.bf16.msra.mxu0 0
    %5665 = vmatprep.subr.bf16.mxu0 0
    %5666 = vmatpush1.bf16.msra.mxu0 0
    %5667 = vmatprep.mubr.bf16.mxu0 0
    %5668 = vmatmul.mubr.bf16.gmra.mrb[0].mxu0 %v5633
    %v5669 = vpop.f32.mrb[0].mxu0
    %v5670 = vadd.f32 0.0, %v5669
    %v5671 = vpop.f32.mrb[0].mxu0
    %v5672 = vadd.f32 0.0, %v5671
    %v5673 = vpop.f32.mrb[0].mxu0
    %v5674 = vpop.f32.mrb[0].mxu0
    %5675 = vdwg.mxu0
    %v5678 = vcombine.low %v5670, %v5672
    %v5680 = vadd.f32 %v2895, %v5678
    %v5681 = vxor.u32 %v5680, 2147483648
    %v5682 = vmul.f32 %v5681, 1.442695
    %v5683 = vpow.pop %v5682
    %v5684 = vadd.f32 %v5683, 1.0
    %v5685 = vrcp.pop %v5684
    %v5686 = vmul.f32 1.0, %v5685
    %v5688 = vrot.slane %v5680, 4
    %v5690 = vtanh.pop %v5688
    %5691 = vrot.lane.b32.xlu0 %v5680, 64
    %v5692 = vpop.permute.xlu0 %5691
    %v5693 = vrot.slane %v5692, 4
    %v5695 = vxor.u32 %v5693, 2147483648
    %v5696 = vmul.f32 %v5695, 1.442695
    %v5697 = vpow.pop %v5696
    %v5698 = vadd.f32 %v5697, 1.0
    %v5699 = vrcp.pop %v5698
    %v5700 = vmul.f32 1.0, %v5699
    %v5701 = vmul.f32 %v5686, %v5442
    %v5702 = vmul.f32 %v5686, %v5690
    %5704 = vrot.lane.b32.xlu0 %v5702, 64
    %v5705 = vpop.permute.xlu0 %5704
    %v5707 = vadd.f32 %v5701, %v5705
    %v5708 = vtanh.pop %v5707
    %5710 = vrot.lane.b32.xlu0 %v5708, 64
    %v5711 = vpop.permute.xlu0 %5710
    %v5713 = vmul.f32 %v5700, %v5711
    %5714 = vst.msk [vmem:[#allocation2 + $0x24] sm:$0xf] %vm3328, %v5713
    %5716 = vrot.lane.b32.xlu0 %v5537, 48
    %v5717 = vpop.permute.xlu0 %5716
    %v5719 = vsel %vm276, %v5713, %v5717
    %v5720 = vpack.c.bf16 %v5719, %v5719
    %v5722 = vsel %vm167, %v5720, 0
    %5724 = vmatprep.subr.bf16.mxu0 %v2935
    %5725 = vmatpush1.bf16.msra.mxu0 %v2934
    %5726 = vmatprep.subr.bf16.mxu0 %v2937
    %5727 = vmatpush1.bf16.msra.mxu0 %v2936
    %5728 = vmatprep.subr.bf16.mxu0 %v2939
    %5729 = vmatpush1.bf16.msra.mxu0 %v2938
    %5730 = vmatprep.subr.bf16.mxu0 %v2941
    %5731 = vmatpush1.bf16.msra.mxu0 %v2940
    %5732 = vmatprep.subr.bf16.mxu0 %v2943
    %5733 = vmatpush1.bf16.msra.mxu0 %v2942
    %5734 = vmatprep.subr.bf16.mxu0 %v2945
    %5735 = vmatpush1.bf16.msra.mxu0 %v2944
    %5736 = vmatprep.subr.bf16.mxu0 0
    %5737 = vmatpush1.bf16.msra.mxu0 0
    %5738 = vmatprep.subr.bf16.mxu0 0
    %5739 = vmatpush1.bf16.msra.mxu0 0
    %5740 = vmatprep.subr.bf16.mxu0 0
    %5741 = vmatpush1.bf16.msra.mxu0 0
    %5742 = vmatprep.subr.bf16.mxu0 0
    %5743 = vmatpush1.bf16.msra.mxu0 0
    %5744 = vmatprep.subr.bf16.mxu0 0
    %5745 = vmatpush1.bf16.msra.mxu0 0
    %5746 = vmatprep.subr.bf16.mxu0 0
    %5747 = vmatpush1.bf16.msra.mxu0 0
    %5748 = vmatprep.subr.bf16.mxu0 0
    %5749 = vmatpush1.bf16.msra.mxu0 0
    %5750 = vmatprep.subr.bf16.mxu0 0
    %5751 = vmatpush1.bf16.msra.mxu0 0
    %5752 = vmatprep.subr.bf16.mxu0 0
    %5753 = vmatpush1.bf16.msra.mxu0 0
    %5754 = vmatprep.subr.bf16.mxu0 0
    %5755 = vmatpush1.bf16.msra.mxu0 0
    %5756 = vmatprep.mubr.bf16.mxu0 0
    %5757 = vmatmul.mubr.bf16.gmra.mrb[0].mxu0 %v5722
    %v5758 = vpop.f32.mrb[0].mxu0
    %v5759 = vadd.f32 0.0, %v5758
    %v5760 = vpop.f32.mrb[0].mxu0
    %v5761 = vadd.f32 0.0, %v5760
    %v5762 = vpop.f32.mrb[0].mxu0
    %v5763 = vpop.f32.mrb[0].mxu0
    %5764 = vdwg.mxu0
    %v5767 = vcombine.low %v5759, %v5761
    %v5769 = vadd.f32 %v2891, %v5767
    %v5770 = vxor.u32 %v5769, 2147483648
    %v5771 = vmul.f32 %v5770, 1.442695
    %v5772 = vpow.pop %v5771
    %v5773 = vadd.f32 %v5772, 1.0
    %v5774 = vrcp.pop %v5773
    %v5775 = vmul.f32 1.0, %v5774
    %v5777 = vrot.slane %v5769, 4
    %v5779 = vtanh.pop %v5777
    %5780 = vrot.lane.b32.xlu0 %v5769, 64
    %v5781 = vpop.permute.xlu0 %5780
    %v5782 = vrot.slane %v5781, 4
    %v5784 = vxor.u32 %v5782, 2147483648
    %v5785 = vmul.f32 %v5784, 1.442695
    %v5786 = vpow.pop %v5785
    %v5787 = vadd.f32 %v5786, 1.0
    %v5788 = vrcp.pop %v5787
    %v5789 = vmul.f32 1.0, %v5788
    %v5790 = vmul.f32 %v5775, %v5531
    %v5791 = vmul.f32 %v5775, %v5779
    %5793 = vrot.lane.b32.xlu0 %v5791, 64
    %v5794 = vpop.permute.xlu0 %5793
    %v5796 = vadd.f32 %v5790, %v5794
    %v5797 = vtanh.pop %v5796
    %5799 = vrot.lane.b32.xlu0 %v5797, 64
    %v5800 = vpop.permute.xlu0 %5799
    %v5802 = vmul.f32 %v5789, %v5800
    %5804 = vrot.lane.b32.xlu0 %v5625, 48
    %v5805 = vpop.permute.xlu0 %5804
    %v5807 = vsel %vm276, %v5802, %v5805
    %v5808 = vpack.c.bf16 %v5807, %v5807
    %v5810 = vsel %vm167, %v5808, 0
    %5812 = vmatprep.subr.bf16.mxu0 %v3079
    %5813 = vmatpush1.bf16.msra.mxu0 %v3078
    %5814 = vmatprep.subr.bf16.mxu0 %v3081
    %5815 = vmatpush1.bf16.msra.mxu0 %v3080
    %5816 = vmatprep.subr.bf16.mxu0 %v3083
    %5817 = vmatpush1.bf16.msra.mxu0 %v3082
    %5818 = vmatprep.subr.bf16.mxu0 %v3085
    %5819 = vmatpush1.bf16.msra.mxu0 %v3084
    %5820 = vmatprep.subr.bf16.mxu0 %v3087
    %5821 = vmatpush1.bf16.msra.mxu0 %v3086
    %5822 = vmatprep.subr.bf16.mxu0 %v3089
    %5823 = vmatpush1.bf16.msra.mxu0 %v3088
    %5824 = vmatprep.subr.bf16.mxu0 0
    %5825 = vmatpush1.bf16.msra.mxu0 0
    %5826 = vmatprep.subr.bf16.mxu0 0
    %5827 = vmatpush1.bf16.msra.mxu0 0
    %5828 = vmatprep.subr.bf16.mxu0 0
    %5829 = vmatpush1.bf16.msra.mxu0 0
    %5830 = vmatprep.subr.bf16.mxu0 0
    %5831 = vmatpush1.bf16.msra.mxu0 0
    %5832 = vmatprep.subr.bf16.mxu0 0
    %5833 = vmatpush1.bf16.msra.mxu0 0
    %5834 = vmatprep.subr.bf16.mxu0 0
    %5835 = vmatpush1.bf16.msra.mxu0 0
    %5836 = vmatprep.subr.bf16.mxu0 0
    %5837 = vmatpush1.bf16.msra.mxu0 0
    %5838 = vmatprep.subr.bf16.mxu0 0
    %5839 = vmatpush1.bf16.msra.mxu0 0
    %5840 = vmatprep.subr.bf16.mxu0 0
    %5841 = vmatpush1.bf16.msra.mxu0 0
    %5842 = vmatprep.subr.bf16.mxu0 0
    %5843 = vmatpush1.bf16.msra.mxu0 0
    %5844 = vmatprep.mubr.bf16.mxu0 0
    %5845 = vmatmul.mubr.bf16.gmra.mrb[0].mxu0 %v5810
    %v5846 = vpop.f32.mrb[0].mxu0
    %v5847 = vadd.f32 0.0, %v5846
    %v5848 = vpop.f32.mrb[0].mxu0
    %v5849 = vadd.f32 0.0, %v5848
    %v5850 = vpop.f32.mrb[0].mxu0
    %v5851 = vpop.f32.mrb[0].mxu0
    %5852 = vdwg.mxu0
    %v5855 = vcombine.low %v5847, %v5849
    %v5857 = vadd.f32 %v2893, %v5855
    %v5858 = vxor.u32 %v5857, 2147483648
    %v5859 = vmul.f32 %v5858, 1.442695
    %v5860 = vpow.pop %v5859
    %v5861 = vadd.f32 %v5860, 1.0
    %v5862 = vrcp.pop %v5861
    %v5863 = vmul.f32 1.0, %v5862
    %v5865 = vrot.slane %v5857, 4
    %v5867 = vtanh.pop %v5865
    %5868 = vrot.lane.b32.xlu0 %v5857, 64
    %v5869 = vpop.permute.xlu0 %5868
    %v5870 = vrot.slane %v5869, 4
    %v5872 = vxor.u32 %v5870, 2147483648
    %v5873 = vmul.f32 %v5872, 1.442695
    %v5874 = vpow.pop %v5873
    %v5875 = vadd.f32 %v5874, 1.0
    %v5876 = vrcp.pop %v5875
    %v5877 = vmul.f32 1.0, %v5876
    %v5878 = vmul.f32 %v5863, %v5619
    %v5879 = vmul.f32 %v5863, %v5867
    %5881 = vrot.lane.b32.xlu0 %v5879, 64
    %v5882 = vpop.permute.xlu0 %5881
    %v5884 = vadd.f32 %v5878, %v5882
    %v5885 = vtanh.pop %v5884
    %5887 = vrot.lane.b32.xlu0 %v5885, 64
    %v5888 = vpop.permute.xlu0 %5887
    %v5890 = vmul.f32 %v5877, %v5888
    %5892 = vrot.lane.b32.xlu0 %v5713, 48
    %v5893 = vpop.permute.xlu0 %5892
    %v5895 = vsel %vm276, %v5890, %v5893
    %v5896 = vpack.c.bf16 %v5895, %v5895
    %v5898 = vsel %vm167, %v5896, 0
    %5900 = vmatprep.subr.bf16.mxu0 %v3223
    %5901 = vmatpush1.bf16.msra.mxu0 %v3222
    %5902 = vmatprep.subr.bf16.mxu0 %v3225
    %5903 = vmatpush1.bf16.msra.mxu0 %v3224
    %5904 = vmatprep.subr.bf16.mxu0 %v3227
    %5905 = vmatpush1.bf16.msra.mxu0 %v3226
    %5906 = vmatprep.subr.bf16.mxu0 %v3229
    %5907 = vmatpush1.bf16.msra.mxu0 %v3228
    %5908 = vmatprep.subr.bf16.mxu0 %v3231
    %5909 = vmatpush1.bf16.msra.mxu0 %v3230
    %5910 = vmatprep.subr.bf16.mxu0 %v3233
    %5911 = vmatpush1.bf16.msra.mxu0 %v3232
    %5912 = vmatprep.subr.bf16.mxu0 0
    %5913 = vmatpush1.bf16.msra.mxu0 0
    %5914 = vmatprep.subr.bf16.mxu0 0
    %5915 = vmatpush1.bf16.msra.mxu0 0
    %5916 = vmatprep.subr.bf16.mxu0 0
    %5917 = vmatpush1.bf16.msra.mxu0 0
    %5918 = vmatprep.subr.bf16.mxu0 0
    %5919 = vmatpush1.bf16.msra.mxu0 0
    %5920 = vmatprep.subr.bf16.mxu0 0
    %5921 = vmatpush1.bf16.msra.mxu0 0
    %5922 = vmatprep.subr.bf16.mxu0 0
    %5923 = vmatpush1.bf16.msra.mxu0 0
    %5924 = vmatprep.subr.bf16.mxu0 0
    %5925 = vmatpush1.bf16.msra.mxu0 0
    %5926 = vmatprep.subr.bf16.mxu0 0
    %5927 = vmatpush1.bf16.msra.mxu0 0
    %5928 = vmatprep.subr.bf16.mxu0 0
    %5929 = vmatpush1.bf16.msra.mxu0 0
    %5930 = vmatprep.subr.bf16.mxu0 0
    %5931 = vmatpush1.bf16.msra.mxu0 0
    %5932 = vmatprep.mubr.bf16.mxu0 0
    %5933 = vmatmul.mubr.bf16.gmra.mrb[0].mxu0 %v5898
    %v5934 = vpop.f32.mrb[0].mxu0
    %v5935 = vadd.f32 0.0, %v5934
    %v5936 = vpop.f32.mrb[0].mxu0
    %v5937 = vadd.f32 0.0, %v5936
    %v5938 = vpop.f32.mrb[0].mxu0
    %v5939 = vpop.f32.mrb[0].mxu0
    %5940 = vdwg.mxu0
    %v5943 = vcombine.low %v5935, %v5937
    %v5945 = vadd.f32 %v2895, %v5943
    %v5946 = vxor.u32 %v5945, 2147483648
    %v5947 = vmul.f32 %v5946, 1.442695
    %v5948 = vpow.pop %v5947
    %v5949 = vadd.f32 %v5948, 1.0
    %v5950 = vrcp.pop %v5949
    %v5951 = vmul.f32 1.0, %v5950
    %v5953 = vrot.slane %v5945, 4
    %v5955 = vtanh.pop %v5953
    %5956 = vrot.lane.b32.xlu0 %v5945, 64
    %v5957 = vpop.permute.xlu0 %5956
    %v5958 = vrot.slane %v5957, 4
    %v5960 = vxor.u32 %v5958, 2147483648
    %v5961 = vmul.f32 %v5960, 1.442695
    %v5962 = vpow.pop %v5961
    %v5963 = vadd.f32 %v5962, 1.0
    %v5964 = vrcp.pop %v5963
    %v5965 = vmul.f32 1.0, %v5964
    %v5966 = vmul.f32 %v5951, %v5707
    %v5967 = vmul.f32 %v5951, %v5955
    %5969 = vrot.lane.b32.xlu0 %v5967, 64
    %v5970 = vpop.permute.xlu0 %5969
    %v5972 = vadd.f32 %v5966, %v5970
    %v5973 = vtanh.pop %v5972
    %5975 = vrot.lane.b32.xlu0 %v5973, 64
    %v5976 = vpop.permute.xlu0 %5975
    %v5978 = vmul.f32 %v5965, %v5976
    %5979 = vst.msk [vmem:[#allocation2 + $0x28] sm:$0xf] %vm3328, %v5978
    %5981 = vrot.lane.b32.xlu0 %v5802, 48
    %v5982 = vpop.permute.xlu0 %5981
    %v5984 = vsel %vm276, %v5978, %v5982
    %v5985 = vpack.c.bf16 %v5984, %v5984
    %v5987 = vsel %vm167, %v5985, 0
    %5989 = vmatprep.subr.bf16.mxu0 %v2935
    %5990 = vmatpush1.bf16.msra.mxu0 %v2934
    %5991 = vmatprep.subr.bf16.mxu0 %v2937
    %5992 = vmatpush1.bf16.msra.mxu0 %v2936
    %5993 = vmatprep.subr.bf16.mxu0 %v2939
    %5994 = vmatpush1.bf16.msra.mxu0 %v2938
    %5995 = vmatprep.subr.bf16.mxu0 %v2941
    %5996 = vmatpush1.bf16.msra.mxu0 %v2940
    %5997 = vmatprep.subr.bf16.mxu0 %v2943
    %5998 = vmatpush1.bf16.msra.mxu0 %v2942
    %5999 = vmatprep.subr.bf16.mxu0 %v2945
    %6000 = vmatpush1.bf16.msra.mxu0 %v2944
    %6001 = vmatprep.subr.bf16.mxu0 0
    %6002 = vmatpush1.bf16.msra.mxu0 0
    %6003 = vmatprep.subr.bf16.mxu0 0
    %6004 = vmatpush1.bf16.msra.mxu0 0
    %6005 = vmatprep.subr.bf16.mxu0 0
    %6006 = vmatpush1.bf16.msra.mxu0 0
    %6007 = vmatprep.subr.bf16.mxu0 0
    %6008 = vmatpush1.bf16.msra.mxu0 0
    %6009 = vmatprep.subr.bf16.mxu0 0
    %6010 = vmatpush1.bf16.msra.mxu0 0
    %6011 = vmatprep.subr.bf16.mxu0 0
    %6012 = vmatpush1.bf16.msra.mxu0 0
    %6013 = vmatprep.subr.bf16.mxu0 0
    %6014 = vmatpush1.bf16.msra.mxu0 0
    %6015 = vmatprep.subr.bf16.mxu0 0
    %6016 = vmatpush1.bf16.msra.mxu0 0
    %6017 = vmatprep.subr.bf16.mxu0 0
    %6018 = vmatpush1.bf16.msra.mxu0 0
    %6019 = vmatprep.subr.bf16.mxu0 0
    %6020 = vmatpush1.bf16.msra.mxu0 0
    %6021 = vmatprep.mubr.bf16.mxu0 0
    %6022 = vmatmul.mubr.bf16.gmra.mrb[0].mxu0 %v5987
    %v6023 = vpop.f32.mrb[0].mxu0
    %v6024 = vadd.f32 0.0, %v6023
    %v6025 = vpop.f32.mrb[0].mxu0
    %v6026 = vadd.f32 0.0, %v6025
    %v6027 = vpop.f32.mrb[0].mxu0
    %v6028 = vpop.f32.mrb[0].mxu0
    %6029 = vdwg.mxu0
    %v6032 = vcombine.low %v6024, %v6026
    %v6034 = vadd.f32 %v2891, %v6032
    %v6035 = vxor.u32 %v6034, 2147483648
    %v6036 = vmul.f32 %v6035, 1.442695
    %v6037 = vpow.pop %v6036
    %v6038 = vadd.f32 %v6037, 1.0
    %v6039 = vrcp.pop %v6038
    %v6040 = vmul.f32 1.0, %v6039
    %v6042 = vrot.slane %v6034, 4
    %v6044 = vtanh.pop %v6042
    %6045 = vrot.lane.b32.xlu0 %v6034, 64
    %v6046 = vpop.permute.xlu0 %6045
    %v6047 = vrot.slane %v6046, 4
    %v6049 = vxor.u32 %v6047, 2147483648
    %v6050 = vmul.f32 %v6049, 1.442695
    %v6051 = vpow.pop %v6050
    %v6052 = vadd.f32 %v6051, 1.0
    %v6053 = vrcp.pop %v6052
    %v6054 = vmul.f32 1.0, %v6053
    %v6055 = vmul.f32 %v6040, %v5796
    %v6056 = vmul.f32 %v6040, %v6044
    %6058 = vrot.lane.b32.xlu0 %v6056, 64
    %v6059 = vpop.permute.xlu0 %6058
    %v6061 = vadd.f32 %v6055, %v6059
    %v6062 = vtanh.pop %v6061
    %6064 = vrot.lane.b32.xlu0 %v6062, 64
    %v6065 = vpop.permute.xlu0 %6064
    %v6067 = vmul.f32 %v6054, %v6065
    %6069 = vrot.lane.b32.xlu0 %v5890, 48
    %v6070 = vpop.permute.xlu0 %6069
    %v6072 = vsel %vm276, %v6067, %v6070
    %v6073 = vpack.c.bf16 %v6072, %v6072
    %v6075 = vsel %vm167, %v6073, 0
    %6077 = vmatprep.subr.bf16.mxu0 %v3079
    %6078 = vmatpush1.bf16.msra.mxu0 %v3078
    %6079 = vmatprep.subr.bf16.mxu0 %v3081
    %6080 = vmatpush1.bf16.msra.mxu0 %v3080
    %6081 = vmatprep.subr.bf16.mxu0 %v3083
    %6082 = vmatpush1.bf16.msra.mxu0 %v3082
    %6083 = vmatprep.subr.bf16.mxu0 %v3085
    %6084 = vmatpush1.bf16.msra.mxu0 %v3084
    %6085 = vmatprep.subr.bf16.mxu0 %v3087
    %6086 = vmatpush1.bf16.msra.mxu0 %v3086
    %6087 = vmatprep.subr.bf16.mxu0 %v3089
    %6088 = vmatpush1.bf16.msra.mxu0 %v3088
    %6089 = vmatprep.subr.bf16.mxu0 0
    %6090 = vmatpush1.bf16.msra.mxu0 0
    %6091 = vmatprep.subr.bf16.mxu0 0
    %6092 = vmatpush1.bf16.msra.mxu0 0
    %6093 = vmatprep.subr.bf16.mxu0 0
    %6094 = vmatpush1.bf16.msra.mxu0 0
    %6095 = vmatprep.subr.bf16.mxu0 0
    %6096 = vmatpush1.bf16.msra.mxu0 0
    %6097 = vmatprep.subr.bf16.mxu0 0
    %6098 = vmatpush1.bf16.msra.mxu0 0
    %6099 = vmatprep.subr.bf16.mxu0 0
    %6100 = vmatpush1.bf16.msra.mxu0 0
    %6101 = vmatprep.subr.bf16.mxu0 0
    %6102 = vmatpush1.bf16.msra.mxu0 0
    %6103 = vmatprep.subr.bf16.mxu0 0
    %6104 = vmatpush1.bf16.msra.mxu0 0
    %6105 = vmatprep.subr.bf16.mxu0 0
    %6106 = vmatpush1.bf16.msra.mxu0 0
    %6107 = vmatprep.subr.bf16.mxu0 0
    %6108 = vmatpush1.bf16.msra.mxu0 0
    %6109 = vmatprep.mubr.bf16.mxu0 0
    %6110 = vmatmul.mubr.bf16.gmra.mrb[0].mxu0 %v6075
    %v6111 = vpop.f32.mrb[0].mxu0
    %v6112 = vadd.f32 0.0, %v6111
    %v6113 = vpop.f32.mrb[0].mxu0
    %v6114 = vadd.f32 0.0, %v6113
    %v6115 = vpop.f32.mrb[0].mxu0
    %v6116 = vpop.f32.mrb[0].mxu0
    %6117 = vdwg.mxu0
    %v6120 = vcombine.low %v6112, %v6114
    %v6122 = vadd.f32 %v2893, %v6120
    %v6123 = vxor.u32 %v6122, 2147483648
    %v6124 = vmul.f32 %v6123, 1.442695
    %v6125 = vpow.pop %v6124
    %v6126 = vadd.f32 %v6125, 1.0
    %v6127 = vrcp.pop %v6126
    %v6128 = vmul.f32 1.0, %v6127
    %v6130 = vrot.slane %v6122, 4
    %v6132 = vtanh.pop %v6130
    %6133 = vrot.lane.b32.xlu0 %v6122, 64
    %v6134 = vpop.permute.xlu0 %6133
    %v6135 = vrot.slane %v6134, 4
    %v6137 = vxor.u32 %v6135, 2147483648
    %v6138 = vmul.f32 %v6137, 1.442695
    %v6139 = vpow.pop %v6138
    %v6140 = vadd.f32 %v6139, 1.0
    %v6141 = vrcp.pop %v6140
    %v6142 = vmul.f32 1.0, %v6141
    %v6143 = vmul.f32 %v6128, %v5884
    %v6144 = vmul.f32 %v6128, %v6132
    %6146 = vrot.lane.b32.xlu0 %v6144, 64
    %v6147 = vpop.permute.xlu0 %6146
    %v6149 = vadd.f32 %v6143, %v6147
    %v6150 = vtanh.pop %v6149
    %6152 = vrot.lane.b32.xlu0 %v6150, 64
    %v6153 = vpop.permute.xlu0 %6152
    %v6155 = vmul.f32 %v6142, %v6153
    %6157 = vrot.lane.b32.xlu0 %v5978, 48
    %v6158 = vpop.permute.xlu0 %6157
    %v6160 = vsel %vm276, %v6155, %v6158
    %v6161 = vpack.c.bf16 %v6160, %v6160
    %v6163 = vsel %vm167, %v6161, 0
    %6165 = vmatprep.subr.bf16.mxu0 %v3223
    %6166 = vmatpush1.bf16.msra.mxu0 %v3222
    %6167 = vmatprep.subr.bf16.mxu0 %v3225
    %6168 = vmatpush1.bf16.msra.mxu0 %v3224
    %6169 = vmatprep.subr.bf16.mxu0 %v3227
    %6170 = vmatpush1.bf16.msra.mxu0 %v3226
    %6171 = vmatprep.subr.bf16.mxu0 %v3229
    %6172 = vmatpush1.bf16.msra.mxu0 %v3228
    %6173 = vmatprep.subr.bf16.mxu0 %v3231
    %6174 = vmatpush1.bf16.msra.mxu0 %v3230
    %6175 = vmatprep.subr.bf16.mxu0 %v3233
    %6176 = vmatpush1.bf16.msra.mxu0 %v3232
    %6177 = vmatprep.subr.bf16.mxu0 0
    %6178 = vmatpush1.bf16.msra.mxu0 0
    %6179 = vmatprep.subr.bf16.mxu0 0
    %6180 = vmatpush1.bf16.msra.mxu0 0
    %6181 = vmatprep.subr.bf16.mxu0 0
    %6182 = vmatpush1.bf16.msra.mxu0 0
    %6183 = vmatprep.subr.bf16.mxu0 0
    %6184 = vmatpush1.bf16.msra.mxu0 0
    %6185 = vmatprep.subr.bf16.mxu0 0
    %6186 = vmatpush1.bf16.msra.mxu0 0
    %6187 = vmatprep.subr.bf16.mxu0 0
    %6188 = vmatpush1.bf16.msra.mxu0 0
    %6189 = vmatprep.subr.bf16.mxu0 0
    %6190 = vmatpush1.bf16.msra.mxu0 0
    %6191 = vmatprep.subr.bf16.mxu0 0
    %6192 = vmatpush1.bf16.msra.mxu0 0
    %6193 = vmatprep.subr.bf16.mxu0 0
    %6194 = vmatpush1.bf16.msra.mxu0 0
    %6195 = vmatprep.subr.bf16.mxu0 0
    %6196 = vmatpush1.bf16.msra.mxu0 0
    %6197 = vmatprep.mubr.bf16.mxu0 0
    %6198 = vmatmul.mubr.bf16.gmra.mrb[0].mxu0 %v6163
    %v6199 = vpop.f32.mrb[0].mxu0
    %v6200 = vadd.f32 0.0, %v6199
    %v6201 = vpop.f32.mrb[0].mxu0
    %v6202 = vadd.f32 0.0, %v6201
    %v6203 = vpop.f32.mrb[0].mxu0
    %v6204 = vpop.f32.mrb[0].mxu0
    %6205 = vdwg.mxu0
    %v6208 = vcombine.low %v6200, %v6202
    %v6210 = vadd.f32 %v2895, %v6208
    %v6211 = vxor.u32 %v6210, 2147483648
    %v6212 = vmul.f32 %v6211, 1.442695
    %v6213 = vpow.pop %v6212
    %v6214 = vadd.f32 %v6213, 1.0
    %v6215 = vrcp.pop %v6214
    %v6216 = vmul.f32 1.0, %v6215
    %v6218 = vrot.slane %v6210, 4
    %v6220 = vtanh.pop %v6218
    %6221 = vrot.lane.b32.xlu0 %v6210, 64
    %v6222 = vpop.permute.xlu0 %6221
    %v6223 = vrot.slane %v6222, 4
    %v6225 = vxor.u32 %v6223, 2147483648
    %v6226 = vmul.f32 %v6225, 1.442695
    %v6227 = vpow.pop %v6226
    %v6228 = vadd.f32 %v6227, 1.0
    %v6229 = vrcp.pop %v6228
    %v6230 = vmul.f32 1.0, %v6229
    %v6231 = vmul.f32 %v6216, %v5972
    %v6232 = vmul.f32 %v6216, %v6220
    %6234 = vrot.lane.b32.xlu0 %v6232, 64
    %v6235 = vpop.permute.xlu0 %6234
    %v6237 = vadd.f32 %v6231, %v6235
    %v6238 = vtanh.pop %v6237
    %6240 = vrot.lane.b32.xlu0 %v6238, 64
    %v6241 = vpop.permute.xlu0 %6240
    %v6243 = vmul.f32 %v6230, %v6241
    %6244 = vst.msk [vmem:[#allocation2 + $0x2c] sm:$0xf] %vm3328, %v6243
    %v6245 = vld [vmem:[#allocation2] sm:$0xff]
    %v6246 = vld [vmem:[#allocation2 + $0x8] sm:$0xff]
    %v6247 = vld [vmem:[#allocation2 + $0x10] sm:$0xff]
    %v6248 = vld [vmem:[#allocation2 + $0x18] sm:$0xff]
    %v6249 = vld [vmem:[#allocation2 + $0x20] sm:$0xff]
    %v6250 = vld [vmem:[#allocation2 + $0x28] sm:$0xff]
    %v6251 = vpack.c.bf16 %v6246, %v6245
    %v6252 = vpack.c.bf16 %v6248, %v6247
    %v6253 = vpack.c.bf16 %v6250, %v6249
    %v6254 = vld [vmem:[#allocation8] sm:$0xf]
    %v6255 = vld [vmem:[#allocation8 + $0x4] sm:$0xf]
    %v6256 = vld [vmem:[#allocation8 + $0x8] sm:$0xf]
    %v6257 = vld [vmem:[#allocation8 + $0xc] sm:$0xf]
    %v6258 = vld [vmem:[#allocation8 + $0x10] sm:$0xf]
    %v6259 = vld [vmem:[#allocation8 + $0x14] sm:$0xf]
    %v6260 = vld [vmem:[%s7] sm:$0x1]
    %v6262 = vlaneseq
    %v6263 = vshrl.u32 %v6262, 7
    %v6264 = vsub.s32 0, %v6263
    %v6265 = vrot.slane %v6260, %v6264
    %v6273 = vunpack.c.l.b16 %v6254
    %v6274 = vunpack.c.l.b16 %v6255
    %v6275 = vunpack.c.l.b16 %v6256
    %v6276 = vunpack.c.l.b16 %v6257
    %v6277 = vunpack.c.l.b16 %v6258
    %v6278 = vunpack.c.l.b16 %v6259
    %v6279 = vpack.c.b16 %v6274, %v6273
    %v6280 = vpack.c.b16 %v6276, %v6275
    %v6281 = vpack.c.b16 %v6278, %v6277
    %v6286 = vsel %vm276, %v6251, 0
    %v6289 = vsel %vm276, %v6252, 0
    %v6292 = vsel %vm276, %v6253, 0
    %6294 = vmatprep.subr.bf16.mxu0 0
    %6295 = vmatpush1.bf16.msra.mxu0 %v6279
    %6296 = vmatprep.subr.bf16.mxu0 0
    %6297 = vmatpush1.bf16.msra.mxu0 %v6280
    %6298 = vmatprep.subr.bf16.mxu0 0
    %6299 = vmatpush1.bf16.msra.mxu0 %v6281
    %6300 = vmatprep.subr.bf16.mxu0 0
    %6301 = vmatpush1.bf16.msra.mxu0 0
    %6302 = vmatprep.subr.bf16.mxu0 0
    %6303 = vmatpush1.bf16.msra.mxu0 0
    %6304 = vmatprep.subr.bf16.mxu0 0
    %6305 = vmatpush1.bf16.msra.mxu0 0
    %6306 = vmatprep.subr.bf16.mxu0 0
    %6307 = vmatpush1.bf16.msra.mxu0 0
    %6308 = vmatprep.subr.bf16.mxu0 0
    %6309 = vmatpush1.bf16.msra.mxu0 0
    %6310 = vmatprep.subr.bf16.mxu0 0
    %6311 = vmatpush1.bf16.msra.mxu0 0
    %6312 = vmatprep.subr.bf16.mxu0 0
    %6313 = vmatpush1.bf16.msra.mxu0 0
    %6314 = vmatprep.subr.bf16.mxu0 0
    %6315 = vmatpush1.bf16.msra.mxu0 0
    %6316 = vmatprep.subr.bf16.mxu0 0
    %6317 = vmatpush1.bf16.msra.mxu0 0
    %6318 = vmatprep.subr.bf16.mxu0 0
    %6319 = vmatpush1.bf16.msra.mxu0 0
    %6320 = vmatprep.subr.bf16.mxu0 0
    %6321 = vmatpush1.bf16.msra.mxu0 0
    %6322 = vmatprep.subr.bf16.mxu0 0
    %6323 = vmatpush1.bf16.msra.mxu0 0
    %6324 = vmatprep.subr.bf16.mxu0 0
    %6325 = vmatpush1.bf16.msra.mxu0 0
    %6326 = vmatprep.mubr.bf16.mxu0 0
    %6327 = vmatmul.mubr.bf16.gmra.mrb[0].mxu0 %v6286
    %v6328 = vpop.f32.mrb[0].mxu0
    %v6329 = vadd.f32 %v6265, %v6328
    %v6330 = vpop.f32.mrb[0].mxu0
    %v6331 = vpop.f32.mrb[0].mxu0
    %v6332 = vadd.f32 %v6265, %v6331
    %v6333 = vpop.f32.mrb[0].mxu0
    %6334 = vmatprep.mubr.bf16.mxu0 0
    %6335 = vmatmul.mubr.bf16.gmra.mrb[0].mxu0 %v6289
    %v6336 = vpop.f32.mrb[0].mxu0
    %v6337 = vadd.f32 %v6265, %v6336
    %v6338 = vpop.f32.mrb[0].mxu0
    %v6339 = vpop.f32.mrb[0].mxu0
    %v6340 = vadd.f32 %v6265, %v6339
    %v6341 = vpop.f32.mrb[0].mxu0
    %6342 = vmatprep.mubr.bf16.mxu0 0
    %6343 = vmatmul.mubr.bf16.gmra.mrb[0].mxu0 %v6292
    %v6344 = vpop.f32.mrb[0].mxu0
    %v6345 = vadd.f32 %v6265, %v6344
    %v6346 = vpop.f32.mrb[0].mxu0
    %v6347 = vpop.f32.mrb[0].mxu0
    %v6348 = vadd.f32 %v6265, %v6347
    %v6349 = vpop.f32.mrb[0].mxu0
    %6350 = vdwg.mxu0
    %6351 = vst [vmem:[%s8] sm:$0xff] %v6329
    %6352 = vst [vmem:[%s8 + $0x8] sm:$0xff] %v6332
    %6353 = vst [vmem:[%s8 + $0x10] sm:$0xff] %v6337
    %6354 = vst [vmem:[%s8 + $0x18] sm:$0xff] %v6340
    %6355 = vst [vmem:[%s8 + $0x20] sm:$0xff] %v6345
    %6356 = vst [vmem:[%s8 + $0x28] sm:$0xff] %v6348
    // Predicated region
    $region50: #{encoder_trainer_forward.1} parent=1 // pred_check
      _
    $region51: #{encoder_trainer_forward.1} parent=1 // pred_check_branch
      %6358 = sbr.rel (0) target = $region53
    $region52: #{encoder_trainer_forward.1} parent=1 // pred_region
      _
    $region53: #{encoder_trainer_forward.1} parent=1 // pred_fallthru
      _
    // Predicated region
    $region54: #{encoder_trainer_forward.1} parent=1 // pred_check
      _
    $region55: #{encoder_trainer_forward.1} parent=1 // pred_check_branch
      %6360 = sbr.rel (0) target = $region57
    $region56: #{encoder_trainer_forward.1} parent=1 // pred_region
      _
    $region57: #{encoder_trainer_forward.1} parent=1 // pred_fallthru
      _
    %6361 = vsyncpa [#allocation4], 1
    %6362 = vsyncpa [#allocation6], 1
    %6363 = vsyncpa [#allocation9], 1

</llo_original>
